<compile_context>
chip_gen: v7x
topology: tpu7x:2x2x1
jax: 0.10.0
libtpu: 0.0.40
codegen_flags: <defaults>
</compile_context>

<pallas_src>
import numpy as np
import jax
import jax.numpy as jnp
from jax.experimental import pallas as pl
from jax.experimental.pallas import tpu as pltpu


# ----------------------------- fused Pallas kernel ---------------------------

def _fused_net_kernel(x_ref, w1_ref, w2_ref, c_ref, o_ref):
    """Entire Net forward for one batch tile.

    x_ref : (B, 3072)   f32  flattened images, columns ordered (ci, hi, wi).
    w1_ref: (3072, 1024) bf16 lowered conv1 + 2x2-pool grouping;
                         columns ordered (pm, co1, h2, w2), pm = pool member.
    w2_ref: (256, 128)   bf16 lowered conv2 + 2x2-pool grouping;
                         rows (ci, h2, w2), columns (pm, co2, h3, w3).
    c_ref : (40, 256)    f32  packed constants:
                         row 0        = conv1 bias per pooled output column,
                         row 1[:32]   = conv2 bias per pooled output column,
                         row 2[:2]    = fc bias,
                         rows 8:40, cols 0:2 = fc weight^T (32, 2).
    o_ref : (B, 2)       f32  logits.
    """
    # -- block 1: Conv2d(3->4,k5,s2,p2) -> MaxPool2d(2) -> (+bias) -> ReLU ----
    # One lane-dense matmul, batch on the MXU M axis, 1024 output lanes.
    x0 = x_ref[...].astype(jnp.bfloat16)
    y1 = jnp.dot(x0, w1_ref[...], preferred_element_type=jnp.float32)   # (B, 1024)
    q = y1.shape[1] // 4                                                 # 256
    m1 = jnp.maximum(jnp.maximum(y1[:, 0:q], y1[:, q:2 * q]),
                     jnp.maximum(y1[:, 2 * q:3 * q], y1[:, 3 * q:4 * q]))
    # bias + ReLU after the pool max (max is monotone, bias is per-channel).
    x1 = jnp.maximum(m1 + c_ref[0:1, :], 0.0).astype(jnp.bfloat16)       # (B, 256)

    # -- block 2: Conv2d(4->8,k5,s2,p2) -> MaxPool2d(2) -> (+bias) -> ReLU ----
    # ONE matmul (no per-(pool-member, channel) loop), batch on M.
    y2 = jnp.dot(x1, w2_ref[...], preferred_element_type=jnp.float32)   # (B, 128)
    r = y2.shape[1] // 4                                                 # 32
    m2 = jnp.maximum(jnp.maximum(y2[:, 0:r], y2[:, r:2 * r]),
                     jnp.maximum(y2[:, 2 * r:3 * r], y2[:, 3 * r:4 * r]))
    x2 = jnp.maximum(m2 + c_ref[1:2, 0:r], 0.0)                          # (B, 32)
    # x2 columns are already in PyTorch flatten order (co2, h3, w3).

    # -- classifier: Linear(32, 2) ---------------------------------------------
    fcw = c_ref[8:40, 0:2]                                               # (32, 2)
    o_ref[...] = (jnp.dot(x2, fcw, preferred_element_type=jnp.float32)
                  + c_ref[2:3, 0:2])


_VMEM = pl.BlockSpec(memory_space=pltpu.MemorySpace.VMEM)


def _fused_net_call(x0, w1l, w2l, consts):
    n, kin = x0.shape
    flops = 2 * n * (w1l.shape[0] * w1l.shape[1]
                     + w2l.shape[0] * w2l.shape[1] + 32 * 2)
    bytes_accessed = int(4 * x0.size + 2 * w1l.size + 2 * w2l.size
                         + 4 * consts.size + 4 * n * 2)
    cost = pl.CostEstimate(flops=int(flops), transcendentals=0,
                           bytes_accessed=bytes_accessed)

    tb = 128
    if n >= 2 * tb and n % tb == 0:
        # Large batch: tile the batch axis; "parallel" lets v7x's two
        # TensorCores split it and BlockSpec double-buffers the image DMA.
        # Weights use a constant block index -> fetched once, kept resident.
        grid_spec = pltpu.PrefetchScalarGridSpec(
            num_scalar_prefetch=0, grid=(n // tb,),
            in_specs=[pl.BlockSpec((tb, kin), lambda i: (i, 0)),
                      pl.BlockSpec(w1l.shape, lambda i: (0, 0)),
                      pl.BlockSpec(w2l.shape, lambda i: (0, 0)),
                      pl.BlockSpec(consts.shape, lambda i: (0, 0))],
            out_specs=pl.BlockSpec((tb, 2), lambda i: (i, 0)))
        return pl.pallas_call(
            _fused_net_kernel,
            out_shape=jax.ShapeDtypeStruct((n, 2), jnp.float32),
            grid_spec=grid_spec,
            compiler_params=pltpu.CompilerParams(
                dimension_semantics=("parallel",),
                vmem_limit_bytes=48 * 1024 * 1024),
            cost_estimate=cost,
        )(x0, w1l, w2l, consts)

    # Small batch (the test case): single gridless invocation; total VMEM use
    # ~6.2 MiB, under every generation's default scoped limit (v5e 16 MiB,
    # v6e/v7x 32 MiB) and independent of batch size.
    return pl.pallas_call(
        _fused_net_kernel,
        out_shape=jax.ShapeDtypeStruct((n, 2), jnp.float32),
        in_specs=[_VMEM] * 4,
        out_specs=_VMEM,
        cost_estimate=cost,
    )(x0, w1l, w2l, consts)


# ------------------------- one-time weight repacking --------------------------

def _pool_conv_gather(h_in, w_in, hp_out, wp_out, k, stride, pad):
    """0/1 tensor G[pm, hi*w_in+wi, kh*k+kw, h3*wp_out+w3]: 1 where pooled-conv
    output (h3,w3), pool member pm=(ph,pw), tap (kh,kw) reads input (hi,wi)."""
    g = np.zeros((4, h_in * w_in, k * k, hp_out * wp_out), np.float32)
    for ph in range(2):
        for pw in range(2):
            pm = ph * 2 + pw
            for h3 in range(hp_out):
                for w3 in range(wp_out):
                    oh, ow = 2 * h3 + ph, 2 * w3 + pw
                    for kh in range(k):
                        for kw in range(k):
                            hi = stride * oh + kh - pad
                            wi = stride * ow + kw - pad
                            if 0 <= hi < h_in and 0 <= wi < w_in:
                                g[pm, hi * w_in + wi, kh * k + kw,
                                  h3 * wp_out + w3] = 1.0
    return g


def prepare_params(params):
    """Repack PyTorch-layout weights into batch-independent kernel layouts.

    Returns (device_arrays_for_kernel, float32_numpy_pack_for_validation).
    """
    c1w = np.asarray(params["conv1_w"], np.float32)        # (4, 3, 5, 5)
    c1b = np.asarray(params["conv1_b"], np.float32)        # (4,)
    c2w = np.asarray(params["conv2_w"], np.float32)        # (8, 4, 5, 5)
    c2b = np.asarray(params["conv2_b"], np.float32)        # (8,)
    fcw = np.asarray(params["fc_w"], np.float32)            # (2, 32)
    fcb = np.asarray(params["fc_b"], np.float32)            # (2,)

    co1, ci1, k1, _ = c1w.shape
    co2, ci2, k2, _ = c2w.shape

    # Lowered conv1 (+ pool grouping): rows (ci, hi, wi) over the 32x32 image,
    # cols (pm, co1, h2, w2) over the pooled 8x8 output.
    g1 = _pool_conv_gather(32, 32, 8, 8, k1, 2, 2)          # (4, 1024, 25, 64)
    w1l = np.einsum("pstf,oct->cspof", g1,
                    c1w.reshape(co1, ci1, k1 * k1))
    w1l = w1l.reshape(ci1 * 32 * 32, 4 * co1 * 64)          # (3072, 1024)

    # Lowered conv2 (+ pool grouping): rows (ci, h2, w2) over the 8x8 input,
    # cols (pm, co2, h3, w3) over the pooled 2x2 output.
    g2 = _pool_conv_gather(8, 8, 2, 2, k2, 2, 2)            # (4, 64, 25, 4)
    w2l = np.einsum("pstf,oct->cspof", g2,
                    c2w.reshape(co2, ci2, k2 * k2))
    w2l = w2l.reshape(ci2 * 8 * 8, 4 * co2 * 4)             # (256, 128)

    # Packed small constants: one buffer -> one DMA instead of four.
    consts = np.zeros((40, 256), np.float32)
    consts[0, :] = np.repeat(c1b, 64)        # conv1 bias per (co1, h2, w2) col
    consts[1, :32] = np.repeat(c2b, 4)       # conv2 bias per (co2, h3, w3) col
    consts[2, :2] = fcb
    consts[8:40, 0:2] = fcw.T                # fc weight^T, sublane-aligned row 8

    np_pack = dict(w1l=w1l, w2l=w2l, consts=consts)
    prep = dict(w1l=jnp.asarray(w1l, jnp.bfloat16),
                w2l=jnp.asarray(w2l, jnp.bfloat16),
                consts=jnp.asarray(consts, jnp.float32))
    return prep, np_pack


# ------------------------------ forward (glue) --------------------------------

def net_forward(image_nchw, prep):
    """Forward of Net: returns classification logits of shape (N, 2)."""
    n, c, h, w = image_nchw.shape
    assert (c, h, w) == (3, 32, 32), image_nchw.shape
    # Free, layout-preserving reshape; everything else happens in the kernel.
    x0 = image_nchw.astype(jnp.float32).reshape(n, c * h * w)
    logits = _fused_net_call(x0, prep["w1l"], prep["w2l"], prep["consts"])
    # TODO(synk): trw.train.OutputClassification only wraps (logits, target)
    # for loss/metric bookkeeping; no additional forward compute.
    return logits


# ------------------------- numpy references (validation) ----------------------

def _np_conv_block(x, w, b):
    """Conv2d(k=5, s=2, p=2) -> +bias -> ReLU -> MaxPool2d(2), in numpy f32."""
    n, c, h, wd = x.shape
    co = w.shape[0]
    oh, ow = h // 2, wd // 2
    xp = np.zeros((n, c, h + 4, wd + 4), np.float32)
    xp[:, :, 2:2 + h, 2:2 + wd] = x
    y = np.zeros((n, co, oh, ow), np.float32)
    for kh in range(5):
        for kw in range(5):
            patch = xp[:, :, kh:kh + h:2, kw:kw + wd:2]       # (n, c, oh, ow)
            y += np.einsum("nchw,oc->nohw", patch, w[:, :, kh, kw])
    y = np.maximum(y + b.reshape(1, -1, 1, 1), 0.0)
    return y.reshape(n, co, oh // 2, 2, ow // 2, 2).max(axis=(3, 5))


def _np_reference_forward(image, params):
    x = np.asarray(image, np.float32)
    y = _np_conv_block(x, np.asarray(params["conv1_w"], np.float32),
                       np.asarray(params["conv1_b"], np.float32))
    y = _np_conv_block(y, np.asarray(params["conv2_w"], np.float32),
                       np.asarray(params["conv2_b"], np.float32))
    flat = y.reshape(y.shape[0], -1)
    return flat @ np.asarray(params["fc_w"], np.float32).T \
        + np.asarray(params["fc_b"], np.float32)


def _np_lowered_forward(image, np_pack):
    """Same math as the kernel but in f32 numpy: validates the packing exactly."""
    n = image.shape[0]
    x0 = np.asarray(image, np.float32).reshape(n, -1)
    y1 = x0 @ np_pack["w1l"]
    m1 = y1.reshape(n, 4, -1).max(axis=1)
    x1 = np.maximum(m1 + np_pack["consts"][0:1, :], 0.0)
    y2 = x1 @ np_pack["w2l"]
    m2 = y2.reshape(n, 4, -1).max(axis=1)
    x2 = np.maximum(m2 + np_pack["consts"][1:2, :32], 0.0)
    return x2 @ np_pack["consts"][8:40, 0:2] + np_pack["consts"][2:3, 0:2]


# ------------------------------------ main -------------------------------------

if __name__ == "__main__":
    key = jax.random.PRNGKey(0)
    k_img, k_cls, k1, k2, k3, k4, k5 = jax.random.split(key, 7)

    # batch['image']: (N, C, H, W) = (2, 3, 32, 32); batch['classification']: (2,)
    image = jax.random.normal(k_img, (2, 3, 32, 32), jnp.float32)
    classification = jax.random.randint(k_cls, (2,), 0, 2)   # targets (unused by forward)

    params = {
        "conv1_w": 0.1 * jax.random.normal(k1, (4, 3, 5, 5), jnp.float32),
        "conv1_b": 0.1 * jax.random.normal(k2, (4,), jnp.float32),
        "conv2_w": 0.1 * jax.random.normal(k3, (8, 4, 5, 5), jnp.float32),
        "conv2_b": 0.1 * jax.random.normal(k4, (8,), jnp.float32),
        "fc_w": 0.1 * jax.random.normal(k5, (2, 32), jnp.float32),
        "fc_b": jnp.zeros((2,), jnp.float32),
    }

    prep, np_pack = prepare_params(params)
    image_np = np.asarray(image)

    # 1) Exact (f32 numpy) check of the lowered-matrix packing vs a direct
    #    conv reference — tight tolerance, catches any layout/packing bug.
    ref = _np_reference_forward(image_np, params)
    low = _np_lowered_forward(image_np, np_pack)
    np.testing.assert_allclose(low, ref, rtol=1e-5, atol=1e-6)

    # 2) Run the fused Pallas kernel and check against the reference
    #    (looser tolerance only because the kernel uses bf16 matmul operands).
    logits = jax.jit(net_forward)(image, prep)
    logits = jax.block_until_ready(logits)
    assert logits.shape == (2, 2), logits.shape
    assert logits.dtype == jnp.float32
    np.testing.assert_allclose(np.asarray(logits), ref, rtol=2e-2, atol=2e-2)

    print("KERNEL_OK")
</pallas_src>

<mosaic_0001>
module attributes {stable_mosaic.version = 11 : i64} {
  func.func @_fused_net_kernel(%arg0: memref<2x3072xf32, #tpu.memory_space<vmem>>, %arg1: memref<3072x1024xbf16, #tpu.memory_space<vmem>>, %arg2: memref<256x128xbf16, #tpu.memory_space<vmem>>, %arg3: memref<40x256xf32, #tpu.memory_space<vmem>>, %arg4: memref<2x2xf32, #tpu.memory_space<vmem>>) attributes {dimension_semantics = [], scalar_prefetch = 0 : i64, scratch_operands = 0 : i64, tpu.core_type = #tpu.core_type<tc>} {
    %c0 = arith.constant 0 : index
    %c0_0 = arith.constant 0 : index
    %0 = vector.load %arg0[%c0, %c0_0] : memref<2x3072xf32, #tpu.memory_space<vmem>>, vector<2x3072xf32>
    %1 = arith.truncf %0 : vector<2x3072xf32> to vector<2x3072xbf16>
    %c0_1 = arith.constant 0 : index
    %c0_2 = arith.constant 0 : index
    %2 = vector.load %arg1[%c0_1, %c0_2] : memref<3072x1024xbf16, #tpu.memory_space<vmem>>, vector<3072x1024xbf16>
    %cst = arith.constant dense<0.000000e+00> : vector<2x1024xf32>
    %3 = tpu.matmul %1, %2, %cst {dimension_numbers = #tpu.dot_dimension_numbers<[1], [0], [0], [1], [0, 0, 1, 1], [], []>} : vector<2x3072xbf16>, vector<3072x1024xbf16>, vector<2x1024xf32> -> vector<2x1024xf32>
    %4 = vector.extract_strided_slice %3 {offsets = [0, 0], sizes = [2, 256], strides = [1, 1]} : vector<2x1024xf32> to vector<2x256xf32>
    %5 = vector.extract_strided_slice %3 {offsets = [0, 256], sizes = [2, 256], strides = [1, 1]} : vector<2x1024xf32> to vector<2x256xf32>
    %6 = arith.maximumf %4, %5 : vector<2x256xf32>
    %7 = vector.extract_strided_slice %3 {offsets = [0, 512], sizes = [2, 256], strides = [1, 1]} : vector<2x1024xf32> to vector<2x256xf32>
    %8 = vector.extract_strided_slice %3 {offsets = [0, 768], sizes = [2, 256], strides = [1, 1]} : vector<2x1024xf32> to vector<2x256xf32>
    %9 = arith.maximumf %7, %8 : vector<2x256xf32>
    %10 = arith.maximumf %6, %9 : vector<2x256xf32>
    %c0_3 = arith.constant 0 : index
    %c0_4 = arith.constant 0 : index
    %11 = vector.load %arg3[%c0_3, %c0_4] : memref<40x256xf32, #tpu.memory_space<vmem>>, vector<1x256xf32>
    %12 = vector.broadcast %11 : vector<1x256xf32> to vector<2x256xf32>
    %13 = arith.addf %10, %12 : vector<2x256xf32>
    %cst_5 = arith.constant 0.000000e+00 : f32
    %14 = vector.broadcast %cst_5 : f32 to vector<2x256xf32>
    %15 = arith.maximumf %13, %14 : vector<2x256xf32>
    %16 = arith.truncf %15 : vector<2x256xf32> to vector<2x256xbf16>
    %c0_6 = arith.constant 0 : index
    %c0_7 = arith.constant 0 : index
    %17 = vector.load %arg2[%c0_6, %c0_7] : memref<256x128xbf16, #tpu.memory_space<vmem>>, vector<256x128xbf16>
    %cst_8 = arith.constant dense<0.000000e+00> : vector<2x128xf32>
    %18 = tpu.matmul %16, %17, %cst_8 {dimension_numbers = #tpu.dot_dimension_numbers<[1], [0], [0], [1], [0, 0, 1, 1], [], []>} : vector<2x256xbf16>, vector<256x128xbf16>, vector<2x128xf32> -> vector<2x128xf32>
    %19 = vector.extract_strided_slice %18 {offsets = [0, 0], sizes = [2, 32], strides = [1, 1]} : vector<2x128xf32> to vector<2x32xf32>
    %20 = vector.extract_strided_slice %18 {offsets = [0, 32], sizes = [2, 32], strides = [1, 1]} : vector<2x128xf32> to vector<2x32xf32>
    %21 = arith.maximumf %19, %20 : vector<2x32xf32>
    %22 = vector.extract_strided_slice %18 {offsets = [0, 64], sizes = [2, 32], strides = [1, 1]} : vector<2x128xf32> to vector<2x32xf32>
    %23 = vector.extract_strided_slice %18 {offsets = [0, 96], sizes = [2, 32], strides = [1, 1]} : vector<2x128xf32> to vector<2x32xf32>
    %24 = arith.maximumf %22, %23 : vector<2x32xf32>
    %25 = arith.maximumf %21, %24 : vector<2x32xf32>
    %c1 = arith.constant 1 : index
    %c0_9 = arith.constant 0 : index
    %26 = vector.load %arg3[%c1, %c0_9] : memref<40x256xf32, #tpu.memory_space<vmem>>, vector<1x32xf32>
    %27 = vector.broadcast %26 : vector<1x32xf32> to vector<2x32xf32>
    %28 = arith.addf %25, %27 : vector<2x32xf32>
    %cst_10 = arith.constant 0.000000e+00 : f32
    %29 = vector.broadcast %cst_10 : f32 to vector<2x32xf32>
    %30 = arith.maximumf %28, %29 : vector<2x32xf32>
    %c8 = arith.constant 8 : index
    %c0_11 = arith.constant 0 : index
    %31 = vector.load %arg3[%c8, %c0_11] : memref<40x256xf32, #tpu.memory_space<vmem>>, vector<32x2xf32>
    %cst_12 = arith.constant dense<0.000000e+00> : vector<2x2xf32>
    %32 = tpu.matmul %30, %31, %cst_12 {dimension_numbers = #tpu.dot_dimension_numbers<[1], [0], [0], [1], [0, 0, 1, 1], [], []>} : vector<2x32xf32>, vector<32x2xf32>, vector<2x2xf32> -> vector<2x2xf32>
    %c2 = arith.constant 2 : index
    %c0_13 = arith.constant 0 : index
    %33 = vector.load %arg3[%c2, %c0_13] : memref<40x256xf32, #tpu.memory_space<vmem>>, vector<1x2xf32>
    %34 = vector.broadcast %33 : vector<1x2xf32> to vector<2x2xf32>
    %35 = arith.addf %32, %34 : vector<2x2xf32>
    %c0_14 = arith.constant 0 : index
    %c0_15 = arith.constant 0 : index
    %36 = vector.load %arg4[%c0_14, %c0_15] : memref<2x2xf32, #tpu.memory_space<vmem>>, vector<2x2xf32>
    tpu.vector_store %arg4[%c0_14, %c0_15], %35 {strides = array<i32>} : memref<2x2xf32, #tpu.memory_space<vmem>>, vector<2x2xf32>,
    return
  }
}

</mosaic_0001>

<llo_original>
// kernel: net_forward.1
$region0: #{net_forward.1}
  #allocation0 [shape = 'u32[]', space=smem, size = 0x4, offset = 0x4, fixed_abs, tag = 'smem constant byte address 0x4 - core index']
  #allocation1 [shape = 'u32[144,128]{1,0:T(1,128)}', space=vmem, size = 0x12000, scoped, tag = 'internal scratch']
  %s0 = inlined_call_operand.vmem [shape: f32[2,3072], index: 0, kind: input, shape index: {}]
  %s1 = inlined_call_operand.hbm [shape: bf16[3072,1024], index: 1, kind: input, shape index: {}]
  %s2 = inlined_call_operand.hbm [shape: bf16[256,128], index: 2, kind: input, shape index: {}]
  %s3 = inlined_call_operand.hbm [shape: f32[40,256], index: 3, kind: input, shape index: {}]
  %s4 = inlined_call_operand.hbm [shape: f32[2,2], index: 4, kind: output, shape index: {}]
  %s5 = sld [smem:[#allocation0]]
  $region38: #{net_forward.1} parent=0
    _
  %s7 = ssub.s32 1, %s5
  %s8 = scalar_select 0, %s7, %s5
  $region1: #{net_forward.1} parent=0
    #allocation2 [shape = 'u8[6291456]{0}', space=vmem, size = 0x600000, scoped, tag = 'input window, operand 1, single buffered']
    #allocation3 [shape = 's32[1]{0}', space=sflag, size = 0x4, scoped, tag = 'scoped memory for net_forward.1']
    #allocation4 [shape = 's32[1]{0}', space=sflag, size = 0x4, scoped, tag = 'scoped memory for net_forward.1']
    #allocation5 [shape = 'u8[65536]{0}', space=vmem, size = 0x10000, scoped, tag = 'input window, operand 2, single buffered']
    #allocation6 [shape = 's32[1]{0}', space=sflag, size = 0x4, scoped, tag = 'scoped memory for net_forward.1']
    #allocation7 [shape = 'u8[40960]{0}', space=vmem, size = 0xa000, scoped, tag = 'input window, operand 3, single buffered']
    #allocation8 [shape = 'u8[1024]{0}', space=vmem, size = 0x400, scoped, tag = 'output window, operand 0, single buffered']
    %9 = vsyncpa [#allocation3], 0
    %10 = vsyncpa [#allocation6], 0
    %11 = vsyncpa [#allocation4], 0
    // Predicated region
    $region2: #{net_forward.1} parent=1 // pred_check
      _
    $region3: #{net_forward.1} parent=1 // pred_check_branch
      %13 = sbr.rel (0) target = $region5
    $region4: #{net_forward.1} parent=1 // pred_region
      _
    $region5: #{net_forward.1} parent=1 // pred_fallthru
      _
    // Predicated region
    $region6: #{net_forward.1} parent=1 // pred_check
      _
    $region7: #{net_forward.1} parent=1 // pred_check_branch
      %15 = sbr.rel (0) target = $region9
    $region8: #{net_forward.1} parent=1 // pred_region
      %s17 = ssub.s32 196608, 196608
      %18 = vsyncadd [#allocation3], %s17
      %s19 = sshll.u32 [#allocation2], 4
      %s20 = int_to_ptr.vmem [resolvable:$true] %s19
      %25 = dma.hbm_to_vmem [thread:$0]  %s1, 196608, %s20, [#allocation3], 512, 512, 32
    $region9: #{net_forward.1} parent=1 // pred_fallthru
      _
    // Predicated region
    $region10: #{net_forward.1} parent=1 // pred_check
      _
    $region11: #{net_forward.1} parent=1 // pred_check_branch
      %27 = sbr.rel (0) target = $region13
    $region12: #{net_forward.1} parent=1 // pred_region
      %s29 = ssub.s32 2048, 2048
      %30 = vsyncadd [#allocation6], %s29
      %s31 = sshll.u32 [#allocation5], 4
      %s32 = int_to_ptr.vmem [resolvable:$true] %s31
      %37 = dma.hbm_to_vmem [thread:$0]  %s2, 2048, %s32, [#allocation6], 64, 64, 4
    $region13: #{net_forward.1} parent=1 // pred_fallthru
      _
    // Predicated region
    $region14: #{net_forward.1} parent=1 // pred_check
      _
    $region15: #{net_forward.1} parent=1 // pred_check_branch
      %39 = sbr.rel (0) target = $region17
    $region16: #{net_forward.1} parent=1 // pred_region
      %s41 = ssub.s32 1280, 1280
      %42 = vsyncadd [#allocation6], %s41
      %s43 = sshll.u32 [#allocation7], 4
      %s44 = int_to_ptr.vmem [resolvable:$true] %s43
      %49 = dma.hbm_to_vmem [thread:$0]  %s3, 1280, %s44, [#allocation6], 256, 256, 16
    $region17: #{net_forward.1} parent=1 // pred_fallthru
      _
    // Predicated region
    $region18: #{net_forward.1} parent=1 // pred_check
      _
    $region19: #{net_forward.1} parent=1 // pred_check_branch
      %51 = sbr.rel (0) target = $region21
    $region20: #{net_forward.1} parent=1 // pred_region
      %52 = dma.done [#allocation3], 196608
    $region21: #{net_forward.1} parent=1 // pred_fallthru
      _
    // Predicated region
    $region22: #{net_forward.1} parent=1 // pred_check
      _
    $region23: #{net_forward.1} parent=1 // pred_check_branch
      %54 = sbr.rel (0) target = $region25
    $region24: #{net_forward.1} parent=1 // pred_region
      %55 = dma.done [#allocation6], 2048
    $region25: #{net_forward.1} parent=1 // pred_fallthru
      _
    // Predicated region
    $region26: #{net_forward.1} parent=1 // pred_check
      _
    $region27: #{net_forward.1} parent=1 // pred_check_branch
      %57 = sbr.rel (0) target = $region29
    $region28: #{net_forward.1} parent=1 // pred_region
      %58 = dma.done [#allocation6], 1280
    $region29: #{net_forward.1} parent=1 // pred_fallthru
      _
    %v60 = vld [vmem:[%s0] sm:$0xff]
    %v61 = vld [vmem:[%s0 + $0x8] sm:$0xff]
    %v62 = vld [vmem:[%s0 + $0x10] sm:$0xff]
    %v63 = vld [vmem:[%s0 + $0x18] sm:$0xff]
    %v64 = vld [vmem:[%s0 + $0x20] sm:$0xff]
    %v65 = vld [vmem:[%s0 + $0x28] sm:$0xff]
    %v72 = vcombine.high %v60, %v60
    %v74 = vunpack.c.l.s4 1983009808
    %v75 = vunpack.c.0.s8 %v74
    %v76 = vlaneseq
    %v77 = vshrl.u32 %v76, 7
    %v78 = vsub.s32 %v75, %v77
    %v79 = vrot.slane %v60, %v78
    %v81 = vunpack.c.l.s4 1983009808
    %v82 = vunpack.c.0.s8 %v81
    %v83 = vlaneseq
    %v84 = vshrl.u32 %v83, 7
    %v85 = vsub.s32 %v82, %v84
    %v86 = vrot.slane %v72, %v85
    %v87 = vcombine.high %v79, %v79
    %v88 = vcombine.high %v86, %v86
    %v89 = vcombine.high %v61, %v61
    %v91 = vunpack.c.l.s4 1983009808
    %v92 = vunpack.c.0.s8 %v91
    %v93 = vlaneseq
    %v94 = vshrl.u32 %v93, 7
    %v95 = vsub.s32 %v92, %v94
    %v96 = vrot.slane %v61, %v95
    %v98 = vunpack.c.l.s4 1983009808
    %v99 = vunpack.c.0.s8 %v98
    %v100 = vlaneseq
    %v101 = vshrl.u32 %v100, 7
    %v102 = vsub.s32 %v99, %v101
    %v103 = vrot.slane %v89, %v102
    %v104 = vcombine.high %v96, %v96
    %v105 = vcombine.high %v103, %v103
    %v106 = vcombine.high %v62, %v62
    %v108 = vunpack.c.l.s4 1983009808
    %v109 = vunpack.c.0.s8 %v108
    %v110 = vlaneseq
    %v111 = vshrl.u32 %v110, 7
    %v112 = vsub.s32 %v109, %v111
    %v113 = vrot.slane %v62, %v112
    %v115 = vunpack.c.l.s4 1983009808
    %v116 = vunpack.c.0.s8 %v115
    %v117 = vlaneseq
    %v118 = vshrl.u32 %v117, 7
    %v119 = vsub.s32 %v116, %v118
    %v120 = vrot.slane %v106, %v119
    %v121 = vcombine.high %v113, %v113
    %v122 = vcombine.high %v120, %v120
    %v123 = vcombine.high %v63, %v63
    %v125 = vunpack.c.l.s4 1983009808
    %v126 = vunpack.c.0.s8 %v125
    %v127 = vlaneseq
    %v128 = vshrl.u32 %v127, 7
    %v129 = vsub.s32 %v126, %v128
    %v130 = vrot.slane %v63, %v129
    %v132 = vunpack.c.l.s4 1983009808
    %v133 = vunpack.c.0.s8 %v132
    %v134 = vlaneseq
    %v135 = vshrl.u32 %v134, 7
    %v136 = vsub.s32 %v133, %v135
    %v137 = vrot.slane %v123, %v136
    %v138 = vcombine.high %v130, %v130
    %v139 = vcombine.high %v137, %v137
    %v140 = vcombine.high %v64, %v64
    %v142 = vunpack.c.l.s4 1983009808
    %v143 = vunpack.c.0.s8 %v142
    %v144 = vlaneseq
    %v145 = vshrl.u32 %v144, 7
    %v146 = vsub.s32 %v143, %v145
    %v147 = vrot.slane %v64, %v146
    %v149 = vunpack.c.l.s4 1983009808
    %v150 = vunpack.c.0.s8 %v149
    %v151 = vlaneseq
    %v152 = vshrl.u32 %v151, 7
    %v153 = vsub.s32 %v150, %v152
    %v154 = vrot.slane %v140, %v153
    %v155 = vcombine.high %v147, %v147
    %v156 = vcombine.high %v154, %v154
    %v157 = vcombine.high %v65, %v65
    %v159 = vunpack.c.l.s4 1983009808
    %v160 = vunpack.c.0.s8 %v159
    %v161 = vlaneseq
    %v162 = vshrl.u32 %v161, 7
    %v163 = vsub.s32 %v160, %v162
    %v164 = vrot.slane %v65, %v163
    %v166 = vunpack.c.l.s4 1983009808
    %v167 = vunpack.c.0.s8 %v166
    %v168 = vlaneseq
    %v169 = vshrl.u32 %v168, 7
    %v170 = vsub.s32 %v167, %v169
    %v171 = vrot.slane %v157, %v170
    %v172 = vcombine.high %v164, %v164
    %v173 = vcombine.high %v171, %v171
    %v198 = vpack.c.bf16 %v79, %v79
    %v199 = vpack.c.bf16 %v87, %v87
    %v200 = vpack.c.bf16 %v86, %v86
    %v201 = vpack.c.bf16 %v88, %v88
    %v202 = vpack.c.bf16 %v96, %v96
    %v203 = vpack.c.bf16 %v104, %v104
    %v204 = vpack.c.bf16 %v103, %v103
    %v205 = vpack.c.bf16 %v105, %v105
    %v206 = vpack.c.bf16 %v113, %v113
    %v207 = vpack.c.bf16 %v121, %v121
    %v208 = vpack.c.bf16 %v120, %v120
    %v209 = vpack.c.bf16 %v122, %v122
    %v210 = vpack.c.bf16 %v130, %v130
    %v211 = vpack.c.bf16 %v138, %v138
    %v212 = vpack.c.bf16 %v137, %v137
    %v213 = vpack.c.bf16 %v139, %v139
    %v214 = vpack.c.bf16 %v147, %v147
    %v215 = vpack.c.bf16 %v155, %v155
    %v216 = vpack.c.bf16 %v154, %v154
    %v217 = vpack.c.bf16 %v156, %v156
    %v218 = vpack.c.bf16 %v164, %v164
    %v219 = vpack.c.bf16 %v172, %v172
    %v220 = vpack.c.bf16 %v171, %v171
    %v221 = vpack.c.bf16 %v173, %v173
    %v222 = vld [vmem:[#allocation2] sm:$0xff]
    %v223 = vld [vmem:[#allocation2 + $0x8] sm:$0xff]
    %v224 = vld [vmem:[#allocation2 + $0x10] sm:$0xff]
    %v225 = vld [vmem:[#allocation2 + $0x18] sm:$0xff]
    %v226 = vld [vmem:[#allocation2 + $0x20] sm:$0xff]
    %v227 = vld [vmem:[#allocation2 + $0x28] sm:$0xff]
    %v228 = vld [vmem:[#allocation2 + $0x30] sm:$0xff]
    %v229 = vld [vmem:[#allocation2 + $0x38] sm:$0xff]
    %v230 = vld [vmem:[#allocation2 + $0x40] sm:$0xff]
    %v231 = vld [vmem:[#allocation2 + $0x48] sm:$0xff]
    %v232 = vld [vmem:[#allocation2 + $0x50] sm:$0xff]
    %v233 = vld [vmem:[#allocation2 + $0x58] sm:$0xff]
    %v234 = vld [vmem:[#allocation2 + $0x60] sm:$0xff]
    %v235 = vld [vmem:[#allocation2 + $0x68] sm:$0xff]
    %v236 = vld [vmem:[#allocation2 + $0x70] sm:$0xff]
    %v237 = vld [vmem:[#allocation2 + $0x78] sm:$0xff]
    %v238 = vld [vmem:[#allocation2 + $0x80] sm:$0xff]
    %v239 = vld [vmem:[#allocation2 + $0x88] sm:$0xff]
    %v240 = vld [vmem:[#allocation2 + $0x90] sm:$0xff]
    %v241 = vld [vmem:[#allocation2 + $0x98] sm:$0xff]
    %v242 = vld [vmem:[#allocation2 + $0xa0] sm:$0xff]
    %v243 = vld [vmem:[#allocation2 + $0xa8] sm:$0xff]
    %v244 = vld [vmem:[#allocation2 + $0xb0] sm:$0xff]
    %v245 = vld [vmem:[#allocation2 + $0xb8] sm:$0xff]
    %v246 = vld [vmem:[#allocation2 + $0xc0] sm:$0xff]
    %v247 = vld [vmem:[#allocation2 + $0xc8] sm:$0xff]
    %v248 = vld [vmem:[#allocation2 + $0xd0] sm:$0xff]
    %v249 = vld [vmem:[#allocation2 + $0xd8] sm:$0xff]
    %v250 = vld [vmem:[#allocation2 + $0xe0] sm:$0xff]
    %v251 = vld [vmem:[#allocation2 + $0xe8] sm:$0xff]
    %v252 = vld [vmem:[#allocation2 + $0xf0] sm:$0xff]
    %v253 = vld [vmem:[#allocation2 + $0xf8] sm:$0xff]
    %v254 = vld [vmem:[#allocation2 + $0x100] sm:$0xff]
    %v255 = vld [vmem:[#allocation2 + $0x108] sm:$0xff]
    %v256 = vld [vmem:[#allocation2 + $0x110] sm:$0xff]
    %v257 = vld [vmem:[#allocation2 + $0x118] sm:$0xff]
    %v258 = vld [vmem:[#allocation2 + $0x120] sm:$0xff]
    %v259 = vld [vmem:[#allocation2 + $0x128] sm:$0xff]
    %v260 = vld [vmem:[#allocation2 + $0x130] sm:$0xff]
    %v261 = vld [vmem:[#allocation2 + $0x138] sm:$0xff]
    %v262 = vld [vmem:[#allocation2 + $0x140] sm:$0xff]
    %v263 = vld [vmem:[#allocation2 + $0x148] sm:$0xff]
    %v264 = vld [vmem:[#allocation2 + $0x150] sm:$0xff]
    %v265 = vld [vmem:[#allocation2 + $0x158] sm:$0xff]
    %v266 = vld [vmem:[#allocation2 + $0x160] sm:$0xff]
    %v267 = vld [vmem:[#allocation2 + $0x168] sm:$0xff]
    %v268 = vld [vmem:[#allocation2 + $0x170] sm:$0xff]
    %v269 = vld [vmem:[#allocation2 + $0x178] sm:$0xff]
    %v270 = vld [vmem:[#allocation2 + $0x180] sm:$0xff]
    %v271 = vld [vmem:[#allocation2 + $0x188] sm:$0xff]
    %v272 = vld [vmem:[#allocation2 + $0x190] sm:$0xff]
    %v273 = vld [vmem:[#allocation2 + $0x198] sm:$0xff]
    %v274 = vld [vmem:[#allocation2 + $0x1a0] sm:$0xff]
    %v275 = vld [vmem:[#allocation2 + $0x1a8] sm:$0xff]
    %v276 = vld [vmem:[#allocation2 + $0x1b0] sm:$0xff]
    %v277 = vld [vmem:[#allocation2 + $0x1b8] sm:$0xff]
    %v278 = vld [vmem:[#allocation2 + $0x1c0] sm:$0xff]
    %v279 = vld [vmem:[#allocation2 + $0x1c8] sm:$0xff]
    %v280 = vld [vmem:[#allocation2 + $0x1d0] sm:$0xff]
    %v281 = vld [vmem:[#allocation2 + $0x1d8] sm:$0xff]
    %v282 = vld [vmem:[#allocation2 + $0x1e0] sm:$0xff]
    %v283 = vld [vmem:[#allocation2 + $0x1e8] sm:$0xff]
    %v284 = vld [vmem:[#allocation2 + $0x1f0] sm:$0xff]
    %v285 = vld [vmem:[#allocation2 + $0x1f8] sm:$0xff]
    %v286 = vld [vmem:[#allocation2 + $0x200] sm:$0xff]
    %v287 = vld [vmem:[#allocation2 + $0x208] sm:$0xff]
    %v288 = vld [vmem:[#allocation2 + $0x210] sm:$0xff]
    %v289 = vld [vmem:[#allocation2 + $0x218] sm:$0xff]
    %v290 = vld [vmem:[#allocation2 + $0x220] sm:$0xff]
    %v291 = vld [vmem:[#allocation2 + $0x228] sm:$0xff]
    %v292 = vld [vmem:[#allocation2 + $0x230] sm:$0xff]
    %v293 = vld [vmem:[#allocation2 + $0x238] sm:$0xff]
    %v294 = vld [vmem:[#allocation2 + $0x240] sm:$0xff]
    %v295 = vld [vmem:[#allocation2 + $0x248] sm:$0xff]
    %v296 = vld [vmem:[#allocation2 + $0x250] sm:$0xff]
    %v297 = vld [vmem:[#allocation2 + $0x258] sm:$0xff]
    %v298 = vld [vmem:[#allocation2 + $0x260] sm:$0xff]
    %v299 = vld [vmem:[#allocation2 + $0x268] sm:$0xff]
    %v300 = vld [vmem:[#allocation2 + $0x270] sm:$0xff]
    %v301 = vld [vmem:[#allocation2 + $0x278] sm:$0xff]
    %v302 = vld [vmem:[#allocation2 + $0x280] sm:$0xff]
    %v303 = vld [vmem:[#allocation2 + $0x288] sm:$0xff]
    %v304 = vld [vmem:[#allocation2 + $0x290] sm:$0xff]
    %v305 = vld [vmem:[#allocation2 + $0x298] sm:$0xff]
    %v306 = vld [vmem:[#allocation2 + $0x2a0] sm:$0xff]
    %v307 = vld [vmem:[#allocation2 + $0x2a8] sm:$0xff]
    %v308 = vld [vmem:[#allocation2 + $0x2b0] sm:$0xff]
    %v309 = vld [vmem:[#allocation2 + $0x2b8] sm:$0xff]
    %v310 = vld [vmem:[#allocation2 + $0x2c0] sm:$0xff]
    %v311 = vld [vmem:[#allocation2 + $0x2c8] sm:$0xff]
    %v312 = vld [vmem:[#allocation2 + $0x2d0] sm:$0xff]
    %v313 = vld [vmem:[#allocation2 + $0x2d8] sm:$0xff]
    %v314 = vld [vmem:[#allocation2 + $0x2e0] sm:$0xff]
    %v315 = vld [vmem:[#allocation2 + $0x2e8] sm:$0xff]
    %v316 = vld [vmem:[#allocation2 + $0x2f0] sm:$0xff]
    %v317 = vld [vmem:[#allocation2 + $0x2f8] sm:$0xff]
    %v318 = vld [vmem:[#allocation2 + $0x300] sm:$0xff]
    %v319 = vld [vmem:[#allocation2 + $0x308] sm:$0xff]
    %v320 = vld [vmem:[#allocation2 + $0x310] sm:$0xff]
    %v321 = vld [vmem:[#allocation2 + $0x318] sm:$0xff]
    %v322 = vld [vmem:[#allocation2 + $0x320] sm:$0xff]
    %v323 = vld [vmem:[#allocation2 + $0x328] sm:$0xff]
    %v324 = vld [vmem:[#allocation2 + $0x330] sm:$0xff]
    %v325 = vld [vmem:[#allocation2 + $0x338] sm:$0xff]
    %v326 = vld [vmem:[#allocation2 + $0x340] sm:$0xff]
    %v327 = vld [vmem:[#allocation2 + $0x348] sm:$0xff]
    %v328 = vld [vmem:[#allocation2 + $0x350] sm:$0xff]
    %v329 = vld [vmem:[#allocation2 + $0x358] sm:$0xff]
    %v330 = vld [vmem:[#allocation2 + $0x360] sm:$0xff]
    %v331 = vld [vmem:[#allocation2 + $0x368] sm:$0xff]
    %v332 = vld [vmem:[#allocation2 + $0x370] sm:$0xff]
    %v333 = vld [vmem:[#allocation2 + $0x378] sm:$0xff]
    %v334 = vld [vmem:[#allocation2 + $0x380] sm:$0xff]
    %v335 = vld [vmem:[#allocation2 + $0x388] sm:$0xff]
    %v336 = vld [vmem:[#allocation2 + $0x390] sm:$0xff]
    %v337 = vld [vmem:[#allocation2 + $0x398] sm:$0xff]
    %v338 = vld [vmem:[#allocation2 + $0x3a0] sm:$0xff]
    %v339 = vld [vmem:[#allocation2 + $0x3a8] sm:$0xff]
    %v340 = vld [vmem:[#allocation2 + $0x3b0] sm:$0xff]
    %v341 = vld [vmem:[#allocation2 + $0x3b8] sm:$0xff]
    %v342 = vld [vmem:[#allocation2 + $0x3c0] sm:$0xff]
    %v343 = vld [vmem:[#allocation2 + $0x3c8] sm:$0xff]
    %v344 = vld [vmem:[#allocation2 + $0x3d0] sm:$0xff]
    %v345 = vld [vmem:[#allocation2 + $0x3d8] sm:$0xff]
    %v346 = vld [vmem:[#allocation2 + $0x3e0] sm:$0xff]
    %v347 = vld [vmem:[#allocation2 + $0x3e8] sm:$0xff]
    %v348 = vld [vmem:[#allocation2 + $0x3f0] sm:$0xff]
    %v349 = vld [vmem:[#allocation2 + $0x3f8] sm:$0xff]
    %v350 = vld [vmem:[#allocation2 + $0x400] sm:$0xff]
    %v351 = vld [vmem:[#allocation2 + $0x408] sm:$0xff]
    %v352 = vld [vmem:[#allocation2 + $0x410] sm:$0xff]
    %v353 = vld [vmem:[#allocation2 + $0x418] sm:$0xff]
    %v354 = vld [vmem:[#allocation2 + $0x420] sm:$0xff]
    %v355 = vld [vmem:[#allocation2 + $0x428] sm:$0xff]
    %v356 = vld [vmem:[#allocation2 + $0x430] sm:$0xff]
    %v357 = vld [vmem:[#allocation2 + $0x438] sm:$0xff]
    %v358 = vld [vmem:[#allocation2 + $0x440] sm:$0xff]
    %v359 = vld [vmem:[#allocation2 + $0x448] sm:$0xff]
    %v360 = vld [vmem:[#allocation2 + $0x450] sm:$0xff]
    %v361 = vld [vmem:[#allocation2 + $0x458] sm:$0xff]
    %v362 = vld [vmem:[#allocation2 + $0x460] sm:$0xff]
    %v363 = vld [vmem:[#allocation2 + $0x468] sm:$0xff]
    %v364 = vld [vmem:[#allocation2 + $0x470] sm:$0xff]
    %v365 = vld [vmem:[#allocation2 + $0x478] sm:$0xff]
    %v366 = vld [vmem:[#allocation2 + $0x480] sm:$0xff]
    %v367 = vld [vmem:[#allocation2 + $0x488] sm:$0xff]
    %v368 = vld [vmem:[#allocation2 + $0x490] sm:$0xff]
    %v369 = vld [vmem:[#allocation2 + $0x498] sm:$0xff]
    %v370 = vld [vmem:[#allocation2 + $0x4a0] sm:$0xff]
    %v371 = vld [vmem:[#allocation2 + $0x4a8] sm:$0xff]
    %v372 = vld [vmem:[#allocation2 + $0x4b0] sm:$0xff]
    %v373 = vld [vmem:[#allocation2 + $0x4b8] sm:$0xff]
    %v374 = vld [vmem:[#allocation2 + $0x4c0] sm:$0xff]
    %v375 = vld [vmem:[#allocation2 + $0x4c8] sm:$0xff]
    %v376 = vld [vmem:[#allocation2 + $0x4d0] sm:$0xff]
    %v377 = vld [vmem:[#allocation2 + $0x4d8] sm:$0xff]
    %v378 = vld [vmem:[#allocation2 + $0x4e0] sm:$0xff]
    %v379 = vld [vmem:[#allocation2 + $0x4e8] sm:$0xff]
    %v380 = vld [vmem:[#allocation2 + $0x4f0] sm:$0xff]
    %v381 = vld [vmem:[#allocation2 + $0x4f8] sm:$0xff]
    %v382 = vld [vmem:[#allocation2 + $0x500] sm:$0xff]
    %v383 = vld [vmem:[#allocation2 + $0x508] sm:$0xff]
    %v384 = vld [vmem:[#allocation2 + $0x510] sm:$0xff]
    %v385 = vld [vmem:[#allocation2 + $0x518] sm:$0xff]
    %v386 = vld [vmem:[#allocation2 + $0x520] sm:$0xff]
    %v387 = vld [vmem:[#allocation2 + $0x528] sm:$0xff]
    %v388 = vld [vmem:[#allocation2 + $0x530] sm:$0xff]
    %v389 = vld [vmem:[#allocation2 + $0x538] sm:$0xff]
    %v390 = vld [vmem:[#allocation2 + $0x540] sm:$0xff]
    %v391 = vld [vmem:[#allocation2 + $0x548] sm:$0xff]
    %v392 = vld [vmem:[#allocation2 + $0x550] sm:$0xff]
    %v393 = vld [vmem:[#allocation2 + $0x558] sm:$0xff]
    %v394 = vld [vmem:[#allocation2 + $0x560] sm:$0xff]
    %v395 = vld [vmem:[#allocation2 + $0x568] sm:$0xff]
    %v396 = vld [vmem:[#allocation2 + $0x570] sm:$0xff]
    %v397 = vld [vmem:[#allocation2 + $0x578] sm:$0xff]
    %v398 = vld [vmem:[#allocation2 + $0x580] sm:$0xff]
    %v399 = vld [vmem:[#allocation2 + $0x588] sm:$0xff]
    %v400 = vld [vmem:[#allocation2 + $0x590] sm:$0xff]
    %v401 = vld [vmem:[#allocation2 + $0x598] sm:$0xff]
    %v402 = vld [vmem:[#allocation2 + $0x5a0] sm:$0xff]
    %v403 = vld [vmem:[#allocation2 + $0x5a8] sm:$0xff]
    %v404 = vld [vmem:[#allocation2 + $0x5b0] sm:$0xff]
    %v405 = vld [vmem:[#allocation2 + $0x5b8] sm:$0xff]
    %v406 = vld [vmem:[#allocation2 + $0x5c0] sm:$0xff]
    %v407 = vld [vmem:[#allocation2 + $0x5c8] sm:$0xff]
    %v408 = vld [vmem:[#allocation2 + $0x5d0] sm:$0xff]
    %v409 = vld [vmem:[#allocation2 + $0x5d8] sm:$0xff]
    %v410 = vld [vmem:[#allocation2 + $0x5e0] sm:$0xff]
    %v411 = vld [vmem:[#allocation2 + $0x5e8] sm:$0xff]
    %v412 = vld [vmem:[#allocation2 + $0x5f0] sm:$0xff]
    %v413 = vld [vmem:[#allocation2 + $0x5f8] sm:$0xff]
    %v414 = vld [vmem:[#allocation2 + $0x600] sm:$0xff]
    %v415 = vld [vmem:[#allocation2 + $0x608] sm:$0xff]
    %v416 = vld [vmem:[#allocation2 + $0x610] sm:$0xff]
    %v417 = vld [vmem:[#allocation2 + $0x618] sm:$0xff]
    %v418 = vld [vmem:[#allocation2 + $0x620] sm:$0xff]
    %v419 = vld [vmem:[#allocation2 + $0x628] sm:$0xff]
    %v420 = vld [vmem:[#allocation2 + $0x630] sm:$0xff]
    %v421 = vld [vmem:[#allocation2 + $0x638] sm:$0xff]
    %v422 = vld [vmem:[#allocation2 + $0x640] sm:$0xff]
    %v423 = vld [vmem:[#allocation2 + $0x648] sm:$0xff]
    %v424 = vld [vmem:[#allocation2 + $0x650] sm:$0xff]
    %v425 = vld [vmem:[#allocation2 + $0x658] sm:$0xff]
    %v426 = vld [vmem:[#allocation2 + $0x660] sm:$0xff]
    %v427 = vld [vmem:[#allocation2 + $0x668] sm:$0xff]
    %v428 = vld [vmem:[#allocation2 + $0x670] sm:$0xff]
    %v429 = vld [vmem:[#allocation2 + $0x678] sm:$0xff]
    %v430 = vld [vmem:[#allocation2 + $0x680] sm:$0xff]
    %v431 = vld [vmem:[#allocation2 + $0x688] sm:$0xff]
    %v432 = vld [vmem:[#allocation2 + $0x690] sm:$0xff]
    %v433 = vld [vmem:[#allocation2 + $0x698] sm:$0xff]
    %v434 = vld [vmem:[#allocation2 + $0x6a0] sm:$0xff]
    %v435 = vld [vmem:[#allocation2 + $0x6a8] sm:$0xff]
    %v436 = vld [vmem:[#allocation2 + $0x6b0] sm:$0xff]
    %v437 = vld [vmem:[#allocation2 + $0x6b8] sm:$0xff]
    %v438 = vld [vmem:[#allocation2 + $0x6c0] sm:$0xff]
    %v439 = vld [vmem:[#allocation2 + $0x6c8] sm:$0xff]
    %v440 = vld [vmem:[#allocation2 + $0x6d0] sm:$0xff]
    %v441 = vld [vmem:[#allocation2 + $0x6d8] sm:$0xff]
    %v442 = vld [vmem:[#allocation2 + $0x6e0] sm:$0xff]
    %v443 = vld [vmem:[#allocation2 + $0x6e8] sm:$0xff]
    %v444 = vld [vmem:[#allocation2 + $0x6f0] sm:$0xff]
    %v445 = vld [vmem:[#allocation2 + $0x6f8] sm:$0xff]
    %v446 = vld [vmem:[#allocation2 + $0x700] sm:$0xff]
    %v447 = vld [vmem:[#allocation2 + $0x708] sm:$0xff]
    %v448 = vld [vmem:[#allocation2 + $0x710] sm:$0xff]
    %v449 = vld [vmem:[#allocation2 + $0x718] sm:$0xff]
    %v450 = vld [vmem:[#allocation2 + $0x720] sm:$0xff]
    %v451 = vld [vmem:[#allocation2 + $0x728] sm:$0xff]
    %v452 = vld [vmem:[#allocation2 + $0x730] sm:$0xff]
    %v453 = vld [vmem:[#allocation2 + $0x738] sm:$0xff]
    %v454 = vld [vmem:[#allocation2 + $0x740] sm:$0xff]
    %v455 = vld [vmem:[#allocation2 + $0x748] sm:$0xff]
    %v456 = vld [vmem:[#allocation2 + $0x750] sm:$0xff]
    %v457 = vld [vmem:[#allocation2 + $0x758] sm:$0xff]
    %v458 = vld [vmem:[#allocation2 + $0x760] sm:$0xff]
    %v459 = vld [vmem:[#allocation2 + $0x768] sm:$0xff]
    %v460 = vld [vmem:[#allocation2 + $0x770] sm:$0xff]
    %v461 = vld [vmem:[#allocation2 + $0x778] sm:$0xff]
    %v462 = vld [vmem:[#allocation2 + $0x780] sm:$0xff]
    %v463 = vld [vmem:[#allocation2 + $0x788] sm:$0xff]
    %v464 = vld [vmem:[#allocation2 + $0x790] sm:$0xff]
    %v465 = vld [vmem:[#allocation2 + $0x798] sm:$0xff]
    %v466 = vld [vmem:[#allocation2 + $0x7a0] sm:$0xff]
    %v467 = vld [vmem:[#allocation2 + $0x7a8] sm:$0xff]
    %v468 = vld [vmem:[#allocation2 + $0x7b0] sm:$0xff]
    %v469 = vld [vmem:[#allocation2 + $0x7b8] sm:$0xff]
    %v470 = vld [vmem:[#allocation2 + $0x7c0] sm:$0xff]
    %v471 = vld [vmem:[#allocation2 + $0x7c8] sm:$0xff]
    %v472 = vld [vmem:[#allocation2 + $0x7d0] sm:$0xff]
    %v473 = vld [vmem:[#allocation2 + $0x7d8] sm:$0xff]
    %v474 = vld [vmem:[#allocation2 + $0x7e0] sm:$0xff]
    %v475 = vld [vmem:[#allocation2 + $0x7e8] sm:$0xff]
    %v476 = vld [vmem:[#allocation2 + $0x7f0] sm:$0xff]
    %v477 = vld [vmem:[#allocation2 + $0x7f8] sm:$0xff]
    %v478 = vld [vmem:[#allocation2 + $0x800] sm:$0xff]
    %v479 = vld [vmem:[#allocation2 + $0x808] sm:$0xff]
    %v480 = vld [vmem:[#allocation2 + $0x810] sm:$0xff]
    %v481 = vld [vmem:[#allocation2 + $0x818] sm:$0xff]
    %v482 = vld [vmem:[#allocation2 + $0x820] sm:$0xff]
    %v483 = vld [vmem:[#allocation2 + $0x828] sm:$0xff]
    %v484 = vld [vmem:[#allocation2 + $0x830] sm:$0xff]
    %v485 = vld [vmem:[#allocation2 + $0x838] sm:$0xff]
    %v486 = vld [vmem:[#allocation2 + $0x840] sm:$0xff]
    %v487 = vld [vmem:[#allocation2 + $0x848] sm:$0xff]
    %v488 = vld [vmem:[#allocation2 + $0x850] sm:$0xff]
    %v489 = vld [vmem:[#allocation2 + $0x858] sm:$0xff]
    %v490 = vld [vmem:[#allocation2 + $0x860] sm:$0xff]
    %v491 = vld [vmem:[#allocation2 + $0x868] sm:$0xff]
    %v492 = vld [vmem:[#allocation2 + $0x870] sm:$0xff]
    %v493 = vld [vmem:[#allocation2 + $0x878] sm:$0xff]
    %v494 = vld [vmem:[#allocation2 + $0x880] sm:$0xff]
    %v495 = vld [vmem:[#allocation2 + $0x888] sm:$0xff]
    %v496 = vld [vmem:[#allocation2 + $0x890] sm:$0xff]
    %v497 = vld [vmem:[#allocation2 + $0x898] sm:$0xff]
    %v498 = vld [vmem:[#allocation2 + $0x8a0] sm:$0xff]
    %v499 = vld [vmem:[#allocation2 + $0x8a8] sm:$0xff]
    %v500 = vld [vmem:[#allocation2 + $0x8b0] sm:$0xff]
    %v501 = vld [vmem:[#allocation2 + $0x8b8] sm:$0xff]
    %v502 = vld [vmem:[#allocation2 + $0x8c0] sm:$0xff]
    %v503 = vld [vmem:[#allocation2 + $0x8c8] sm:$0xff]
    %v504 = vld [vmem:[#allocation2 + $0x8d0] sm:$0xff]
    %v505 = vld [vmem:[#allocation2 + $0x8d8] sm:$0xff]
    %v506 = vld [vmem:[#allocation2 + $0x8e0] sm:$0xff]
    %v507 = vld [vmem:[#allocation2 + $0x8e8] sm:$0xff]
    %v508 = vld [vmem:[#allocation2 + $0x8f0] sm:$0xff]
    %v509 = vld [vmem:[#allocation2 + $0x8f8] sm:$0xff]
    %v510 = vld [vmem:[#allocation2 + $0x900] sm:$0xff]
    %v511 = vld [vmem:[#allocation2 + $0x908] sm:$0xff]
    %v512 = vld [vmem:[#allocation2 + $0x910] sm:$0xff]
    %v513 = vld [vmem:[#allocation2 + $0x918] sm:$0xff]
    %v514 = vld [vmem:[#allocation2 + $0x920] sm:$0xff]
    %v515 = vld [vmem:[#allocation2 + $0x928] sm:$0xff]
    %v516 = vld [vmem:[#allocation2 + $0x930] sm:$0xff]
    %v517 = vld [vmem:[#allocation2 + $0x938] sm:$0xff]
    %v518 = vld [vmem:[#allocation2 + $0x940] sm:$0xff]
    %v519 = vld [vmem:[#allocation2 + $0x948] sm:$0xff]
    %v520 = vld [vmem:[#allocation2 + $0x950] sm:$0xff]
    %v521 = vld [vmem:[#allocation2 + $0x958] sm:$0xff]
    %v522 = vld [vmem:[#allocation2 + $0x960] sm:$0xff]
    %v523 = vld [vmem:[#allocation2 + $0x968] sm:$0xff]
    %v524 = vld [vmem:[#allocation2 + $0x970] sm:$0xff]
    %v525 = vld [vmem:[#allocation2 + $0x978] sm:$0xff]
    %v526 = vld [vmem:[#allocation2 + $0x980] sm:$0xff]
    %v527 = vld [vmem:[#allocation2 + $0x988] sm:$0xff]
    %v528 = vld [vmem:[#allocation2 + $0x990] sm:$0xff]
    %v529 = vld [vmem:[#allocation2 + $0x998] sm:$0xff]
    %v530 = vld [vmem:[#allocation2 + $0x9a0] sm:$0xff]
    %v531 = vld [vmem:[#allocation2 + $0x9a8] sm:$0xff]
    %v532 = vld [vmem:[#allocation2 + $0x9b0] sm:$0xff]
    %v533 = vld [vmem:[#allocation2 + $0x9b8] sm:$0xff]
    %v534 = vld [vmem:[#allocation2 + $0x9c0] sm:$0xff]
    %v535 = vld [vmem:[#allocation2 + $0x9c8] sm:$0xff]
    %v536 = vld [vmem:[#allocation2 + $0x9d0] sm:$0xff]
    %v537 = vld [vmem:[#allocation2 + $0x9d8] sm:$0xff]
    %v538 = vld [vmem:[#allocation2 + $0x9e0] sm:$0xff]
    %v539 = vld [vmem:[#allocation2 + $0x9e8] sm:$0xff]
    %v540 = vld [vmem:[#allocation2 + $0x9f0] sm:$0xff]
    %v541 = vld [vmem:[#allocation2 + $0x9f8] sm:$0xff]
    %v542 = vld [vmem:[#allocation2 + $0xa00] sm:$0xff]
    %v543 = vld [vmem:[#allocation2 + $0xa08] sm:$0xff]
    %v544 = vld [vmem:[#allocation2 + $0xa10] sm:$0xff]
    %v545 = vld [vmem:[#allocation2 + $0xa18] sm:$0xff]
    %v546 = vld [vmem:[#allocation2 + $0xa20] sm:$0xff]
    %v547 = vld [vmem:[#allocation2 + $0xa28] sm:$0xff]
    %v548 = vld [vmem:[#allocation2 + $0xa30] sm:$0xff]
    %v549 = vld [vmem:[#allocation2 + $0xa38] sm:$0xff]
    %v550 = vld [vmem:[#allocation2 + $0xa40] sm:$0xff]
    %v551 = vld [vmem:[#allocation2 + $0xa48] sm:$0xff]
    %v552 = vld [vmem:[#allocation2 + $0xa50] sm:$0xff]
    %v553 = vld [vmem:[#allocation2 + $0xa58] sm:$0xff]
    %v554 = vld [vmem:[#allocation2 + $0xa60] sm:$0xff]
    %v555 = vld [vmem:[#allocation2 + $0xa68] sm:$0xff]
    %v556 = vld [vmem:[#allocation2 + $0xa70] sm:$0xff]
    %v557 = vld [vmem:[#allocation2 + $0xa78] sm:$0xff]
    %v558 = vld [vmem:[#allocation2 + $0xa80] sm:$0xff]
    %v559 = vld [vmem:[#allocation2 + $0xa88] sm:$0xff]
    %v560 = vld [vmem:[#allocation2 + $0xa90] sm:$0xff]
    %v561 = vld [vmem:[#allocation2 + $0xa98] sm:$0xff]
    %v562 = vld [vmem:[#allocation2 + $0xaa0] sm:$0xff]
    %v563 = vld [vmem:[#allocation2 + $0xaa8] sm:$0xff]
    %v564 = vld [vmem:[#allocation2 + $0xab0] sm:$0xff]
    %v565 = vld [vmem:[#allocation2 + $0xab8] sm:$0xff]
    %v566 = vld [vmem:[#allocation2 + $0xac0] sm:$0xff]
    %v567 = vld [vmem:[#allocation2 + $0xac8] sm:$0xff]
    %v568 = vld [vmem:[#allocation2 + $0xad0] sm:$0xff]
    %v569 = vld [vmem:[#allocation2 + $0xad8] sm:$0xff]
    %v570 = vld [vmem:[#allocation2 + $0xae0] sm:$0xff]
    %v571 = vld [vmem:[#allocation2 + $0xae8] sm:$0xff]
    %v572 = vld [vmem:[#allocation2 + $0xaf0] sm:$0xff]
    %v573 = vld [vmem:[#allocation2 + $0xaf8] sm:$0xff]
    %v574 = vld [vmem:[#allocation2 + $0xb00] sm:$0xff]
    %v575 = vld [vmem:[#allocation2 + $0xb08] sm:$0xff]
    %v576 = vld [vmem:[#allocation2 + $0xb10] sm:$0xff]
    %v577 = vld [vmem:[#allocation2 + $0xb18] sm:$0xff]
    %v578 = vld [vmem:[#allocation2 + $0xb20] sm:$0xff]
    %v579 = vld [vmem:[#allocation2 + $0xb28] sm:$0xff]
    %v580 = vld [vmem:[#allocation2 + $0xb30] sm:$0xff]
    %v581 = vld [vmem:[#allocation2 + $0xb38] sm:$0xff]
    %v582 = vld [vmem:[#allocation2 + $0xb40] sm:$0xff]
    %v583 = vld [vmem:[#allocation2 + $0xb48] sm:$0xff]
    %v584 = vld [vmem:[#allocation2 + $0xb50] sm:$0xff]
    %v585 = vld [vmem:[#allocation2 + $0xb58] sm:$0xff]
    %v586 = vld [vmem:[#allocation2 + $0xb60] sm:$0xff]
    %v587 = vld [vmem:[#allocation2 + $0xb68] sm:$0xff]
    %v588 = vld [vmem:[#allocation2 + $0xb70] sm:$0xff]
    %v589 = vld [vmem:[#allocation2 + $0xb78] sm:$0xff]
    %v590 = vld [vmem:[#allocation2 + $0xb80] sm:$0xff]
    %v591 = vld [vmem:[#allocation2 + $0xb88] sm:$0xff]
    %v592 = vld [vmem:[#allocation2 + $0xb90] sm:$0xff]
    %v593 = vld [vmem:[#allocation2 + $0xb98] sm:$0xff]
    %v594 = vld [vmem:[#allocation2 + $0xba0] sm:$0xff]
    %v595 = vld [vmem:[#allocation2 + $0xba8] sm:$0xff]
    %v596 = vld [vmem:[#allocation2 + $0xbb0] sm:$0xff]
    %v597 = vld [vmem:[#allocation2 + $0xbb8] sm:$0xff]
    %v598 = vld [vmem:[#allocation2 + $0xbc0] sm:$0xff]
    %v599 = vld [vmem:[#allocation2 + $0xbc8] sm:$0xff]
    %v600 = vld [vmem:[#allocation2 + $0xbd0] sm:$0xff]
    %v601 = vld [vmem:[#allocation2 + $0xbd8] sm:$0xff]
    %v602 = vld [vmem:[#allocation2 + $0xbe0] sm:$0xff]
    %v603 = vld [vmem:[#allocation2 + $0xbe8] sm:$0xff]
    %v604 = vld [vmem:[#allocation2 + $0xbf0] sm:$0xff]
    %v605 = vld [vmem:[#allocation2 + $0xbf8] sm:$0xff]
    %v606 = vld [vmem:[#allocation2 + $0xc00] sm:$0xff]
    %v607 = vld [vmem:[#allocation2 + $0xc08] sm:$0xff]
    %v608 = vld [vmem:[#allocation2 + $0xc10] sm:$0xff]
    %v609 = vld [vmem:[#allocation2 + $0xc18] sm:$0xff]
    %v610 = vld [vmem:[#allocation2 + $0xc20] sm:$0xff]
    %v611 = vld [vmem:[#allocation2 + $0xc28] sm:$0xff]
    %v612 = vld [vmem:[#allocation2 + $0xc30] sm:$0xff]
    %v613 = vld [vmem:[#allocation2 + $0xc38] sm:$0xff]
    %v614 = vld [vmem:[#allocation2 + $0xc40] sm:$0xff]
    %v615 = vld [vmem:[#allocation2 + $0xc48] sm:$0xff]
    %v616 = vld [vmem:[#allocation2 + $0xc50] sm:$0xff]
    %v617 = vld [vmem:[#allocation2 + $0xc58] sm:$0xff]
    %v618 = vld [vmem:[#allocation2 + $0xc60] sm:$0xff]
    %v619 = vld [vmem:[#allocation2 + $0xc68] sm:$0xff]
    %v620 = vld [vmem:[#allocation2 + $0xc70] sm:$0xff]
    %v621 = vld [vmem:[#allocation2 + $0xc78] sm:$0xff]
    %v622 = vld [vmem:[#allocation2 + $0xc80] sm:$0xff]
    %v623 = vld [vmem:[#allocation2 + $0xc88] sm:$0xff]
    %v624 = vld [vmem:[#allocation2 + $0xc90] sm:$0xff]
    %v625 = vld [vmem:[#allocation2 + $0xc98] sm:$0xff]
    %v626 = vld [vmem:[#allocation2 + $0xca0] sm:$0xff]
    %v627 = vld [vmem:[#allocation2 + $0xca8] sm:$0xff]
    %v628 = vld [vmem:[#allocation2 + $0xcb0] sm:$0xff]
    %v629 = vld [vmem:[#allocation2 + $0xcb8] sm:$0xff]
    %v630 = vld [vmem:[#allocation2 + $0xcc0] sm:$0xff]
    %v631 = vld [vmem:[#allocation2 + $0xcc8] sm:$0xff]
    %v632 = vld [vmem:[#allocation2 + $0xcd0] sm:$0xff]
    %v633 = vld [vmem:[#allocation2 + $0xcd8] sm:$0xff]
    %v634 = vld [vmem:[#allocation2 + $0xce0] sm:$0xff]
    %v635 = vld [vmem:[#allocation2 + $0xce8] sm:$0xff]
    %v636 = vld [vmem:[#allocation2 + $0xcf0] sm:$0xff]
    %v637 = vld [vmem:[#allocation2 + $0xcf8] sm:$0xff]
    %v638 = vld [vmem:[#allocation2 + $0xd00] sm:$0xff]
    %v639 = vld [vmem:[#allocation2 + $0xd08] sm:$0xff]
    %v640 = vld [vmem:[#allocation2 + $0xd10] sm:$0xff]
    %v641 = vld [vmem:[#allocation2 + $0xd18] sm:$0xff]
    %v642 = vld [vmem:[#allocation2 + $0xd20] sm:$0xff]
    %v643 = vld [vmem:[#allocation2 + $0xd28] sm:$0xff]
    %v644 = vld [vmem:[#allocation2 + $0xd30] sm:$0xff]
    %v645 = vld [vmem:[#allocation2 + $0xd38] sm:$0xff]
    %v646 = vld [vmem:[#allocation2 + $0xd40] sm:$0xff]
    %v647 = vld [vmem:[#allocation2 + $0xd48] sm:$0xff]
    %v648 = vld [vmem:[#allocation2 + $0xd50] sm:$0xff]
    %v649 = vld [vmem:[#allocation2 + $0xd58] sm:$0xff]
    %v650 = vld [vmem:[#allocation2 + $0xd60] sm:$0xff]
    %v651 = vld [vmem:[#allocation2 + $0xd68] sm:$0xff]
    %v652 = vld [vmem:[#allocation2 + $0xd70] sm:$0xff]
    %v653 = vld [vmem:[#allocation2 + $0xd78] sm:$0xff]
    %v654 = vld [vmem:[#allocation2 + $0xd80] sm:$0xff]
    %v655 = vld [vmem:[#allocation2 + $0xd88] sm:$0xff]
    %v656 = vld [vmem:[#allocation2 + $0xd90] sm:$0xff]
    %v657 = vld [vmem:[#allocation2 + $0xd98] sm:$0xff]
    %v658 = vld [vmem:[#allocation2 + $0xda0] sm:$0xff]
    %v659 = vld [vmem:[#allocation2 + $0xda8] sm:$0xff]
    %v660 = vld [vmem:[#allocation2 + $0xdb0] sm:$0xff]
    %v661 = vld [vmem:[#allocation2 + $0xdb8] sm:$0xff]
    %v662 = vld [vmem:[#allocation2 + $0xdc0] sm:$0xff]
    %v663 = vld [vmem:[#allocation2 + $0xdc8] sm:$0xff]
    %v664 = vld [vmem:[#allocation2 + $0xdd0] sm:$0xff]
    %v665 = vld [vmem:[#allocation2 + $0xdd8] sm:$0xff]
    %v666 = vld [vmem:[#allocation2 + $0xde0] sm:$0xff]
    %v667 = vld [vmem:[#allocation2 + $0xde8] sm:$0xff]
    %v668 = vld [vmem:[#allocation2 + $0xdf0] sm:$0xff]
    %v669 = vld [vmem:[#allocation2 + $0xdf8] sm:$0xff]
    %v670 = vld [vmem:[#allocation2 + $0xe00] sm:$0xff]
    %v671 = vld [vmem:[#allocation2 + $0xe08] sm:$0xff]
    %v672 = vld [vmem:[#allocation2 + $0xe10] sm:$0xff]
    %v673 = vld [vmem:[#allocation2 + $0xe18] sm:$0xff]
    %v674 = vld [vmem:[#allocation2 + $0xe20] sm:$0xff]
    %v675 = vld [vmem:[#allocation2 + $0xe28] sm:$0xff]
    %v676 = vld [vmem:[#allocation2 + $0xe30] sm:$0xff]
    %v677 = vld [vmem:[#allocation2 + $0xe38] sm:$0xff]
    %v678 = vld [vmem:[#allocation2 + $0xe40] sm:$0xff]
    %v679 = vld [vmem:[#allocation2 + $0xe48] sm:$0xff]
    %v680 = vld [vmem:[#allocation2 + $0xe50] sm:$0xff]
    %v681 = vld [vmem:[#allocation2 + $0xe58] sm:$0xff]
    %v682 = vld [vmem:[#allocation2 + $0xe60] sm:$0xff]
    %v683 = vld [vmem:[#allocation2 + $0xe68] sm:$0xff]
    %v684 = vld [vmem:[#allocation2 + $0xe70] sm:$0xff]
    %v685 = vld [vmem:[#allocation2 + $0xe78] sm:$0xff]
    %v686 = vld [vmem:[#allocation2 + $0xe80] sm:$0xff]
    %v687 = vld [vmem:[#allocation2 + $0xe88] sm:$0xff]
    %v688 = vld [vmem:[#allocation2 + $0xe90] sm:$0xff]
    %v689 = vld [vmem:[#allocation2 + $0xe98] sm:$0xff]
    %v690 = vld [vmem:[#allocation2 + $0xea0] sm:$0xff]
    %v691 = vld [vmem:[#allocation2 + $0xea8] sm:$0xff]
    %v692 = vld [vmem:[#allocation2 + $0xeb0] sm:$0xff]
    %v693 = vld [vmem:[#allocation2 + $0xeb8] sm:$0xff]
    %v694 = vld [vmem:[#allocation2 + $0xec0] sm:$0xff]
    %v695 = vld [vmem:[#allocation2 + $0xec8] sm:$0xff]
    %v696 = vld [vmem:[#allocation2 + $0xed0] sm:$0xff]
    %v697 = vld [vmem:[#allocation2 + $0xed8] sm:$0xff]
    %v698 = vld [vmem:[#allocation2 + $0xee0] sm:$0xff]
    %v699 = vld [vmem:[#allocation2 + $0xee8] sm:$0xff]
    %v700 = vld [vmem:[#allocation2 + $0xef0] sm:$0xff]
    %v701 = vld [vmem:[#allocation2 + $0xef8] sm:$0xff]
    %v702 = vld [vmem:[#allocation2 + $0xf00] sm:$0xff]
    %v703 = vld [vmem:[#allocation2 + $0xf08] sm:$0xff]
    %v704 = vld [vmem:[#allocation2 + $0xf10] sm:$0xff]
    %v705 = vld [vmem:[#allocation2 + $0xf18] sm:$0xff]
    %v706 = vld [vmem:[#allocation2 + $0xf20] sm:$0xff]
    %v707 = vld [vmem:[#allocation2 + $0xf28] sm:$0xff]
    %v708 = vld [vmem:[#allocation2 + $0xf30] sm:$0xff]
    %v709 = vld [vmem:[#allocation2 + $0xf38] sm:$0xff]
    %v710 = vld [vmem:[#allocation2 + $0xf40] sm:$0xff]
    %v711 = vld [vmem:[#allocation2 + $0xf48] sm:$0xff]
    %v712 = vld [vmem:[#allocation2 + $0xf50] sm:$0xff]
    %v713 = vld [vmem:[#allocation2 + $0xf58] sm:$0xff]
    %v714 = vld [vmem:[#allocation2 + $0xf60] sm:$0xff]
    %v715 = vld [vmem:[#allocation2 + $0xf68] sm:$0xff]
    %v716 = vld [vmem:[#allocation2 + $0xf70] sm:$0xff]
    %v717 = vld [vmem:[#allocation2 + $0xf78] sm:$0xff]
    %v718 = vld [vmem:[#allocation2 + $0xf80] sm:$0xff]
    %v719 = vld [vmem:[#allocation2 + $0xf88] sm:$0xff]
    %v720 = vld [vmem:[#allocation2 + $0xf90] sm:$0xff]
    %v721 = vld [vmem:[#allocation2 + $0xf98] sm:$0xff]
    %v722 = vld [vmem:[#allocation2 + $0xfa0] sm:$0xff]
    %v723 = vld [vmem:[#allocation2 + $0xfa8] sm:$0xff]
    %v724 = vld [vmem:[#allocation2 + $0xfb0] sm:$0xff]
    %v725 = vld [vmem:[#allocation2 + $0xfb8] sm:$0xff]
    %v726 = vld [vmem:[#allocation2 + $0xfc0] sm:$0xff]
    %v727 = vld [vmem:[#allocation2 + $0xfc8] sm:$0xff]
    %v728 = vld [vmem:[#allocation2 + $0xfd0] sm:$0xff]
    %v729 = vld [vmem:[#allocation2 + $0xfd8] sm:$0xff]
    %v730 = vld [vmem:[#allocation2 + $0xfe0] sm:$0xff]
    %v731 = vld [vmem:[#allocation2 + $0xfe8] sm:$0xff]
    %v732 = vld [vmem:[#allocation2 + $0xff0] sm:$0xff]
    %v733 = vld [vmem:[#allocation2 + $0xff8] sm:$0xff]
    %v734 = vld [vmem:[#allocation2 + $0x1000] sm:$0xff]
    %v735 = vld [vmem:[#allocation2 + $0x1008] sm:$0xff]
    %v736 = vld [vmem:[#allocation2 + $0x1010] sm:$0xff]
    %v737 = vld [vmem:[#allocation2 + $0x1018] sm:$0xff]
    %v738 = vld [vmem:[#allocation2 + $0x1020] sm:$0xff]
    %v739 = vld [vmem:[#allocation2 + $0x1028] sm:$0xff]
    %v740 = vld [vmem:[#allocation2 + $0x1030] sm:$0xff]
    %v741 = vld [vmem:[#allocation2 + $0x1038] sm:$0xff]
    %v742 = vld [vmem:[#allocation2 + $0x1040] sm:$0xff]
    %v743 = vld [vmem:[#allocation2 + $0x1048] sm:$0xff]
    %v744 = vld [vmem:[#allocation2 + $0x1050] sm:$0xff]
    %v745 = vld [vmem:[#allocation2 + $0x1058] sm:$0xff]
    %v746 = vld [vmem:[#allocation2 + $0x1060] sm:$0xff]
    %v747 = vld [vmem:[#allocation2 + $0x1068] sm:$0xff]
    %v748 = vld [vmem:[#allocation2 + $0x1070] sm:$0xff]
    %v749 = vld [vmem:[#allocation2 + $0x1078] sm:$0xff]
    %v750 = vld [vmem:[#allocation2 + $0x1080] sm:$0xff]
    %v751 = vld [vmem:[#allocation2 + $0x1088] sm:$0xff]
    %v752 = vld [vmem:[#allocation2 + $0x1090] sm:$0xff]
    %v753 = vld [vmem:[#allocation2 + $0x1098] sm:$0xff]
    %v754 = vld [vmem:[#allocation2 + $0x10a0] sm:$0xff]
    %v755 = vld [vmem:[#allocation2 + $0x10a8] sm:$0xff]
    %v756 = vld [vmem:[#allocation2 + $0x10b0] sm:$0xff]
    %v757 = vld [vmem:[#allocation2 + $0x10b8] sm:$0xff]
    %v758 = vld [vmem:[#allocation2 + $0x10c0] sm:$0xff]
    %v759 = vld [vmem:[#allocation2 + $0x10c8] sm:$0xff]
    %v760 = vld [vmem:[#allocation2 + $0x10d0] sm:$0xff]
    %v761 = vld [vmem:[#allocation2 + $0x10d8] sm:$0xff]
    %v762 = vld [vmem:[#allocation2 + $0x10e0] sm:$0xff]
    %v763 = vld [vmem:[#allocation2 + $0x10e8] sm:$0xff]
    %v764 = vld [vmem:[#allocation2 + $0x10f0] sm:$0xff]
    %v765 = vld [vmem:[#allocation2 + $0x10f8] sm:$0xff]
    %v766 = vld [vmem:[#allocation2 + $0x1100] sm:$0xff]
    %v767 = vld [vmem:[#allocation2 + $0x1108] sm:$0xff]
    %v768 = vld [vmem:[#allocation2 + $0x1110] sm:$0xff]
    %v769 = vld [vmem:[#allocation2 + $0x1118] sm:$0xff]
    %v770 = vld [vmem:[#allocation2 + $0x1120] sm:$0xff]
    %v771 = vld [vmem:[#allocation2 + $0x1128] sm:$0xff]
    %v772 = vld [vmem:[#allocation2 + $0x1130] sm:$0xff]
    %v773 = vld [vmem:[#allocation2 + $0x1138] sm:$0xff]
    %v774 = vld [vmem:[#allocation2 + $0x1140] sm:$0xff]
    %v775 = vld [vmem:[#allocation2 + $0x1148] sm:$0xff]
    %v776 = vld [vmem:[#allocation2 + $0x1150] sm:$0xff]
    %v777 = vld [vmem:[#allocation2 + $0x1158] sm:$0xff]
    %v778 = vld [vmem:[#allocation2 + $0x1160] sm:$0xff]
    %v779 = vld [vmem:[#allocation2 + $0x1168] sm:$0xff]
    %v780 = vld [vmem:[#allocation2 + $0x1170] sm:$0xff]
    %v781 = vld [vmem:[#allocation2 + $0x1178] sm:$0xff]
    %v782 = vld [vmem:[#allocation2 + $0x1180] sm:$0xff]
    %v783 = vld [vmem:[#allocation2 + $0x1188] sm:$0xff]
    %v784 = vld [vmem:[#allocation2 + $0x1190] sm:$0xff]
    %v785 = vld [vmem:[#allocation2 + $0x1198] sm:$0xff]
    %v786 = vld [vmem:[#allocation2 + $0x11a0] sm:$0xff]
    %v787 = vld [vmem:[#allocation2 + $0x11a8] sm:$0xff]
    %v788 = vld [vmem:[#allocation2 + $0x11b0] sm:$0xff]
    %v789 = vld [vmem:[#allocation2 + $0x11b8] sm:$0xff]
    %v790 = vld [vmem:[#allocation2 + $0x11c0] sm:$0xff]
    %v791 = vld [vmem:[#allocation2 + $0x11c8] sm:$0xff]
    %v792 = vld [vmem:[#allocation2 + $0x11d0] sm:$0xff]
    %v793 = vld [vmem:[#allocation2 + $0x11d8] sm:$0xff]
    %v794 = vld [vmem:[#allocation2 + $0x11e0] sm:$0xff]
    %v795 = vld [vmem:[#allocation2 + $0x11e8] sm:$0xff]
    %v796 = vld [vmem:[#allocation2 + $0x11f0] sm:$0xff]
    %v797 = vld [vmem:[#allocation2 + $0x11f8] sm:$0xff]
    %v798 = vld [vmem:[#allocation2 + $0x1200] sm:$0xff]
    %v799 = vld [vmem:[#allocation2 + $0x1208] sm:$0xff]
    %v800 = vld [vmem:[#allocation2 + $0x1210] sm:$0xff]
    %v801 = vld [vmem:[#allocation2 + $0x1218] sm:$0xff]
    %v802 = vld [vmem:[#allocation2 + $0x1220] sm:$0xff]
    %v803 = vld [vmem:[#allocation2 + $0x1228] sm:$0xff]
    %v804 = vld [vmem:[#allocation2 + $0x1230] sm:$0xff]
    %v805 = vld [vmem:[#allocation2 + $0x1238] sm:$0xff]
    %v806 = vld [vmem:[#allocation2 + $0x1240] sm:$0xff]
    %v807 = vld [vmem:[#allocation2 + $0x1248] sm:$0xff]
    %v808 = vld [vmem:[#allocation2 + $0x1250] sm:$0xff]
    %v809 = vld [vmem:[#allocation2 + $0x1258] sm:$0xff]
    %v810 = vld [vmem:[#allocation2 + $0x1260] sm:$0xff]
    %v811 = vld [vmem:[#allocation2 + $0x1268] sm:$0xff]
    %v812 = vld [vmem:[#allocation2 + $0x1270] sm:$0xff]
    %v813 = vld [vmem:[#allocation2 + $0x1278] sm:$0xff]
    %v814 = vld [vmem:[#allocation2 + $0x1280] sm:$0xff]
    %v815 = vld [vmem:[#allocation2 + $0x1288] sm:$0xff]
    %v816 = vld [vmem:[#allocation2 + $0x1290] sm:$0xff]
    %v817 = vld [vmem:[#allocation2 + $0x1298] sm:$0xff]
    %v818 = vld [vmem:[#allocation2 + $0x12a0] sm:$0xff]
    %v819 = vld [vmem:[#allocation2 + $0x12a8] sm:$0xff]
    %v820 = vld [vmem:[#allocation2 + $0x12b0] sm:$0xff]
    %v821 = vld [vmem:[#allocation2 + $0x12b8] sm:$0xff]
    %v822 = vld [vmem:[#allocation2 + $0x12c0] sm:$0xff]
    %v823 = vld [vmem:[#allocation2 + $0x12c8] sm:$0xff]
    %v824 = vld [vmem:[#allocation2 + $0x12d0] sm:$0xff]
    %v825 = vld [vmem:[#allocation2 + $0x12d8] sm:$0xff]
    %v826 = vld [vmem:[#allocation2 + $0x12e0] sm:$0xff]
    %v827 = vld [vmem:[#allocation2 + $0x12e8] sm:$0xff]
    %v828 = vld [vmem:[#allocation2 + $0x12f0] sm:$0xff]
    %v829 = vld [vmem:[#allocation2 + $0x12f8] sm:$0xff]
    %v830 = vld [vmem:[#allocation2 + $0x1300] sm:$0xff]
    %v831 = vld [vmem:[#allocation2 + $0x1308] sm:$0xff]
    %v832 = vld [vmem:[#allocation2 + $0x1310] sm:$0xff]
    %v833 = vld [vmem:[#allocation2 + $0x1318] sm:$0xff]
    %v834 = vld [vmem:[#allocation2 + $0x1320] sm:$0xff]
    %v835 = vld [vmem:[#allocation2 + $0x1328] sm:$0xff]
    %v836 = vld [vmem:[#allocation2 + $0x1330] sm:$0xff]
    %v837 = vld [vmem:[#allocation2 + $0x1338] sm:$0xff]
    %v838 = vld [vmem:[#allocation2 + $0x1340] sm:$0xff]
    %v839 = vld [vmem:[#allocation2 + $0x1348] sm:$0xff]
    %v840 = vld [vmem:[#allocation2 + $0x1350] sm:$0xff]
    %v841 = vld [vmem:[#allocation2 + $0x1358] sm:$0xff]
    %v842 = vld [vmem:[#allocation2 + $0x1360] sm:$0xff]
    %v843 = vld [vmem:[#allocation2 + $0x1368] sm:$0xff]
    %v844 = vld [vmem:[#allocation2 + $0x1370] sm:$0xff]
    %v845 = vld [vmem:[#allocation2 + $0x1378] sm:$0xff]
    %v846 = vld [vmem:[#allocation2 + $0x1380] sm:$0xff]
    %v847 = vld [vmem:[#allocation2 + $0x1388] sm:$0xff]
    %v848 = vld [vmem:[#allocation2 + $0x1390] sm:$0xff]
    %v849 = vld [vmem:[#allocation2 + $0x1398] sm:$0xff]
    %v850 = vld [vmem:[#allocation2 + $0x13a0] sm:$0xff]
    %v851 = vld [vmem:[#allocation2 + $0x13a8] sm:$0xff]
    %v852 = vld [vmem:[#allocation2 + $0x13b0] sm:$0xff]
    %v853 = vld [vmem:[#allocation2 + $0x13b8] sm:$0xff]
    %v854 = vld [vmem:[#allocation2 + $0x13c0] sm:$0xff]
    %v855 = vld [vmem:[#allocation2 + $0x13c8] sm:$0xff]
    %v856 = vld [vmem:[#allocation2 + $0x13d0] sm:$0xff]
    %v857 = vld [vmem:[#allocation2 + $0x13d8] sm:$0xff]
    %v858 = vld [vmem:[#allocation2 + $0x13e0] sm:$0xff]
    %v859 = vld [vmem:[#allocation2 + $0x13e8] sm:$0xff]
    %v860 = vld [vmem:[#allocation2 + $0x13f0] sm:$0xff]
    %v861 = vld [vmem:[#allocation2 + $0x13f8] sm:$0xff]
    %v862 = vld [vmem:[#allocation2 + $0x1400] sm:$0xff]
    %v863 = vld [vmem:[#allocation2 + $0x1408] sm:$0xff]
    %v864 = vld [vmem:[#allocation2 + $0x1410] sm:$0xff]
    %v865 = vld [vmem:[#allocation2 + $0x1418] sm:$0xff]
    %v866 = vld [vmem:[#allocation2 + $0x1420] sm:$0xff]
    %v867 = vld [vmem:[#allocation2 + $0x1428] sm:$0xff]
    %v868 = vld [vmem:[#allocation2 + $0x1430] sm:$0xff]
    %v869 = vld [vmem:[#allocation2 + $0x1438] sm:$0xff]
    %v870 = vld [vmem:[#allocation2 + $0x1440] sm:$0xff]
    %v871 = vld [vmem:[#allocation2 + $0x1448] sm:$0xff]
    %v872 = vld [vmem:[#allocation2 + $0x1450] sm:$0xff]
    %v873 = vld [vmem:[#allocation2 + $0x1458] sm:$0xff]
    %v874 = vld [vmem:[#allocation2 + $0x1460] sm:$0xff]
    %v875 = vld [vmem:[#allocation2 + $0x1468] sm:$0xff]
    %v876 = vld [vmem:[#allocation2 + $0x1470] sm:$0xff]
    %v877 = vld [vmem:[#allocation2 + $0x1478] sm:$0xff]
    %v878 = vld [vmem:[#allocation2 + $0x1480] sm:$0xff]
    %v879 = vld [vmem:[#allocation2 + $0x1488] sm:$0xff]
    %v880 = vld [vmem:[#allocation2 + $0x1490] sm:$0xff]
    %v881 = vld [vmem:[#allocation2 + $0x1498] sm:$0xff]
    %v882 = vld [vmem:[#allocation2 + $0x14a0] sm:$0xff]
    %v883 = vld [vmem:[#allocation2 + $0x14a8] sm:$0xff]
    %v884 = vld [vmem:[#allocation2 + $0x14b0] sm:$0xff]
    %v885 = vld [vmem:[#allocation2 + $0x14b8] sm:$0xff]
    %v886 = vld [vmem:[#allocation2 + $0x14c0] sm:$0xff]
    %v887 = vld [vmem:[#allocation2 + $0x14c8] sm:$0xff]
    %v888 = vld [vmem:[#allocation2 + $0x14d0] sm:$0xff]
    %v889 = vld [vmem:[#allocation2 + $0x14d8] sm:$0xff]
    %v890 = vld [vmem:[#allocation2 + $0x14e0] sm:$0xff]
    %v891 = vld [vmem:[#allocation2 + $0x14e8] sm:$0xff]
    %v892 = vld [vmem:[#allocation2 + $0x14f0] sm:$0xff]
    %v893 = vld [vmem:[#allocation2 + $0x14f8] sm:$0xff]
    %v894 = vld [vmem:[#allocation2 + $0x1500] sm:$0xff]
    %v895 = vld [vmem:[#allocation2 + $0x1508] sm:$0xff]
    %v896 = vld [vmem:[#allocation2 + $0x1510] sm:$0xff]
    %v897 = vld [vmem:[#allocation2 + $0x1518] sm:$0xff]
    %v898 = vld [vmem:[#allocation2 + $0x1520] sm:$0xff]
    %v899 = vld [vmem:[#allocation2 + $0x1528] sm:$0xff]
    %v900 = vld [vmem:[#allocation2 + $0x1530] sm:$0xff]
    %v901 = vld [vmem:[#allocation2 + $0x1538] sm:$0xff]
    %v902 = vld [vmem:[#allocation2 + $0x1540] sm:$0xff]
    %v903 = vld [vmem:[#allocation2 + $0x1548] sm:$0xff]
    %v904 = vld [vmem:[#allocation2 + $0x1550] sm:$0xff]
    %v905 = vld [vmem:[#allocation2 + $0x1558] sm:$0xff]
    %v906 = vld [vmem:[#allocation2 + $0x1560] sm:$0xff]
    %v907 = vld [vmem:[#allocation2 + $0x1568] sm:$0xff]
    %v908 = vld [vmem:[#allocation2 + $0x1570] sm:$0xff]
    %v909 = vld [vmem:[#allocation2 + $0x1578] sm:$0xff]
    %v910 = vld [vmem:[#allocation2 + $0x1580] sm:$0xff]
    %v911 = vld [vmem:[#allocation2 + $0x1588] sm:$0xff]
    %v912 = vld [vmem:[#allocation2 + $0x1590] sm:$0xff]
    %v913 = vld [vmem:[#allocation2 + $0x1598] sm:$0xff]
    %v914 = vld [vmem:[#allocation2 + $0x15a0] sm:$0xff]
    %v915 = vld [vmem:[#allocation2 + $0x15a8] sm:$0xff]
    %v916 = vld [vmem:[#allocation2 + $0x15b0] sm:$0xff]
    %v917 = vld [vmem:[#allocation2 + $0x15b8] sm:$0xff]
    %v918 = vld [vmem:[#allocation2 + $0x15c0] sm:$0xff]
    %v919 = vld [vmem:[#allocation2 + $0x15c8] sm:$0xff]
    %v920 = vld [vmem:[#allocation2 + $0x15d0] sm:$0xff]
    %v921 = vld [vmem:[#allocation2 + $0x15d8] sm:$0xff]
    %v922 = vld [vmem:[#allocation2 + $0x15e0] sm:$0xff]
    %v923 = vld [vmem:[#allocation2 + $0x15e8] sm:$0xff]
    %v924 = vld [vmem:[#allocation2 + $0x15f0] sm:$0xff]
    %v925 = vld [vmem:[#allocation2 + $0x15f8] sm:$0xff]
    %v926 = vld [vmem:[#allocation2 + $0x1600] sm:$0xff]
    %v927 = vld [vmem:[#allocation2 + $0x1608] sm:$0xff]
    %v928 = vld [vmem:[#allocation2 + $0x1610] sm:$0xff]
    %v929 = vld [vmem:[#allocation2 + $0x1618] sm:$0xff]
    %v930 = vld [vmem:[#allocation2 + $0x1620] sm:$0xff]
    %v931 = vld [vmem:[#allocation2 + $0x1628] sm:$0xff]
    %v932 = vld [vmem:[#allocation2 + $0x1630] sm:$0xff]
    %v933 = vld [vmem:[#allocation2 + $0x1638] sm:$0xff]
    %v934 = vld [vmem:[#allocation2 + $0x1640] sm:$0xff]
    %v935 = vld [vmem:[#allocation2 + $0x1648] sm:$0xff]
    %v936 = vld [vmem:[#allocation2 + $0x1650] sm:$0xff]
    %v937 = vld [vmem:[#allocation2 + $0x1658] sm:$0xff]
    %v938 = vld [vmem:[#allocation2 + $0x1660] sm:$0xff]
    %v939 = vld [vmem:[#allocation2 + $0x1668] sm:$0xff]
    %v940 = vld [vmem:[#allocation2 + $0x1670] sm:$0xff]
    %v941 = vld [vmem:[#allocation2 + $0x1678] sm:$0xff]
    %v942 = vld [vmem:[#allocation2 + $0x1680] sm:$0xff]
    %v943 = vld [vmem:[#allocation2 + $0x1688] sm:$0xff]
    %v944 = vld [vmem:[#allocation2 + $0x1690] sm:$0xff]
    %v945 = vld [vmem:[#allocation2 + $0x1698] sm:$0xff]
    %v946 = vld [vmem:[#allocation2 + $0x16a0] sm:$0xff]
    %v947 = vld [vmem:[#allocation2 + $0x16a8] sm:$0xff]
    %v948 = vld [vmem:[#allocation2 + $0x16b0] sm:$0xff]
    %v949 = vld [vmem:[#allocation2 + $0x16b8] sm:$0xff]
    %v950 = vld [vmem:[#allocation2 + $0x16c0] sm:$0xff]
    %v951 = vld [vmem:[#allocation2 + $0x16c8] sm:$0xff]
    %v952 = vld [vmem:[#allocation2 + $0x16d0] sm:$0xff]
    %v953 = vld [vmem:[#allocation2 + $0x16d8] sm:$0xff]
    %v954 = vld [vmem:[#allocation2 + $0x16e0] sm:$0xff]
    %v955 = vld [vmem:[#allocation2 + $0x16e8] sm:$0xff]
    %v956 = vld [vmem:[#allocation2 + $0x16f0] sm:$0xff]
    %v957 = vld [vmem:[#allocation2 + $0x16f8] sm:$0xff]
    %v958 = vld [vmem:[#allocation2 + $0x1700] sm:$0xff]
    %v959 = vld [vmem:[#allocation2 + $0x1708] sm:$0xff]
    %v960 = vld [vmem:[#allocation2 + $0x1710] sm:$0xff]
    %v961 = vld [vmem:[#allocation2 + $0x1718] sm:$0xff]
    %v962 = vld [vmem:[#allocation2 + $0x1720] sm:$0xff]
    %v963 = vld [vmem:[#allocation2 + $0x1728] sm:$0xff]
    %v964 = vld [vmem:[#allocation2 + $0x1730] sm:$0xff]
    %v965 = vld [vmem:[#allocation2 + $0x1738] sm:$0xff]
    %v966 = vld [vmem:[#allocation2 + $0x1740] sm:$0xff]
    %v967 = vld [vmem:[#allocation2 + $0x1748] sm:$0xff]
    %v968 = vld [vmem:[#allocation2 + $0x1750] sm:$0xff]
    %v969 = vld [vmem:[#allocation2 + $0x1758] sm:$0xff]
    %v970 = vld [vmem:[#allocation2 + $0x1760] sm:$0xff]
    %v971 = vld [vmem:[#allocation2 + $0x1768] sm:$0xff]
    %v972 = vld [vmem:[#allocation2 + $0x1770] sm:$0xff]
    %v973 = vld [vmem:[#allocation2 + $0x1778] sm:$0xff]
    %v974 = vld [vmem:[#allocation2 + $0x1780] sm:$0xff]
    %v975 = vld [vmem:[#allocation2 + $0x1788] sm:$0xff]
    %v976 = vld [vmem:[#allocation2 + $0x1790] sm:$0xff]
    %v977 = vld [vmem:[#allocation2 + $0x1798] sm:$0xff]
    %v978 = vld [vmem:[#allocation2 + $0x17a0] sm:$0xff]
    %v979 = vld [vmem:[#allocation2 + $0x17a8] sm:$0xff]
    %v980 = vld [vmem:[#allocation2 + $0x17b0] sm:$0xff]
    %v981 = vld [vmem:[#allocation2 + $0x17b8] sm:$0xff]
    %v982 = vld [vmem:[#allocation2 + $0x17c0] sm:$0xff]
    %v983 = vld [vmem:[#allocation2 + $0x17c8] sm:$0xff]
    %v984 = vld [vmem:[#allocation2 + $0x17d0] sm:$0xff]
    %v985 = vld [vmem:[#allocation2 + $0x17d8] sm:$0xff]
    %v986 = vld [vmem:[#allocation2 + $0x17e0] sm:$0xff]
    %v987 = vld [vmem:[#allocation2 + $0x17e8] sm:$0xff]
    %v988 = vld [vmem:[#allocation2 + $0x17f0] sm:$0xff]
    %v989 = vld [vmem:[#allocation2 + $0x17f8] sm:$0xff]
    %v990 = vld [vmem:[#allocation2 + $0x1800] sm:$0xff]
    %v991 = vld [vmem:[#allocation2 + $0x1808] sm:$0xff]
    %v992 = vld [vmem:[#allocation2 + $0x1810] sm:$0xff]
    %v993 = vld [vmem:[#allocation2 + $0x1818] sm:$0xff]
    %v994 = vld [vmem:[#allocation2 + $0x1820] sm:$0xff]
    %v995 = vld [vmem:[#allocation2 + $0x1828] sm:$0xff]
    %v996 = vld [vmem:[#allocation2 + $0x1830] sm:$0xff]
    %v997 = vld [vmem:[#allocation2 + $0x1838] sm:$0xff]
    %v998 = vld [vmem:[#allocation2 + $0x1840] sm:$0xff]
    %v999 = vld [vmem:[#allocation2 + $0x1848] sm:$0xff]
    %v1000 = vld [vmem:[#allocation2 + $0x1850] sm:$0xff]
    %v1001 = vld [vmem:[#allocation2 + $0x1858] sm:$0xff]
    %v1002 = vld [vmem:[#allocation2 + $0x1860] sm:$0xff]
    %v1003 = vld [vmem:[#allocation2 + $0x1868] sm:$0xff]
    %v1004 = vld [vmem:[#allocation2 + $0x1870] sm:$0xff]
    %v1005 = vld [vmem:[#allocation2 + $0x1878] sm:$0xff]
    %v1006 = vld [vmem:[#allocation2 + $0x1880] sm:$0xff]
    %v1007 = vld [vmem:[#allocation2 + $0x1888] sm:$0xff]
    %v1008 = vld [vmem:[#allocation2 + $0x1890] sm:$0xff]
    %v1009 = vld [vmem:[#allocation2 + $0x1898] sm:$0xff]
    %v1010 = vld [vmem:[#allocation2 + $0x18a0] sm:$0xff]
    %v1011 = vld [vmem:[#allocation2 + $0x18a8] sm:$0xff]
    %v1012 = vld [vmem:[#allocation2 + $0x18b0] sm:$0xff]
    %v1013 = vld [vmem:[#allocation2 + $0x18b8] sm:$0xff]
    %v1014 = vld [vmem:[#allocation2 + $0x18c0] sm:$0xff]
    %v1015 = vld [vmem:[#allocation2 + $0x18c8] sm:$0xff]
    %v1016 = vld [vmem:[#allocation2 + $0x18d0] sm:$0xff]
    %v1017 = vld [vmem:[#allocation2 + $0x18d8] sm:$0xff]
    %v1018 = vld [vmem:[#allocation2 + $0x18e0] sm:$0xff]
    %v1019 = vld [vmem:[#allocation2 + $0x18e8] sm:$0xff]
    %v1020 = vld [vmem:[#allocation2 + $0x18f0] sm:$0xff]
    %v1021 = vld [vmem:[#allocation2 + $0x18f8] sm:$0xff]
    %v1022 = vld [vmem:[#allocation2 + $0x1900] sm:$0xff]
    %v1023 = vld [vmem:[#allocation2 + $0x1908] sm:$0xff]
    %v1024 = vld [vmem:[#allocation2 + $0x1910] sm:$0xff]
    %v1025 = vld [vmem:[#allocation2 + $0x1918] sm:$0xff]
    %v1026 = vld [vmem:[#allocation2 + $0x1920] sm:$0xff]
    %v1027 = vld [vmem:[#allocation2 + $0x1928] sm:$0xff]
    %v1028 = vld [vmem:[#allocation2 + $0x1930] sm:$0xff]
    %v1029 = vld [vmem:[#allocation2 + $0x1938] sm:$0xff]
    %v1030 = vld [vmem:[#allocation2 + $0x1940] sm:$0xff]
    %v1031 = vld [vmem:[#allocation2 + $0x1948] sm:$0xff]
    %v1032 = vld [vmem:[#allocation2 + $0x1950] sm:$0xff]
    %v1033 = vld [vmem:[#allocation2 + $0x1958] sm:$0xff]
    %v1034 = vld [vmem:[#allocation2 + $0x1960] sm:$0xff]
    %v1035 = vld [vmem:[#allocation2 + $0x1968] sm:$0xff]
    %v1036 = vld [vmem:[#allocation2 + $0x1970] sm:$0xff]
    %v1037 = vld [vmem:[#allocation2 + $0x1978] sm:$0xff]
    %v1038 = vld [vmem:[#allocation2 + $0x1980] sm:$0xff]
    %v1039 = vld [vmem:[#allocation2 + $0x1988] sm:$0xff]
    %v1040 = vld [vmem:[#allocation2 + $0x1990] sm:$0xff]
    %v1041 = vld [vmem:[#allocation2 + $0x1998] sm:$0xff]
    %v1042 = vld [vmem:[#allocation2 + $0x19a0] sm:$0xff]
    %v1043 = vld [vmem:[#allocation2 + $0x19a8] sm:$0xff]
    %v1044 = vld [vmem:[#allocation2 + $0x19b0] sm:$0xff]
    %v1045 = vld [vmem:[#allocation2 + $0x19b8] sm:$0xff]
    %v1046 = vld [vmem:[#allocation2 + $0x19c0] sm:$0xff]
    %v1047 = vld [vmem:[#allocation2 + $0x19c8] sm:$0xff]
    %v1048 = vld [vmem:[#allocation2 + $0x19d0] sm:$0xff]
    %v1049 = vld [vmem:[#allocation2 + $0x19d8] sm:$0xff]
    %v1050 = vld [vmem:[#allocation2 + $0x19e0] sm:$0xff]
    %v1051 = vld [vmem:[#allocation2 + $0x19e8] sm:$0xff]
    %v1052 = vld [vmem:[#allocation2 + $0x19f0] sm:$0xff]
    %v1053 = vld [vmem:[#allocation2 + $0x19f8] sm:$0xff]
    %v1054 = vld [vmem:[#allocation2 + $0x1a00] sm:$0xff]
    %v1055 = vld [vmem:[#allocation2 + $0x1a08] sm:$0xff]
    %v1056 = vld [vmem:[#allocation2 + $0x1a10] sm:$0xff]
    %v1057 = vld [vmem:[#allocation2 + $0x1a18] sm:$0xff]
    %v1058 = vld [vmem:[#allocation2 + $0x1a20] sm:$0xff]
    %v1059 = vld [vmem:[#allocation2 + $0x1a28] sm:$0xff]
    %v1060 = vld [vmem:[#allocation2 + $0x1a30] sm:$0xff]
    %v1061 = vld [vmem:[#allocation2 + $0x1a38] sm:$0xff]
    %v1062 = vld [vmem:[#allocation2 + $0x1a40] sm:$0xff]
    %v1063 = vld [vmem:[#allocation2 + $0x1a48] sm:$0xff]
    %v1064 = vld [vmem:[#allocation2 + $0x1a50] sm:$0xff]
    %v1065 = vld [vmem:[#allocation2 + $0x1a58] sm:$0xff]
    %v1066 = vld [vmem:[#allocation2 + $0x1a60] sm:$0xff]
    %v1067 = vld [vmem:[#allocation2 + $0x1a68] sm:$0xff]
    %v1068 = vld [vmem:[#allocation2 + $0x1a70] sm:$0xff]
    %v1069 = vld [vmem:[#allocation2 + $0x1a78] sm:$0xff]
    %v1070 = vld [vmem:[#allocation2 + $0x1a80] sm:$0xff]
    %v1071 = vld [vmem:[#allocation2 + $0x1a88] sm:$0xff]
    %v1072 = vld [vmem:[#allocation2 + $0x1a90] sm:$0xff]
    %v1073 = vld [vmem:[#allocation2 + $0x1a98] sm:$0xff]
    %v1074 = vld [vmem:[#allocation2 + $0x1aa0] sm:$0xff]
    %v1075 = vld [vmem:[#allocation2 + $0x1aa8] sm:$0xff]
    %v1076 = vld [vmem:[#allocation2 + $0x1ab0] sm:$0xff]
    %v1077 = vld [vmem:[#allocation2 + $0x1ab8] sm:$0xff]
    %v1078 = vld [vmem:[#allocation2 + $0x1ac0] sm:$0xff]
    %v1079 = vld [vmem:[#allocation2 + $0x1ac8] sm:$0xff]
    %v1080 = vld [vmem:[#allocation2 + $0x1ad0] sm:$0xff]
    %v1081 = vld [vmem:[#allocation2 + $0x1ad8] sm:$0xff]
    %v1082 = vld [vmem:[#allocation2 + $0x1ae0] sm:$0xff]
    %v1083 = vld [vmem:[#allocation2 + $0x1ae8] sm:$0xff]
    %v1084 = vld [vmem:[#allocation2 + $0x1af0] sm:$0xff]
    %v1085 = vld [vmem:[#allocation2 + $0x1af8] sm:$0xff]
    %v1086 = vld [vmem:[#allocation2 + $0x1b00] sm:$0xff]
    %v1087 = vld [vmem:[#allocation2 + $0x1b08] sm:$0xff]
    %v1088 = vld [vmem:[#allocation2 + $0x1b10] sm:$0xff]
    %v1089 = vld [vmem:[#allocation2 + $0x1b18] sm:$0xff]
    %v1090 = vld [vmem:[#allocation2 + $0x1b20] sm:$0xff]
    %v1091 = vld [vmem:[#allocation2 + $0x1b28] sm:$0xff]
    %v1092 = vld [vmem:[#allocation2 + $0x1b30] sm:$0xff]
    %v1093 = vld [vmem:[#allocation2 + $0x1b38] sm:$0xff]
    %v1094 = vld [vmem:[#allocation2 + $0x1b40] sm:$0xff]
    %v1095 = vld [vmem:[#allocation2 + $0x1b48] sm:$0xff]
    %v1096 = vld [vmem:[#allocation2 + $0x1b50] sm:$0xff]
    %v1097 = vld [vmem:[#allocation2 + $0x1b58] sm:$0xff]
    %v1098 = vld [vmem:[#allocation2 + $0x1b60] sm:$0xff]
    %v1099 = vld [vmem:[#allocation2 + $0x1b68] sm:$0xff]
    %v1100 = vld [vmem:[#allocation2 + $0x1b70] sm:$0xff]
    %v1101 = vld [vmem:[#allocation2 + $0x1b78] sm:$0xff]
    %v1102 = vld [vmem:[#allocation2 + $0x1b80] sm:$0xff]
    %v1103 = vld [vmem:[#allocation2 + $0x1b88] sm:$0xff]
    %v1104 = vld [vmem:[#allocation2 + $0x1b90] sm:$0xff]
    %v1105 = vld [vmem:[#allocation2 + $0x1b98] sm:$0xff]
    %v1106 = vld [vmem:[#allocation2 + $0x1ba0] sm:$0xff]
    %v1107 = vld [vmem:[#allocation2 + $0x1ba8] sm:$0xff]
    %v1108 = vld [vmem:[#allocation2 + $0x1bb0] sm:$0xff]
    %v1109 = vld [vmem:[#allocation2 + $0x1bb8] sm:$0xff]
    %v1110 = vld [vmem:[#allocation2 + $0x1bc0] sm:$0xff]
    %v1111 = vld [vmem:[#allocation2 + $0x1bc8] sm:$0xff]
    %v1112 = vld [vmem:[#allocation2 + $0x1bd0] sm:$0xff]
    %v1113 = vld [vmem:[#allocation2 + $0x1bd8] sm:$0xff]
    %v1114 = vld [vmem:[#allocation2 + $0x1be0] sm:$0xff]
    %v1115 = vld [vmem:[#allocation2 + $0x1be8] sm:$0xff]
    %v1116 = vld [vmem:[#allocation2 + $0x1bf0] sm:$0xff]
    %v1117 = vld [vmem:[#allocation2 + $0x1bf8] sm:$0xff]
    %v1118 = vld [vmem:[#allocation2 + $0x1c00] sm:$0xff]
    %v1119 = vld [vmem:[#allocation2 + $0x1c08] sm:$0xff]
    %v1120 = vld [vmem:[#allocation2 + $0x1c10] sm:$0xff]
    %v1121 = vld [vmem:[#allocation2 + $0x1c18] sm:$0xff]
    %v1122 = vld [vmem:[#allocation2 + $0x1c20] sm:$0xff]
    %v1123 = vld [vmem:[#allocation2 + $0x1c28] sm:$0xff]
    %v1124 = vld [vmem:[#allocation2 + $0x1c30] sm:$0xff]
    %v1125 = vld [vmem:[#allocation2 + $0x1c38] sm:$0xff]
    %v1126 = vld [vmem:[#allocation2 + $0x1c40] sm:$0xff]
    %v1127 = vld [vmem:[#allocation2 + $0x1c48] sm:$0xff]
    %v1128 = vld [vmem:[#allocation2 + $0x1c50] sm:$0xff]
    %v1129 = vld [vmem:[#allocation2 + $0x1c58] sm:$0xff]
    %v1130 = vld [vmem:[#allocation2 + $0x1c60] sm:$0xff]
    %v1131 = vld [vmem:[#allocation2 + $0x1c68] sm:$0xff]
    %v1132 = vld [vmem:[#allocation2 + $0x1c70] sm:$0xff]
    %v1133 = vld [vmem:[#allocation2 + $0x1c78] sm:$0xff]
    %v1134 = vld [vmem:[#allocation2 + $0x1c80] sm:$0xff]
    %v1135 = vld [vmem:[#allocation2 + $0x1c88] sm:$0xff]
    %v1136 = vld [vmem:[#allocation2 + $0x1c90] sm:$0xff]
    %v1137 = vld [vmem:[#allocation2 + $0x1c98] sm:$0xff]
    %v1138 = vld [vmem:[#allocation2 + $0x1ca0] sm:$0xff]
    %v1139 = vld [vmem:[#allocation2 + $0x1ca8] sm:$0xff]
    %v1140 = vld [vmem:[#allocation2 + $0x1cb0] sm:$0xff]
    %v1141 = vld [vmem:[#allocation2 + $0x1cb8] sm:$0xff]
    %v1142 = vld [vmem:[#allocation2 + $0x1cc0] sm:$0xff]
    %v1143 = vld [vmem:[#allocation2 + $0x1cc8] sm:$0xff]
    %v1144 = vld [vmem:[#allocation2 + $0x1cd0] sm:$0xff]
    %v1145 = vld [vmem:[#allocation2 + $0x1cd8] sm:$0xff]
    %v1146 = vld [vmem:[#allocation2 + $0x1ce0] sm:$0xff]
    %v1147 = vld [vmem:[#allocation2 + $0x1ce8] sm:$0xff]
    %v1148 = vld [vmem:[#allocation2 + $0x1cf0] sm:$0xff]
    %v1149 = vld [vmem:[#allocation2 + $0x1cf8] sm:$0xff]
    %v1150 = vld [vmem:[#allocation2 + $0x1d00] sm:$0xff]
    %v1151 = vld [vmem:[#allocation2 + $0x1d08] sm:$0xff]
    %v1152 = vld [vmem:[#allocation2 + $0x1d10] sm:$0xff]
    %v1153 = vld [vmem:[#allocation2 + $0x1d18] sm:$0xff]
    %v1154 = vld [vmem:[#allocation2 + $0x1d20] sm:$0xff]
    %v1155 = vld [vmem:[#allocation2 + $0x1d28] sm:$0xff]
    %v1156 = vld [vmem:[#allocation2 + $0x1d30] sm:$0xff]
    %v1157 = vld [vmem:[#allocation2 + $0x1d38] sm:$0xff]
    %v1158 = vld [vmem:[#allocation2 + $0x1d40] sm:$0xff]
    %v1159 = vld [vmem:[#allocation2 + $0x1d48] sm:$0xff]
    %v1160 = vld [vmem:[#allocation2 + $0x1d50] sm:$0xff]
    %v1161 = vld [vmem:[#allocation2 + $0x1d58] sm:$0xff]
    %v1162 = vld [vmem:[#allocation2 + $0x1d60] sm:$0xff]
    %v1163 = vld [vmem:[#allocation2 + $0x1d68] sm:$0xff]
    %v1164 = vld [vmem:[#allocation2 + $0x1d70] sm:$0xff]
    %v1165 = vld [vmem:[#allocation2 + $0x1d78] sm:$0xff]
    %v1166 = vld [vmem:[#allocation2 + $0x1d80] sm:$0xff]
    %v1167 = vld [vmem:[#allocation2 + $0x1d88] sm:$0xff]
    %v1168 = vld [vmem:[#allocation2 + $0x1d90] sm:$0xff]
    %v1169 = vld [vmem:[#allocation2 + $0x1d98] sm:$0xff]
    %v1170 = vld [vmem:[#allocation2 + $0x1da0] sm:$0xff]
    %v1171 = vld [vmem:[#allocation2 + $0x1da8] sm:$0xff]
    %v1172 = vld [vmem:[#allocation2 + $0x1db0] sm:$0xff]
    %v1173 = vld [vmem:[#allocation2 + $0x1db8] sm:$0xff]
    %v1174 = vld [vmem:[#allocation2 + $0x1dc0] sm:$0xff]
    %v1175 = vld [vmem:[#allocation2 + $0x1dc8] sm:$0xff]
    %v1176 = vld [vmem:[#allocation2 + $0x1dd0] sm:$0xff]
    %v1177 = vld [vmem:[#allocation2 + $0x1dd8] sm:$0xff]
    %v1178 = vld [vmem:[#allocation2 + $0x1de0] sm:$0xff]
    %v1179 = vld [vmem:[#allocation2 + $0x1de8] sm:$0xff]
    %v1180 = vld [vmem:[#allocation2 + $0x1df0] sm:$0xff]
    %v1181 = vld [vmem:[#allocation2 + $0x1df8] sm:$0xff]
    %v1182 = vld [vmem:[#allocation2 + $0x1e00] sm:$0xff]
    %v1183 = vld [vmem:[#allocation2 + $0x1e08] sm:$0xff]
    %v1184 = vld [vmem:[#allocation2 + $0x1e10] sm:$0xff]
    %v1185 = vld [vmem:[#allocation2 + $0x1e18] sm:$0xff]
    %v1186 = vld [vmem:[#allocation2 + $0x1e20] sm:$0xff]
    %v1187 = vld [vmem:[#allocation2 + $0x1e28] sm:$0xff]
    %v1188 = vld [vmem:[#allocation2 + $0x1e30] sm:$0xff]
    %v1189 = vld [vmem:[#allocation2 + $0x1e38] sm:$0xff]
    %v1190 = vld [vmem:[#allocation2 + $0x1e40] sm:$0xff]
    %v1191 = vld [vmem:[#allocation2 + $0x1e48] sm:$0xff]
    %v1192 = vld [vmem:[#allocation2 + $0x1e50] sm:$0xff]
    %v1193 = vld [vmem:[#allocation2 + $0x1e58] sm:$0xff]
    %v1194 = vld [vmem:[#allocation2 + $0x1e60] sm:$0xff]
    %v1195 = vld [vmem:[#allocation2 + $0x1e68] sm:$0xff]
    %v1196 = vld [vmem:[#allocation2 + $0x1e70] sm:$0xff]
    %v1197 = vld [vmem:[#allocation2 + $0x1e78] sm:$0xff]
    %v1198 = vld [vmem:[#allocation2 + $0x1e80] sm:$0xff]
    %v1199 = vld [vmem:[#allocation2 + $0x1e88] sm:$0xff]
    %v1200 = vld [vmem:[#allocation2 + $0x1e90] sm:$0xff]
    %v1201 = vld [vmem:[#allocation2 + $0x1e98] sm:$0xff]
    %v1202 = vld [vmem:[#allocation2 + $0x1ea0] sm:$0xff]
    %v1203 = vld [vmem:[#allocation2 + $0x1ea8] sm:$0xff]
    %v1204 = vld [vmem:[#allocation2 + $0x1eb0] sm:$0xff]
    %v1205 = vld [vmem:[#allocation2 + $0x1eb8] sm:$0xff]
    %v1206 = vld [vmem:[#allocation2 + $0x1ec0] sm:$0xff]
    %v1207 = vld [vmem:[#allocation2 + $0x1ec8] sm:$0xff]
    %v1208 = vld [vmem:[#allocation2 + $0x1ed0] sm:$0xff]
    %v1209 = vld [vmem:[#allocation2 + $0x1ed8] sm:$0xff]
    %v1210 = vld [vmem:[#allocation2 + $0x1ee0] sm:$0xff]
    %v1211 = vld [vmem:[#allocation2 + $0x1ee8] sm:$0xff]
    %v1212 = vld [vmem:[#allocation2 + $0x1ef0] sm:$0xff]
    %v1213 = vld [vmem:[#allocation2 + $0x1ef8] sm:$0xff]
    %v1214 = vld [vmem:[#allocation2 + $0x1f00] sm:$0xff]
    %v1215 = vld [vmem:[#allocation2 + $0x1f08] sm:$0xff]
    %v1216 = vld [vmem:[#allocation2 + $0x1f10] sm:$0xff]
    %v1217 = vld [vmem:[#allocation2 + $0x1f18] sm:$0xff]
    %v1218 = vld [vmem:[#allocation2 + $0x1f20] sm:$0xff]
    %v1219 = vld [vmem:[#allocation2 + $0x1f28] sm:$0xff]
    %v1220 = vld [vmem:[#allocation2 + $0x1f30] sm:$0xff]
    %v1221 = vld [vmem:[#allocation2 + $0x1f38] sm:$0xff]
    %v1222 = vld [vmem:[#allocation2 + $0x1f40] sm:$0xff]
    %v1223 = vld [vmem:[#allocation2 + $0x1f48] sm:$0xff]
    %v1224 = vld [vmem:[#allocation2 + $0x1f50] sm:$0xff]
    %v1225 = vld [vmem:[#allocation2 + $0x1f58] sm:$0xff]
    %v1226 = vld [vmem:[#allocation2 + $0x1f60] sm:$0xff]
    %v1227 = vld [vmem:[#allocation2 + $0x1f68] sm:$0xff]
    %v1228 = vld [vmem:[#allocation2 + $0x1f70] sm:$0xff]
    %v1229 = vld [vmem:[#allocation2 + $0x1f78] sm:$0xff]
    %v1230 = vld [vmem:[#allocation2 + $0x1f80] sm:$0xff]
    %v1231 = vld [vmem:[#allocation2 + $0x1f88] sm:$0xff]
    %v1232 = vld [vmem:[#allocation2 + $0x1f90] sm:$0xff]
    %v1233 = vld [vmem:[#allocation2 + $0x1f98] sm:$0xff]
    %v1234 = vld [vmem:[#allocation2 + $0x1fa0] sm:$0xff]
    %v1235 = vld [vmem:[#allocation2 + $0x1fa8] sm:$0xff]
    %v1236 = vld [vmem:[#allocation2 + $0x1fb0] sm:$0xff]
    %v1237 = vld [vmem:[#allocation2 + $0x1fb8] sm:$0xff]
    %v1238 = vld [vmem:[#allocation2 + $0x1fc0] sm:$0xff]
    %v1239 = vld [vmem:[#allocation2 + $0x1fc8] sm:$0xff]
    %v1240 = vld [vmem:[#allocation2 + $0x1fd0] sm:$0xff]
    %v1241 = vld [vmem:[#allocation2 + $0x1fd8] sm:$0xff]
    %v1242 = vld [vmem:[#allocation2 + $0x1fe0] sm:$0xff]
    %v1243 = vld [vmem:[#allocation2 + $0x1fe8] sm:$0xff]
    %v1244 = vld [vmem:[#allocation2 + $0x1ff0] sm:$0xff]
    %v1245 = vld [vmem:[#allocation2 + $0x1ff8] sm:$0xff]
    %v1246 = vld [vmem:[#allocation2 + $0x2000] sm:$0xff]
    %v1247 = vld [vmem:[#allocation2 + $0x2008] sm:$0xff]
    %v1248 = vld [vmem:[#allocation2 + $0x2010] sm:$0xff]
    %v1249 = vld [vmem:[#allocation2 + $0x2018] sm:$0xff]
    %v1250 = vld [vmem:[#allocation2 + $0x2020] sm:$0xff]
    %v1251 = vld [vmem:[#allocation2 + $0x2028] sm:$0xff]
    %v1252 = vld [vmem:[#allocation2 + $0x2030] sm:$0xff]
    %v1253 = vld [vmem:[#allocation2 + $0x2038] sm:$0xff]
    %v1254 = vld [vmem:[#allocation2 + $0x2040] sm:$0xff]
    %v1255 = vld [vmem:[#allocation2 + $0x2048] sm:$0xff]
    %v1256 = vld [vmem:[#allocation2 + $0x2050] sm:$0xff]
    %v1257 = vld [vmem:[#allocation2 + $0x2058] sm:$0xff]
    %v1258 = vld [vmem:[#allocation2 + $0x2060] sm:$0xff]
    %v1259 = vld [vmem:[#allocation2 + $0x2068] sm:$0xff]
    %v1260 = vld [vmem:[#allocation2 + $0x2070] sm:$0xff]
    %v1261 = vld [vmem:[#allocation2 + $0x2078] sm:$0xff]
    %v1262 = vld [vmem:[#allocation2 + $0x2080] sm:$0xff]
    %v1263 = vld [vmem:[#allocation2 + $0x2088] sm:$0xff]
    %v1264 = vld [vmem:[#allocation2 + $0x2090] sm:$0xff]
    %v1265 = vld [vmem:[#allocation2 + $0x2098] sm:$0xff]
    %v1266 = vld [vmem:[#allocation2 + $0x20a0] sm:$0xff]
    %v1267 = vld [vmem:[#allocation2 + $0x20a8] sm:$0xff]
    %v1268 = vld [vmem:[#allocation2 + $0x20b0] sm:$0xff]
    %v1269 = vld [vmem:[#allocation2 + $0x20b8] sm:$0xff]
    %v1270 = vld [vmem:[#allocation2 + $0x20c0] sm:$0xff]
    %v1271 = vld [vmem:[#allocation2 + $0x20c8] sm:$0xff]
    %v1272 = vld [vmem:[#allocation2 + $0x20d0] sm:$0xff]
    %v1273 = vld [vmem:[#allocation2 + $0x20d8] sm:$0xff]
    %v1274 = vld [vmem:[#allocation2 + $0x20e0] sm:$0xff]
    %v1275 = vld [vmem:[#allocation2 + $0x20e8] sm:$0xff]
    %v1276 = vld [vmem:[#allocation2 + $0x20f0] sm:$0xff]
    %v1277 = vld [vmem:[#allocation2 + $0x20f8] sm:$0xff]
    %v1278 = vld [vmem:[#allocation2 + $0x2100] sm:$0xff]
    %v1279 = vld [vmem:[#allocation2 + $0x2108] sm:$0xff]
    %v1280 = vld [vmem:[#allocation2 + $0x2110] sm:$0xff]
    %v1281 = vld [vmem:[#allocation2 + $0x2118] sm:$0xff]
    %v1282 = vld [vmem:[#allocation2 + $0x2120] sm:$0xff]
    %v1283 = vld [vmem:[#allocation2 + $0x2128] sm:$0xff]
    %v1284 = vld [vmem:[#allocation2 + $0x2130] sm:$0xff]
    %v1285 = vld [vmem:[#allocation2 + $0x2138] sm:$0xff]
    %v1286 = vld [vmem:[#allocation2 + $0x2140] sm:$0xff]
    %v1287 = vld [vmem:[#allocation2 + $0x2148] sm:$0xff]
    %v1288 = vld [vmem:[#allocation2 + $0x2150] sm:$0xff]
    %v1289 = vld [vmem:[#allocation2 + $0x2158] sm:$0xff]
    %v1290 = vld [vmem:[#allocation2 + $0x2160] sm:$0xff]
    %v1291 = vld [vmem:[#allocation2 + $0x2168] sm:$0xff]
    %v1292 = vld [vmem:[#allocation2 + $0x2170] sm:$0xff]
    %v1293 = vld [vmem:[#allocation2 + $0x2178] sm:$0xff]
    %v1294 = vld [vmem:[#allocation2 + $0x2180] sm:$0xff]
    %v1295 = vld [vmem:[#allocation2 + $0x2188] sm:$0xff]
    %v1296 = vld [vmem:[#allocation2 + $0x2190] sm:$0xff]
    %v1297 = vld [vmem:[#allocation2 + $0x2198] sm:$0xff]
    %v1298 = vld [vmem:[#allocation2 + $0x21a0] sm:$0xff]
    %v1299 = vld [vmem:[#allocation2 + $0x21a8] sm:$0xff]
    %v1300 = vld [vmem:[#allocation2 + $0x21b0] sm:$0xff]
    %v1301 = vld [vmem:[#allocation2 + $0x21b8] sm:$0xff]
    %v1302 = vld [vmem:[#allocation2 + $0x21c0] sm:$0xff]
    %v1303 = vld [vmem:[#allocation2 + $0x21c8] sm:$0xff]
    %v1304 = vld [vmem:[#allocation2 + $0x21d0] sm:$0xff]
    %v1305 = vld [vmem:[#allocation2 + $0x21d8] sm:$0xff]
    %v1306 = vld [vmem:[#allocation2 + $0x21e0] sm:$0xff]
    %v1307 = vld [vmem:[#allocation2 + $0x21e8] sm:$0xff]
    %v1308 = vld [vmem:[#allocation2 + $0x21f0] sm:$0xff]
    %v1309 = vld [vmem:[#allocation2 + $0x21f8] sm:$0xff]
    %v1310 = vld [vmem:[#allocation2 + $0x2200] sm:$0xff]
    %v1311 = vld [vmem:[#allocation2 + $0x2208] sm:$0xff]
    %v1312 = vld [vmem:[#allocation2 + $0x2210] sm:$0xff]
    %v1313 = vld [vmem:[#allocation2 + $0x2218] sm:$0xff]
    %v1314 = vld [vmem:[#allocation2 + $0x2220] sm:$0xff]
    %v1315 = vld [vmem:[#allocation2 + $0x2228] sm:$0xff]
    %v1316 = vld [vmem:[#allocation2 + $0x2230] sm:$0xff]
    %v1317 = vld [vmem:[#allocation2 + $0x2238] sm:$0xff]
    %v1318 = vld [vmem:[#allocation2 + $0x2240] sm:$0xff]
    %v1319 = vld [vmem:[#allocation2 + $0x2248] sm:$0xff]
    %v1320 = vld [vmem:[#allocation2 + $0x2250] sm:$0xff]
    %v1321 = vld [vmem:[#allocation2 + $0x2258] sm:$0xff]
    %v1322 = vld [vmem:[#allocation2 + $0x2260] sm:$0xff]
    %v1323 = vld [vmem:[#allocation2 + $0x2268] sm:$0xff]
    %v1324 = vld [vmem:[#allocation2 + $0x2270] sm:$0xff]
    %v1325 = vld [vmem:[#allocation2 + $0x2278] sm:$0xff]
    %v1326 = vld [vmem:[#allocation2 + $0x2280] sm:$0xff]
    %v1327 = vld [vmem:[#allocation2 + $0x2288] sm:$0xff]
    %v1328 = vld [vmem:[#allocation2 + $0x2290] sm:$0xff]
    %v1329 = vld [vmem:[#allocation2 + $0x2298] sm:$0xff]
    %v1330 = vld [vmem:[#allocation2 + $0x22a0] sm:$0xff]
    %v1331 = vld [vmem:[#allocation2 + $0x22a8] sm:$0xff]
    %v1332 = vld [vmem:[#allocation2 + $0x22b0] sm:$0xff]
    %v1333 = vld [vmem:[#allocation2 + $0x22b8] sm:$0xff]
    %v1334 = vld [vmem:[#allocation2 + $0x22c0] sm:$0xff]
    %v1335 = vld [vmem:[#allocation2 + $0x22c8] sm:$0xff]
    %v1336 = vld [vmem:[#allocation2 + $0x22d0] sm:$0xff]
    %v1337 = vld [vmem:[#allocation2 + $0x22d8] sm:$0xff]
    %v1338 = vld [vmem:[#allocation2 + $0x22e0] sm:$0xff]
    %v1339 = vld [vmem:[#allocation2 + $0x22e8] sm:$0xff]
    %v1340 = vld [vmem:[#allocation2 + $0x22f0] sm:$0xff]
    %v1341 = vld [vmem:[#allocation2 + $0x22f8] sm:$0xff]
    %v1342 = vld [vmem:[#allocation2 + $0x2300] sm:$0xff]
    %v1343 = vld [vmem:[#allocation2 + $0x2308] sm:$0xff]
    %v1344 = vld [vmem:[#allocation2 + $0x2310] sm:$0xff]
    %v1345 = vld [vmem:[#allocation2 + $0x2318] sm:$0xff]
    %v1346 = vld [vmem:[#allocation2 + $0x2320] sm:$0xff]
    %v1347 = vld [vmem:[#allocation2 + $0x2328] sm:$0xff]
    %v1348 = vld [vmem:[#allocation2 + $0x2330] sm:$0xff]
    %v1349 = vld [vmem:[#allocation2 + $0x2338] sm:$0xff]
    %v1350 = vld [vmem:[#allocation2 + $0x2340] sm:$0xff]
    %v1351 = vld [vmem:[#allocation2 + $0x2348] sm:$0xff]
    %v1352 = vld [vmem:[#allocation2 + $0x2350] sm:$0xff]
    %v1353 = vld [vmem:[#allocation2 + $0x2358] sm:$0xff]
    %v1354 = vld [vmem:[#allocation2 + $0x2360] sm:$0xff]
    %v1355 = vld [vmem:[#allocation2 + $0x2368] sm:$0xff]
    %v1356 = vld [vmem:[#allocation2 + $0x2370] sm:$0xff]
    %v1357 = vld [vmem:[#allocation2 + $0x2378] sm:$0xff]
    %v1358 = vld [vmem:[#allocation2 + $0x2380] sm:$0xff]
    %v1359 = vld [vmem:[#allocation2 + $0x2388] sm:$0xff]
    %v1360 = vld [vmem:[#allocation2 + $0x2390] sm:$0xff]
    %v1361 = vld [vmem:[#allocation2 + $0x2398] sm:$0xff]
    %v1362 = vld [vmem:[#allocation2 + $0x23a0] sm:$0xff]
    %v1363 = vld [vmem:[#allocation2 + $0x23a8] sm:$0xff]
    %v1364 = vld [vmem:[#allocation2 + $0x23b0] sm:$0xff]
    %v1365 = vld [vmem:[#allocation2 + $0x23b8] sm:$0xff]
    %v1366 = vld [vmem:[#allocation2 + $0x23c0] sm:$0xff]
    %v1367 = vld [vmem:[#allocation2 + $0x23c8] sm:$0xff]
    %v1368 = vld [vmem:[#allocation2 + $0x23d0] sm:$0xff]
    %v1369 = vld [vmem:[#allocation2 + $0x23d8] sm:$0xff]
    %v1370 = vld [vmem:[#allocation2 + $0x23e0] sm:$0xff]
    %v1371 = vld [vmem:[#allocation2 + $0x23e8] sm:$0xff]
    %v1372 = vld [vmem:[#allocation2 + $0x23f0] sm:$0xff]
    %v1373 = vld [vmem:[#allocation2 + $0x23f8] sm:$0xff]
    %v1374 = vld [vmem:[#allocation2 + $0x2400] sm:$0xff]
    %v1375 = vld [vmem:[#allocation2 + $0x2408] sm:$0xff]
    %v1376 = vld [vmem:[#allocation2 + $0x2410] sm:$0xff]
    %v1377 = vld [vmem:[#allocation2 + $0x2418] sm:$0xff]
    %v1378 = vld [vmem:[#allocation2 + $0x2420] sm:$0xff]
    %v1379 = vld [vmem:[#allocation2 + $0x2428] sm:$0xff]
    %v1380 = vld [vmem:[#allocation2 + $0x2430] sm:$0xff]
    %v1381 = vld [vmem:[#allocation2 + $0x2438] sm:$0xff]
    %v1382 = vld [vmem:[#allocation2 + $0x2440] sm:$0xff]
    %v1383 = vld [vmem:[#allocation2 + $0x2448] sm:$0xff]
    %v1384 = vld [vmem:[#allocation2 + $0x2450] sm:$0xff]
    %v1385 = vld [vmem:[#allocation2 + $0x2458] sm:$0xff]
    %v1386 = vld [vmem:[#allocation2 + $0x2460] sm:$0xff]
    %v1387 = vld [vmem:[#allocation2 + $0x2468] sm:$0xff]
    %v1388 = vld [vmem:[#allocation2 + $0x2470] sm:$0xff]
    %v1389 = vld [vmem:[#allocation2 + $0x2478] sm:$0xff]
    %v1390 = vld [vmem:[#allocation2 + $0x2480] sm:$0xff]
    %v1391 = vld [vmem:[#allocation2 + $0x2488] sm:$0xff]
    %v1392 = vld [vmem:[#allocation2 + $0x2490] sm:$0xff]
    %v1393 = vld [vmem:[#allocation2 + $0x2498] sm:$0xff]
    %v1394 = vld [vmem:[#allocation2 + $0x24a0] sm:$0xff]
    %v1395 = vld [vmem:[#allocation2 + $0x24a8] sm:$0xff]
    %v1396 = vld [vmem:[#allocation2 + $0x24b0] sm:$0xff]
    %v1397 = vld [vmem:[#allocation2 + $0x24b8] sm:$0xff]
    %v1398 = vld [vmem:[#allocation2 + $0x24c0] sm:$0xff]
    %v1399 = vld [vmem:[#allocation2 + $0x24c8] sm:$0xff]
    %v1400 = vld [vmem:[#allocation2 + $0x24d0] sm:$0xff]
    %v1401 = vld [vmem:[#allocation2 + $0x24d8] sm:$0xff]
    %v1402 = vld [vmem:[#allocation2 + $0x24e0] sm:$0xff]
    %v1403 = vld [vmem:[#allocation2 + $0x24e8] sm:$0xff]
    %v1404 = vld [vmem:[#allocation2 + $0x24f0] sm:$0xff]
    %v1405 = vld [vmem:[#allocation2 + $0x24f8] sm:$0xff]
    %v1406 = vld [vmem:[#allocation2 + $0x2500] sm:$0xff]
    %v1407 = vld [vmem:[#allocation2 + $0x2508] sm:$0xff]
    %v1408 = vld [vmem:[#allocation2 + $0x2510] sm:$0xff]
    %v1409 = vld [vmem:[#allocation2 + $0x2518] sm:$0xff]
    %v1410 = vld [vmem:[#allocation2 + $0x2520] sm:$0xff]
    %v1411 = vld [vmem:[#allocation2 + $0x2528] sm:$0xff]
    %v1412 = vld [vmem:[#allocation2 + $0x2530] sm:$0xff]
    %v1413 = vld [vmem:[#allocation2 + $0x2538] sm:$0xff]
    %v1414 = vld [vmem:[#allocation2 + $0x2540] sm:$0xff]
    %v1415 = vld [vmem:[#allocation2 + $0x2548] sm:$0xff]
    %v1416 = vld [vmem:[#allocation2 + $0x2550] sm:$0xff]
    %v1417 = vld [vmem:[#allocation2 + $0x2558] sm:$0xff]
    %v1418 = vld [vmem:[#allocation2 + $0x2560] sm:$0xff]
    %v1419 = vld [vmem:[#allocation2 + $0x2568] sm:$0xff]
    %v1420 = vld [vmem:[#allocation2 + $0x2570] sm:$0xff]
    %v1421 = vld [vmem:[#allocation2 + $0x2578] sm:$0xff]
    %v1422 = vld [vmem:[#allocation2 + $0x2580] sm:$0xff]
    %v1423 = vld [vmem:[#allocation2 + $0x2588] sm:$0xff]
    %v1424 = vld [vmem:[#allocation2 + $0x2590] sm:$0xff]
    %v1425 = vld [vmem:[#allocation2 + $0x2598] sm:$0xff]
    %v1426 = vld [vmem:[#allocation2 + $0x25a0] sm:$0xff]
    %v1427 = vld [vmem:[#allocation2 + $0x25a8] sm:$0xff]
    %v1428 = vld [vmem:[#allocation2 + $0x25b0] sm:$0xff]
    %v1429 = vld [vmem:[#allocation2 + $0x25b8] sm:$0xff]
    %v1430 = vld [vmem:[#allocation2 + $0x25c0] sm:$0xff]
    %v1431 = vld [vmem:[#allocation2 + $0x25c8] sm:$0xff]
    %v1432 = vld [vmem:[#allocation2 + $0x25d0] sm:$0xff]
    %v1433 = vld [vmem:[#allocation2 + $0x25d8] sm:$0xff]
    %v1434 = vld [vmem:[#allocation2 + $0x25e0] sm:$0xff]
    %v1435 = vld [vmem:[#allocation2 + $0x25e8] sm:$0xff]
    %v1436 = vld [vmem:[#allocation2 + $0x25f0] sm:$0xff]
    %v1437 = vld [vmem:[#allocation2 + $0x25f8] sm:$0xff]
    %v1438 = vld [vmem:[#allocation2 + $0x2600] sm:$0xff]
    %v1439 = vld [vmem:[#allocation2 + $0x2608] sm:$0xff]
    %v1440 = vld [vmem:[#allocation2 + $0x2610] sm:$0xff]
    %v1441 = vld [vmem:[#allocation2 + $0x2618] sm:$0xff]
    %v1442 = vld [vmem:[#allocation2 + $0x2620] sm:$0xff]
    %v1443 = vld [vmem:[#allocation2 + $0x2628] sm:$0xff]
    %v1444 = vld [vmem:[#allocation2 + $0x2630] sm:$0xff]
    %v1445 = vld [vmem:[#allocation2 + $0x2638] sm:$0xff]
    %v1446 = vld [vmem:[#allocation2 + $0x2640] sm:$0xff]
    %v1447 = vld [vmem:[#allocation2 + $0x2648] sm:$0xff]
    %v1448 = vld [vmem:[#allocation2 + $0x2650] sm:$0xff]
    %v1449 = vld [vmem:[#allocation2 + $0x2658] sm:$0xff]
    %v1450 = vld [vmem:[#allocation2 + $0x2660] sm:$0xff]
    %v1451 = vld [vmem:[#allocation2 + $0x2668] sm:$0xff]
    %v1452 = vld [vmem:[#allocation2 + $0x2670] sm:$0xff]
    %v1453 = vld [vmem:[#allocation2 + $0x2678] sm:$0xff]
    %v1454 = vld [vmem:[#allocation2 + $0x2680] sm:$0xff]
    %v1455 = vld [vmem:[#allocation2 + $0x2688] sm:$0xff]
    %v1456 = vld [vmem:[#allocation2 + $0x2690] sm:$0xff]
    %v1457 = vld [vmem:[#allocation2 + $0x2698] sm:$0xff]
    %v1458 = vld [vmem:[#allocation2 + $0x26a0] sm:$0xff]
    %v1459 = vld [vmem:[#allocation2 + $0x26a8] sm:$0xff]
    %v1460 = vld [vmem:[#allocation2 + $0x26b0] sm:$0xff]
    %v1461 = vld [vmem:[#allocation2 + $0x26b8] sm:$0xff]
    %v1462 = vld [vmem:[#allocation2 + $0x26c0] sm:$0xff]
    %v1463 = vld [vmem:[#allocation2 + $0x26c8] sm:$0xff]
    %v1464 = vld [vmem:[#allocation2 + $0x26d0] sm:$0xff]
    %v1465 = vld [vmem:[#allocation2 + $0x26d8] sm:$0xff]
    %v1466 = vld [vmem:[#allocation2 + $0x26e0] sm:$0xff]
    %v1467 = vld [vmem:[#allocation2 + $0x26e8] sm:$0xff]
    %v1468 = vld [vmem:[#allocation2 + $0x26f0] sm:$0xff]
    %v1469 = vld [vmem:[#allocation2 + $0x26f8] sm:$0xff]
    %v1470 = vld [vmem:[#allocation2 + $0x2700] sm:$0xff]
    %v1471 = vld [vmem:[#allocation2 + $0x2708] sm:$0xff]
    %v1472 = vld [vmem:[#allocation2 + $0x2710] sm:$0xff]
    %v1473 = vld [vmem:[#allocation2 + $0x2718] sm:$0xff]
    %v1474 = vld [vmem:[#allocation2 + $0x2720] sm:$0xff]
    %v1475 = vld [vmem:[#allocation2 + $0x2728] sm:$0xff]
    %v1476 = vld [vmem:[#allocation2 + $0x2730] sm:$0xff]
    %v1477 = vld [vmem:[#allocation2 + $0x2738] sm:$0xff]
    %v1478 = vld [vmem:[#allocation2 + $0x2740] sm:$0xff]
    %v1479 = vld [vmem:[#allocation2 + $0x2748] sm:$0xff]
    %v1480 = vld [vmem:[#allocation2 + $0x2750] sm:$0xff]
    %v1481 = vld [vmem:[#allocation2 + $0x2758] sm:$0xff]
    %v1482 = vld [vmem:[#allocation2 + $0x2760] sm:$0xff]
    %v1483 = vld [vmem:[#allocation2 + $0x2768] sm:$0xff]
    %v1484 = vld [vmem:[#allocation2 + $0x2770] sm:$0xff]
    %v1485 = vld [vmem:[#allocation2 + $0x2778] sm:$0xff]
    %v1486 = vld [vmem:[#allocation2 + $0x2780] sm:$0xff]
    %v1487 = vld [vmem:[#allocation2 + $0x2788] sm:$0xff]
    %v1488 = vld [vmem:[#allocation2 + $0x2790] sm:$0xff]
    %v1489 = vld [vmem:[#allocation2 + $0x2798] sm:$0xff]
    %v1490 = vld [vmem:[#allocation2 + $0x27a0] sm:$0xff]
    %v1491 = vld [vmem:[#allocation2 + $0x27a8] sm:$0xff]
    %v1492 = vld [vmem:[#allocation2 + $0x27b0] sm:$0xff]
    %v1493 = vld [vmem:[#allocation2 + $0x27b8] sm:$0xff]
    %v1494 = vld [vmem:[#allocation2 + $0x27c0] sm:$0xff]
    %v1495 = vld [vmem:[#allocation2 + $0x27c8] sm:$0xff]
    %v1496 = vld [vmem:[#allocation2 + $0x27d0] sm:$0xff]
    %v1497 = vld [vmem:[#allocation2 + $0x27d8] sm:$0xff]
    %v1498 = vld [vmem:[#allocation2 + $0x27e0] sm:$0xff]
    %v1499 = vld [vmem:[#allocation2 + $0x27e8] sm:$0xff]
    %v1500 = vld [vmem:[#allocation2 + $0x27f0] sm:$0xff]
    %v1501 = vld [vmem:[#allocation2 + $0x27f8] sm:$0xff]
    %v1502 = vld [vmem:[#allocation2 + $0x2800] sm:$0xff]
    %v1503 = vld [vmem:[#allocation2 + $0x2808] sm:$0xff]
    %v1504 = vld [vmem:[#allocation2 + $0x2810] sm:$0xff]
    %v1505 = vld [vmem:[#allocation2 + $0x2818] sm:$0xff]
    %v1506 = vld [vmem:[#allocation2 + $0x2820] sm:$0xff]
    %v1507 = vld [vmem:[#allocation2 + $0x2828] sm:$0xff]
    %v1508 = vld [vmem:[#allocation2 + $0x2830] sm:$0xff]
    %v1509 = vld [vmem:[#allocation2 + $0x2838] sm:$0xff]
    %v1510 = vld [vmem:[#allocation2 + $0x2840] sm:$0xff]
    %v1511 = vld [vmem:[#allocation2 + $0x2848] sm:$0xff]
    %v1512 = vld [vmem:[#allocation2 + $0x2850] sm:$0xff]
    %v1513 = vld [vmem:[#allocation2 + $0x2858] sm:$0xff]
    %v1514 = vld [vmem:[#allocation2 + $0x2860] sm:$0xff]
    %v1515 = vld [vmem:[#allocation2 + $0x2868] sm:$0xff]
    %v1516 = vld [vmem:[#allocation2 + $0x2870] sm:$0xff]
    %v1517 = vld [vmem:[#allocation2 + $0x2878] sm:$0xff]
    %v1518 = vld [vmem:[#allocation2 + $0x2880] sm:$0xff]
    %v1519 = vld [vmem:[#allocation2 + $0x2888] sm:$0xff]
    %v1520 = vld [vmem:[#allocation2 + $0x2890] sm:$0xff]
    %v1521 = vld [vmem:[#allocation2 + $0x2898] sm:$0xff]
    %v1522 = vld [vmem:[#allocation2 + $0x28a0] sm:$0xff]
    %v1523 = vld [vmem:[#allocation2 + $0x28a8] sm:$0xff]
    %v1524 = vld [vmem:[#allocation2 + $0x28b0] sm:$0xff]
    %v1525 = vld [vmem:[#allocation2 + $0x28b8] sm:$0xff]
    %v1526 = vld [vmem:[#allocation2 + $0x28c0] sm:$0xff]
    %v1527 = vld [vmem:[#allocation2 + $0x28c8] sm:$0xff]
    %v1528 = vld [vmem:[#allocation2 + $0x28d0] sm:$0xff]
    %v1529 = vld [vmem:[#allocation2 + $0x28d8] sm:$0xff]
    %v1530 = vld [vmem:[#allocation2 + $0x28e0] sm:$0xff]
    %v1531 = vld [vmem:[#allocation2 + $0x28e8] sm:$0xff]
    %v1532 = vld [vmem:[#allocation2 + $0x28f0] sm:$0xff]
    %v1533 = vld [vmem:[#allocation2 + $0x28f8] sm:$0xff]
    %v1534 = vld [vmem:[#allocation2 + $0x2900] sm:$0xff]
    %v1535 = vld [vmem:[#allocation2 + $0x2908] sm:$0xff]
    %v1536 = vld [vmem:[#allocation2 + $0x2910] sm:$0xff]
    %v1537 = vld [vmem:[#allocation2 + $0x2918] sm:$0xff]
    %v1538 = vld [vmem:[#allocation2 + $0x2920] sm:$0xff]
    %v1539 = vld [vmem:[#allocation2 + $0x2928] sm:$0xff]
    %v1540 = vld [vmem:[#allocation2 + $0x2930] sm:$0xff]
    %v1541 = vld [vmem:[#allocation2 + $0x2938] sm:$0xff]
    %v1542 = vld [vmem:[#allocation2 + $0x2940] sm:$0xff]
    %v1543 = vld [vmem:[#allocation2 + $0x2948] sm:$0xff]
    %v1544 = vld [vmem:[#allocation2 + $0x2950] sm:$0xff]
    %v1545 = vld [vmem:[#allocation2 + $0x2958] sm:$0xff]
    %v1546 = vld [vmem:[#allocation2 + $0x2960] sm:$0xff]
    %v1547 = vld [vmem:[#allocation2 + $0x2968] sm:$0xff]
    %v1548 = vld [vmem:[#allocation2 + $0x2970] sm:$0xff]
    %v1549 = vld [vmem:[#allocation2 + $0x2978] sm:$0xff]
    %v1550 = vld [vmem:[#allocation2 + $0x2980] sm:$0xff]
    %v1551 = vld [vmem:[#allocation2 + $0x2988] sm:$0xff]
    %v1552 = vld [vmem:[#allocation2 + $0x2990] sm:$0xff]
    %v1553 = vld [vmem:[#allocation2 + $0x2998] sm:$0xff]
    %v1554 = vld [vmem:[#allocation2 + $0x29a0] sm:$0xff]
    %v1555 = vld [vmem:[#allocation2 + $0x29a8] sm:$0xff]
    %v1556 = vld [vmem:[#allocation2 + $0x29b0] sm:$0xff]
    %v1557 = vld [vmem:[#allocation2 + $0x29b8] sm:$0xff]
    %v1558 = vld [vmem:[#allocation2 + $0x29c0] sm:$0xff]
    %v1559 = vld [vmem:[#allocation2 + $0x29c8] sm:$0xff]
    %v1560 = vld [vmem:[#allocation2 + $0x29d0] sm:$0xff]
    %v1561 = vld [vmem:[#allocation2 + $0x29d8] sm:$0xff]
    %v1562 = vld [vmem:[#allocation2 + $0x29e0] sm:$0xff]
    %v1563 = vld [vmem:[#allocation2 + $0x29e8] sm:$0xff]
    %v1564 = vld [vmem:[#allocation2 + $0x29f0] sm:$0xff]
    %v1565 = vld [vmem:[#allocation2 + $0x29f8] sm:$0xff]
    %v1566 = vld [vmem:[#allocation2 + $0x2a00] sm:$0xff]
    %v1567 = vld [vmem:[#allocation2 + $0x2a08] sm:$0xff]
    %v1568 = vld [vmem:[#allocation2 + $0x2a10] sm:$0xff]
    %v1569 = vld [vmem:[#allocation2 + $0x2a18] sm:$0xff]
    %v1570 = vld [vmem:[#allocation2 + $0x2a20] sm:$0xff]
    %v1571 = vld [vmem:[#allocation2 + $0x2a28] sm:$0xff]
    %v1572 = vld [vmem:[#allocation2 + $0x2a30] sm:$0xff]
    %v1573 = vld [vmem:[#allocation2 + $0x2a38] sm:$0xff]
    %v1574 = vld [vmem:[#allocation2 + $0x2a40] sm:$0xff]
    %v1575 = vld [vmem:[#allocation2 + $0x2a48] sm:$0xff]
    %v1576 = vld [vmem:[#allocation2 + $0x2a50] sm:$0xff]
    %v1577 = vld [vmem:[#allocation2 + $0x2a58] sm:$0xff]
    %v1578 = vld [vmem:[#allocation2 + $0x2a60] sm:$0xff]
    %v1579 = vld [vmem:[#allocation2 + $0x2a68] sm:$0xff]
    %v1580 = vld [vmem:[#allocation2 + $0x2a70] sm:$0xff]
    %v1581 = vld [vmem:[#allocation2 + $0x2a78] sm:$0xff]
    %v1582 = vld [vmem:[#allocation2 + $0x2a80] sm:$0xff]
    %v1583 = vld [vmem:[#allocation2 + $0x2a88] sm:$0xff]
    %v1584 = vld [vmem:[#allocation2 + $0x2a90] sm:$0xff]
    %v1585 = vld [vmem:[#allocation2 + $0x2a98] sm:$0xff]
    %v1586 = vld [vmem:[#allocation2 + $0x2aa0] sm:$0xff]
    %v1587 = vld [vmem:[#allocation2 + $0x2aa8] sm:$0xff]
    %v1588 = vld [vmem:[#allocation2 + $0x2ab0] sm:$0xff]
    %v1589 = vld [vmem:[#allocation2 + $0x2ab8] sm:$0xff]
    %v1590 = vld [vmem:[#allocation2 + $0x2ac0] sm:$0xff]
    %v1591 = vld [vmem:[#allocation2 + $0x2ac8] sm:$0xff]
    %v1592 = vld [vmem:[#allocation2 + $0x2ad0] sm:$0xff]
    %v1593 = vld [vmem:[#allocation2 + $0x2ad8] sm:$0xff]
    %v1594 = vld [vmem:[#allocation2 + $0x2ae0] sm:$0xff]
    %v1595 = vld [vmem:[#allocation2 + $0x2ae8] sm:$0xff]
    %v1596 = vld [vmem:[#allocation2 + $0x2af0] sm:$0xff]
    %v1597 = vld [vmem:[#allocation2 + $0x2af8] sm:$0xff]
    %v1598 = vld [vmem:[#allocation2 + $0x2b00] sm:$0xff]
    %v1599 = vld [vmem:[#allocation2 + $0x2b08] sm:$0xff]
    %v1600 = vld [vmem:[#allocation2 + $0x2b10] sm:$0xff]
    %v1601 = vld [vmem:[#allocation2 + $0x2b18] sm:$0xff]
    %v1602 = vld [vmem:[#allocation2 + $0x2b20] sm:$0xff]
    %v1603 = vld [vmem:[#allocation2 + $0x2b28] sm:$0xff]
    %v1604 = vld [vmem:[#allocation2 + $0x2b30] sm:$0xff]
    %v1605 = vld [vmem:[#allocation2 + $0x2b38] sm:$0xff]
    %v1606 = vld [vmem:[#allocation2 + $0x2b40] sm:$0xff]
    %v1607 = vld [vmem:[#allocation2 + $0x2b48] sm:$0xff]
    %v1608 = vld [vmem:[#allocation2 + $0x2b50] sm:$0xff]
    %v1609 = vld [vmem:[#allocation2 + $0x2b58] sm:$0xff]
    %v1610 = vld [vmem:[#allocation2 + $0x2b60] sm:$0xff]
    %v1611 = vld [vmem:[#allocation2 + $0x2b68] sm:$0xff]
    %v1612 = vld [vmem:[#allocation2 + $0x2b70] sm:$0xff]
    %v1613 = vld [vmem:[#allocation2 + $0x2b78] sm:$0xff]
    %v1614 = vld [vmem:[#allocation2 + $0x2b80] sm:$0xff]
    %v1615 = vld [vmem:[#allocation2 + $0x2b88] sm:$0xff]
    %v1616 = vld [vmem:[#allocation2 + $0x2b90] sm:$0xff]
    %v1617 = vld [vmem:[#allocation2 + $0x2b98] sm:$0xff]
    %v1618 = vld [vmem:[#allocation2 + $0x2ba0] sm:$0xff]
    %v1619 = vld [vmem:[#allocation2 + $0x2ba8] sm:$0xff]
    %v1620 = vld [vmem:[#allocation2 + $0x2bb0] sm:$0xff]
    %v1621 = vld [vmem:[#allocation2 + $0x2bb8] sm:$0xff]
    %v1622 = vld [vmem:[#allocation2 + $0x2bc0] sm:$0xff]
    %v1623 = vld [vmem:[#allocation2 + $0x2bc8] sm:$0xff]
    %v1624 = vld [vmem:[#allocation2 + $0x2bd0] sm:$0xff]
    %v1625 = vld [vmem:[#allocation2 + $0x2bd8] sm:$0xff]
    %v1626 = vld [vmem:[#allocation2 + $0x2be0] sm:$0xff]
    %v1627 = vld [vmem:[#allocation2 + $0x2be8] sm:$0xff]
    %v1628 = vld [vmem:[#allocation2 + $0x2bf0] sm:$0xff]
    %v1629 = vld [vmem:[#allocation2 + $0x2bf8] sm:$0xff]
    %v1630 = vld [vmem:[#allocation2 + $0x2c00] sm:$0xff]
    %v1631 = vld [vmem:[#allocation2 + $0x2c08] sm:$0xff]
    %v1632 = vld [vmem:[#allocation2 + $0x2c10] sm:$0xff]
    %v1633 = vld [vmem:[#allocation2 + $0x2c18] sm:$0xff]
    %v1634 = vld [vmem:[#allocation2 + $0x2c20] sm:$0xff]
    %v1635 = vld [vmem:[#allocation2 + $0x2c28] sm:$0xff]
    %v1636 = vld [vmem:[#allocation2 + $0x2c30] sm:$0xff]
    %v1637 = vld [vmem:[#allocation2 + $0x2c38] sm:$0xff]
    %v1638 = vld [vmem:[#allocation2 + $0x2c40] sm:$0xff]
    %v1639 = vld [vmem:[#allocation2 + $0x2c48] sm:$0xff]
    %v1640 = vld [vmem:[#allocation2 + $0x2c50] sm:$0xff]
    %v1641 = vld [vmem:[#allocation2 + $0x2c58] sm:$0xff]
    %v1642 = vld [vmem:[#allocation2 + $0x2c60] sm:$0xff]
    %v1643 = vld [vmem:[#allocation2 + $0x2c68] sm:$0xff]
    %v1644 = vld [vmem:[#allocation2 + $0x2c70] sm:$0xff]
    %v1645 = vld [vmem:[#allocation2 + $0x2c78] sm:$0xff]
    %v1646 = vld [vmem:[#allocation2 + $0x2c80] sm:$0xff]
    %v1647 = vld [vmem:[#allocation2 + $0x2c88] sm:$0xff]
    %v1648 = vld [vmem:[#allocation2 + $0x2c90] sm:$0xff]
    %v1649 = vld [vmem:[#allocation2 + $0x2c98] sm:$0xff]
    %v1650 = vld [vmem:[#allocation2 + $0x2ca0] sm:$0xff]
    %v1651 = vld [vmem:[#allocation2 + $0x2ca8] sm:$0xff]
    %v1652 = vld [vmem:[#allocation2 + $0x2cb0] sm:$0xff]
    %v1653 = vld [vmem:[#allocation2 + $0x2cb8] sm:$0xff]
    %v1654 = vld [vmem:[#allocation2 + $0x2cc0] sm:$0xff]
    %v1655 = vld [vmem:[#allocation2 + $0x2cc8] sm:$0xff]
    %v1656 = vld [vmem:[#allocation2 + $0x2cd0] sm:$0xff]
    %v1657 = vld [vmem:[#allocation2 + $0x2cd8] sm:$0xff]
    %v1658 = vld [vmem:[#allocation2 + $0x2ce0] sm:$0xff]
    %v1659 = vld [vmem:[#allocation2 + $0x2ce8] sm:$0xff]
    %v1660 = vld [vmem:[#allocation2 + $0x2cf0] sm:$0xff]
    %v1661 = vld [vmem:[#allocation2 + $0x2cf8] sm:$0xff]
    %v1662 = vld [vmem:[#allocation2 + $0x2d00] sm:$0xff]
    %v1663 = vld [vmem:[#allocation2 + $0x2d08] sm:$0xff]
    %v1664 = vld [vmem:[#allocation2 + $0x2d10] sm:$0xff]
    %v1665 = vld [vmem:[#allocation2 + $0x2d18] sm:$0xff]
    %v1666 = vld [vmem:[#allocation2 + $0x2d20] sm:$0xff]
    %v1667 = vld [vmem:[#allocation2 + $0x2d28] sm:$0xff]
    %v1668 = vld [vmem:[#allocation2 + $0x2d30] sm:$0xff]
    %v1669 = vld [vmem:[#allocation2 + $0x2d38] sm:$0xff]
    %v1670 = vld [vmem:[#allocation2 + $0x2d40] sm:$0xff]
    %v1671 = vld [vmem:[#allocation2 + $0x2d48] sm:$0xff]
    %v1672 = vld [vmem:[#allocation2 + $0x2d50] sm:$0xff]
    %v1673 = vld [vmem:[#allocation2 + $0x2d58] sm:$0xff]
    %v1674 = vld [vmem:[#allocation2 + $0x2d60] sm:$0xff]
    %v1675 = vld [vmem:[#allocation2 + $0x2d68] sm:$0xff]
    %v1676 = vld [vmem:[#allocation2 + $0x2d70] sm:$0xff]
    %v1677 = vld [vmem:[#allocation2 + $0x2d78] sm:$0xff]
    %v1678 = vld [vmem:[#allocation2 + $0x2d80] sm:$0xff]
    %v1679 = vld [vmem:[#allocation2 + $0x2d88] sm:$0xff]
    %v1680 = vld [vmem:[#allocation2 + $0x2d90] sm:$0xff]
    %v1681 = vld [vmem:[#allocation2 + $0x2d98] sm:$0xff]
    %v1682 = vld [vmem:[#allocation2 + $0x2da0] sm:$0xff]
    %v1683 = vld [vmem:[#allocation2 + $0x2da8] sm:$0xff]
    %v1684 = vld [vmem:[#allocation2 + $0x2db0] sm:$0xff]
    %v1685 = vld [vmem:[#allocation2 + $0x2db8] sm:$0xff]
    %v1686 = vld [vmem:[#allocation2 + $0x2dc0] sm:$0xff]
    %v1687 = vld [vmem:[#allocation2 + $0x2dc8] sm:$0xff]
    %v1688 = vld [vmem:[#allocation2 + $0x2dd0] sm:$0xff]
    %v1689 = vld [vmem:[#allocation2 + $0x2dd8] sm:$0xff]
    %v1690 = vld [vmem:[#allocation2 + $0x2de0] sm:$0xff]
    %v1691 = vld [vmem:[#allocation2 + $0x2de8] sm:$0xff]
    %v1692 = vld [vmem:[#allocation2 + $0x2df0] sm:$0xff]
    %v1693 = vld [vmem:[#allocation2 + $0x2df8] sm:$0xff]
    %v1694 = vld [vmem:[#allocation2 + $0x2e00] sm:$0xff]
    %v1695 = vld [vmem:[#allocation2 + $0x2e08] sm:$0xff]
    %v1696 = vld [vmem:[#allocation2 + $0x2e10] sm:$0xff]
    %v1697 = vld [vmem:[#allocation2 + $0x2e18] sm:$0xff]
    %v1698 = vld [vmem:[#allocation2 + $0x2e20] sm:$0xff]
    %v1699 = vld [vmem:[#allocation2 + $0x2e28] sm:$0xff]
    %v1700 = vld [vmem:[#allocation2 + $0x2e30] sm:$0xff]
    %v1701 = vld [vmem:[#allocation2 + $0x2e38] sm:$0xff]
    %v1702 = vld [vmem:[#allocation2 + $0x2e40] sm:$0xff]
    %v1703 = vld [vmem:[#allocation2 + $0x2e48] sm:$0xff]
    %v1704 = vld [vmem:[#allocation2 + $0x2e50] sm:$0xff]
    %v1705 = vld [vmem:[#allocation2 + $0x2e58] sm:$0xff]
    %v1706 = vld [vmem:[#allocation2 + $0x2e60] sm:$0xff]
    %v1707 = vld [vmem:[#allocation2 + $0x2e68] sm:$0xff]
    %v1708 = vld [vmem:[#allocation2 + $0x2e70] sm:$0xff]
    %v1709 = vld [vmem:[#allocation2 + $0x2e78] sm:$0xff]
    %v1710 = vld [vmem:[#allocation2 + $0x2e80] sm:$0xff]
    %v1711 = vld [vmem:[#allocation2 + $0x2e88] sm:$0xff]
    %v1712 = vld [vmem:[#allocation2 + $0x2e90] sm:$0xff]
    %v1713 = vld [vmem:[#allocation2 + $0x2e98] sm:$0xff]
    %v1714 = vld [vmem:[#allocation2 + $0x2ea0] sm:$0xff]
    %v1715 = vld [vmem:[#allocation2 + $0x2ea8] sm:$0xff]
    %v1716 = vld [vmem:[#allocation2 + $0x2eb0] sm:$0xff]
    %v1717 = vld [vmem:[#allocation2 + $0x2eb8] sm:$0xff]
    %v1718 = vld [vmem:[#allocation2 + $0x2ec0] sm:$0xff]
    %v1719 = vld [vmem:[#allocation2 + $0x2ec8] sm:$0xff]
    %v1720 = vld [vmem:[#allocation2 + $0x2ed0] sm:$0xff]
    %v1721 = vld [vmem:[#allocation2 + $0x2ed8] sm:$0xff]
    %v1722 = vld [vmem:[#allocation2 + $0x2ee0] sm:$0xff]
    %v1723 = vld [vmem:[#allocation2 + $0x2ee8] sm:$0xff]
    %v1724 = vld [vmem:[#allocation2 + $0x2ef0] sm:$0xff]
    %v1725 = vld [vmem:[#allocation2 + $0x2ef8] sm:$0xff]
    %v1726 = vld [vmem:[#allocation2 + $0x2f00] sm:$0xff]
    %v1727 = vld [vmem:[#allocation2 + $0x2f08] sm:$0xff]
    %v1728 = vld [vmem:[#allocation2 + $0x2f10] sm:$0xff]
    %v1729 = vld [vmem:[#allocation2 + $0x2f18] sm:$0xff]
    %v1730 = vld [vmem:[#allocation2 + $0x2f20] sm:$0xff]
    %v1731 = vld [vmem:[#allocation2 + $0x2f28] sm:$0xff]
    %v1732 = vld [vmem:[#allocation2 + $0x2f30] sm:$0xff]
    %v1733 = vld [vmem:[#allocation2 + $0x2f38] sm:$0xff]
    %v1734 = vld [vmem:[#allocation2 + $0x2f40] sm:$0xff]
    %v1735 = vld [vmem:[#allocation2 + $0x2f48] sm:$0xff]
    %v1736 = vld [vmem:[#allocation2 + $0x2f50] sm:$0xff]
    %v1737 = vld [vmem:[#allocation2 + $0x2f58] sm:$0xff]
    %v1738 = vld [vmem:[#allocation2 + $0x2f60] sm:$0xff]
    %v1739 = vld [vmem:[#allocation2 + $0x2f68] sm:$0xff]
    %v1740 = vld [vmem:[#allocation2 + $0x2f70] sm:$0xff]
    %v1741 = vld [vmem:[#allocation2 + $0x2f78] sm:$0xff]
    %v1742 = vld [vmem:[#allocation2 + $0x2f80] sm:$0xff]
    %v1743 = vld [vmem:[#allocation2 + $0x2f88] sm:$0xff]
    %v1744 = vld [vmem:[#allocation2 + $0x2f90] sm:$0xff]
    %v1745 = vld [vmem:[#allocation2 + $0x2f98] sm:$0xff]
    %v1746 = vld [vmem:[#allocation2 + $0x2fa0] sm:$0xff]
    %v1747 = vld [vmem:[#allocation2 + $0x2fa8] sm:$0xff]
    %v1748 = vld [vmem:[#allocation2 + $0x2fb0] sm:$0xff]
    %v1749 = vld [vmem:[#allocation2 + $0x2fb8] sm:$0xff]
    %v1750 = vld [vmem:[#allocation2 + $0x2fc0] sm:$0xff]
    %v1751 = vld [vmem:[#allocation2 + $0x2fc8] sm:$0xff]
    %v1752 = vld [vmem:[#allocation2 + $0x2fd0] sm:$0xff]
    %v1753 = vld [vmem:[#allocation2 + $0x2fd8] sm:$0xff]
    %v1754 = vld [vmem:[#allocation2 + $0x2fe0] sm:$0xff]
    %v1755 = vld [vmem:[#allocation2 + $0x2fe8] sm:$0xff]
    %v1756 = vld [vmem:[#allocation2 + $0x2ff0] sm:$0xff]
    %v1757 = vld [vmem:[#allocation2 + $0x2ff8] sm:$0xff]
    %v3294 = vunpack.c.l.b16 %v222
    %v3295 = vunpack.c.h.b16 %v222
    %v3296 = vunpack.c.l.b16 %v223
    %v3297 = vunpack.c.h.b16 %v223
    %v3298 = vunpack.c.l.b16 %v224
    %v3299 = vunpack.c.h.b16 %v224
    %v3300 = vunpack.c.l.b16 %v225
    %v3301 = vunpack.c.h.b16 %v225
    %v3302 = vunpack.c.l.b16 %v226
    %v3303 = vunpack.c.h.b16 %v226
    %v3304 = vunpack.c.l.b16 %v227
    %v3305 = vunpack.c.h.b16 %v227
    %v3306 = vunpack.c.l.b16 %v228
    %v3307 = vunpack.c.h.b16 %v228
    %v3308 = vunpack.c.l.b16 %v229
    %v3309 = vunpack.c.h.b16 %v229
    %v3310 = vunpack.c.l.b16 %v230
    %v3311 = vunpack.c.h.b16 %v230
    %v3312 = vunpack.c.l.b16 %v231
    %v3313 = vunpack.c.h.b16 %v231
    %v3314 = vunpack.c.l.b16 %v232
    %v3315 = vunpack.c.h.b16 %v232
    %v3316 = vunpack.c.l.b16 %v233
    %v3317 = vunpack.c.h.b16 %v233
    %v3318 = vunpack.c.l.b16 %v234
    %v3319 = vunpack.c.h.b16 %v234
    %v3320 = vunpack.c.l.b16 %v235
    %v3321 = vunpack.c.h.b16 %v235
    %v3322 = vunpack.c.l.b16 %v236
    %v3323 = vunpack.c.h.b16 %v236
    %v3324 = vunpack.c.l.b16 %v237
    %v3325 = vunpack.c.h.b16 %v237
    %v3326 = vunpack.c.l.b16 %v238
    %v3327 = vunpack.c.h.b16 %v238
    %v3328 = vunpack.c.l.b16 %v239
    %v3329 = vunpack.c.h.b16 %v239
    %v3330 = vunpack.c.l.b16 %v240
    %v3331 = vunpack.c.h.b16 %v240
    %v3332 = vunpack.c.l.b16 %v241
    %v3333 = vunpack.c.h.b16 %v241
    %v3334 = vunpack.c.l.b16 %v242
    %v3335 = vunpack.c.h.b16 %v242
    %v3336 = vunpack.c.l.b16 %v243
    %v3337 = vunpack.c.h.b16 %v243
    %v3338 = vunpack.c.l.b16 %v244
    %v3339 = vunpack.c.h.b16 %v244
    %v3340 = vunpack.c.l.b16 %v245
    %v3341 = vunpack.c.h.b16 %v245
    %v3342 = vunpack.c.l.b16 %v246
    %v3343 = vunpack.c.h.b16 %v246
    %v3344 = vunpack.c.l.b16 %v247
    %v3345 = vunpack.c.h.b16 %v247
    %v3346 = vunpack.c.l.b16 %v248
    %v3347 = vunpack.c.h.b16 %v248
    %v3348 = vunpack.c.l.b16 %v249
    %v3349 = vunpack.c.h.b16 %v249
    %v3350 = vunpack.c.l.b16 %v250
    %v3351 = vunpack.c.h.b16 %v250
    %v3352 = vunpack.c.l.b16 %v251
    %v3353 = vunpack.c.h.b16 %v251
    %v3354 = vunpack.c.l.b16 %v252
    %v3355 = vunpack.c.h.b16 %v252
    %v3356 = vunpack.c.l.b16 %v253
    %v3357 = vunpack.c.h.b16 %v253
    %v3358 = vunpack.c.l.b16 %v254
    %v3359 = vunpack.c.h.b16 %v254
    %v3360 = vunpack.c.l.b16 %v255
    %v3361 = vunpack.c.h.b16 %v255
    %v3362 = vunpack.c.l.b16 %v256
    %v3363 = vunpack.c.h.b16 %v256
    %v3364 = vunpack.c.l.b16 %v257
    %v3365 = vunpack.c.h.b16 %v257
    %v3366 = vunpack.c.l.b16 %v258
    %v3367 = vunpack.c.h.b16 %v258
    %v3368 = vunpack.c.l.b16 %v259
    %v3369 = vunpack.c.h.b16 %v259
    %v3370 = vunpack.c.l.b16 %v260
    %v3371 = vunpack.c.h.b16 %v260
    %v3372 = vunpack.c.l.b16 %v261
    %v3373 = vunpack.c.h.b16 %v261
    %v3374 = vunpack.c.l.b16 %v262
    %v3375 = vunpack.c.h.b16 %v262
    %v3376 = vunpack.c.l.b16 %v263
    %v3377 = vunpack.c.h.b16 %v263
    %v3378 = vunpack.c.l.b16 %v264
    %v3379 = vunpack.c.h.b16 %v264
    %v3380 = vunpack.c.l.b16 %v265
    %v3381 = vunpack.c.h.b16 %v265
    %v3382 = vunpack.c.l.b16 %v266
    %v3383 = vunpack.c.h.b16 %v266
    %v3384 = vunpack.c.l.b16 %v267
    %v3385 = vunpack.c.h.b16 %v267
    %v3386 = vunpack.c.l.b16 %v268
    %v3387 = vunpack.c.h.b16 %v268
    %v3388 = vunpack.c.l.b16 %v269
    %v3389 = vunpack.c.h.b16 %v269
    %v3390 = vunpack.c.l.b16 %v270
    %v3391 = vunpack.c.h.b16 %v270
    %v3392 = vunpack.c.l.b16 %v271
    %v3393 = vunpack.c.h.b16 %v271
    %v3394 = vunpack.c.l.b16 %v272
    %v3395 = vunpack.c.h.b16 %v272
    %v3396 = vunpack.c.l.b16 %v273
    %v3397 = vunpack.c.h.b16 %v273
    %v3398 = vunpack.c.l.b16 %v274
    %v3399 = vunpack.c.h.b16 %v274
    %v3400 = vunpack.c.l.b16 %v275
    %v3401 = vunpack.c.h.b16 %v275
    %v3402 = vunpack.c.l.b16 %v276
    %v3403 = vunpack.c.h.b16 %v276
    %v3404 = vunpack.c.l.b16 %v277
    %v3405 = vunpack.c.h.b16 %v277
    %v3406 = vunpack.c.l.b16 %v278
    %v3407 = vunpack.c.h.b16 %v278
    %v3408 = vunpack.c.l.b16 %v279
    %v3409 = vunpack.c.h.b16 %v279
    %v3410 = vunpack.c.l.b16 %v280
    %v3411 = vunpack.c.h.b16 %v280
    %v3412 = vunpack.c.l.b16 %v281
    %v3413 = vunpack.c.h.b16 %v281
    %v3414 = vunpack.c.l.b16 %v282
    %v3415 = vunpack.c.h.b16 %v282
    %v3416 = vunpack.c.l.b16 %v283
    %v3417 = vunpack.c.h.b16 %v283
    %v3418 = vunpack.c.l.b16 %v284
    %v3419 = vunpack.c.h.b16 %v284
    %v3420 = vunpack.c.l.b16 %v285
    %v3421 = vunpack.c.h.b16 %v285
    %v3422 = vunpack.c.l.b16 %v286
    %v3423 = vunpack.c.h.b16 %v286
    %v3424 = vunpack.c.l.b16 %v287
    %v3425 = vunpack.c.h.b16 %v287
    %v3426 = vunpack.c.l.b16 %v288
    %v3427 = vunpack.c.h.b16 %v288
    %v3428 = vunpack.c.l.b16 %v289
    %v3429 = vunpack.c.h.b16 %v289
    %v3430 = vunpack.c.l.b16 %v290
    %v3431 = vunpack.c.h.b16 %v290
    %v3432 = vunpack.c.l.b16 %v291
    %v3433 = vunpack.c.h.b16 %v291
    %v3434 = vunpack.c.l.b16 %v292
    %v3435 = vunpack.c.h.b16 %v292
    %v3436 = vunpack.c.l.b16 %v293
    %v3437 = vunpack.c.h.b16 %v293
    %v3438 = vunpack.c.l.b16 %v294
    %v3439 = vunpack.c.h.b16 %v294
    %v3440 = vunpack.c.l.b16 %v295
    %v3441 = vunpack.c.h.b16 %v295
    %v3442 = vunpack.c.l.b16 %v296
    %v3443 = vunpack.c.h.b16 %v296
    %v3444 = vunpack.c.l.b16 %v297
    %v3445 = vunpack.c.h.b16 %v297
    %v3446 = vunpack.c.l.b16 %v298
    %v3447 = vunpack.c.h.b16 %v298
    %v3448 = vunpack.c.l.b16 %v299
    %v3449 = vunpack.c.h.b16 %v299
    %v3450 = vunpack.c.l.b16 %v300
    %v3451 = vunpack.c.h.b16 %v300
    %v3452 = vunpack.c.l.b16 %v301
    %v3453 = vunpack.c.h.b16 %v301
    %v3454 = vunpack.c.l.b16 %v302
    %v3455 = vunpack.c.h.b16 %v302
    %v3456 = vunpack.c.l.b16 %v303
    %v3457 = vunpack.c.h.b16 %v303
    %v3458 = vunpack.c.l.b16 %v304
    %v3459 = vunpack.c.h.b16 %v304
    %v3460 = vunpack.c.l.b16 %v305
    %v3461 = vunpack.c.h.b16 %v305
    %v3462 = vunpack.c.l.b16 %v306
    %v3463 = vunpack.c.h.b16 %v306
    %v3464 = vunpack.c.l.b16 %v307
    %v3465 = vunpack.c.h.b16 %v307
    %v3466 = vunpack.c.l.b16 %v308
    %v3467 = vunpack.c.h.b16 %v308
    %v3468 = vunpack.c.l.b16 %v309
    %v3469 = vunpack.c.h.b16 %v309
    %v3470 = vunpack.c.l.b16 %v310
    %v3471 = vunpack.c.h.b16 %v310
    %v3472 = vunpack.c.l.b16 %v311
    %v3473 = vunpack.c.h.b16 %v311
    %v3474 = vunpack.c.l.b16 %v312
    %v3475 = vunpack.c.h.b16 %v312
    %v3476 = vunpack.c.l.b16 %v313
    %v3477 = vunpack.c.h.b16 %v313
    %v3478 = vunpack.c.l.b16 %v314
    %v3479 = vunpack.c.h.b16 %v314
    %v3480 = vunpack.c.l.b16 %v315
    %v3481 = vunpack.c.h.b16 %v315
    %v3482 = vunpack.c.l.b16 %v316
    %v3483 = vunpack.c.h.b16 %v316
    %v3484 = vunpack.c.l.b16 %v317
    %v3485 = vunpack.c.h.b16 %v317
    %v3486 = vunpack.c.l.b16 %v318
    %v3487 = vunpack.c.h.b16 %v318
    %v3488 = vunpack.c.l.b16 %v319
    %v3489 = vunpack.c.h.b16 %v319
    %v3490 = vunpack.c.l.b16 %v320
    %v3491 = vunpack.c.h.b16 %v320
    %v3492 = vunpack.c.l.b16 %v321
    %v3493 = vunpack.c.h.b16 %v321
    %v3494 = vunpack.c.l.b16 %v322
    %v3495 = vunpack.c.h.b16 %v322
    %v3496 = vunpack.c.l.b16 %v323
    %v3497 = vunpack.c.h.b16 %v323
    %v3498 = vunpack.c.l.b16 %v324
    %v3499 = vunpack.c.h.b16 %v324
    %v3500 = vunpack.c.l.b16 %v325
    %v3501 = vunpack.c.h.b16 %v325
    %v3502 = vunpack.c.l.b16 %v326
    %v3503 = vunpack.c.h.b16 %v326
    %v3504 = vunpack.c.l.b16 %v327
    %v3505 = vunpack.c.h.b16 %v327
    %v3506 = vunpack.c.l.b16 %v328
    %v3507 = vunpack.c.h.b16 %v328
    %v3508 = vunpack.c.l.b16 %v329
    %v3509 = vunpack.c.h.b16 %v329
    %v3510 = vunpack.c.l.b16 %v330
    %v3511 = vunpack.c.h.b16 %v330
    %v3512 = vunpack.c.l.b16 %v331
    %v3513 = vunpack.c.h.b16 %v331
    %v3514 = vunpack.c.l.b16 %v332
    %v3515 = vunpack.c.h.b16 %v332
    %v3516 = vunpack.c.l.b16 %v333
    %v3517 = vunpack.c.h.b16 %v333
    %v3518 = vunpack.c.l.b16 %v334
    %v3519 = vunpack.c.h.b16 %v334
    %v3520 = vunpack.c.l.b16 %v335
    %v3521 = vunpack.c.h.b16 %v335
    %v3522 = vunpack.c.l.b16 %v336
    %v3523 = vunpack.c.h.b16 %v336
    %v3524 = vunpack.c.l.b16 %v337
    %v3525 = vunpack.c.h.b16 %v337
    %v3526 = vunpack.c.l.b16 %v338
    %v3527 = vunpack.c.h.b16 %v338
    %v3528 = vunpack.c.l.b16 %v339
    %v3529 = vunpack.c.h.b16 %v339
    %v3530 = vunpack.c.l.b16 %v340
    %v3531 = vunpack.c.h.b16 %v340
    %v3532 = vunpack.c.l.b16 %v341
    %v3533 = vunpack.c.h.b16 %v341
    %v3534 = vunpack.c.l.b16 %v342
    %v3535 = vunpack.c.h.b16 %v342
    %v3536 = vunpack.c.l.b16 %v343
    %v3537 = vunpack.c.h.b16 %v343
    %v3538 = vunpack.c.l.b16 %v344
    %v3539 = vunpack.c.h.b16 %v344
    %v3540 = vunpack.c.l.b16 %v345
    %v3541 = vunpack.c.h.b16 %v345
    %v3542 = vunpack.c.l.b16 %v346
    %v3543 = vunpack.c.h.b16 %v346
    %v3544 = vunpack.c.l.b16 %v347
    %v3545 = vunpack.c.h.b16 %v347
    %v3546 = vunpack.c.l.b16 %v348
    %v3547 = vunpack.c.h.b16 %v348
    %v3548 = vunpack.c.l.b16 %v349
    %v3549 = vunpack.c.h.b16 %v349
    %v3550 = vunpack.c.l.b16 %v350
    %v3551 = vunpack.c.h.b16 %v350
    %v3552 = vunpack.c.l.b16 %v351
    %v3553 = vunpack.c.h.b16 %v351
    %v3554 = vunpack.c.l.b16 %v352
    %v3555 = vunpack.c.h.b16 %v352
    %v3556 = vunpack.c.l.b16 %v353
    %v3557 = vunpack.c.h.b16 %v353
    %v3558 = vunpack.c.l.b16 %v354
    %v3559 = vunpack.c.h.b16 %v354
    %v3560 = vunpack.c.l.b16 %v355
    %v3561 = vunpack.c.h.b16 %v355
    %v3562 = vunpack.c.l.b16 %v356
    %v3563 = vunpack.c.h.b16 %v356
    %v3564 = vunpack.c.l.b16 %v357
    %v3565 = vunpack.c.h.b16 %v357
    %v3566 = vunpack.c.l.b16 %v358
    %v3567 = vunpack.c.h.b16 %v358
    %v3568 = vunpack.c.l.b16 %v359
    %v3569 = vunpack.c.h.b16 %v359
    %v3570 = vunpack.c.l.b16 %v360
    %v3571 = vunpack.c.h.b16 %v360
    %v3572 = vunpack.c.l.b16 %v361
    %v3573 = vunpack.c.h.b16 %v361
    %v3574 = vunpack.c.l.b16 %v362
    %v3575 = vunpack.c.h.b16 %v362
    %v3576 = vunpack.c.l.b16 %v363
    %v3577 = vunpack.c.h.b16 %v363
    %v3578 = vunpack.c.l.b16 %v364
    %v3579 = vunpack.c.h.b16 %v364
    %v3580 = vunpack.c.l.b16 %v365
    %v3581 = vunpack.c.h.b16 %v365
    %v3582 = vunpack.c.l.b16 %v366
    %v3583 = vunpack.c.h.b16 %v366
    %v3584 = vunpack.c.l.b16 %v367
    %v3585 = vunpack.c.h.b16 %v367
    %v3586 = vunpack.c.l.b16 %v368
    %v3587 = vunpack.c.h.b16 %v368
    %v3588 = vunpack.c.l.b16 %v369
    %v3589 = vunpack.c.h.b16 %v369
    %v3590 = vunpack.c.l.b16 %v370
    %v3591 = vunpack.c.h.b16 %v370
    %v3592 = vunpack.c.l.b16 %v371
    %v3593 = vunpack.c.h.b16 %v371
    %v3594 = vunpack.c.l.b16 %v372
    %v3595 = vunpack.c.h.b16 %v372
    %v3596 = vunpack.c.l.b16 %v373
    %v3597 = vunpack.c.h.b16 %v373
    %v3598 = vunpack.c.l.b16 %v374
    %v3599 = vunpack.c.h.b16 %v374
    %v3600 = vunpack.c.l.b16 %v375
    %v3601 = vunpack.c.h.b16 %v375
    %v3602 = vunpack.c.l.b16 %v376
    %v3603 = vunpack.c.h.b16 %v376
    %v3604 = vunpack.c.l.b16 %v377
    %v3605 = vunpack.c.h.b16 %v377
    %v3606 = vunpack.c.l.b16 %v378
    %v3607 = vunpack.c.h.b16 %v378
    %v3608 = vunpack.c.l.b16 %v379
    %v3609 = vunpack.c.h.b16 %v379
    %v3610 = vunpack.c.l.b16 %v380
    %v3611 = vunpack.c.h.b16 %v380
    %v3612 = vunpack.c.l.b16 %v381
    %v3613 = vunpack.c.h.b16 %v381
    %v3614 = vunpack.c.l.b16 %v382
    %v3615 = vunpack.c.h.b16 %v382
    %v3616 = vunpack.c.l.b16 %v383
    %v3617 = vunpack.c.h.b16 %v383
    %v3618 = vunpack.c.l.b16 %v384
    %v3619 = vunpack.c.h.b16 %v384
    %v3620 = vunpack.c.l.b16 %v385
    %v3621 = vunpack.c.h.b16 %v385
    %v3622 = vunpack.c.l.b16 %v386
    %v3623 = vunpack.c.h.b16 %v386
    %v3624 = vunpack.c.l.b16 %v387
    %v3625 = vunpack.c.h.b16 %v387
    %v3626 = vunpack.c.l.b16 %v388
    %v3627 = vunpack.c.h.b16 %v388
    %v3628 = vunpack.c.l.b16 %v389
    %v3629 = vunpack.c.h.b16 %v389
    %v3630 = vunpack.c.l.b16 %v390
    %v3631 = vunpack.c.h.b16 %v390
    %v3632 = vunpack.c.l.b16 %v391
    %v3633 = vunpack.c.h.b16 %v391
    %v3634 = vunpack.c.l.b16 %v392
    %v3635 = vunpack.c.h.b16 %v392
    %v3636 = vunpack.c.l.b16 %v393
    %v3637 = vunpack.c.h.b16 %v393
    %v3638 = vunpack.c.l.b16 %v394
    %v3639 = vunpack.c.h.b16 %v394
    %v3640 = vunpack.c.l.b16 %v395
    %v3641 = vunpack.c.h.b16 %v395
    %v3642 = vunpack.c.l.b16 %v396
    %v3643 = vunpack.c.h.b16 %v396
    %v3644 = vunpack.c.l.b16 %v397
    %v3645 = vunpack.c.h.b16 %v397
    %v3646 = vunpack.c.l.b16 %v398
    %v3647 = vunpack.c.h.b16 %v398
    %v3648 = vunpack.c.l.b16 %v399
    %v3649 = vunpack.c.h.b16 %v399
    %v3650 = vunpack.c.l.b16 %v400
    %v3651 = vunpack.c.h.b16 %v400
    %v3652 = vunpack.c.l.b16 %v401
    %v3653 = vunpack.c.h.b16 %v401
    %v3654 = vunpack.c.l.b16 %v402
    %v3655 = vunpack.c.h.b16 %v402
    %v3656 = vunpack.c.l.b16 %v403
    %v3657 = vunpack.c.h.b16 %v403
    %v3658 = vunpack.c.l.b16 %v404
    %v3659 = vunpack.c.h.b16 %v404
    %v3660 = vunpack.c.l.b16 %v405
    %v3661 = vunpack.c.h.b16 %v405
    %v3662 = vunpack.c.l.b16 %v406
    %v3663 = vunpack.c.h.b16 %v406
    %v3664 = vunpack.c.l.b16 %v407
    %v3665 = vunpack.c.h.b16 %v407
    %v3666 = vunpack.c.l.b16 %v408
    %v3667 = vunpack.c.h.b16 %v408
    %v3668 = vunpack.c.l.b16 %v409
    %v3669 = vunpack.c.h.b16 %v409
    %v3670 = vunpack.c.l.b16 %v410
    %v3671 = vunpack.c.h.b16 %v410
    %v3672 = vunpack.c.l.b16 %v411
    %v3673 = vunpack.c.h.b16 %v411
    %v3674 = vunpack.c.l.b16 %v412
    %v3675 = vunpack.c.h.b16 %v412
    %v3676 = vunpack.c.l.b16 %v413
    %v3677 = vunpack.c.h.b16 %v413
    %v3678 = vunpack.c.l.b16 %v414
    %v3679 = vunpack.c.h.b16 %v414
    %v3680 = vunpack.c.l.b16 %v415
    %v3681 = vunpack.c.h.b16 %v415
    %v3682 = vunpack.c.l.b16 %v416
    %v3683 = vunpack.c.h.b16 %v416
    %v3684 = vunpack.c.l.b16 %v417
    %v3685 = vunpack.c.h.b16 %v417
    %v3686 = vunpack.c.l.b16 %v418
    %v3687 = vunpack.c.h.b16 %v418
    %v3688 = vunpack.c.l.b16 %v419
    %v3689 = vunpack.c.h.b16 %v419
    %v3690 = vunpack.c.l.b16 %v420
    %v3691 = vunpack.c.h.b16 %v420
    %v3692 = vunpack.c.l.b16 %v421
    %v3693 = vunpack.c.h.b16 %v421
    %v3694 = vunpack.c.l.b16 %v422
    %v3695 = vunpack.c.h.b16 %v422
    %v3696 = vunpack.c.l.b16 %v423
    %v3697 = vunpack.c.h.b16 %v423
    %v3698 = vunpack.c.l.b16 %v424
    %v3699 = vunpack.c.h.b16 %v424
    %v3700 = vunpack.c.l.b16 %v425
    %v3701 = vunpack.c.h.b16 %v425
    %v3702 = vunpack.c.l.b16 %v426
    %v3703 = vunpack.c.h.b16 %v426
    %v3704 = vunpack.c.l.b16 %v427
    %v3705 = vunpack.c.h.b16 %v427
    %v3706 = vunpack.c.l.b16 %v428
    %v3707 = vunpack.c.h.b16 %v428
    %v3708 = vunpack.c.l.b16 %v429
    %v3709 = vunpack.c.h.b16 %v429
    %v3710 = vunpack.c.l.b16 %v430
    %v3711 = vunpack.c.h.b16 %v430
    %v3712 = vunpack.c.l.b16 %v431
    %v3713 = vunpack.c.h.b16 %v431
    %v3714 = vunpack.c.l.b16 %v432
    %v3715 = vunpack.c.h.b16 %v432
    %v3716 = vunpack.c.l.b16 %v433
    %v3717 = vunpack.c.h.b16 %v433
    %v3718 = vunpack.c.l.b16 %v434
    %v3719 = vunpack.c.h.b16 %v434
    %v3720 = vunpack.c.l.b16 %v435
    %v3721 = vunpack.c.h.b16 %v435
    %v3722 = vunpack.c.l.b16 %v436
    %v3723 = vunpack.c.h.b16 %v436
    %v3724 = vunpack.c.l.b16 %v437
    %v3725 = vunpack.c.h.b16 %v437
    %v3726 = vunpack.c.l.b16 %v438
    %v3727 = vunpack.c.h.b16 %v438
    %v3728 = vunpack.c.l.b16 %v439
    %v3729 = vunpack.c.h.b16 %v439
    %v3730 = vunpack.c.l.b16 %v440
    %v3731 = vunpack.c.h.b16 %v440
    %v3732 = vunpack.c.l.b16 %v441
    %v3733 = vunpack.c.h.b16 %v441
    %v3734 = vunpack.c.l.b16 %v442
    %v3735 = vunpack.c.h.b16 %v442
    %v3736 = vunpack.c.l.b16 %v443
    %v3737 = vunpack.c.h.b16 %v443
    %v3738 = vunpack.c.l.b16 %v444
    %v3739 = vunpack.c.h.b16 %v444
    %v3740 = vunpack.c.l.b16 %v445
    %v3741 = vunpack.c.h.b16 %v445
    %v3742 = vunpack.c.l.b16 %v446
    %v3743 = vunpack.c.h.b16 %v446
    %v3744 = vunpack.c.l.b16 %v447
    %v3745 = vunpack.c.h.b16 %v447
    %v3746 = vunpack.c.l.b16 %v448
    %v3747 = vunpack.c.h.b16 %v448
    %v3748 = vunpack.c.l.b16 %v449
    %v3749 = vunpack.c.h.b16 %v449
    %v3750 = vunpack.c.l.b16 %v450
    %v3751 = vunpack.c.h.b16 %v450
    %v3752 = vunpack.c.l.b16 %v451
    %v3753 = vunpack.c.h.b16 %v451
    %v3754 = vunpack.c.l.b16 %v452
    %v3755 = vunpack.c.h.b16 %v452
    %v3756 = vunpack.c.l.b16 %v453
    %v3757 = vunpack.c.h.b16 %v453
    %v3758 = vunpack.c.l.b16 %v454
    %v3759 = vunpack.c.h.b16 %v454
    %v3760 = vunpack.c.l.b16 %v455
    %v3761 = vunpack.c.h.b16 %v455
    %v3762 = vunpack.c.l.b16 %v456
    %v3763 = vunpack.c.h.b16 %v456
    %v3764 = vunpack.c.l.b16 %v457
    %v3765 = vunpack.c.h.b16 %v457
    %v3766 = vunpack.c.l.b16 %v458
    %v3767 = vunpack.c.h.b16 %v458
    %v3768 = vunpack.c.l.b16 %v459
    %v3769 = vunpack.c.h.b16 %v459
    %v3770 = vunpack.c.l.b16 %v460
    %v3771 = vunpack.c.h.b16 %v460
    %v3772 = vunpack.c.l.b16 %v461
    %v3773 = vunpack.c.h.b16 %v461
    %v3774 = vunpack.c.l.b16 %v462
    %v3775 = vunpack.c.h.b16 %v462
    %v3776 = vunpack.c.l.b16 %v463
    %v3777 = vunpack.c.h.b16 %v463
    %v3778 = vunpack.c.l.b16 %v464
    %v3779 = vunpack.c.h.b16 %v464
    %v3780 = vunpack.c.l.b16 %v465
    %v3781 = vunpack.c.h.b16 %v465
    %v3782 = vunpack.c.l.b16 %v466
    %v3783 = vunpack.c.h.b16 %v466
    %v3784 = vunpack.c.l.b16 %v467
    %v3785 = vunpack.c.h.b16 %v467
    %v3786 = vunpack.c.l.b16 %v468
    %v3787 = vunpack.c.h.b16 %v468
    %v3788 = vunpack.c.l.b16 %v469
    %v3789 = vunpack.c.h.b16 %v469
    %v3790 = vunpack.c.l.b16 %v470
    %v3791 = vunpack.c.h.b16 %v470
    %v3792 = vunpack.c.l.b16 %v471
    %v3793 = vunpack.c.h.b16 %v471
    %v3794 = vunpack.c.l.b16 %v472
    %v3795 = vunpack.c.h.b16 %v472
    %v3796 = vunpack.c.l.b16 %v473
    %v3797 = vunpack.c.h.b16 %v473
    %v3798 = vunpack.c.l.b16 %v474
    %v3799 = vunpack.c.h.b16 %v474
    %v3800 = vunpack.c.l.b16 %v475
    %v3801 = vunpack.c.h.b16 %v475
    %v3802 = vunpack.c.l.b16 %v476
    %v3803 = vunpack.c.h.b16 %v476
    %v3804 = vunpack.c.l.b16 %v477
    %v3805 = vunpack.c.h.b16 %v477
    %v3806 = vunpack.c.l.b16 %v478
    %v3807 = vunpack.c.h.b16 %v478
    %v3808 = vunpack.c.l.b16 %v479
    %v3809 = vunpack.c.h.b16 %v479
    %v3810 = vunpack.c.l.b16 %v480
    %v3811 = vunpack.c.h.b16 %v480
    %v3812 = vunpack.c.l.b16 %v481
    %v3813 = vunpack.c.h.b16 %v481
    %v3814 = vunpack.c.l.b16 %v482
    %v3815 = vunpack.c.h.b16 %v482
    %v3816 = vunpack.c.l.b16 %v483
    %v3817 = vunpack.c.h.b16 %v483
    %v3818 = vunpack.c.l.b16 %v484
    %v3819 = vunpack.c.h.b16 %v484
    %v3820 = vunpack.c.l.b16 %v485
    %v3821 = vunpack.c.h.b16 %v485
    %v3822 = vunpack.c.l.b16 %v486
    %v3823 = vunpack.c.h.b16 %v486
    %v3824 = vunpack.c.l.b16 %v487
    %v3825 = vunpack.c.h.b16 %v487
    %v3826 = vunpack.c.l.b16 %v488
    %v3827 = vunpack.c.h.b16 %v488
    %v3828 = vunpack.c.l.b16 %v489
    %v3829 = vunpack.c.h.b16 %v489
    %v3830 = vunpack.c.l.b16 %v490
    %v3831 = vunpack.c.h.b16 %v490
    %v3832 = vunpack.c.l.b16 %v491
    %v3833 = vunpack.c.h.b16 %v491
    %v3834 = vunpack.c.l.b16 %v492
    %v3835 = vunpack.c.h.b16 %v492
    %v3836 = vunpack.c.l.b16 %v493
    %v3837 = vunpack.c.h.b16 %v493
    %v3838 = vunpack.c.l.b16 %v494
    %v3839 = vunpack.c.h.b16 %v494
    %v3840 = vunpack.c.l.b16 %v495
    %v3841 = vunpack.c.h.b16 %v495
    %v3842 = vunpack.c.l.b16 %v496
    %v3843 = vunpack.c.h.b16 %v496
    %v3844 = vunpack.c.l.b16 %v497
    %v3845 = vunpack.c.h.b16 %v497
    %v3846 = vunpack.c.l.b16 %v498
    %v3847 = vunpack.c.h.b16 %v498
    %v3848 = vunpack.c.l.b16 %v499
    %v3849 = vunpack.c.h.b16 %v499
    %v3850 = vunpack.c.l.b16 %v500
    %v3851 = vunpack.c.h.b16 %v500
    %v3852 = vunpack.c.l.b16 %v501
    %v3853 = vunpack.c.h.b16 %v501
    %v3854 = vunpack.c.l.b16 %v502
    %v3855 = vunpack.c.h.b16 %v502
    %v3856 = vunpack.c.l.b16 %v503
    %v3857 = vunpack.c.h.b16 %v503
    %v3858 = vunpack.c.l.b16 %v504
    %v3859 = vunpack.c.h.b16 %v504
    %v3860 = vunpack.c.l.b16 %v505
    %v3861 = vunpack.c.h.b16 %v505
    %v3862 = vunpack.c.l.b16 %v506
    %v3863 = vunpack.c.h.b16 %v506
    %v3864 = vunpack.c.l.b16 %v507
    %v3865 = vunpack.c.h.b16 %v507
    %v3866 = vunpack.c.l.b16 %v508
    %v3867 = vunpack.c.h.b16 %v508
    %v3868 = vunpack.c.l.b16 %v509
    %v3869 = vunpack.c.h.b16 %v509
    %v3870 = vunpack.c.l.b16 %v510
    %v3871 = vunpack.c.h.b16 %v510
    %v3872 = vunpack.c.l.b16 %v511
    %v3873 = vunpack.c.h.b16 %v511
    %v3874 = vunpack.c.l.b16 %v512
    %v3875 = vunpack.c.h.b16 %v512
    %v3876 = vunpack.c.l.b16 %v513
    %v3877 = vunpack.c.h.b16 %v513
    %v3878 = vunpack.c.l.b16 %v514
    %v3879 = vunpack.c.h.b16 %v514
    %v3880 = vunpack.c.l.b16 %v515
    %v3881 = vunpack.c.h.b16 %v515
    %v3882 = vunpack.c.l.b16 %v516
    %v3883 = vunpack.c.h.b16 %v516
    %v3884 = vunpack.c.l.b16 %v517
    %v3885 = vunpack.c.h.b16 %v517
    %v3886 = vunpack.c.l.b16 %v518
    %v3887 = vunpack.c.h.b16 %v518
    %v3888 = vunpack.c.l.b16 %v519
    %v3889 = vunpack.c.h.b16 %v519
    %v3890 = vunpack.c.l.b16 %v520
    %v3891 = vunpack.c.h.b16 %v520
    %v3892 = vunpack.c.l.b16 %v521
    %v3893 = vunpack.c.h.b16 %v521
    %v3894 = vunpack.c.l.b16 %v522
    %v3895 = vunpack.c.h.b16 %v522
    %v3896 = vunpack.c.l.b16 %v523
    %v3897 = vunpack.c.h.b16 %v523
    %v3898 = vunpack.c.l.b16 %v524
    %v3899 = vunpack.c.h.b16 %v524
    %v3900 = vunpack.c.l.b16 %v525
    %v3901 = vunpack.c.h.b16 %v525
    %v3902 = vunpack.c.l.b16 %v526
    %v3903 = vunpack.c.h.b16 %v526
    %v3904 = vunpack.c.l.b16 %v527
    %v3905 = vunpack.c.h.b16 %v527
    %v3906 = vunpack.c.l.b16 %v528
    %v3907 = vunpack.c.h.b16 %v528
    %v3908 = vunpack.c.l.b16 %v529
    %v3909 = vunpack.c.h.b16 %v529
    %v3910 = vunpack.c.l.b16 %v530
    %v3911 = vunpack.c.h.b16 %v530
    %v3912 = vunpack.c.l.b16 %v531
    %v3913 = vunpack.c.h.b16 %v531
    %v3914 = vunpack.c.l.b16 %v532
    %v3915 = vunpack.c.h.b16 %v532
    %v3916 = vunpack.c.l.b16 %v533
    %v3917 = vunpack.c.h.b16 %v533
    %v3918 = vunpack.c.l.b16 %v534
    %v3919 = vunpack.c.h.b16 %v534
    %v3920 = vunpack.c.l.b16 %v535
    %v3921 = vunpack.c.h.b16 %v535
    %v3922 = vunpack.c.l.b16 %v536
    %v3923 = vunpack.c.h.b16 %v536
    %v3924 = vunpack.c.l.b16 %v537
    %v3925 = vunpack.c.h.b16 %v537
    %v3926 = vunpack.c.l.b16 %v538
    %v3927 = vunpack.c.h.b16 %v538
    %v3928 = vunpack.c.l.b16 %v539
    %v3929 = vunpack.c.h.b16 %v539
    %v3930 = vunpack.c.l.b16 %v540
    %v3931 = vunpack.c.h.b16 %v540
    %v3932 = vunpack.c.l.b16 %v541
    %v3933 = vunpack.c.h.b16 %v541
    %v3934 = vunpack.c.l.b16 %v542
    %v3935 = vunpack.c.h.b16 %v542
    %v3936 = vunpack.c.l.b16 %v543
    %v3937 = vunpack.c.h.b16 %v543
    %v3938 = vunpack.c.l.b16 %v544
    %v3939 = vunpack.c.h.b16 %v544
    %v3940 = vunpack.c.l.b16 %v545
    %v3941 = vunpack.c.h.b16 %v545
    %v3942 = vunpack.c.l.b16 %v546
    %v3943 = vunpack.c.h.b16 %v546
    %v3944 = vunpack.c.l.b16 %v547
    %v3945 = vunpack.c.h.b16 %v547
    %v3946 = vunpack.c.l.b16 %v548
    %v3947 = vunpack.c.h.b16 %v548
    %v3948 = vunpack.c.l.b16 %v549
    %v3949 = vunpack.c.h.b16 %v549
    %v3950 = vunpack.c.l.b16 %v550
    %v3951 = vunpack.c.h.b16 %v550
    %v3952 = vunpack.c.l.b16 %v551
    %v3953 = vunpack.c.h.b16 %v551
    %v3954 = vunpack.c.l.b16 %v552
    %v3955 = vunpack.c.h.b16 %v552
    %v3956 = vunpack.c.l.b16 %v553
    %v3957 = vunpack.c.h.b16 %v553
    %v3958 = vunpack.c.l.b16 %v554
    %v3959 = vunpack.c.h.b16 %v554
    %v3960 = vunpack.c.l.b16 %v555
    %v3961 = vunpack.c.h.b16 %v555
    %v3962 = vunpack.c.l.b16 %v556
    %v3963 = vunpack.c.h.b16 %v556
    %v3964 = vunpack.c.l.b16 %v557
    %v3965 = vunpack.c.h.b16 %v557
    %v3966 = vunpack.c.l.b16 %v558
    %v3967 = vunpack.c.h.b16 %v558
    %v3968 = vunpack.c.l.b16 %v559
    %v3969 = vunpack.c.h.b16 %v559
    %v3970 = vunpack.c.l.b16 %v560
    %v3971 = vunpack.c.h.b16 %v560
    %v3972 = vunpack.c.l.b16 %v561
    %v3973 = vunpack.c.h.b16 %v561
    %v3974 = vunpack.c.l.b16 %v562
    %v3975 = vunpack.c.h.b16 %v562
    %v3976 = vunpack.c.l.b16 %v563
    %v3977 = vunpack.c.h.b16 %v563
    %v3978 = vunpack.c.l.b16 %v564
    %v3979 = vunpack.c.h.b16 %v564
    %v3980 = vunpack.c.l.b16 %v565
    %v3981 = vunpack.c.h.b16 %v565
    %v3982 = vunpack.c.l.b16 %v566
    %v3983 = vunpack.c.h.b16 %v566
    %v3984 = vunpack.c.l.b16 %v567
    %v3985 = vunpack.c.h.b16 %v567
    %v3986 = vunpack.c.l.b16 %v568
    %v3987 = vunpack.c.h.b16 %v568
    %v3988 = vunpack.c.l.b16 %v569
    %v3989 = vunpack.c.h.b16 %v569
    %v3990 = vunpack.c.l.b16 %v570
    %v3991 = vunpack.c.h.b16 %v570
    %v3992 = vunpack.c.l.b16 %v571
    %v3993 = vunpack.c.h.b16 %v571
    %v3994 = vunpack.c.l.b16 %v572
    %v3995 = vunpack.c.h.b16 %v572
    %v3996 = vunpack.c.l.b16 %v573
    %v3997 = vunpack.c.h.b16 %v573
    %v3998 = vunpack.c.l.b16 %v574
    %v3999 = vunpack.c.h.b16 %v574
    %v4000 = vunpack.c.l.b16 %v575
    %v4001 = vunpack.c.h.b16 %v575
    %v4002 = vunpack.c.l.b16 %v576
    %v4003 = vunpack.c.h.b16 %v576
    %v4004 = vunpack.c.l.b16 %v577
    %v4005 = vunpack.c.h.b16 %v577
    %v4006 = vunpack.c.l.b16 %v578
    %v4007 = vunpack.c.h.b16 %v578
    %v4008 = vunpack.c.l.b16 %v579
    %v4009 = vunpack.c.h.b16 %v579
    %v4010 = vunpack.c.l.b16 %v580
    %v4011 = vunpack.c.h.b16 %v580
    %v4012 = vunpack.c.l.b16 %v581
    %v4013 = vunpack.c.h.b16 %v581
    %v4014 = vunpack.c.l.b16 %v582
    %v4015 = vunpack.c.h.b16 %v582
    %v4016 = vunpack.c.l.b16 %v583
    %v4017 = vunpack.c.h.b16 %v583
    %v4018 = vunpack.c.l.b16 %v584
    %v4019 = vunpack.c.h.b16 %v584
    %v4020 = vunpack.c.l.b16 %v585
    %v4021 = vunpack.c.h.b16 %v585
    %v4022 = vunpack.c.l.b16 %v586
    %v4023 = vunpack.c.h.b16 %v586
    %v4024 = vunpack.c.l.b16 %v587
    %v4025 = vunpack.c.h.b16 %v587
    %v4026 = vunpack.c.l.b16 %v588
    %v4027 = vunpack.c.h.b16 %v588
    %v4028 = vunpack.c.l.b16 %v589
    %v4029 = vunpack.c.h.b16 %v589
    %v4030 = vunpack.c.l.b16 %v590
    %v4031 = vunpack.c.h.b16 %v590
    %v4032 = vunpack.c.l.b16 %v591
    %v4033 = vunpack.c.h.b16 %v591
    %v4034 = vunpack.c.l.b16 %v592
    %v4035 = vunpack.c.h.b16 %v592
    %v4036 = vunpack.c.l.b16 %v593
    %v4037 = vunpack.c.h.b16 %v593
    %v4038 = vunpack.c.l.b16 %v594
    %v4039 = vunpack.c.h.b16 %v594
    %v4040 = vunpack.c.l.b16 %v595
    %v4041 = vunpack.c.h.b16 %v595
    %v4042 = vunpack.c.l.b16 %v596
    %v4043 = vunpack.c.h.b16 %v596
    %v4044 = vunpack.c.l.b16 %v597
    %v4045 = vunpack.c.h.b16 %v597
    %v4046 = vunpack.c.l.b16 %v598
    %v4047 = vunpack.c.h.b16 %v598
    %v4048 = vunpack.c.l.b16 %v599
    %v4049 = vunpack.c.h.b16 %v599
    %v4050 = vunpack.c.l.b16 %v600
    %v4051 = vunpack.c.h.b16 %v600
    %v4052 = vunpack.c.l.b16 %v601
    %v4053 = vunpack.c.h.b16 %v601
    %v4054 = vunpack.c.l.b16 %v602
    %v4055 = vunpack.c.h.b16 %v602
    %v4056 = vunpack.c.l.b16 %v603
    %v4057 = vunpack.c.h.b16 %v603
    %v4058 = vunpack.c.l.b16 %v604
    %v4059 = vunpack.c.h.b16 %v604
    %v4060 = vunpack.c.l.b16 %v605
    %v4061 = vunpack.c.h.b16 %v605
    %v4062 = vunpack.c.l.b16 %v606
    %v4063 = vunpack.c.h.b16 %v606
    %v4064 = vunpack.c.l.b16 %v607
    %v4065 = vunpack.c.h.b16 %v607
    %v4066 = vunpack.c.l.b16 %v608
    %v4067 = vunpack.c.h.b16 %v608
    %v4068 = vunpack.c.l.b16 %v609
    %v4069 = vunpack.c.h.b16 %v609
    %v4070 = vunpack.c.l.b16 %v610
    %v4071 = vunpack.c.h.b16 %v610
    %v4072 = vunpack.c.l.b16 %v611
    %v4073 = vunpack.c.h.b16 %v611
    %v4074 = vunpack.c.l.b16 %v612
    %v4075 = vunpack.c.h.b16 %v612
    %v4076 = vunpack.c.l.b16 %v613
    %v4077 = vunpack.c.h.b16 %v613
    %v4078 = vunpack.c.l.b16 %v614
    %v4079 = vunpack.c.h.b16 %v614
    %v4080 = vunpack.c.l.b16 %v615
    %v4081 = vunpack.c.h.b16 %v615
    %v4082 = vunpack.c.l.b16 %v616
    %v4083 = vunpack.c.h.b16 %v616
    %v4084 = vunpack.c.l.b16 %v617
    %v4085 = vunpack.c.h.b16 %v617
    %v4086 = vunpack.c.l.b16 %v618
    %v4087 = vunpack.c.h.b16 %v618
    %v4088 = vunpack.c.l.b16 %v619
    %v4089 = vunpack.c.h.b16 %v619
    %v4090 = vunpack.c.l.b16 %v620
    %v4091 = vunpack.c.h.b16 %v620
    %v4092 = vunpack.c.l.b16 %v621
    %v4093 = vunpack.c.h.b16 %v621
    %v4094 = vunpack.c.l.b16 %v622
    %v4095 = vunpack.c.h.b16 %v622
    %v4096 = vunpack.c.l.b16 %v623
    %v4097 = vunpack.c.h.b16 %v623
    %v4098 = vunpack.c.l.b16 %v624
    %v4099 = vunpack.c.h.b16 %v624
    %v4100 = vunpack.c.l.b16 %v625
    %v4101 = vunpack.c.h.b16 %v625
    %v4102 = vunpack.c.l.b16 %v626
    %v4103 = vunpack.c.h.b16 %v626
    %v4104 = vunpack.c.l.b16 %v627
    %v4105 = vunpack.c.h.b16 %v627
    %v4106 = vunpack.c.l.b16 %v628
    %v4107 = vunpack.c.h.b16 %v628
    %v4108 = vunpack.c.l.b16 %v629
    %v4109 = vunpack.c.h.b16 %v629
    %v4110 = vunpack.c.l.b16 %v630
    %v4111 = vunpack.c.h.b16 %v630
    %v4112 = vunpack.c.l.b16 %v631
    %v4113 = vunpack.c.h.b16 %v631
    %v4114 = vunpack.c.l.b16 %v632
    %v4115 = vunpack.c.h.b16 %v632
    %v4116 = vunpack.c.l.b16 %v633
    %v4117 = vunpack.c.h.b16 %v633
    %v4118 = vunpack.c.l.b16 %v634
    %v4119 = vunpack.c.h.b16 %v634
    %v4120 = vunpack.c.l.b16 %v635
    %v4121 = vunpack.c.h.b16 %v635
    %v4122 = vunpack.c.l.b16 %v636
    %v4123 = vunpack.c.h.b16 %v636
    %v4124 = vunpack.c.l.b16 %v637
    %v4125 = vunpack.c.h.b16 %v637
    %v4126 = vunpack.c.l.b16 %v638
    %v4127 = vunpack.c.h.b16 %v638
    %v4128 = vunpack.c.l.b16 %v639
    %v4129 = vunpack.c.h.b16 %v639
    %v4130 = vunpack.c.l.b16 %v640
    %v4131 = vunpack.c.h.b16 %v640
    %v4132 = vunpack.c.l.b16 %v641
    %v4133 = vunpack.c.h.b16 %v641
    %v4134 = vunpack.c.l.b16 %v642
    %v4135 = vunpack.c.h.b16 %v642
    %v4136 = vunpack.c.l.b16 %v643
    %v4137 = vunpack.c.h.b16 %v643
    %v4138 = vunpack.c.l.b16 %v644
    %v4139 = vunpack.c.h.b16 %v644
    %v4140 = vunpack.c.l.b16 %v645
    %v4141 = vunpack.c.h.b16 %v645
    %v4142 = vunpack.c.l.b16 %v646
    %v4143 = vunpack.c.h.b16 %v646
    %v4144 = vunpack.c.l.b16 %v647
    %v4145 = vunpack.c.h.b16 %v647
    %v4146 = vunpack.c.l.b16 %v648
    %v4147 = vunpack.c.h.b16 %v648
    %v4148 = vunpack.c.l.b16 %v649
    %v4149 = vunpack.c.h.b16 %v649
    %v4150 = vunpack.c.l.b16 %v650
    %v4151 = vunpack.c.h.b16 %v650
    %v4152 = vunpack.c.l.b16 %v651
    %v4153 = vunpack.c.h.b16 %v651
    %v4154 = vunpack.c.l.b16 %v652
    %v4155 = vunpack.c.h.b16 %v652
    %v4156 = vunpack.c.l.b16 %v653
    %v4157 = vunpack.c.h.b16 %v653
    %v4158 = vunpack.c.l.b16 %v654
    %v4159 = vunpack.c.h.b16 %v654
    %v4160 = vunpack.c.l.b16 %v655
    %v4161 = vunpack.c.h.b16 %v655
    %v4162 = vunpack.c.l.b16 %v656
    %v4163 = vunpack.c.h.b16 %v656
    %v4164 = vunpack.c.l.b16 %v657
    %v4165 = vunpack.c.h.b16 %v657
    %v4166 = vunpack.c.l.b16 %v658
    %v4167 = vunpack.c.h.b16 %v658
    %v4168 = vunpack.c.l.b16 %v659
    %v4169 = vunpack.c.h.b16 %v659
    %v4170 = vunpack.c.l.b16 %v660
    %v4171 = vunpack.c.h.b16 %v660
    %v4172 = vunpack.c.l.b16 %v661
    %v4173 = vunpack.c.h.b16 %v661
    %v4174 = vunpack.c.l.b16 %v662
    %v4175 = vunpack.c.h.b16 %v662
    %v4176 = vunpack.c.l.b16 %v663
    %v4177 = vunpack.c.h.b16 %v663
    %v4178 = vunpack.c.l.b16 %v664
    %v4179 = vunpack.c.h.b16 %v664
    %v4180 = vunpack.c.l.b16 %v665
    %v4181 = vunpack.c.h.b16 %v665
    %v4182 = vunpack.c.l.b16 %v666
    %v4183 = vunpack.c.h.b16 %v666
    %v4184 = vunpack.c.l.b16 %v667
    %v4185 = vunpack.c.h.b16 %v667
    %v4186 = vunpack.c.l.b16 %v668
    %v4187 = vunpack.c.h.b16 %v668
    %v4188 = vunpack.c.l.b16 %v669
    %v4189 = vunpack.c.h.b16 %v669
    %v4190 = vunpack.c.l.b16 %v670
    %v4191 = vunpack.c.h.b16 %v670
    %v4192 = vunpack.c.l.b16 %v671
    %v4193 = vunpack.c.h.b16 %v671
    %v4194 = vunpack.c.l.b16 %v672
    %v4195 = vunpack.c.h.b16 %v672
    %v4196 = vunpack.c.l.b16 %v673
    %v4197 = vunpack.c.h.b16 %v673
    %v4198 = vunpack.c.l.b16 %v674
    %v4199 = vunpack.c.h.b16 %v674
    %v4200 = vunpack.c.l.b16 %v675
    %v4201 = vunpack.c.h.b16 %v675
    %v4202 = vunpack.c.l.b16 %v676
    %v4203 = vunpack.c.h.b16 %v676
    %v4204 = vunpack.c.l.b16 %v677
    %v4205 = vunpack.c.h.b16 %v677
    %v4206 = vunpack.c.l.b16 %v678
    %v4207 = vunpack.c.h.b16 %v678
    %v4208 = vunpack.c.l.b16 %v679
    %v4209 = vunpack.c.h.b16 %v679
    %v4210 = vunpack.c.l.b16 %v680
    %v4211 = vunpack.c.h.b16 %v680
    %v4212 = vunpack.c.l.b16 %v681
    %v4213 = vunpack.c.h.b16 %v681
    %v4214 = vunpack.c.l.b16 %v682
    %v4215 = vunpack.c.h.b16 %v682
    %v4216 = vunpack.c.l.b16 %v683
    %v4217 = vunpack.c.h.b16 %v683
    %v4218 = vunpack.c.l.b16 %v684
    %v4219 = vunpack.c.h.b16 %v684
    %v4220 = vunpack.c.l.b16 %v685
    %v4221 = vunpack.c.h.b16 %v685
    %v4222 = vunpack.c.l.b16 %v686
    %v4223 = vunpack.c.h.b16 %v686
    %v4224 = vunpack.c.l.b16 %v687
    %v4225 = vunpack.c.h.b16 %v687
    %v4226 = vunpack.c.l.b16 %v688
    %v4227 = vunpack.c.h.b16 %v688
    %v4228 = vunpack.c.l.b16 %v689
    %v4229 = vunpack.c.h.b16 %v689
    %v4230 = vunpack.c.l.b16 %v690
    %v4231 = vunpack.c.h.b16 %v690
    %v4232 = vunpack.c.l.b16 %v691
    %v4233 = vunpack.c.h.b16 %v691
    %v4234 = vunpack.c.l.b16 %v692
    %v4235 = vunpack.c.h.b16 %v692
    %v4236 = vunpack.c.l.b16 %v693
    %v4237 = vunpack.c.h.b16 %v693
    %v4238 = vunpack.c.l.b16 %v694
    %v4239 = vunpack.c.h.b16 %v694
    %v4240 = vunpack.c.l.b16 %v695
    %v4241 = vunpack.c.h.b16 %v695
    %v4242 = vunpack.c.l.b16 %v696
    %v4243 = vunpack.c.h.b16 %v696
    %v4244 = vunpack.c.l.b16 %v697
    %v4245 = vunpack.c.h.b16 %v697
    %v4246 = vunpack.c.l.b16 %v698
    %v4247 = vunpack.c.h.b16 %v698
    %v4248 = vunpack.c.l.b16 %v699
    %v4249 = vunpack.c.h.b16 %v699
    %v4250 = vunpack.c.l.b16 %v700
    %v4251 = vunpack.c.h.b16 %v700
    %v4252 = vunpack.c.l.b16 %v701
    %v4253 = vunpack.c.h.b16 %v701
    %v4254 = vunpack.c.l.b16 %v702
    %v4255 = vunpack.c.h.b16 %v702
    %v4256 = vunpack.c.l.b16 %v703
    %v4257 = vunpack.c.h.b16 %v703
    %v4258 = vunpack.c.l.b16 %v704
    %v4259 = vunpack.c.h.b16 %v704
    %v4260 = vunpack.c.l.b16 %v705
    %v4261 = vunpack.c.h.b16 %v705
    %v4262 = vunpack.c.l.b16 %v706
    %v4263 = vunpack.c.h.b16 %v706
    %v4264 = vunpack.c.l.b16 %v707
    %v4265 = vunpack.c.h.b16 %v707
    %v4266 = vunpack.c.l.b16 %v708
    %v4267 = vunpack.c.h.b16 %v708
    %v4268 = vunpack.c.l.b16 %v709
    %v4269 = vunpack.c.h.b16 %v709
    %v4270 = vunpack.c.l.b16 %v710
    %v4271 = vunpack.c.h.b16 %v710
    %v4272 = vunpack.c.l.b16 %v711
    %v4273 = vunpack.c.h.b16 %v711
    %v4274 = vunpack.c.l.b16 %v712
    %v4275 = vunpack.c.h.b16 %v712
    %v4276 = vunpack.c.l.b16 %v713
    %v4277 = vunpack.c.h.b16 %v713
    %v4278 = vunpack.c.l.b16 %v714
    %v4279 = vunpack.c.h.b16 %v714
    %v4280 = vunpack.c.l.b16 %v715
    %v4281 = vunpack.c.h.b16 %v715
    %v4282 = vunpack.c.l.b16 %v716
    %v4283 = vunpack.c.h.b16 %v716
    %v4284 = vunpack.c.l.b16 %v717
    %v4285 = vunpack.c.h.b16 %v717
    %v4286 = vunpack.c.l.b16 %v718
    %v4287 = vunpack.c.h.b16 %v718
    %v4288 = vunpack.c.l.b16 %v719
    %v4289 = vunpack.c.h.b16 %v719
    %v4290 = vunpack.c.l.b16 %v720
    %v4291 = vunpack.c.h.b16 %v720
    %v4292 = vunpack.c.l.b16 %v721
    %v4293 = vunpack.c.h.b16 %v721
    %v4294 = vunpack.c.l.b16 %v722
    %v4295 = vunpack.c.h.b16 %v722
    %v4296 = vunpack.c.l.b16 %v723
    %v4297 = vunpack.c.h.b16 %v723
    %v4298 = vunpack.c.l.b16 %v724
    %v4299 = vunpack.c.h.b16 %v724
    %v4300 = vunpack.c.l.b16 %v725
    %v4301 = vunpack.c.h.b16 %v725
    %v4302 = vunpack.c.l.b16 %v726
    %v4303 = vunpack.c.h.b16 %v726
    %v4304 = vunpack.c.l.b16 %v727
    %v4305 = vunpack.c.h.b16 %v727
    %v4306 = vunpack.c.l.b16 %v728
    %v4307 = vunpack.c.h.b16 %v728
    %v4308 = vunpack.c.l.b16 %v729
    %v4309 = vunpack.c.h.b16 %v729
    %v4310 = vunpack.c.l.b16 %v730
    %v4311 = vunpack.c.h.b16 %v730
    %v4312 = vunpack.c.l.b16 %v731
    %v4313 = vunpack.c.h.b16 %v731
    %v4314 = vunpack.c.l.b16 %v732
    %v4315 = vunpack.c.h.b16 %v732
    %v4316 = vunpack.c.l.b16 %v733
    %v4317 = vunpack.c.h.b16 %v733
    %v4318 = vunpack.c.l.b16 %v734
    %v4319 = vunpack.c.h.b16 %v734
    %v4320 = vunpack.c.l.b16 %v735
    %v4321 = vunpack.c.h.b16 %v735
    %v4322 = vunpack.c.l.b16 %v736
    %v4323 = vunpack.c.h.b16 %v736
    %v4324 = vunpack.c.l.b16 %v737
    %v4325 = vunpack.c.h.b16 %v737
    %v4326 = vunpack.c.l.b16 %v738
    %v4327 = vunpack.c.h.b16 %v738
    %v4328 = vunpack.c.l.b16 %v739
    %v4329 = vunpack.c.h.b16 %v739
    %v4330 = vunpack.c.l.b16 %v740
    %v4331 = vunpack.c.h.b16 %v740
    %v4332 = vunpack.c.l.b16 %v741
    %v4333 = vunpack.c.h.b16 %v741
    %v4334 = vunpack.c.l.b16 %v742
    %v4335 = vunpack.c.h.b16 %v742
    %v4336 = vunpack.c.l.b16 %v743
    %v4337 = vunpack.c.h.b16 %v743
    %v4338 = vunpack.c.l.b16 %v744
    %v4339 = vunpack.c.h.b16 %v744
    %v4340 = vunpack.c.l.b16 %v745
    %v4341 = vunpack.c.h.b16 %v745
    %v4342 = vunpack.c.l.b16 %v746
    %v4343 = vunpack.c.h.b16 %v746
    %v4344 = vunpack.c.l.b16 %v747
    %v4345 = vunpack.c.h.b16 %v747
    %v4346 = vunpack.c.l.b16 %v748
    %v4347 = vunpack.c.h.b16 %v748
    %v4348 = vunpack.c.l.b16 %v749
    %v4349 = vunpack.c.h.b16 %v749
    %v4350 = vunpack.c.l.b16 %v750
    %v4351 = vunpack.c.h.b16 %v750
    %v4352 = vunpack.c.l.b16 %v751
    %v4353 = vunpack.c.h.b16 %v751
    %v4354 = vunpack.c.l.b16 %v752
    %v4355 = vunpack.c.h.b16 %v752
    %v4356 = vunpack.c.l.b16 %v753
    %v4357 = vunpack.c.h.b16 %v753
    %v4358 = vunpack.c.l.b16 %v754
    %v4359 = vunpack.c.h.b16 %v754
    %v4360 = vunpack.c.l.b16 %v755
    %v4361 = vunpack.c.h.b16 %v755
    %v4362 = vunpack.c.l.b16 %v756
    %v4363 = vunpack.c.h.b16 %v756
    %v4364 = vunpack.c.l.b16 %v757
    %v4365 = vunpack.c.h.b16 %v757
    %v4366 = vunpack.c.l.b16 %v758
    %v4367 = vunpack.c.h.b16 %v758
    %v4368 = vunpack.c.l.b16 %v759
    %v4369 = vunpack.c.h.b16 %v759
    %v4370 = vunpack.c.l.b16 %v760
    %v4371 = vunpack.c.h.b16 %v760
    %v4372 = vunpack.c.l.b16 %v761
    %v4373 = vunpack.c.h.b16 %v761
    %v4374 = vunpack.c.l.b16 %v762
    %v4375 = vunpack.c.h.b16 %v762
    %v4376 = vunpack.c.l.b16 %v763
    %v4377 = vunpack.c.h.b16 %v763
    %v4378 = vunpack.c.l.b16 %v764
    %v4379 = vunpack.c.h.b16 %v764
    %v4380 = vunpack.c.l.b16 %v765
    %v4381 = vunpack.c.h.b16 %v765
    %v4382 = vunpack.c.l.b16 %v766
    %v4383 = vunpack.c.h.b16 %v766
    %v4384 = vunpack.c.l.b16 %v767
    %v4385 = vunpack.c.h.b16 %v767
    %v4386 = vunpack.c.l.b16 %v768
    %v4387 = vunpack.c.h.b16 %v768
    %v4388 = vunpack.c.l.b16 %v769
    %v4389 = vunpack.c.h.b16 %v769
    %v4390 = vunpack.c.l.b16 %v770
    %v4391 = vunpack.c.h.b16 %v770
    %v4392 = vunpack.c.l.b16 %v771
    %v4393 = vunpack.c.h.b16 %v771
    %v4394 = vunpack.c.l.b16 %v772
    %v4395 = vunpack.c.h.b16 %v772
    %v4396 = vunpack.c.l.b16 %v773
    %v4397 = vunpack.c.h.b16 %v773
    %v4398 = vunpack.c.l.b16 %v774
    %v4399 = vunpack.c.h.b16 %v774
    %v4400 = vunpack.c.l.b16 %v775
    %v4401 = vunpack.c.h.b16 %v775
    %v4402 = vunpack.c.l.b16 %v776
    %v4403 = vunpack.c.h.b16 %v776
    %v4404 = vunpack.c.l.b16 %v777
    %v4405 = vunpack.c.h.b16 %v777
    %v4406 = vunpack.c.l.b16 %v778
    %v4407 = vunpack.c.h.b16 %v778
    %v4408 = vunpack.c.l.b16 %v779
    %v4409 = vunpack.c.h.b16 %v779
    %v4410 = vunpack.c.l.b16 %v780
    %v4411 = vunpack.c.h.b16 %v780
    %v4412 = vunpack.c.l.b16 %v781
    %v4413 = vunpack.c.h.b16 %v781
    %v4414 = vunpack.c.l.b16 %v782
    %v4415 = vunpack.c.h.b16 %v782
    %v4416 = vunpack.c.l.b16 %v783
    %v4417 = vunpack.c.h.b16 %v783
    %v4418 = vunpack.c.l.b16 %v784
    %v4419 = vunpack.c.h.b16 %v784
    %v4420 = vunpack.c.l.b16 %v785
    %v4421 = vunpack.c.h.b16 %v785
    %v4422 = vunpack.c.l.b16 %v786
    %v4423 = vunpack.c.h.b16 %v786
    %v4424 = vunpack.c.l.b16 %v787
    %v4425 = vunpack.c.h.b16 %v787
    %v4426 = vunpack.c.l.b16 %v788
    %v4427 = vunpack.c.h.b16 %v788
    %v4428 = vunpack.c.l.b16 %v789
    %v4429 = vunpack.c.h.b16 %v789
    %v4430 = vunpack.c.l.b16 %v790
    %v4431 = vunpack.c.h.b16 %v790
    %v4432 = vunpack.c.l.b16 %v791
    %v4433 = vunpack.c.h.b16 %v791
    %v4434 = vunpack.c.l.b16 %v792
    %v4435 = vunpack.c.h.b16 %v792
    %v4436 = vunpack.c.l.b16 %v793
    %v4437 = vunpack.c.h.b16 %v793
    %v4438 = vunpack.c.l.b16 %v794
    %v4439 = vunpack.c.h.b16 %v794
    %v4440 = vunpack.c.l.b16 %v795
    %v4441 = vunpack.c.h.b16 %v795
    %v4442 = vunpack.c.l.b16 %v796
    %v4443 = vunpack.c.h.b16 %v796
    %v4444 = vunpack.c.l.b16 %v797
    %v4445 = vunpack.c.h.b16 %v797
    %v4446 = vunpack.c.l.b16 %v798
    %v4447 = vunpack.c.h.b16 %v798
    %v4448 = vunpack.c.l.b16 %v799
    %v4449 = vunpack.c.h.b16 %v799
    %v4450 = vunpack.c.l.b16 %v800
    %v4451 = vunpack.c.h.b16 %v800
    %v4452 = vunpack.c.l.b16 %v801
    %v4453 = vunpack.c.h.b16 %v801
    %v4454 = vunpack.c.l.b16 %v802
    %v4455 = vunpack.c.h.b16 %v802
    %v4456 = vunpack.c.l.b16 %v803
    %v4457 = vunpack.c.h.b16 %v803
    %v4458 = vunpack.c.l.b16 %v804
    %v4459 = vunpack.c.h.b16 %v804
    %v4460 = vunpack.c.l.b16 %v805
    %v4461 = vunpack.c.h.b16 %v805
    %v4462 = vunpack.c.l.b16 %v806
    %v4463 = vunpack.c.h.b16 %v806
    %v4464 = vunpack.c.l.b16 %v807
    %v4465 = vunpack.c.h.b16 %v807
    %v4466 = vunpack.c.l.b16 %v808
    %v4467 = vunpack.c.h.b16 %v808
    %v4468 = vunpack.c.l.b16 %v809
    %v4469 = vunpack.c.h.b16 %v809
    %v4470 = vunpack.c.l.b16 %v810
    %v4471 = vunpack.c.h.b16 %v810
    %v4472 = vunpack.c.l.b16 %v811
    %v4473 = vunpack.c.h.b16 %v811
    %v4474 = vunpack.c.l.b16 %v812
    %v4475 = vunpack.c.h.b16 %v812
    %v4476 = vunpack.c.l.b16 %v813
    %v4477 = vunpack.c.h.b16 %v813
    %v4478 = vunpack.c.l.b16 %v814
    %v4479 = vunpack.c.h.b16 %v814
    %v4480 = vunpack.c.l.b16 %v815
    %v4481 = vunpack.c.h.b16 %v815
    %v4482 = vunpack.c.l.b16 %v816
    %v4483 = vunpack.c.h.b16 %v816
    %v4484 = vunpack.c.l.b16 %v817
    %v4485 = vunpack.c.h.b16 %v817
    %v4486 = vunpack.c.l.b16 %v818
    %v4487 = vunpack.c.h.b16 %v818
    %v4488 = vunpack.c.l.b16 %v819
    %v4489 = vunpack.c.h.b16 %v819
    %v4490 = vunpack.c.l.b16 %v820
    %v4491 = vunpack.c.h.b16 %v820
    %v4492 = vunpack.c.l.b16 %v821
    %v4493 = vunpack.c.h.b16 %v821
    %v4494 = vunpack.c.l.b16 %v822
    %v4495 = vunpack.c.h.b16 %v822
    %v4496 = vunpack.c.l.b16 %v823
    %v4497 = vunpack.c.h.b16 %v823
    %v4498 = vunpack.c.l.b16 %v824
    %v4499 = vunpack.c.h.b16 %v824
    %v4500 = vunpack.c.l.b16 %v825
    %v4501 = vunpack.c.h.b16 %v825
    %v4502 = vunpack.c.l.b16 %v826
    %v4503 = vunpack.c.h.b16 %v826
    %v4504 = vunpack.c.l.b16 %v827
    %v4505 = vunpack.c.h.b16 %v827
    %v4506 = vunpack.c.l.b16 %v828
    %v4507 = vunpack.c.h.b16 %v828
    %v4508 = vunpack.c.l.b16 %v829
    %v4509 = vunpack.c.h.b16 %v829
    %v4510 = vunpack.c.l.b16 %v830
    %v4511 = vunpack.c.h.b16 %v830
    %v4512 = vunpack.c.l.b16 %v831
    %v4513 = vunpack.c.h.b16 %v831
    %v4514 = vunpack.c.l.b16 %v832
    %v4515 = vunpack.c.h.b16 %v832
    %v4516 = vunpack.c.l.b16 %v833
    %v4517 = vunpack.c.h.b16 %v833
    %v4518 = vunpack.c.l.b16 %v834
    %v4519 = vunpack.c.h.b16 %v834
    %v4520 = vunpack.c.l.b16 %v835
    %v4521 = vunpack.c.h.b16 %v835
    %v4522 = vunpack.c.l.b16 %v836
    %v4523 = vunpack.c.h.b16 %v836
    %v4524 = vunpack.c.l.b16 %v837
    %v4525 = vunpack.c.h.b16 %v837
    %v4526 = vunpack.c.l.b16 %v838
    %v4527 = vunpack.c.h.b16 %v838
    %v4528 = vunpack.c.l.b16 %v839
    %v4529 = vunpack.c.h.b16 %v839
    %v4530 = vunpack.c.l.b16 %v840
    %v4531 = vunpack.c.h.b16 %v840
    %v4532 = vunpack.c.l.b16 %v841
    %v4533 = vunpack.c.h.b16 %v841
    %v4534 = vunpack.c.l.b16 %v842
    %v4535 = vunpack.c.h.b16 %v842
    %v4536 = vunpack.c.l.b16 %v843
    %v4537 = vunpack.c.h.b16 %v843
    %v4538 = vunpack.c.l.b16 %v844
    %v4539 = vunpack.c.h.b16 %v844
    %v4540 = vunpack.c.l.b16 %v845
    %v4541 = vunpack.c.h.b16 %v845
    %v4542 = vunpack.c.l.b16 %v846
    %v4543 = vunpack.c.h.b16 %v846
    %v4544 = vunpack.c.l.b16 %v847
    %v4545 = vunpack.c.h.b16 %v847
    %v4546 = vunpack.c.l.b16 %v848
    %v4547 = vunpack.c.h.b16 %v848
    %v4548 = vunpack.c.l.b16 %v849
    %v4549 = vunpack.c.h.b16 %v849
    %v4550 = vunpack.c.l.b16 %v850
    %v4551 = vunpack.c.h.b16 %v850
    %v4552 = vunpack.c.l.b16 %v851
    %v4553 = vunpack.c.h.b16 %v851
    %v4554 = vunpack.c.l.b16 %v852
    %v4555 = vunpack.c.h.b16 %v852
    %v4556 = vunpack.c.l.b16 %v853
    %v4557 = vunpack.c.h.b16 %v853
    %v4558 = vunpack.c.l.b16 %v854
    %v4559 = vunpack.c.h.b16 %v854
    %v4560 = vunpack.c.l.b16 %v855
    %v4561 = vunpack.c.h.b16 %v855
    %v4562 = vunpack.c.l.b16 %v856
    %v4563 = vunpack.c.h.b16 %v856
    %v4564 = vunpack.c.l.b16 %v857
    %v4565 = vunpack.c.h.b16 %v857
    %v4566 = vunpack.c.l.b16 %v858
    %v4567 = vunpack.c.h.b16 %v858
    %v4568 = vunpack.c.l.b16 %v859
    %v4569 = vunpack.c.h.b16 %v859
    %v4570 = vunpack.c.l.b16 %v860
    %v4571 = vunpack.c.h.b16 %v860
    %v4572 = vunpack.c.l.b16 %v861
    %v4573 = vunpack.c.h.b16 %v861
    %v4574 = vunpack.c.l.b16 %v862
    %v4575 = vunpack.c.h.b16 %v862
    %v4576 = vunpack.c.l.b16 %v863
    %v4577 = vunpack.c.h.b16 %v863
    %v4578 = vunpack.c.l.b16 %v864
    %v4579 = vunpack.c.h.b16 %v864
    %v4580 = vunpack.c.l.b16 %v865
    %v4581 = vunpack.c.h.b16 %v865
    %v4582 = vunpack.c.l.b16 %v866
    %v4583 = vunpack.c.h.b16 %v866
    %v4584 = vunpack.c.l.b16 %v867
    %v4585 = vunpack.c.h.b16 %v867
    %v4586 = vunpack.c.l.b16 %v868
    %v4587 = vunpack.c.h.b16 %v868
    %v4588 = vunpack.c.l.b16 %v869
    %v4589 = vunpack.c.h.b16 %v869
    %v4590 = vunpack.c.l.b16 %v870
    %v4591 = vunpack.c.h.b16 %v870
    %v4592 = vunpack.c.l.b16 %v871
    %v4593 = vunpack.c.h.b16 %v871
    %v4594 = vunpack.c.l.b16 %v872
    %v4595 = vunpack.c.h.b16 %v872
    %v4596 = vunpack.c.l.b16 %v873
    %v4597 = vunpack.c.h.b16 %v873
    %v4598 = vunpack.c.l.b16 %v874
    %v4599 = vunpack.c.h.b16 %v874
    %v4600 = vunpack.c.l.b16 %v875
    %v4601 = vunpack.c.h.b16 %v875
    %v4602 = vunpack.c.l.b16 %v876
    %v4603 = vunpack.c.h.b16 %v876
    %v4604 = vunpack.c.l.b16 %v877
    %v4605 = vunpack.c.h.b16 %v877
    %v4606 = vunpack.c.l.b16 %v878
    %v4607 = vunpack.c.h.b16 %v878
    %v4608 = vunpack.c.l.b16 %v879
    %v4609 = vunpack.c.h.b16 %v879
    %v4610 = vunpack.c.l.b16 %v880
    %v4611 = vunpack.c.h.b16 %v880
    %v4612 = vunpack.c.l.b16 %v881
    %v4613 = vunpack.c.h.b16 %v881
    %v4614 = vunpack.c.l.b16 %v882
    %v4615 = vunpack.c.h.b16 %v882
    %v4616 = vunpack.c.l.b16 %v883
    %v4617 = vunpack.c.h.b16 %v883
    %v4618 = vunpack.c.l.b16 %v884
    %v4619 = vunpack.c.h.b16 %v884
    %v4620 = vunpack.c.l.b16 %v885
    %v4621 = vunpack.c.h.b16 %v885
    %v4622 = vunpack.c.l.b16 %v886
    %v4623 = vunpack.c.h.b16 %v886
    %v4624 = vunpack.c.l.b16 %v887
    %v4625 = vunpack.c.h.b16 %v887
    %v4626 = vunpack.c.l.b16 %v888
    %v4627 = vunpack.c.h.b16 %v888
    %v4628 = vunpack.c.l.b16 %v889
    %v4629 = vunpack.c.h.b16 %v889
    %v4630 = vunpack.c.l.b16 %v890
    %v4631 = vunpack.c.h.b16 %v890
    %v4632 = vunpack.c.l.b16 %v891
    %v4633 = vunpack.c.h.b16 %v891
    %v4634 = vunpack.c.l.b16 %v892
    %v4635 = vunpack.c.h.b16 %v892
    %v4636 = vunpack.c.l.b16 %v893
    %v4637 = vunpack.c.h.b16 %v893
    %v4638 = vunpack.c.l.b16 %v894
    %v4639 = vunpack.c.h.b16 %v894
    %v4640 = vunpack.c.l.b16 %v895
    %v4641 = vunpack.c.h.b16 %v895
    %v4642 = vunpack.c.l.b16 %v896
    %v4643 = vunpack.c.h.b16 %v896
    %v4644 = vunpack.c.l.b16 %v897
    %v4645 = vunpack.c.h.b16 %v897
    %v4646 = vunpack.c.l.b16 %v898
    %v4647 = vunpack.c.h.b16 %v898
    %v4648 = vunpack.c.l.b16 %v899
    %v4649 = vunpack.c.h.b16 %v899
    %v4650 = vunpack.c.l.b16 %v900
    %v4651 = vunpack.c.h.b16 %v900
    %v4652 = vunpack.c.l.b16 %v901
    %v4653 = vunpack.c.h.b16 %v901
    %v4654 = vunpack.c.l.b16 %v902
    %v4655 = vunpack.c.h.b16 %v902
    %v4656 = vunpack.c.l.b16 %v903
    %v4657 = vunpack.c.h.b16 %v903
    %v4658 = vunpack.c.l.b16 %v904
    %v4659 = vunpack.c.h.b16 %v904
    %v4660 = vunpack.c.l.b16 %v905
    %v4661 = vunpack.c.h.b16 %v905
    %v4662 = vunpack.c.l.b16 %v906
    %v4663 = vunpack.c.h.b16 %v906
    %v4664 = vunpack.c.l.b16 %v907
    %v4665 = vunpack.c.h.b16 %v907
    %v4666 = vunpack.c.l.b16 %v908
    %v4667 = vunpack.c.h.b16 %v908
    %v4668 = vunpack.c.l.b16 %v909
    %v4669 = vunpack.c.h.b16 %v909
    %v4670 = vunpack.c.l.b16 %v910
    %v4671 = vunpack.c.h.b16 %v910
    %v4672 = vunpack.c.l.b16 %v911
    %v4673 = vunpack.c.h.b16 %v911
    %v4674 = vunpack.c.l.b16 %v912
    %v4675 = vunpack.c.h.b16 %v912
    %v4676 = vunpack.c.l.b16 %v913
    %v4677 = vunpack.c.h.b16 %v913
    %v4678 = vunpack.c.l.b16 %v914
    %v4679 = vunpack.c.h.b16 %v914
    %v4680 = vunpack.c.l.b16 %v915
    %v4681 = vunpack.c.h.b16 %v915
    %v4682 = vunpack.c.l.b16 %v916
    %v4683 = vunpack.c.h.b16 %v916
    %v4684 = vunpack.c.l.b16 %v917
    %v4685 = vunpack.c.h.b16 %v917
    %v4686 = vunpack.c.l.b16 %v918
    %v4687 = vunpack.c.h.b16 %v918
    %v4688 = vunpack.c.l.b16 %v919
    %v4689 = vunpack.c.h.b16 %v919
    %v4690 = vunpack.c.l.b16 %v920
    %v4691 = vunpack.c.h.b16 %v920
    %v4692 = vunpack.c.l.b16 %v921
    %v4693 = vunpack.c.h.b16 %v921
    %v4694 = vunpack.c.l.b16 %v922
    %v4695 = vunpack.c.h.b16 %v922
    %v4696 = vunpack.c.l.b16 %v923
    %v4697 = vunpack.c.h.b16 %v923
    %v4698 = vunpack.c.l.b16 %v924
    %v4699 = vunpack.c.h.b16 %v924
    %v4700 = vunpack.c.l.b16 %v925
    %v4701 = vunpack.c.h.b16 %v925
    %v4702 = vunpack.c.l.b16 %v926
    %v4703 = vunpack.c.h.b16 %v926
    %v4704 = vunpack.c.l.b16 %v927
    %v4705 = vunpack.c.h.b16 %v927
    %v4706 = vunpack.c.l.b16 %v928
    %v4707 = vunpack.c.h.b16 %v928
    %v4708 = vunpack.c.l.b16 %v929
    %v4709 = vunpack.c.h.b16 %v929
    %v4710 = vunpack.c.l.b16 %v930
    %v4711 = vunpack.c.h.b16 %v930
    %v4712 = vunpack.c.l.b16 %v931
    %v4713 = vunpack.c.h.b16 %v931
    %v4714 = vunpack.c.l.b16 %v932
    %v4715 = vunpack.c.h.b16 %v932
    %v4716 = vunpack.c.l.b16 %v933
    %v4717 = vunpack.c.h.b16 %v933
    %v4718 = vunpack.c.l.b16 %v934
    %v4719 = vunpack.c.h.b16 %v934
    %v4720 = vunpack.c.l.b16 %v935
    %v4721 = vunpack.c.h.b16 %v935
    %v4722 = vunpack.c.l.b16 %v936
    %v4723 = vunpack.c.h.b16 %v936
    %v4724 = vunpack.c.l.b16 %v937
    %v4725 = vunpack.c.h.b16 %v937
    %v4726 = vunpack.c.l.b16 %v938
    %v4727 = vunpack.c.h.b16 %v938
    %v4728 = vunpack.c.l.b16 %v939
    %v4729 = vunpack.c.h.b16 %v939
    %v4730 = vunpack.c.l.b16 %v940
    %v4731 = vunpack.c.h.b16 %v940
    %v4732 = vunpack.c.l.b16 %v941
    %v4733 = vunpack.c.h.b16 %v941
    %v4734 = vunpack.c.l.b16 %v942
    %v4735 = vunpack.c.h.b16 %v942
    %v4736 = vunpack.c.l.b16 %v943
    %v4737 = vunpack.c.h.b16 %v943
    %v4738 = vunpack.c.l.b16 %v944
    %v4739 = vunpack.c.h.b16 %v944
    %v4740 = vunpack.c.l.b16 %v945
    %v4741 = vunpack.c.h.b16 %v945
    %v4742 = vunpack.c.l.b16 %v946
    %v4743 = vunpack.c.h.b16 %v946
    %v4744 = vunpack.c.l.b16 %v947
    %v4745 = vunpack.c.h.b16 %v947
    %v4746 = vunpack.c.l.b16 %v948
    %v4747 = vunpack.c.h.b16 %v948
    %v4748 = vunpack.c.l.b16 %v949
    %v4749 = vunpack.c.h.b16 %v949
    %v4750 = vunpack.c.l.b16 %v950
    %v4751 = vunpack.c.h.b16 %v950
    %v4752 = vunpack.c.l.b16 %v951
    %v4753 = vunpack.c.h.b16 %v951
    %v4754 = vunpack.c.l.b16 %v952
    %v4755 = vunpack.c.h.b16 %v952
    %v4756 = vunpack.c.l.b16 %v953
    %v4757 = vunpack.c.h.b16 %v953
    %v4758 = vunpack.c.l.b16 %v954
    %v4759 = vunpack.c.h.b16 %v954
    %v4760 = vunpack.c.l.b16 %v955
    %v4761 = vunpack.c.h.b16 %v955
    %v4762 = vunpack.c.l.b16 %v956
    %v4763 = vunpack.c.h.b16 %v956
    %v4764 = vunpack.c.l.b16 %v957
    %v4765 = vunpack.c.h.b16 %v957
    %v4766 = vunpack.c.l.b16 %v958
    %v4767 = vunpack.c.h.b16 %v958
    %v4768 = vunpack.c.l.b16 %v959
    %v4769 = vunpack.c.h.b16 %v959
    %v4770 = vunpack.c.l.b16 %v960
    %v4771 = vunpack.c.h.b16 %v960
    %v4772 = vunpack.c.l.b16 %v961
    %v4773 = vunpack.c.h.b16 %v961
    %v4774 = vunpack.c.l.b16 %v962
    %v4775 = vunpack.c.h.b16 %v962
    %v4776 = vunpack.c.l.b16 %v963
    %v4777 = vunpack.c.h.b16 %v963
    %v4778 = vunpack.c.l.b16 %v964
    %v4779 = vunpack.c.h.b16 %v964
    %v4780 = vunpack.c.l.b16 %v965
    %v4781 = vunpack.c.h.b16 %v965
    %v4782 = vunpack.c.l.b16 %v966
    %v4783 = vunpack.c.h.b16 %v966
    %v4784 = vunpack.c.l.b16 %v967
    %v4785 = vunpack.c.h.b16 %v967
    %v4786 = vunpack.c.l.b16 %v968
    %v4787 = vunpack.c.h.b16 %v968
    %v4788 = vunpack.c.l.b16 %v969
    %v4789 = vunpack.c.h.b16 %v969
    %v4790 = vunpack.c.l.b16 %v970
    %v4791 = vunpack.c.h.b16 %v970
    %v4792 = vunpack.c.l.b16 %v971
    %v4793 = vunpack.c.h.b16 %v971
    %v4794 = vunpack.c.l.b16 %v972
    %v4795 = vunpack.c.h.b16 %v972
    %v4796 = vunpack.c.l.b16 %v973
    %v4797 = vunpack.c.h.b16 %v973
    %v4798 = vunpack.c.l.b16 %v974
    %v4799 = vunpack.c.h.b16 %v974
    %v4800 = vunpack.c.l.b16 %v975
    %v4801 = vunpack.c.h.b16 %v975
    %v4802 = vunpack.c.l.b16 %v976
    %v4803 = vunpack.c.h.b16 %v976
    %v4804 = vunpack.c.l.b16 %v977
    %v4805 = vunpack.c.h.b16 %v977
    %v4806 = vunpack.c.l.b16 %v978
    %v4807 = vunpack.c.h.b16 %v978
    %v4808 = vunpack.c.l.b16 %v979
    %v4809 = vunpack.c.h.b16 %v979
    %v4810 = vunpack.c.l.b16 %v980
    %v4811 = vunpack.c.h.b16 %v980
    %v4812 = vunpack.c.l.b16 %v981
    %v4813 = vunpack.c.h.b16 %v981
    %v4814 = vunpack.c.l.b16 %v982
    %v4815 = vunpack.c.h.b16 %v982
    %v4816 = vunpack.c.l.b16 %v983
    %v4817 = vunpack.c.h.b16 %v983
    %v4818 = vunpack.c.l.b16 %v984
    %v4819 = vunpack.c.h.b16 %v984
    %v4820 = vunpack.c.l.b16 %v985
    %v4821 = vunpack.c.h.b16 %v985
    %v4822 = vunpack.c.l.b16 %v986
    %v4823 = vunpack.c.h.b16 %v986
    %v4824 = vunpack.c.l.b16 %v987
    %v4825 = vunpack.c.h.b16 %v987
    %v4826 = vunpack.c.l.b16 %v988
    %v4827 = vunpack.c.h.b16 %v988
    %v4828 = vunpack.c.l.b16 %v989
    %v4829 = vunpack.c.h.b16 %v989
    %v4830 = vunpack.c.l.b16 %v990
    %v4831 = vunpack.c.h.b16 %v990
    %v4832 = vunpack.c.l.b16 %v991
    %v4833 = vunpack.c.h.b16 %v991
    %v4834 = vunpack.c.l.b16 %v992
    %v4835 = vunpack.c.h.b16 %v992
    %v4836 = vunpack.c.l.b16 %v993
    %v4837 = vunpack.c.h.b16 %v993
    %v4838 = vunpack.c.l.b16 %v994
    %v4839 = vunpack.c.h.b16 %v994
    %v4840 = vunpack.c.l.b16 %v995
    %v4841 = vunpack.c.h.b16 %v995
    %v4842 = vunpack.c.l.b16 %v996
    %v4843 = vunpack.c.h.b16 %v996
    %v4844 = vunpack.c.l.b16 %v997
    %v4845 = vunpack.c.h.b16 %v997
    %v4846 = vunpack.c.l.b16 %v998
    %v4847 = vunpack.c.h.b16 %v998
    %v4848 = vunpack.c.l.b16 %v999
    %v4849 = vunpack.c.h.b16 %v999
    %v4850 = vunpack.c.l.b16 %v1000
    %v4851 = vunpack.c.h.b16 %v1000
    %v4852 = vunpack.c.l.b16 %v1001
    %v4853 = vunpack.c.h.b16 %v1001
    %v4854 = vunpack.c.l.b16 %v1002
    %v4855 = vunpack.c.h.b16 %v1002
    %v4856 = vunpack.c.l.b16 %v1003
    %v4857 = vunpack.c.h.b16 %v1003
    %v4858 = vunpack.c.l.b16 %v1004
    %v4859 = vunpack.c.h.b16 %v1004
    %v4860 = vunpack.c.l.b16 %v1005
    %v4861 = vunpack.c.h.b16 %v1005
    %v4862 = vunpack.c.l.b16 %v1006
    %v4863 = vunpack.c.h.b16 %v1006
    %v4864 = vunpack.c.l.b16 %v1007
    %v4865 = vunpack.c.h.b16 %v1007
    %v4866 = vunpack.c.l.b16 %v1008
    %v4867 = vunpack.c.h.b16 %v1008
    %v4868 = vunpack.c.l.b16 %v1009
    %v4869 = vunpack.c.h.b16 %v1009
    %v4870 = vunpack.c.l.b16 %v1010
    %v4871 = vunpack.c.h.b16 %v1010
    %v4872 = vunpack.c.l.b16 %v1011
    %v4873 = vunpack.c.h.b16 %v1011
    %v4874 = vunpack.c.l.b16 %v1012
    %v4875 = vunpack.c.h.b16 %v1012
    %v4876 = vunpack.c.l.b16 %v1013
    %v4877 = vunpack.c.h.b16 %v1013
    %v4878 = vunpack.c.l.b16 %v1014
    %v4879 = vunpack.c.h.b16 %v1014
    %v4880 = vunpack.c.l.b16 %v1015
    %v4881 = vunpack.c.h.b16 %v1015
    %v4882 = vunpack.c.l.b16 %v1016
    %v4883 = vunpack.c.h.b16 %v1016
    %v4884 = vunpack.c.l.b16 %v1017
    %v4885 = vunpack.c.h.b16 %v1017
    %v4886 = vunpack.c.l.b16 %v1018
    %v4887 = vunpack.c.h.b16 %v1018
    %v4888 = vunpack.c.l.b16 %v1019
    %v4889 = vunpack.c.h.b16 %v1019
    %v4890 = vunpack.c.l.b16 %v1020
    %v4891 = vunpack.c.h.b16 %v1020
    %v4892 = vunpack.c.l.b16 %v1021
    %v4893 = vunpack.c.h.b16 %v1021
    %v4894 = vunpack.c.l.b16 %v1022
    %v4895 = vunpack.c.h.b16 %v1022
    %v4896 = vunpack.c.l.b16 %v1023
    %v4897 = vunpack.c.h.b16 %v1023
    %v4898 = vunpack.c.l.b16 %v1024
    %v4899 = vunpack.c.h.b16 %v1024
    %v4900 = vunpack.c.l.b16 %v1025
    %v4901 = vunpack.c.h.b16 %v1025
    %v4902 = vunpack.c.l.b16 %v1026
    %v4903 = vunpack.c.h.b16 %v1026
    %v4904 = vunpack.c.l.b16 %v1027
    %v4905 = vunpack.c.h.b16 %v1027
    %v4906 = vunpack.c.l.b16 %v1028
    %v4907 = vunpack.c.h.b16 %v1028
    %v4908 = vunpack.c.l.b16 %v1029
    %v4909 = vunpack.c.h.b16 %v1029
    %v4910 = vunpack.c.l.b16 %v1030
    %v4911 = vunpack.c.h.b16 %v1030
    %v4912 = vunpack.c.l.b16 %v1031
    %v4913 = vunpack.c.h.b16 %v1031
    %v4914 = vunpack.c.l.b16 %v1032
    %v4915 = vunpack.c.h.b16 %v1032
    %v4916 = vunpack.c.l.b16 %v1033
    %v4917 = vunpack.c.h.b16 %v1033
    %v4918 = vunpack.c.l.b16 %v1034
    %v4919 = vunpack.c.h.b16 %v1034
    %v4920 = vunpack.c.l.b16 %v1035
    %v4921 = vunpack.c.h.b16 %v1035
    %v4922 = vunpack.c.l.b16 %v1036
    %v4923 = vunpack.c.h.b16 %v1036
    %v4924 = vunpack.c.l.b16 %v1037
    %v4925 = vunpack.c.h.b16 %v1037
    %v4926 = vunpack.c.l.b16 %v1038
    %v4927 = vunpack.c.h.b16 %v1038
    %v4928 = vunpack.c.l.b16 %v1039
    %v4929 = vunpack.c.h.b16 %v1039
    %v4930 = vunpack.c.l.b16 %v1040
    %v4931 = vunpack.c.h.b16 %v1040
    %v4932 = vunpack.c.l.b16 %v1041
    %v4933 = vunpack.c.h.b16 %v1041
    %v4934 = vunpack.c.l.b16 %v1042
    %v4935 = vunpack.c.h.b16 %v1042
    %v4936 = vunpack.c.l.b16 %v1043
    %v4937 = vunpack.c.h.b16 %v1043
    %v4938 = vunpack.c.l.b16 %v1044
    %v4939 = vunpack.c.h.b16 %v1044
    %v4940 = vunpack.c.l.b16 %v1045
    %v4941 = vunpack.c.h.b16 %v1045
    %v4942 = vunpack.c.l.b16 %v1046
    %v4943 = vunpack.c.h.b16 %v1046
    %v4944 = vunpack.c.l.b16 %v1047
    %v4945 = vunpack.c.h.b16 %v1047
    %v4946 = vunpack.c.l.b16 %v1048
    %v4947 = vunpack.c.h.b16 %v1048
    %v4948 = vunpack.c.l.b16 %v1049
    %v4949 = vunpack.c.h.b16 %v1049
    %v4950 = vunpack.c.l.b16 %v1050
    %v4951 = vunpack.c.h.b16 %v1050
    %v4952 = vunpack.c.l.b16 %v1051
    %v4953 = vunpack.c.h.b16 %v1051
    %v4954 = vunpack.c.l.b16 %v1052
    %v4955 = vunpack.c.h.b16 %v1052
    %v4956 = vunpack.c.l.b16 %v1053
    %v4957 = vunpack.c.h.b16 %v1053
    %v4958 = vunpack.c.l.b16 %v1054
    %v4959 = vunpack.c.h.b16 %v1054
    %v4960 = vunpack.c.l.b16 %v1055
    %v4961 = vunpack.c.h.b16 %v1055
    %v4962 = vunpack.c.l.b16 %v1056
    %v4963 = vunpack.c.h.b16 %v1056
    %v4964 = vunpack.c.l.b16 %v1057
    %v4965 = vunpack.c.h.b16 %v1057
    %v4966 = vunpack.c.l.b16 %v1058
    %v4967 = vunpack.c.h.b16 %v1058
    %v4968 = vunpack.c.l.b16 %v1059
    %v4969 = vunpack.c.h.b16 %v1059
    %v4970 = vunpack.c.l.b16 %v1060
    %v4971 = vunpack.c.h.b16 %v1060
    %v4972 = vunpack.c.l.b16 %v1061
    %v4973 = vunpack.c.h.b16 %v1061
    %v4974 = vunpack.c.l.b16 %v1062
    %v4975 = vunpack.c.h.b16 %v1062
    %v4976 = vunpack.c.l.b16 %v1063
    %v4977 = vunpack.c.h.b16 %v1063
    %v4978 = vunpack.c.l.b16 %v1064
    %v4979 = vunpack.c.h.b16 %v1064
    %v4980 = vunpack.c.l.b16 %v1065
    %v4981 = vunpack.c.h.b16 %v1065
    %v4982 = vunpack.c.l.b16 %v1066
    %v4983 = vunpack.c.h.b16 %v1066
    %v4984 = vunpack.c.l.b16 %v1067
    %v4985 = vunpack.c.h.b16 %v1067
    %v4986 = vunpack.c.l.b16 %v1068
    %v4987 = vunpack.c.h.b16 %v1068
    %v4988 = vunpack.c.l.b16 %v1069
    %v4989 = vunpack.c.h.b16 %v1069
    %v4990 = vunpack.c.l.b16 %v1070
    %v4991 = vunpack.c.h.b16 %v1070
    %v4992 = vunpack.c.l.b16 %v1071
    %v4993 = vunpack.c.h.b16 %v1071
    %v4994 = vunpack.c.l.b16 %v1072
    %v4995 = vunpack.c.h.b16 %v1072
    %v4996 = vunpack.c.l.b16 %v1073
    %v4997 = vunpack.c.h.b16 %v1073
    %v4998 = vunpack.c.l.b16 %v1074
    %v4999 = vunpack.c.h.b16 %v1074
    %v5000 = vunpack.c.l.b16 %v1075
    %v5001 = vunpack.c.h.b16 %v1075
    %v5002 = vunpack.c.l.b16 %v1076
    %v5003 = vunpack.c.h.b16 %v1076
    %v5004 = vunpack.c.l.b16 %v1077
    %v5005 = vunpack.c.h.b16 %v1077
    %v5006 = vunpack.c.l.b16 %v1078
    %v5007 = vunpack.c.h.b16 %v1078
    %v5008 = vunpack.c.l.b16 %v1079
    %v5009 = vunpack.c.h.b16 %v1079
    %v5010 = vunpack.c.l.b16 %v1080
    %v5011 = vunpack.c.h.b16 %v1080
    %v5012 = vunpack.c.l.b16 %v1081
    %v5013 = vunpack.c.h.b16 %v1081
    %v5014 = vunpack.c.l.b16 %v1082
    %v5015 = vunpack.c.h.b16 %v1082
    %v5016 = vunpack.c.l.b16 %v1083
    %v5017 = vunpack.c.h.b16 %v1083
    %v5018 = vunpack.c.l.b16 %v1084
    %v5019 = vunpack.c.h.b16 %v1084
    %v5020 = vunpack.c.l.b16 %v1085
    %v5021 = vunpack.c.h.b16 %v1085
    %v5022 = vunpack.c.l.b16 %v1086
    %v5023 = vunpack.c.h.b16 %v1086
    %v5024 = vunpack.c.l.b16 %v1087
    %v5025 = vunpack.c.h.b16 %v1087
    %v5026 = vunpack.c.l.b16 %v1088
    %v5027 = vunpack.c.h.b16 %v1088
    %v5028 = vunpack.c.l.b16 %v1089
    %v5029 = vunpack.c.h.b16 %v1089
    %v5030 = vunpack.c.l.b16 %v1090
    %v5031 = vunpack.c.h.b16 %v1090
    %v5032 = vunpack.c.l.b16 %v1091
    %v5033 = vunpack.c.h.b16 %v1091
    %v5034 = vunpack.c.l.b16 %v1092
    %v5035 = vunpack.c.h.b16 %v1092
    %v5036 = vunpack.c.l.b16 %v1093
    %v5037 = vunpack.c.h.b16 %v1093
    %v5038 = vunpack.c.l.b16 %v1094
    %v5039 = vunpack.c.h.b16 %v1094
    %v5040 = vunpack.c.l.b16 %v1095
    %v5041 = vunpack.c.h.b16 %v1095
    %v5042 = vunpack.c.l.b16 %v1096
    %v5043 = vunpack.c.h.b16 %v1096
    %v5044 = vunpack.c.l.b16 %v1097
    %v5045 = vunpack.c.h.b16 %v1097
    %v5046 = vunpack.c.l.b16 %v1098
    %v5047 = vunpack.c.h.b16 %v1098
    %v5048 = vunpack.c.l.b16 %v1099
    %v5049 = vunpack.c.h.b16 %v1099
    %v5050 = vunpack.c.l.b16 %v1100
    %v5051 = vunpack.c.h.b16 %v1100
    %v5052 = vunpack.c.l.b16 %v1101
    %v5053 = vunpack.c.h.b16 %v1101
    %v5054 = vunpack.c.l.b16 %v1102
    %v5055 = vunpack.c.h.b16 %v1102
    %v5056 = vunpack.c.l.b16 %v1103
    %v5057 = vunpack.c.h.b16 %v1103
    %v5058 = vunpack.c.l.b16 %v1104
    %v5059 = vunpack.c.h.b16 %v1104
    %v5060 = vunpack.c.l.b16 %v1105
    %v5061 = vunpack.c.h.b16 %v1105
    %v5062 = vunpack.c.l.b16 %v1106
    %v5063 = vunpack.c.h.b16 %v1106
    %v5064 = vunpack.c.l.b16 %v1107
    %v5065 = vunpack.c.h.b16 %v1107
    %v5066 = vunpack.c.l.b16 %v1108
    %v5067 = vunpack.c.h.b16 %v1108
    %v5068 = vunpack.c.l.b16 %v1109
    %v5069 = vunpack.c.h.b16 %v1109
    %v5070 = vunpack.c.l.b16 %v1110
    %v5071 = vunpack.c.h.b16 %v1110
    %v5072 = vunpack.c.l.b16 %v1111
    %v5073 = vunpack.c.h.b16 %v1111
    %v5074 = vunpack.c.l.b16 %v1112
    %v5075 = vunpack.c.h.b16 %v1112
    %v5076 = vunpack.c.l.b16 %v1113
    %v5077 = vunpack.c.h.b16 %v1113
    %v5078 = vunpack.c.l.b16 %v1114
    %v5079 = vunpack.c.h.b16 %v1114
    %v5080 = vunpack.c.l.b16 %v1115
    %v5081 = vunpack.c.h.b16 %v1115
    %v5082 = vunpack.c.l.b16 %v1116
    %v5083 = vunpack.c.h.b16 %v1116
    %v5084 = vunpack.c.l.b16 %v1117
    %v5085 = vunpack.c.h.b16 %v1117
    %v5086 = vunpack.c.l.b16 %v1118
    %v5087 = vunpack.c.h.b16 %v1118
    %v5088 = vunpack.c.l.b16 %v1119
    %v5089 = vunpack.c.h.b16 %v1119
    %v5090 = vunpack.c.l.b16 %v1120
    %v5091 = vunpack.c.h.b16 %v1120
    %v5092 = vunpack.c.l.b16 %v1121
    %v5093 = vunpack.c.h.b16 %v1121
    %v5094 = vunpack.c.l.b16 %v1122
    %v5095 = vunpack.c.h.b16 %v1122
    %v5096 = vunpack.c.l.b16 %v1123
    %v5097 = vunpack.c.h.b16 %v1123
    %v5098 = vunpack.c.l.b16 %v1124
    %v5099 = vunpack.c.h.b16 %v1124
    %v5100 = vunpack.c.l.b16 %v1125
    %v5101 = vunpack.c.h.b16 %v1125
    %v5102 = vunpack.c.l.b16 %v1126
    %v5103 = vunpack.c.h.b16 %v1126
    %v5104 = vunpack.c.l.b16 %v1127
    %v5105 = vunpack.c.h.b16 %v1127
    %v5106 = vunpack.c.l.b16 %v1128
    %v5107 = vunpack.c.h.b16 %v1128
    %v5108 = vunpack.c.l.b16 %v1129
    %v5109 = vunpack.c.h.b16 %v1129
    %v5110 = vunpack.c.l.b16 %v1130
    %v5111 = vunpack.c.h.b16 %v1130
    %v5112 = vunpack.c.l.b16 %v1131
    %v5113 = vunpack.c.h.b16 %v1131
    %v5114 = vunpack.c.l.b16 %v1132
    %v5115 = vunpack.c.h.b16 %v1132
    %v5116 = vunpack.c.l.b16 %v1133
    %v5117 = vunpack.c.h.b16 %v1133
    %v5118 = vunpack.c.l.b16 %v1134
    %v5119 = vunpack.c.h.b16 %v1134
    %v5120 = vunpack.c.l.b16 %v1135
    %v5121 = vunpack.c.h.b16 %v1135
    %v5122 = vunpack.c.l.b16 %v1136
    %v5123 = vunpack.c.h.b16 %v1136
    %v5124 = vunpack.c.l.b16 %v1137
    %v5125 = vunpack.c.h.b16 %v1137
    %v5126 = vunpack.c.l.b16 %v1138
    %v5127 = vunpack.c.h.b16 %v1138
    %v5128 = vunpack.c.l.b16 %v1139
    %v5129 = vunpack.c.h.b16 %v1139
    %v5130 = vunpack.c.l.b16 %v1140
    %v5131 = vunpack.c.h.b16 %v1140
    %v5132 = vunpack.c.l.b16 %v1141
    %v5133 = vunpack.c.h.b16 %v1141
    %v5134 = vunpack.c.l.b16 %v1142
    %v5135 = vunpack.c.h.b16 %v1142
    %v5136 = vunpack.c.l.b16 %v1143
    %v5137 = vunpack.c.h.b16 %v1143
    %v5138 = vunpack.c.l.b16 %v1144
    %v5139 = vunpack.c.h.b16 %v1144
    %v5140 = vunpack.c.l.b16 %v1145
    %v5141 = vunpack.c.h.b16 %v1145
    %v5142 = vunpack.c.l.b16 %v1146
    %v5143 = vunpack.c.h.b16 %v1146
    %v5144 = vunpack.c.l.b16 %v1147
    %v5145 = vunpack.c.h.b16 %v1147
    %v5146 = vunpack.c.l.b16 %v1148
    %v5147 = vunpack.c.h.b16 %v1148
    %v5148 = vunpack.c.l.b16 %v1149
    %v5149 = vunpack.c.h.b16 %v1149
    %v5150 = vunpack.c.l.b16 %v1150
    %v5151 = vunpack.c.h.b16 %v1150
    %v5152 = vunpack.c.l.b16 %v1151
    %v5153 = vunpack.c.h.b16 %v1151
    %v5154 = vunpack.c.l.b16 %v1152
    %v5155 = vunpack.c.h.b16 %v1152
    %v5156 = vunpack.c.l.b16 %v1153
    %v5157 = vunpack.c.h.b16 %v1153
    %v5158 = vunpack.c.l.b16 %v1154
    %v5159 = vunpack.c.h.b16 %v1154
    %v5160 = vunpack.c.l.b16 %v1155
    %v5161 = vunpack.c.h.b16 %v1155
    %v5162 = vunpack.c.l.b16 %v1156
    %v5163 = vunpack.c.h.b16 %v1156
    %v5164 = vunpack.c.l.b16 %v1157
    %v5165 = vunpack.c.h.b16 %v1157
    %v5166 = vunpack.c.l.b16 %v1158
    %v5167 = vunpack.c.h.b16 %v1158
    %v5168 = vunpack.c.l.b16 %v1159
    %v5169 = vunpack.c.h.b16 %v1159
    %v5170 = vunpack.c.l.b16 %v1160
    %v5171 = vunpack.c.h.b16 %v1160
    %v5172 = vunpack.c.l.b16 %v1161
    %v5173 = vunpack.c.h.b16 %v1161
    %v5174 = vunpack.c.l.b16 %v1162
    %v5175 = vunpack.c.h.b16 %v1162
    %v5176 = vunpack.c.l.b16 %v1163
    %v5177 = vunpack.c.h.b16 %v1163
    %v5178 = vunpack.c.l.b16 %v1164
    %v5179 = vunpack.c.h.b16 %v1164
    %v5180 = vunpack.c.l.b16 %v1165
    %v5181 = vunpack.c.h.b16 %v1165
    %v5182 = vunpack.c.l.b16 %v1166
    %v5183 = vunpack.c.h.b16 %v1166
    %v5184 = vunpack.c.l.b16 %v1167
    %v5185 = vunpack.c.h.b16 %v1167
    %v5186 = vunpack.c.l.b16 %v1168
    %v5187 = vunpack.c.h.b16 %v1168
    %v5188 = vunpack.c.l.b16 %v1169
    %v5189 = vunpack.c.h.b16 %v1169
    %v5190 = vunpack.c.l.b16 %v1170
    %v5191 = vunpack.c.h.b16 %v1170
    %v5192 = vunpack.c.l.b16 %v1171
    %v5193 = vunpack.c.h.b16 %v1171
    %v5194 = vunpack.c.l.b16 %v1172
    %v5195 = vunpack.c.h.b16 %v1172
    %v5196 = vunpack.c.l.b16 %v1173
    %v5197 = vunpack.c.h.b16 %v1173
    %v5198 = vunpack.c.l.b16 %v1174
    %v5199 = vunpack.c.h.b16 %v1174
    %v5200 = vunpack.c.l.b16 %v1175
    %v5201 = vunpack.c.h.b16 %v1175
    %v5202 = vunpack.c.l.b16 %v1176
    %v5203 = vunpack.c.h.b16 %v1176
    %v5204 = vunpack.c.l.b16 %v1177
    %v5205 = vunpack.c.h.b16 %v1177
    %v5206 = vunpack.c.l.b16 %v1178
    %v5207 = vunpack.c.h.b16 %v1178
    %v5208 = vunpack.c.l.b16 %v1179
    %v5209 = vunpack.c.h.b16 %v1179
    %v5210 = vunpack.c.l.b16 %v1180
    %v5211 = vunpack.c.h.b16 %v1180
    %v5212 = vunpack.c.l.b16 %v1181
    %v5213 = vunpack.c.h.b16 %v1181
    %v5214 = vunpack.c.l.b16 %v1182
    %v5215 = vunpack.c.h.b16 %v1182
    %v5216 = vunpack.c.l.b16 %v1183
    %v5217 = vunpack.c.h.b16 %v1183
    %v5218 = vunpack.c.l.b16 %v1184
    %v5219 = vunpack.c.h.b16 %v1184
    %v5220 = vunpack.c.l.b16 %v1185
    %v5221 = vunpack.c.h.b16 %v1185
    %v5222 = vunpack.c.l.b16 %v1186
    %v5223 = vunpack.c.h.b16 %v1186
    %v5224 = vunpack.c.l.b16 %v1187
    %v5225 = vunpack.c.h.b16 %v1187
    %v5226 = vunpack.c.l.b16 %v1188
    %v5227 = vunpack.c.h.b16 %v1188
    %v5228 = vunpack.c.l.b16 %v1189
    %v5229 = vunpack.c.h.b16 %v1189
    %v5230 = vunpack.c.l.b16 %v1190
    %v5231 = vunpack.c.h.b16 %v1190
    %v5232 = vunpack.c.l.b16 %v1191
    %v5233 = vunpack.c.h.b16 %v1191
    %v5234 = vunpack.c.l.b16 %v1192
    %v5235 = vunpack.c.h.b16 %v1192
    %v5236 = vunpack.c.l.b16 %v1193
    %v5237 = vunpack.c.h.b16 %v1193
    %v5238 = vunpack.c.l.b16 %v1194
    %v5239 = vunpack.c.h.b16 %v1194
    %v5240 = vunpack.c.l.b16 %v1195
    %v5241 = vunpack.c.h.b16 %v1195
    %v5242 = vunpack.c.l.b16 %v1196
    %v5243 = vunpack.c.h.b16 %v1196
    %v5244 = vunpack.c.l.b16 %v1197
    %v5245 = vunpack.c.h.b16 %v1197
    %v5246 = vunpack.c.l.b16 %v1198
    %v5247 = vunpack.c.h.b16 %v1198
    %v5248 = vunpack.c.l.b16 %v1199
    %v5249 = vunpack.c.h.b16 %v1199
    %v5250 = vunpack.c.l.b16 %v1200
    %v5251 = vunpack.c.h.b16 %v1200
    %v5252 = vunpack.c.l.b16 %v1201
    %v5253 = vunpack.c.h.b16 %v1201
    %v5254 = vunpack.c.l.b16 %v1202
    %v5255 = vunpack.c.h.b16 %v1202
    %v5256 = vunpack.c.l.b16 %v1203
    %v5257 = vunpack.c.h.b16 %v1203
    %v5258 = vunpack.c.l.b16 %v1204
    %v5259 = vunpack.c.h.b16 %v1204
    %v5260 = vunpack.c.l.b16 %v1205
    %v5261 = vunpack.c.h.b16 %v1205
    %v5262 = vunpack.c.l.b16 %v1206
    %v5263 = vunpack.c.h.b16 %v1206
    %v5264 = vunpack.c.l.b16 %v1207
    %v5265 = vunpack.c.h.b16 %v1207
    %v5266 = vunpack.c.l.b16 %v1208
    %v5267 = vunpack.c.h.b16 %v1208
    %v5268 = vunpack.c.l.b16 %v1209
    %v5269 = vunpack.c.h.b16 %v1209
    %v5270 = vunpack.c.l.b16 %v1210
    %v5271 = vunpack.c.h.b16 %v1210
    %v5272 = vunpack.c.l.b16 %v1211
    %v5273 = vunpack.c.h.b16 %v1211
    %v5274 = vunpack.c.l.b16 %v1212
    %v5275 = vunpack.c.h.b16 %v1212
    %v5276 = vunpack.c.l.b16 %v1213
    %v5277 = vunpack.c.h.b16 %v1213
    %v5278 = vunpack.c.l.b16 %v1214
    %v5279 = vunpack.c.h.b16 %v1214
    %v5280 = vunpack.c.l.b16 %v1215
    %v5281 = vunpack.c.h.b16 %v1215
    %v5282 = vunpack.c.l.b16 %v1216
    %v5283 = vunpack.c.h.b16 %v1216
    %v5284 = vunpack.c.l.b16 %v1217
    %v5285 = vunpack.c.h.b16 %v1217
    %v5286 = vunpack.c.l.b16 %v1218
    %v5287 = vunpack.c.h.b16 %v1218
    %v5288 = vunpack.c.l.b16 %v1219
    %v5289 = vunpack.c.h.b16 %v1219
    %v5290 = vunpack.c.l.b16 %v1220
    %v5291 = vunpack.c.h.b16 %v1220
    %v5292 = vunpack.c.l.b16 %v1221
    %v5293 = vunpack.c.h.b16 %v1221
    %v5294 = vunpack.c.l.b16 %v1222
    %v5295 = vunpack.c.h.b16 %v1222
    %v5296 = vunpack.c.l.b16 %v1223
    %v5297 = vunpack.c.h.b16 %v1223
    %v5298 = vunpack.c.l.b16 %v1224
    %v5299 = vunpack.c.h.b16 %v1224
    %v5300 = vunpack.c.l.b16 %v1225
    %v5301 = vunpack.c.h.b16 %v1225
    %v5302 = vunpack.c.l.b16 %v1226
    %v5303 = vunpack.c.h.b16 %v1226
    %v5304 = vunpack.c.l.b16 %v1227
    %v5305 = vunpack.c.h.b16 %v1227
    %v5306 = vunpack.c.l.b16 %v1228
    %v5307 = vunpack.c.h.b16 %v1228
    %v5308 = vunpack.c.l.b16 %v1229
    %v5309 = vunpack.c.h.b16 %v1229
    %v5310 = vunpack.c.l.b16 %v1230
    %v5311 = vunpack.c.h.b16 %v1230
    %v5312 = vunpack.c.l.b16 %v1231
    %v5313 = vunpack.c.h.b16 %v1231
    %v5314 = vunpack.c.l.b16 %v1232
    %v5315 = vunpack.c.h.b16 %v1232
    %v5316 = vunpack.c.l.b16 %v1233
    %v5317 = vunpack.c.h.b16 %v1233
    %v5318 = vunpack.c.l.b16 %v1234
    %v5319 = vunpack.c.h.b16 %v1234
    %v5320 = vunpack.c.l.b16 %v1235
    %v5321 = vunpack.c.h.b16 %v1235
    %v5322 = vunpack.c.l.b16 %v1236
    %v5323 = vunpack.c.h.b16 %v1236
    %v5324 = vunpack.c.l.b16 %v1237
    %v5325 = vunpack.c.h.b16 %v1237
    %v5326 = vunpack.c.l.b16 %v1238
    %v5327 = vunpack.c.h.b16 %v1238
    %v5328 = vunpack.c.l.b16 %v1239
    %v5329 = vunpack.c.h.b16 %v1239
    %v5330 = vunpack.c.l.b16 %v1240
    %v5331 = vunpack.c.h.b16 %v1240
    %v5332 = vunpack.c.l.b16 %v1241
    %v5333 = vunpack.c.h.b16 %v1241
    %v5334 = vunpack.c.l.b16 %v1242
    %v5335 = vunpack.c.h.b16 %v1242
    %v5336 = vunpack.c.l.b16 %v1243
    %v5337 = vunpack.c.h.b16 %v1243
    %v5338 = vunpack.c.l.b16 %v1244
    %v5339 = vunpack.c.h.b16 %v1244
    %v5340 = vunpack.c.l.b16 %v1245
    %v5341 = vunpack.c.h.b16 %v1245
    %v5342 = vunpack.c.l.b16 %v1246
    %v5343 = vunpack.c.h.b16 %v1246
    %v5344 = vunpack.c.l.b16 %v1247
    %v5345 = vunpack.c.h.b16 %v1247
    %v5346 = vunpack.c.l.b16 %v1248
    %v5347 = vunpack.c.h.b16 %v1248
    %v5348 = vunpack.c.l.b16 %v1249
    %v5349 = vunpack.c.h.b16 %v1249
    %v5350 = vunpack.c.l.b16 %v1250
    %v5351 = vunpack.c.h.b16 %v1250
    %v5352 = vunpack.c.l.b16 %v1251
    %v5353 = vunpack.c.h.b16 %v1251
    %v5354 = vunpack.c.l.b16 %v1252
    %v5355 = vunpack.c.h.b16 %v1252
    %v5356 = vunpack.c.l.b16 %v1253
    %v5357 = vunpack.c.h.b16 %v1253
    %v5358 = vunpack.c.l.b16 %v1254
    %v5359 = vunpack.c.h.b16 %v1254
    %v5360 = vunpack.c.l.b16 %v1255
    %v5361 = vunpack.c.h.b16 %v1255
    %v5362 = vunpack.c.l.b16 %v1256
    %v5363 = vunpack.c.h.b16 %v1256
    %v5364 = vunpack.c.l.b16 %v1257
    %v5365 = vunpack.c.h.b16 %v1257
    %v5366 = vunpack.c.l.b16 %v1258
    %v5367 = vunpack.c.h.b16 %v1258
    %v5368 = vunpack.c.l.b16 %v1259
    %v5369 = vunpack.c.h.b16 %v1259
    %v5370 = vunpack.c.l.b16 %v1260
    %v5371 = vunpack.c.h.b16 %v1260
    %v5372 = vunpack.c.l.b16 %v1261
    %v5373 = vunpack.c.h.b16 %v1261
    %v5374 = vunpack.c.l.b16 %v1262
    %v5375 = vunpack.c.h.b16 %v1262
    %v5376 = vunpack.c.l.b16 %v1263
    %v5377 = vunpack.c.h.b16 %v1263
    %v5378 = vunpack.c.l.b16 %v1264
    %v5379 = vunpack.c.h.b16 %v1264
    %v5380 = vunpack.c.l.b16 %v1265
    %v5381 = vunpack.c.h.b16 %v1265
    %v5382 = vunpack.c.l.b16 %v1266
    %v5383 = vunpack.c.h.b16 %v1266
    %v5384 = vunpack.c.l.b16 %v1267
    %v5385 = vunpack.c.h.b16 %v1267
    %v5386 = vunpack.c.l.b16 %v1268
    %v5387 = vunpack.c.h.b16 %v1268
    %v5388 = vunpack.c.l.b16 %v1269
    %v5389 = vunpack.c.h.b16 %v1269
    %v5390 = vunpack.c.l.b16 %v1270
    %v5391 = vunpack.c.h.b16 %v1270
    %v5392 = vunpack.c.l.b16 %v1271
    %v5393 = vunpack.c.h.b16 %v1271
    %v5394 = vunpack.c.l.b16 %v1272
    %v5395 = vunpack.c.h.b16 %v1272
    %v5396 = vunpack.c.l.b16 %v1273
    %v5397 = vunpack.c.h.b16 %v1273
    %v5398 = vunpack.c.l.b16 %v1274
    %v5399 = vunpack.c.h.b16 %v1274
    %v5400 = vunpack.c.l.b16 %v1275
    %v5401 = vunpack.c.h.b16 %v1275
    %v5402 = vunpack.c.l.b16 %v1276
    %v5403 = vunpack.c.h.b16 %v1276
    %v5404 = vunpack.c.l.b16 %v1277
    %v5405 = vunpack.c.h.b16 %v1277
    %v5406 = vunpack.c.l.b16 %v1278
    %v5407 = vunpack.c.h.b16 %v1278
    %v5408 = vunpack.c.l.b16 %v1279
    %v5409 = vunpack.c.h.b16 %v1279
    %v5410 = vunpack.c.l.b16 %v1280
    %v5411 = vunpack.c.h.b16 %v1280
    %v5412 = vunpack.c.l.b16 %v1281
    %v5413 = vunpack.c.h.b16 %v1281
    %v5414 = vunpack.c.l.b16 %v1282
    %v5415 = vunpack.c.h.b16 %v1282
    %v5416 = vunpack.c.l.b16 %v1283
    %v5417 = vunpack.c.h.b16 %v1283
    %v5418 = vunpack.c.l.b16 %v1284
    %v5419 = vunpack.c.h.b16 %v1284
    %v5420 = vunpack.c.l.b16 %v1285
    %v5421 = vunpack.c.h.b16 %v1285
    %v5422 = vunpack.c.l.b16 %v1286
    %v5423 = vunpack.c.h.b16 %v1286
    %v5424 = vunpack.c.l.b16 %v1287
    %v5425 = vunpack.c.h.b16 %v1287
    %v5426 = vunpack.c.l.b16 %v1288
    %v5427 = vunpack.c.h.b16 %v1288
    %v5428 = vunpack.c.l.b16 %v1289
    %v5429 = vunpack.c.h.b16 %v1289
    %v5430 = vunpack.c.l.b16 %v1290
    %v5431 = vunpack.c.h.b16 %v1290
    %v5432 = vunpack.c.l.b16 %v1291
    %v5433 = vunpack.c.h.b16 %v1291
    %v5434 = vunpack.c.l.b16 %v1292
    %v5435 = vunpack.c.h.b16 %v1292
    %v5436 = vunpack.c.l.b16 %v1293
    %v5437 = vunpack.c.h.b16 %v1293
    %v5438 = vunpack.c.l.b16 %v1294
    %v5439 = vunpack.c.h.b16 %v1294
    %v5440 = vunpack.c.l.b16 %v1295
    %v5441 = vunpack.c.h.b16 %v1295
    %v5442 = vunpack.c.l.b16 %v1296
    %v5443 = vunpack.c.h.b16 %v1296
    %v5444 = vunpack.c.l.b16 %v1297
    %v5445 = vunpack.c.h.b16 %v1297
    %v5446 = vunpack.c.l.b16 %v1298
    %v5447 = vunpack.c.h.b16 %v1298
    %v5448 = vunpack.c.l.b16 %v1299
    %v5449 = vunpack.c.h.b16 %v1299
    %v5450 = vunpack.c.l.b16 %v1300
    %v5451 = vunpack.c.h.b16 %v1300
    %v5452 = vunpack.c.l.b16 %v1301
    %v5453 = vunpack.c.h.b16 %v1301
    %v5454 = vunpack.c.l.b16 %v1302
    %v5455 = vunpack.c.h.b16 %v1302
    %v5456 = vunpack.c.l.b16 %v1303
    %v5457 = vunpack.c.h.b16 %v1303
    %v5458 = vunpack.c.l.b16 %v1304
    %v5459 = vunpack.c.h.b16 %v1304
    %v5460 = vunpack.c.l.b16 %v1305
    %v5461 = vunpack.c.h.b16 %v1305
    %v5462 = vunpack.c.l.b16 %v1306
    %v5463 = vunpack.c.h.b16 %v1306
    %v5464 = vunpack.c.l.b16 %v1307
    %v5465 = vunpack.c.h.b16 %v1307
    %v5466 = vunpack.c.l.b16 %v1308
    %v5467 = vunpack.c.h.b16 %v1308
    %v5468 = vunpack.c.l.b16 %v1309
    %v5469 = vunpack.c.h.b16 %v1309
    %v5470 = vunpack.c.l.b16 %v1310
    %v5471 = vunpack.c.h.b16 %v1310
    %v5472 = vunpack.c.l.b16 %v1311
    %v5473 = vunpack.c.h.b16 %v1311
    %v5474 = vunpack.c.l.b16 %v1312
    %v5475 = vunpack.c.h.b16 %v1312
    %v5476 = vunpack.c.l.b16 %v1313
    %v5477 = vunpack.c.h.b16 %v1313
    %v5478 = vunpack.c.l.b16 %v1314
    %v5479 = vunpack.c.h.b16 %v1314
    %v5480 = vunpack.c.l.b16 %v1315
    %v5481 = vunpack.c.h.b16 %v1315
    %v5482 = vunpack.c.l.b16 %v1316
    %v5483 = vunpack.c.h.b16 %v1316
    %v5484 = vunpack.c.l.b16 %v1317
    %v5485 = vunpack.c.h.b16 %v1317
    %v5486 = vunpack.c.l.b16 %v1318
    %v5487 = vunpack.c.h.b16 %v1318
    %v5488 = vunpack.c.l.b16 %v1319
    %v5489 = vunpack.c.h.b16 %v1319
    %v5490 = vunpack.c.l.b16 %v1320
    %v5491 = vunpack.c.h.b16 %v1320
    %v5492 = vunpack.c.l.b16 %v1321
    %v5493 = vunpack.c.h.b16 %v1321
    %v5494 = vunpack.c.l.b16 %v1322
    %v5495 = vunpack.c.h.b16 %v1322
    %v5496 = vunpack.c.l.b16 %v1323
    %v5497 = vunpack.c.h.b16 %v1323
    %v5498 = vunpack.c.l.b16 %v1324
    %v5499 = vunpack.c.h.b16 %v1324
    %v5500 = vunpack.c.l.b16 %v1325
    %v5501 = vunpack.c.h.b16 %v1325
    %v5502 = vunpack.c.l.b16 %v1326
    %v5503 = vunpack.c.h.b16 %v1326
    %v5504 = vunpack.c.l.b16 %v1327
    %v5505 = vunpack.c.h.b16 %v1327
    %v5506 = vunpack.c.l.b16 %v1328
    %v5507 = vunpack.c.h.b16 %v1328
    %v5508 = vunpack.c.l.b16 %v1329
    %v5509 = vunpack.c.h.b16 %v1329
    %v5510 = vunpack.c.l.b16 %v1330
    %v5511 = vunpack.c.h.b16 %v1330
    %v5512 = vunpack.c.l.b16 %v1331
    %v5513 = vunpack.c.h.b16 %v1331
    %v5514 = vunpack.c.l.b16 %v1332
    %v5515 = vunpack.c.h.b16 %v1332
    %v5516 = vunpack.c.l.b16 %v1333
    %v5517 = vunpack.c.h.b16 %v1333
    %v5518 = vunpack.c.l.b16 %v1334
    %v5519 = vunpack.c.h.b16 %v1334
    %v5520 = vunpack.c.l.b16 %v1335
    %v5521 = vunpack.c.h.b16 %v1335
    %v5522 = vunpack.c.l.b16 %v1336
    %v5523 = vunpack.c.h.b16 %v1336
    %v5524 = vunpack.c.l.b16 %v1337
    %v5525 = vunpack.c.h.b16 %v1337
    %v5526 = vunpack.c.l.b16 %v1338
    %v5527 = vunpack.c.h.b16 %v1338
    %v5528 = vunpack.c.l.b16 %v1339
    %v5529 = vunpack.c.h.b16 %v1339
    %v5530 = vunpack.c.l.b16 %v1340
    %v5531 = vunpack.c.h.b16 %v1340
    %v5532 = vunpack.c.l.b16 %v1341
    %v5533 = vunpack.c.h.b16 %v1341
    %v5534 = vunpack.c.l.b16 %v1342
    %v5535 = vunpack.c.h.b16 %v1342
    %v5536 = vunpack.c.l.b16 %v1343
    %v5537 = vunpack.c.h.b16 %v1343
    %v5538 = vunpack.c.l.b16 %v1344
    %v5539 = vunpack.c.h.b16 %v1344
    %v5540 = vunpack.c.l.b16 %v1345
    %v5541 = vunpack.c.h.b16 %v1345
    %v5542 = vunpack.c.l.b16 %v1346
    %v5543 = vunpack.c.h.b16 %v1346
    %v5544 = vunpack.c.l.b16 %v1347
    %v5545 = vunpack.c.h.b16 %v1347
    %v5546 = vunpack.c.l.b16 %v1348
    %v5547 = vunpack.c.h.b16 %v1348
    %v5548 = vunpack.c.l.b16 %v1349
    %v5549 = vunpack.c.h.b16 %v1349
    %v5550 = vunpack.c.l.b16 %v1350
    %v5551 = vunpack.c.h.b16 %v1350
    %v5552 = vunpack.c.l.b16 %v1351
    %v5553 = vunpack.c.h.b16 %v1351
    %v5554 = vunpack.c.l.b16 %v1352
    %v5555 = vunpack.c.h.b16 %v1352
    %v5556 = vunpack.c.l.b16 %v1353
    %v5557 = vunpack.c.h.b16 %v1353
    %v5558 = vunpack.c.l.b16 %v1354
    %v5559 = vunpack.c.h.b16 %v1354
    %v5560 = vunpack.c.l.b16 %v1355
    %v5561 = vunpack.c.h.b16 %v1355
    %v5562 = vunpack.c.l.b16 %v1356
    %v5563 = vunpack.c.h.b16 %v1356
    %v5564 = vunpack.c.l.b16 %v1357
    %v5565 = vunpack.c.h.b16 %v1357
    %v5566 = vunpack.c.l.b16 %v1358
    %v5567 = vunpack.c.h.b16 %v1358
    %v5568 = vunpack.c.l.b16 %v1359
    %v5569 = vunpack.c.h.b16 %v1359
    %v5570 = vunpack.c.l.b16 %v1360
    %v5571 = vunpack.c.h.b16 %v1360
    %v5572 = vunpack.c.l.b16 %v1361
    %v5573 = vunpack.c.h.b16 %v1361
    %v5574 = vunpack.c.l.b16 %v1362
    %v5575 = vunpack.c.h.b16 %v1362
    %v5576 = vunpack.c.l.b16 %v1363
    %v5577 = vunpack.c.h.b16 %v1363
    %v5578 = vunpack.c.l.b16 %v1364
    %v5579 = vunpack.c.h.b16 %v1364
    %v5580 = vunpack.c.l.b16 %v1365
    %v5581 = vunpack.c.h.b16 %v1365
    %v5582 = vunpack.c.l.b16 %v1366
    %v5583 = vunpack.c.h.b16 %v1366
    %v5584 = vunpack.c.l.b16 %v1367
    %v5585 = vunpack.c.h.b16 %v1367
    %v5586 = vunpack.c.l.b16 %v1368
    %v5587 = vunpack.c.h.b16 %v1368
    %v5588 = vunpack.c.l.b16 %v1369
    %v5589 = vunpack.c.h.b16 %v1369
    %v5590 = vunpack.c.l.b16 %v1370
    %v5591 = vunpack.c.h.b16 %v1370
    %v5592 = vunpack.c.l.b16 %v1371
    %v5593 = vunpack.c.h.b16 %v1371
    %v5594 = vunpack.c.l.b16 %v1372
    %v5595 = vunpack.c.h.b16 %v1372
    %v5596 = vunpack.c.l.b16 %v1373
    %v5597 = vunpack.c.h.b16 %v1373
    %v5598 = vunpack.c.l.b16 %v1374
    %v5599 = vunpack.c.h.b16 %v1374
    %v5600 = vunpack.c.l.b16 %v1375
    %v5601 = vunpack.c.h.b16 %v1375
    %v5602 = vunpack.c.l.b16 %v1376
    %v5603 = vunpack.c.h.b16 %v1376
    %v5604 = vunpack.c.l.b16 %v1377
    %v5605 = vunpack.c.h.b16 %v1377
    %v5606 = vunpack.c.l.b16 %v1378
    %v5607 = vunpack.c.h.b16 %v1378
    %v5608 = vunpack.c.l.b16 %v1379
    %v5609 = vunpack.c.h.b16 %v1379
    %v5610 = vunpack.c.l.b16 %v1380
    %v5611 = vunpack.c.h.b16 %v1380
    %v5612 = vunpack.c.l.b16 %v1381
    %v5613 = vunpack.c.h.b16 %v1381
    %v5614 = vunpack.c.l.b16 %v1382
    %v5615 = vunpack.c.h.b16 %v1382
    %v5616 = vunpack.c.l.b16 %v1383
    %v5617 = vunpack.c.h.b16 %v1383
    %v5618 = vunpack.c.l.b16 %v1384
    %v5619 = vunpack.c.h.b16 %v1384
    %v5620 = vunpack.c.l.b16 %v1385
    %v5621 = vunpack.c.h.b16 %v1385
    %v5622 = vunpack.c.l.b16 %v1386
    %v5623 = vunpack.c.h.b16 %v1386
    %v5624 = vunpack.c.l.b16 %v1387
    %v5625 = vunpack.c.h.b16 %v1387
    %v5626 = vunpack.c.l.b16 %v1388
    %v5627 = vunpack.c.h.b16 %v1388
    %v5628 = vunpack.c.l.b16 %v1389
    %v5629 = vunpack.c.h.b16 %v1389
    %v5630 = vunpack.c.l.b16 %v1390
    %v5631 = vunpack.c.h.b16 %v1390
    %v5632 = vunpack.c.l.b16 %v1391
    %v5633 = vunpack.c.h.b16 %v1391
    %v5634 = vunpack.c.l.b16 %v1392
    %v5635 = vunpack.c.h.b16 %v1392
    %v5636 = vunpack.c.l.b16 %v1393
    %v5637 = vunpack.c.h.b16 %v1393
    %v5638 = vunpack.c.l.b16 %v1394
    %v5639 = vunpack.c.h.b16 %v1394
    %v5640 = vunpack.c.l.b16 %v1395
    %v5641 = vunpack.c.h.b16 %v1395
    %v5642 = vunpack.c.l.b16 %v1396
    %v5643 = vunpack.c.h.b16 %v1396
    %v5644 = vunpack.c.l.b16 %v1397
    %v5645 = vunpack.c.h.b16 %v1397
    %v5646 = vunpack.c.l.b16 %v1398
    %v5647 = vunpack.c.h.b16 %v1398
    %v5648 = vunpack.c.l.b16 %v1399
    %v5649 = vunpack.c.h.b16 %v1399
    %v5650 = vunpack.c.l.b16 %v1400
    %v5651 = vunpack.c.h.b16 %v1400
    %v5652 = vunpack.c.l.b16 %v1401
    %v5653 = vunpack.c.h.b16 %v1401
    %v5654 = vunpack.c.l.b16 %v1402
    %v5655 = vunpack.c.h.b16 %v1402
    %v5656 = vunpack.c.l.b16 %v1403
    %v5657 = vunpack.c.h.b16 %v1403
    %v5658 = vunpack.c.l.b16 %v1404
    %v5659 = vunpack.c.h.b16 %v1404
    %v5660 = vunpack.c.l.b16 %v1405
    %v5661 = vunpack.c.h.b16 %v1405
    %v5662 = vunpack.c.l.b16 %v1406
    %v5663 = vunpack.c.h.b16 %v1406
    %v5664 = vunpack.c.l.b16 %v1407
    %v5665 = vunpack.c.h.b16 %v1407
    %v5666 = vunpack.c.l.b16 %v1408
    %v5667 = vunpack.c.h.b16 %v1408
    %v5668 = vunpack.c.l.b16 %v1409
    %v5669 = vunpack.c.h.b16 %v1409
    %v5670 = vunpack.c.l.b16 %v1410
    %v5671 = vunpack.c.h.b16 %v1410
    %v5672 = vunpack.c.l.b16 %v1411
    %v5673 = vunpack.c.h.b16 %v1411
    %v5674 = vunpack.c.l.b16 %v1412
    %v5675 = vunpack.c.h.b16 %v1412
    %v5676 = vunpack.c.l.b16 %v1413
    %v5677 = vunpack.c.h.b16 %v1413
    %v5678 = vunpack.c.l.b16 %v1414
    %v5679 = vunpack.c.h.b16 %v1414
    %v5680 = vunpack.c.l.b16 %v1415
    %v5681 = vunpack.c.h.b16 %v1415
    %v5682 = vunpack.c.l.b16 %v1416
    %v5683 = vunpack.c.h.b16 %v1416
    %v5684 = vunpack.c.l.b16 %v1417
    %v5685 = vunpack.c.h.b16 %v1417
    %v5686 = vunpack.c.l.b16 %v1418
    %v5687 = vunpack.c.h.b16 %v1418
    %v5688 = vunpack.c.l.b16 %v1419
    %v5689 = vunpack.c.h.b16 %v1419
    %v5690 = vunpack.c.l.b16 %v1420
    %v5691 = vunpack.c.h.b16 %v1420
    %v5692 = vunpack.c.l.b16 %v1421
    %v5693 = vunpack.c.h.b16 %v1421
    %v5694 = vunpack.c.l.b16 %v1422
    %v5695 = vunpack.c.h.b16 %v1422
    %v5696 = vunpack.c.l.b16 %v1423
    %v5697 = vunpack.c.h.b16 %v1423
    %v5698 = vunpack.c.l.b16 %v1424
    %v5699 = vunpack.c.h.b16 %v1424
    %v5700 = vunpack.c.l.b16 %v1425
    %v5701 = vunpack.c.h.b16 %v1425
    %v5702 = vunpack.c.l.b16 %v1426
    %v5703 = vunpack.c.h.b16 %v1426
    %v5704 = vunpack.c.l.b16 %v1427
    %v5705 = vunpack.c.h.b16 %v1427
    %v5706 = vunpack.c.l.b16 %v1428
    %v5707 = vunpack.c.h.b16 %v1428
    %v5708 = vunpack.c.l.b16 %v1429
    %v5709 = vunpack.c.h.b16 %v1429
    %v5710 = vunpack.c.l.b16 %v1430
    %v5711 = vunpack.c.h.b16 %v1430
    %v5712 = vunpack.c.l.b16 %v1431
    %v5713 = vunpack.c.h.b16 %v1431
    %v5714 = vunpack.c.l.b16 %v1432
    %v5715 = vunpack.c.h.b16 %v1432
    %v5716 = vunpack.c.l.b16 %v1433
    %v5717 = vunpack.c.h.b16 %v1433
    %v5718 = vunpack.c.l.b16 %v1434
    %v5719 = vunpack.c.h.b16 %v1434
    %v5720 = vunpack.c.l.b16 %v1435
    %v5721 = vunpack.c.h.b16 %v1435
    %v5722 = vunpack.c.l.b16 %v1436
    %v5723 = vunpack.c.h.b16 %v1436
    %v5724 = vunpack.c.l.b16 %v1437
    %v5725 = vunpack.c.h.b16 %v1437
    %v5726 = vunpack.c.l.b16 %v1438
    %v5727 = vunpack.c.h.b16 %v1438
    %v5728 = vunpack.c.l.b16 %v1439
    %v5729 = vunpack.c.h.b16 %v1439
    %v5730 = vunpack.c.l.b16 %v1440
    %v5731 = vunpack.c.h.b16 %v1440
    %v5732 = vunpack.c.l.b16 %v1441
    %v5733 = vunpack.c.h.b16 %v1441
    %v5734 = vunpack.c.l.b16 %v1442
    %v5735 = vunpack.c.h.b16 %v1442
    %v5736 = vunpack.c.l.b16 %v1443
    %v5737 = vunpack.c.h.b16 %v1443
    %v5738 = vunpack.c.l.b16 %v1444
    %v5739 = vunpack.c.h.b16 %v1444
    %v5740 = vunpack.c.l.b16 %v1445
    %v5741 = vunpack.c.h.b16 %v1445
    %v5742 = vunpack.c.l.b16 %v1446
    %v5743 = vunpack.c.h.b16 %v1446
    %v5744 = vunpack.c.l.b16 %v1447
    %v5745 = vunpack.c.h.b16 %v1447
    %v5746 = vunpack.c.l.b16 %v1448
    %v5747 = vunpack.c.h.b16 %v1448
    %v5748 = vunpack.c.l.b16 %v1449
    %v5749 = vunpack.c.h.b16 %v1449
    %v5750 = vunpack.c.l.b16 %v1450
    %v5751 = vunpack.c.h.b16 %v1450
    %v5752 = vunpack.c.l.b16 %v1451
    %v5753 = vunpack.c.h.b16 %v1451
    %v5754 = vunpack.c.l.b16 %v1452
    %v5755 = vunpack.c.h.b16 %v1452
    %v5756 = vunpack.c.l.b16 %v1453
    %v5757 = vunpack.c.h.b16 %v1453
    %v5758 = vunpack.c.l.b16 %v1454
    %v5759 = vunpack.c.h.b16 %v1454
    %v5760 = vunpack.c.l.b16 %v1455
    %v5761 = vunpack.c.h.b16 %v1455
    %v5762 = vunpack.c.l.b16 %v1456
    %v5763 = vunpack.c.h.b16 %v1456
    %v5764 = vunpack.c.l.b16 %v1457
    %v5765 = vunpack.c.h.b16 %v1457
    %v5766 = vunpack.c.l.b16 %v1458
    %v5767 = vunpack.c.h.b16 %v1458
    %v5768 = vunpack.c.l.b16 %v1459
    %v5769 = vunpack.c.h.b16 %v1459
    %v5770 = vunpack.c.l.b16 %v1460
    %v5771 = vunpack.c.h.b16 %v1460
    %v5772 = vunpack.c.l.b16 %v1461
    %v5773 = vunpack.c.h.b16 %v1461
    %v5774 = vunpack.c.l.b16 %v1462
    %v5775 = vunpack.c.h.b16 %v1462
    %v5776 = vunpack.c.l.b16 %v1463
    %v5777 = vunpack.c.h.b16 %v1463
    %v5778 = vunpack.c.l.b16 %v1464
    %v5779 = vunpack.c.h.b16 %v1464
    %v5780 = vunpack.c.l.b16 %v1465
    %v5781 = vunpack.c.h.b16 %v1465
    %v5782 = vunpack.c.l.b16 %v1466
    %v5783 = vunpack.c.h.b16 %v1466
    %v5784 = vunpack.c.l.b16 %v1467
    %v5785 = vunpack.c.h.b16 %v1467
    %v5786 = vunpack.c.l.b16 %v1468
    %v5787 = vunpack.c.h.b16 %v1468
    %v5788 = vunpack.c.l.b16 %v1469
    %v5789 = vunpack.c.h.b16 %v1469
    %v5790 = vunpack.c.l.b16 %v1470
    %v5791 = vunpack.c.h.b16 %v1470
    %v5792 = vunpack.c.l.b16 %v1471
    %v5793 = vunpack.c.h.b16 %v1471
    %v5794 = vunpack.c.l.b16 %v1472
    %v5795 = vunpack.c.h.b16 %v1472
    %v5796 = vunpack.c.l.b16 %v1473
    %v5797 = vunpack.c.h.b16 %v1473
    %v5798 = vunpack.c.l.b16 %v1474
    %v5799 = vunpack.c.h.b16 %v1474
    %v5800 = vunpack.c.l.b16 %v1475
    %v5801 = vunpack.c.h.b16 %v1475
    %v5802 = vunpack.c.l.b16 %v1476
    %v5803 = vunpack.c.h.b16 %v1476
    %v5804 = vunpack.c.l.b16 %v1477
    %v5805 = vunpack.c.h.b16 %v1477
    %v5806 = vunpack.c.l.b16 %v1478
    %v5807 = vunpack.c.h.b16 %v1478
    %v5808 = vunpack.c.l.b16 %v1479
    %v5809 = vunpack.c.h.b16 %v1479
    %v5810 = vunpack.c.l.b16 %v1480
    %v5811 = vunpack.c.h.b16 %v1480
    %v5812 = vunpack.c.l.b16 %v1481
    %v5813 = vunpack.c.h.b16 %v1481
    %v5814 = vunpack.c.l.b16 %v1482
    %v5815 = vunpack.c.h.b16 %v1482
    %v5816 = vunpack.c.l.b16 %v1483
    %v5817 = vunpack.c.h.b16 %v1483
    %v5818 = vunpack.c.l.b16 %v1484
    %v5819 = vunpack.c.h.b16 %v1484
    %v5820 = vunpack.c.l.b16 %v1485
    %v5821 = vunpack.c.h.b16 %v1485
    %v5822 = vunpack.c.l.b16 %v1486
    %v5823 = vunpack.c.h.b16 %v1486
    %v5824 = vunpack.c.l.b16 %v1487
    %v5825 = vunpack.c.h.b16 %v1487
    %v5826 = vunpack.c.l.b16 %v1488
    %v5827 = vunpack.c.h.b16 %v1488
    %v5828 = vunpack.c.l.b16 %v1489
    %v5829 = vunpack.c.h.b16 %v1489
    %v5830 = vunpack.c.l.b16 %v1490
    %v5831 = vunpack.c.h.b16 %v1490
    %v5832 = vunpack.c.l.b16 %v1491
    %v5833 = vunpack.c.h.b16 %v1491
    %v5834 = vunpack.c.l.b16 %v1492
    %v5835 = vunpack.c.h.b16 %v1492
    %v5836 = vunpack.c.l.b16 %v1493
    %v5837 = vunpack.c.h.b16 %v1493
    %v5838 = vunpack.c.l.b16 %v1494
    %v5839 = vunpack.c.h.b16 %v1494
    %v5840 = vunpack.c.l.b16 %v1495
    %v5841 = vunpack.c.h.b16 %v1495
    %v5842 = vunpack.c.l.b16 %v1496
    %v5843 = vunpack.c.h.b16 %v1496
    %v5844 = vunpack.c.l.b16 %v1497
    %v5845 = vunpack.c.h.b16 %v1497
    %v5846 = vunpack.c.l.b16 %v1498
    %v5847 = vunpack.c.h.b16 %v1498
    %v5848 = vunpack.c.l.b16 %v1499
    %v5849 = vunpack.c.h.b16 %v1499
    %v5850 = vunpack.c.l.b16 %v1500
    %v5851 = vunpack.c.h.b16 %v1500
    %v5852 = vunpack.c.l.b16 %v1501
    %v5853 = vunpack.c.h.b16 %v1501
    %v5854 = vunpack.c.l.b16 %v1502
    %v5855 = vunpack.c.h.b16 %v1502
    %v5856 = vunpack.c.l.b16 %v1503
    %v5857 = vunpack.c.h.b16 %v1503
    %v5858 = vunpack.c.l.b16 %v1504
    %v5859 = vunpack.c.h.b16 %v1504
    %v5860 = vunpack.c.l.b16 %v1505
    %v5861 = vunpack.c.h.b16 %v1505
    %v5862 = vunpack.c.l.b16 %v1506
    %v5863 = vunpack.c.h.b16 %v1506
    %v5864 = vunpack.c.l.b16 %v1507
    %v5865 = vunpack.c.h.b16 %v1507
    %v5866 = vunpack.c.l.b16 %v1508
    %v5867 = vunpack.c.h.b16 %v1508
    %v5868 = vunpack.c.l.b16 %v1509
    %v5869 = vunpack.c.h.b16 %v1509
    %v5870 = vunpack.c.l.b16 %v1510
    %v5871 = vunpack.c.h.b16 %v1510
    %v5872 = vunpack.c.l.b16 %v1511
    %v5873 = vunpack.c.h.b16 %v1511
    %v5874 = vunpack.c.l.b16 %v1512
    %v5875 = vunpack.c.h.b16 %v1512
    %v5876 = vunpack.c.l.b16 %v1513
    %v5877 = vunpack.c.h.b16 %v1513
    %v5878 = vunpack.c.l.b16 %v1514
    %v5879 = vunpack.c.h.b16 %v1514
    %v5880 = vunpack.c.l.b16 %v1515
    %v5881 = vunpack.c.h.b16 %v1515
    %v5882 = vunpack.c.l.b16 %v1516
    %v5883 = vunpack.c.h.b16 %v1516
    %v5884 = vunpack.c.l.b16 %v1517
    %v5885 = vunpack.c.h.b16 %v1517
    %v5886 = vunpack.c.l.b16 %v1518
    %v5887 = vunpack.c.h.b16 %v1518
    %v5888 = vunpack.c.l.b16 %v1519
    %v5889 = vunpack.c.h.b16 %v1519
    %v5890 = vunpack.c.l.b16 %v1520
    %v5891 = vunpack.c.h.b16 %v1520
    %v5892 = vunpack.c.l.b16 %v1521
    %v5893 = vunpack.c.h.b16 %v1521
    %v5894 = vunpack.c.l.b16 %v1522
    %v5895 = vunpack.c.h.b16 %v1522
    %v5896 = vunpack.c.l.b16 %v1523
    %v5897 = vunpack.c.h.b16 %v1523
    %v5898 = vunpack.c.l.b16 %v1524
    %v5899 = vunpack.c.h.b16 %v1524
    %v5900 = vunpack.c.l.b16 %v1525
    %v5901 = vunpack.c.h.b16 %v1525
    %v5902 = vunpack.c.l.b16 %v1526
    %v5903 = vunpack.c.h.b16 %v1526
    %v5904 = vunpack.c.l.b16 %v1527
    %v5905 = vunpack.c.h.b16 %v1527
    %v5906 = vunpack.c.l.b16 %v1528
    %v5907 = vunpack.c.h.b16 %v1528
    %v5908 = vunpack.c.l.b16 %v1529
    %v5909 = vunpack.c.h.b16 %v1529
    %v5910 = vunpack.c.l.b16 %v1530
    %v5911 = vunpack.c.h.b16 %v1530
    %v5912 = vunpack.c.l.b16 %v1531
    %v5913 = vunpack.c.h.b16 %v1531
    %v5914 = vunpack.c.l.b16 %v1532
    %v5915 = vunpack.c.h.b16 %v1532
    %v5916 = vunpack.c.l.b16 %v1533
    %v5917 = vunpack.c.h.b16 %v1533
    %v5918 = vunpack.c.l.b16 %v1534
    %v5919 = vunpack.c.h.b16 %v1534
    %v5920 = vunpack.c.l.b16 %v1535
    %v5921 = vunpack.c.h.b16 %v1535
    %v5922 = vunpack.c.l.b16 %v1536
    %v5923 = vunpack.c.h.b16 %v1536
    %v5924 = vunpack.c.l.b16 %v1537
    %v5925 = vunpack.c.h.b16 %v1537
    %v5926 = vunpack.c.l.b16 %v1538
    %v5927 = vunpack.c.h.b16 %v1538
    %v5928 = vunpack.c.l.b16 %v1539
    %v5929 = vunpack.c.h.b16 %v1539
    %v5930 = vunpack.c.l.b16 %v1540
    %v5931 = vunpack.c.h.b16 %v1540
    %v5932 = vunpack.c.l.b16 %v1541
    %v5933 = vunpack.c.h.b16 %v1541
    %v5934 = vunpack.c.l.b16 %v1542
    %v5935 = vunpack.c.h.b16 %v1542
    %v5936 = vunpack.c.l.b16 %v1543
    %v5937 = vunpack.c.h.b16 %v1543
    %v5938 = vunpack.c.l.b16 %v1544
    %v5939 = vunpack.c.h.b16 %v1544
    %v5940 = vunpack.c.l.b16 %v1545
    %v5941 = vunpack.c.h.b16 %v1545
    %v5942 = vunpack.c.l.b16 %v1546
    %v5943 = vunpack.c.h.b16 %v1546
    %v5944 = vunpack.c.l.b16 %v1547
    %v5945 = vunpack.c.h.b16 %v1547
    %v5946 = vunpack.c.l.b16 %v1548
    %v5947 = vunpack.c.h.b16 %v1548
    %v5948 = vunpack.c.l.b16 %v1549
    %v5949 = vunpack.c.h.b16 %v1549
    %v5950 = vunpack.c.l.b16 %v1550
    %v5951 = vunpack.c.h.b16 %v1550
    %v5952 = vunpack.c.l.b16 %v1551
    %v5953 = vunpack.c.h.b16 %v1551
    %v5954 = vunpack.c.l.b16 %v1552
    %v5955 = vunpack.c.h.b16 %v1552
    %v5956 = vunpack.c.l.b16 %v1553
    %v5957 = vunpack.c.h.b16 %v1553
    %v5958 = vunpack.c.l.b16 %v1554
    %v5959 = vunpack.c.h.b16 %v1554
    %v5960 = vunpack.c.l.b16 %v1555
    %v5961 = vunpack.c.h.b16 %v1555
    %v5962 = vunpack.c.l.b16 %v1556
    %v5963 = vunpack.c.h.b16 %v1556
    %v5964 = vunpack.c.l.b16 %v1557
    %v5965 = vunpack.c.h.b16 %v1557
    %v5966 = vunpack.c.l.b16 %v1558
    %v5967 = vunpack.c.h.b16 %v1558
    %v5968 = vunpack.c.l.b16 %v1559
    %v5969 = vunpack.c.h.b16 %v1559
    %v5970 = vunpack.c.l.b16 %v1560
    %v5971 = vunpack.c.h.b16 %v1560
    %v5972 = vunpack.c.l.b16 %v1561
    %v5973 = vunpack.c.h.b16 %v1561
    %v5974 = vunpack.c.l.b16 %v1562
    %v5975 = vunpack.c.h.b16 %v1562
    %v5976 = vunpack.c.l.b16 %v1563
    %v5977 = vunpack.c.h.b16 %v1563
    %v5978 = vunpack.c.l.b16 %v1564
    %v5979 = vunpack.c.h.b16 %v1564
    %v5980 = vunpack.c.l.b16 %v1565
    %v5981 = vunpack.c.h.b16 %v1565
    %v5982 = vunpack.c.l.b16 %v1566
    %v5983 = vunpack.c.h.b16 %v1566
    %v5984 = vunpack.c.l.b16 %v1567
    %v5985 = vunpack.c.h.b16 %v1567
    %v5986 = vunpack.c.l.b16 %v1568
    %v5987 = vunpack.c.h.b16 %v1568
    %v5988 = vunpack.c.l.b16 %v1569
    %v5989 = vunpack.c.h.b16 %v1569
    %v5990 = vunpack.c.l.b16 %v1570
    %v5991 = vunpack.c.h.b16 %v1570
    %v5992 = vunpack.c.l.b16 %v1571
    %v5993 = vunpack.c.h.b16 %v1571
    %v5994 = vunpack.c.l.b16 %v1572
    %v5995 = vunpack.c.h.b16 %v1572
    %v5996 = vunpack.c.l.b16 %v1573
    %v5997 = vunpack.c.h.b16 %v1573
    %v5998 = vunpack.c.l.b16 %v1574
    %v5999 = vunpack.c.h.b16 %v1574
    %v6000 = vunpack.c.l.b16 %v1575
    %v6001 = vunpack.c.h.b16 %v1575
    %v6002 = vunpack.c.l.b16 %v1576
    %v6003 = vunpack.c.h.b16 %v1576
    %v6004 = vunpack.c.l.b16 %v1577
    %v6005 = vunpack.c.h.b16 %v1577
    %v6006 = vunpack.c.l.b16 %v1578
    %v6007 = vunpack.c.h.b16 %v1578
    %v6008 = vunpack.c.l.b16 %v1579
    %v6009 = vunpack.c.h.b16 %v1579
    %v6010 = vunpack.c.l.b16 %v1580
    %v6011 = vunpack.c.h.b16 %v1580
    %v6012 = vunpack.c.l.b16 %v1581
    %v6013 = vunpack.c.h.b16 %v1581
    %v6014 = vunpack.c.l.b16 %v1582
    %v6015 = vunpack.c.h.b16 %v1582
    %v6016 = vunpack.c.l.b16 %v1583
    %v6017 = vunpack.c.h.b16 %v1583
    %v6018 = vunpack.c.l.b16 %v1584
    %v6019 = vunpack.c.h.b16 %v1584
    %v6020 = vunpack.c.l.b16 %v1585
    %v6021 = vunpack.c.h.b16 %v1585
    %v6022 = vunpack.c.l.b16 %v1586
    %v6023 = vunpack.c.h.b16 %v1586
    %v6024 = vunpack.c.l.b16 %v1587
    %v6025 = vunpack.c.h.b16 %v1587
    %v6026 = vunpack.c.l.b16 %v1588
    %v6027 = vunpack.c.h.b16 %v1588
    %v6028 = vunpack.c.l.b16 %v1589
    %v6029 = vunpack.c.h.b16 %v1589
    %v6030 = vunpack.c.l.b16 %v1590
    %v6031 = vunpack.c.h.b16 %v1590
    %v6032 = vunpack.c.l.b16 %v1591
    %v6033 = vunpack.c.h.b16 %v1591
    %v6034 = vunpack.c.l.b16 %v1592
    %v6035 = vunpack.c.h.b16 %v1592
    %v6036 = vunpack.c.l.b16 %v1593
    %v6037 = vunpack.c.h.b16 %v1593
    %v6038 = vunpack.c.l.b16 %v1594
    %v6039 = vunpack.c.h.b16 %v1594
    %v6040 = vunpack.c.l.b16 %v1595
    %v6041 = vunpack.c.h.b16 %v1595
    %v6042 = vunpack.c.l.b16 %v1596
    %v6043 = vunpack.c.h.b16 %v1596
    %v6044 = vunpack.c.l.b16 %v1597
    %v6045 = vunpack.c.h.b16 %v1597
    %v6046 = vunpack.c.l.b16 %v1598
    %v6047 = vunpack.c.h.b16 %v1598
    %v6048 = vunpack.c.l.b16 %v1599
    %v6049 = vunpack.c.h.b16 %v1599
    %v6050 = vunpack.c.l.b16 %v1600
    %v6051 = vunpack.c.h.b16 %v1600
    %v6052 = vunpack.c.l.b16 %v1601
    %v6053 = vunpack.c.h.b16 %v1601
    %v6054 = vunpack.c.l.b16 %v1602
    %v6055 = vunpack.c.h.b16 %v1602
    %v6056 = vunpack.c.l.b16 %v1603
    %v6057 = vunpack.c.h.b16 %v1603
    %v6058 = vunpack.c.l.b16 %v1604
    %v6059 = vunpack.c.h.b16 %v1604
    %v6060 = vunpack.c.l.b16 %v1605
    %v6061 = vunpack.c.h.b16 %v1605
    %v6062 = vunpack.c.l.b16 %v1606
    %v6063 = vunpack.c.h.b16 %v1606
    %v6064 = vunpack.c.l.b16 %v1607
    %v6065 = vunpack.c.h.b16 %v1607
    %v6066 = vunpack.c.l.b16 %v1608
    %v6067 = vunpack.c.h.b16 %v1608
    %v6068 = vunpack.c.l.b16 %v1609
    %v6069 = vunpack.c.h.b16 %v1609
    %v6070 = vunpack.c.l.b16 %v1610
    %v6071 = vunpack.c.h.b16 %v1610
    %v6072 = vunpack.c.l.b16 %v1611
    %v6073 = vunpack.c.h.b16 %v1611
    %v6074 = vunpack.c.l.b16 %v1612
    %v6075 = vunpack.c.h.b16 %v1612
    %v6076 = vunpack.c.l.b16 %v1613
    %v6077 = vunpack.c.h.b16 %v1613
    %v6078 = vunpack.c.l.b16 %v1614
    %v6079 = vunpack.c.h.b16 %v1614
    %v6080 = vunpack.c.l.b16 %v1615
    %v6081 = vunpack.c.h.b16 %v1615
    %v6082 = vunpack.c.l.b16 %v1616
    %v6083 = vunpack.c.h.b16 %v1616
    %v6084 = vunpack.c.l.b16 %v1617
    %v6085 = vunpack.c.h.b16 %v1617
    %v6086 = vunpack.c.l.b16 %v1618
    %v6087 = vunpack.c.h.b16 %v1618
    %v6088 = vunpack.c.l.b16 %v1619
    %v6089 = vunpack.c.h.b16 %v1619
    %v6090 = vunpack.c.l.b16 %v1620
    %v6091 = vunpack.c.h.b16 %v1620
    %v6092 = vunpack.c.l.b16 %v1621
    %v6093 = vunpack.c.h.b16 %v1621
    %v6094 = vunpack.c.l.b16 %v1622
    %v6095 = vunpack.c.h.b16 %v1622
    %v6096 = vunpack.c.l.b16 %v1623
    %v6097 = vunpack.c.h.b16 %v1623
    %v6098 = vunpack.c.l.b16 %v1624
    %v6099 = vunpack.c.h.b16 %v1624
    %v6100 = vunpack.c.l.b16 %v1625
    %v6101 = vunpack.c.h.b16 %v1625
    %v6102 = vunpack.c.l.b16 %v1626
    %v6103 = vunpack.c.h.b16 %v1626
    %v6104 = vunpack.c.l.b16 %v1627
    %v6105 = vunpack.c.h.b16 %v1627
    %v6106 = vunpack.c.l.b16 %v1628
    %v6107 = vunpack.c.h.b16 %v1628
    %v6108 = vunpack.c.l.b16 %v1629
    %v6109 = vunpack.c.h.b16 %v1629
    %v6110 = vunpack.c.l.b16 %v1630
    %v6111 = vunpack.c.h.b16 %v1630
    %v6112 = vunpack.c.l.b16 %v1631
    %v6113 = vunpack.c.h.b16 %v1631
    %v6114 = vunpack.c.l.b16 %v1632
    %v6115 = vunpack.c.h.b16 %v1632
    %v6116 = vunpack.c.l.b16 %v1633
    %v6117 = vunpack.c.h.b16 %v1633
    %v6118 = vunpack.c.l.b16 %v1634
    %v6119 = vunpack.c.h.b16 %v1634
    %v6120 = vunpack.c.l.b16 %v1635
    %v6121 = vunpack.c.h.b16 %v1635
    %v6122 = vunpack.c.l.b16 %v1636
    %v6123 = vunpack.c.h.b16 %v1636
    %v6124 = vunpack.c.l.b16 %v1637
    %v6125 = vunpack.c.h.b16 %v1637
    %v6126 = vunpack.c.l.b16 %v1638
    %v6127 = vunpack.c.h.b16 %v1638
    %v6128 = vunpack.c.l.b16 %v1639
    %v6129 = vunpack.c.h.b16 %v1639
    %v6130 = vunpack.c.l.b16 %v1640
    %v6131 = vunpack.c.h.b16 %v1640
    %v6132 = vunpack.c.l.b16 %v1641
    %v6133 = vunpack.c.h.b16 %v1641
    %v6134 = vunpack.c.l.b16 %v1642
    %v6135 = vunpack.c.h.b16 %v1642
    %v6136 = vunpack.c.l.b16 %v1643
    %v6137 = vunpack.c.h.b16 %v1643
    %v6138 = vunpack.c.l.b16 %v1644
    %v6139 = vunpack.c.h.b16 %v1644
    %v6140 = vunpack.c.l.b16 %v1645
    %v6141 = vunpack.c.h.b16 %v1645
    %v6142 = vunpack.c.l.b16 %v1646
    %v6143 = vunpack.c.h.b16 %v1646
    %v6144 = vunpack.c.l.b16 %v1647
    %v6145 = vunpack.c.h.b16 %v1647
    %v6146 = vunpack.c.l.b16 %v1648
    %v6147 = vunpack.c.h.b16 %v1648
    %v6148 = vunpack.c.l.b16 %v1649
    %v6149 = vunpack.c.h.b16 %v1649
    %v6150 = vunpack.c.l.b16 %v1650
    %v6151 = vunpack.c.h.b16 %v1650
    %v6152 = vunpack.c.l.b16 %v1651
    %v6153 = vunpack.c.h.b16 %v1651
    %v6154 = vunpack.c.l.b16 %v1652
    %v6155 = vunpack.c.h.b16 %v1652
    %v6156 = vunpack.c.l.b16 %v1653
    %v6157 = vunpack.c.h.b16 %v1653
    %v6158 = vunpack.c.l.b16 %v1654
    %v6159 = vunpack.c.h.b16 %v1654
    %v6160 = vunpack.c.l.b16 %v1655
    %v6161 = vunpack.c.h.b16 %v1655
    %v6162 = vunpack.c.l.b16 %v1656
    %v6163 = vunpack.c.h.b16 %v1656
    %v6164 = vunpack.c.l.b16 %v1657
    %v6165 = vunpack.c.h.b16 %v1657
    %v6166 = vunpack.c.l.b16 %v1658
    %v6167 = vunpack.c.h.b16 %v1658
    %v6168 = vunpack.c.l.b16 %v1659
    %v6169 = vunpack.c.h.b16 %v1659
    %v6170 = vunpack.c.l.b16 %v1660
    %v6171 = vunpack.c.h.b16 %v1660
    %v6172 = vunpack.c.l.b16 %v1661
    %v6173 = vunpack.c.h.b16 %v1661
    %v6174 = vunpack.c.l.b16 %v1662
    %v6175 = vunpack.c.h.b16 %v1662
    %v6176 = vunpack.c.l.b16 %v1663
    %v6177 = vunpack.c.h.b16 %v1663
    %v6178 = vunpack.c.l.b16 %v1664
    %v6179 = vunpack.c.h.b16 %v1664
    %v6180 = vunpack.c.l.b16 %v1665
    %v6181 = vunpack.c.h.b16 %v1665
    %v6182 = vunpack.c.l.b16 %v1666
    %v6183 = vunpack.c.h.b16 %v1666
    %v6184 = vunpack.c.l.b16 %v1667
    %v6185 = vunpack.c.h.b16 %v1667
    %v6186 = vunpack.c.l.b16 %v1668
    %v6187 = vunpack.c.h.b16 %v1668
    %v6188 = vunpack.c.l.b16 %v1669
    %v6189 = vunpack.c.h.b16 %v1669
    %v6190 = vunpack.c.l.b16 %v1670
    %v6191 = vunpack.c.h.b16 %v1670
    %v6192 = vunpack.c.l.b16 %v1671
    %v6193 = vunpack.c.h.b16 %v1671
    %v6194 = vunpack.c.l.b16 %v1672
    %v6195 = vunpack.c.h.b16 %v1672
    %v6196 = vunpack.c.l.b16 %v1673
    %v6197 = vunpack.c.h.b16 %v1673
    %v6198 = vunpack.c.l.b16 %v1674
    %v6199 = vunpack.c.h.b16 %v1674
    %v6200 = vunpack.c.l.b16 %v1675
    %v6201 = vunpack.c.h.b16 %v1675
    %v6202 = vunpack.c.l.b16 %v1676
    %v6203 = vunpack.c.h.b16 %v1676
    %v6204 = vunpack.c.l.b16 %v1677
    %v6205 = vunpack.c.h.b16 %v1677
    %v6206 = vunpack.c.l.b16 %v1678
    %v6207 = vunpack.c.h.b16 %v1678
    %v6208 = vunpack.c.l.b16 %v1679
    %v6209 = vunpack.c.h.b16 %v1679
    %v6210 = vunpack.c.l.b16 %v1680
    %v6211 = vunpack.c.h.b16 %v1680
    %v6212 = vunpack.c.l.b16 %v1681
    %v6213 = vunpack.c.h.b16 %v1681
    %v6214 = vunpack.c.l.b16 %v1682
    %v6215 = vunpack.c.h.b16 %v1682
    %v6216 = vunpack.c.l.b16 %v1683
    %v6217 = vunpack.c.h.b16 %v1683
    %v6218 = vunpack.c.l.b16 %v1684
    %v6219 = vunpack.c.h.b16 %v1684
    %v6220 = vunpack.c.l.b16 %v1685
    %v6221 = vunpack.c.h.b16 %v1685
    %v6222 = vunpack.c.l.b16 %v1686
    %v6223 = vunpack.c.h.b16 %v1686
    %v6224 = vunpack.c.l.b16 %v1687
    %v6225 = vunpack.c.h.b16 %v1687
    %v6226 = vunpack.c.l.b16 %v1688
    %v6227 = vunpack.c.h.b16 %v1688
    %v6228 = vunpack.c.l.b16 %v1689
    %v6229 = vunpack.c.h.b16 %v1689
    %v6230 = vunpack.c.l.b16 %v1690
    %v6231 = vunpack.c.h.b16 %v1690
    %v6232 = vunpack.c.l.b16 %v1691
    %v6233 = vunpack.c.h.b16 %v1691
    %v6234 = vunpack.c.l.b16 %v1692
    %v6235 = vunpack.c.h.b16 %v1692
    %v6236 = vunpack.c.l.b16 %v1693
    %v6237 = vunpack.c.h.b16 %v1693
    %v6238 = vunpack.c.l.b16 %v1694
    %v6239 = vunpack.c.h.b16 %v1694
    %v6240 = vunpack.c.l.b16 %v1695
    %v6241 = vunpack.c.h.b16 %v1695
    %v6242 = vunpack.c.l.b16 %v1696
    %v6243 = vunpack.c.h.b16 %v1696
    %v6244 = vunpack.c.l.b16 %v1697
    %v6245 = vunpack.c.h.b16 %v1697
    %v6246 = vunpack.c.l.b16 %v1698
    %v6247 = vunpack.c.h.b16 %v1698
    %v6248 = vunpack.c.l.b16 %v1699
    %v6249 = vunpack.c.h.b16 %v1699
    %v6250 = vunpack.c.l.b16 %v1700
    %v6251 = vunpack.c.h.b16 %v1700
    %v6252 = vunpack.c.l.b16 %v1701
    %v6253 = vunpack.c.h.b16 %v1701
    %v6254 = vunpack.c.l.b16 %v1702
    %v6255 = vunpack.c.h.b16 %v1702
    %v6256 = vunpack.c.l.b16 %v1703
    %v6257 = vunpack.c.h.b16 %v1703
    %v6258 = vunpack.c.l.b16 %v1704
    %v6259 = vunpack.c.h.b16 %v1704
    %v6260 = vunpack.c.l.b16 %v1705
    %v6261 = vunpack.c.h.b16 %v1705
    %v6262 = vunpack.c.l.b16 %v1706
    %v6263 = vunpack.c.h.b16 %v1706
    %v6264 = vunpack.c.l.b16 %v1707
    %v6265 = vunpack.c.h.b16 %v1707
    %v6266 = vunpack.c.l.b16 %v1708
    %v6267 = vunpack.c.h.b16 %v1708
    %v6268 = vunpack.c.l.b16 %v1709
    %v6269 = vunpack.c.h.b16 %v1709
    %v6270 = vunpack.c.l.b16 %v1710
    %v6271 = vunpack.c.h.b16 %v1710
    %v6272 = vunpack.c.l.b16 %v1711
    %v6273 = vunpack.c.h.b16 %v1711
    %v6274 = vunpack.c.l.b16 %v1712
    %v6275 = vunpack.c.h.b16 %v1712
    %v6276 = vunpack.c.l.b16 %v1713
    %v6277 = vunpack.c.h.b16 %v1713
    %v6278 = vunpack.c.l.b16 %v1714
    %v6279 = vunpack.c.h.b16 %v1714
    %v6280 = vunpack.c.l.b16 %v1715
    %v6281 = vunpack.c.h.b16 %v1715
    %v6282 = vunpack.c.l.b16 %v1716
    %v6283 = vunpack.c.h.b16 %v1716
    %v6284 = vunpack.c.l.b16 %v1717
    %v6285 = vunpack.c.h.b16 %v1717
    %v6286 = vunpack.c.l.b16 %v1718
    %v6287 = vunpack.c.h.b16 %v1718
    %v6288 = vunpack.c.l.b16 %v1719
    %v6289 = vunpack.c.h.b16 %v1719
    %v6290 = vunpack.c.l.b16 %v1720
    %v6291 = vunpack.c.h.b16 %v1720
    %v6292 = vunpack.c.l.b16 %v1721
    %v6293 = vunpack.c.h.b16 %v1721
    %v6294 = vunpack.c.l.b16 %v1722
    %v6295 = vunpack.c.h.b16 %v1722
    %v6296 = vunpack.c.l.b16 %v1723
    %v6297 = vunpack.c.h.b16 %v1723
    %v6298 = vunpack.c.l.b16 %v1724
    %v6299 = vunpack.c.h.b16 %v1724
    %v6300 = vunpack.c.l.b16 %v1725
    %v6301 = vunpack.c.h.b16 %v1725
    %v6302 = vunpack.c.l.b16 %v1726
    %v6303 = vunpack.c.h.b16 %v1726
    %v6304 = vunpack.c.l.b16 %v1727
    %v6305 = vunpack.c.h.b16 %v1727
    %v6306 = vunpack.c.l.b16 %v1728
    %v6307 = vunpack.c.h.b16 %v1728
    %v6308 = vunpack.c.l.b16 %v1729
    %v6309 = vunpack.c.h.b16 %v1729
    %v6310 = vunpack.c.l.b16 %v1730
    %v6311 = vunpack.c.h.b16 %v1730
    %v6312 = vunpack.c.l.b16 %v1731
    %v6313 = vunpack.c.h.b16 %v1731
    %v6314 = vunpack.c.l.b16 %v1732
    %v6315 = vunpack.c.h.b16 %v1732
    %v6316 = vunpack.c.l.b16 %v1733
    %v6317 = vunpack.c.h.b16 %v1733
    %v6318 = vunpack.c.l.b16 %v1734
    %v6319 = vunpack.c.h.b16 %v1734
    %v6320 = vunpack.c.l.b16 %v1735
    %v6321 = vunpack.c.h.b16 %v1735
    %v6322 = vunpack.c.l.b16 %v1736
    %v6323 = vunpack.c.h.b16 %v1736
    %v6324 = vunpack.c.l.b16 %v1737
    %v6325 = vunpack.c.h.b16 %v1737
    %v6326 = vunpack.c.l.b16 %v1738
    %v6327 = vunpack.c.h.b16 %v1738
    %v6328 = vunpack.c.l.b16 %v1739
    %v6329 = vunpack.c.h.b16 %v1739
    %v6330 = vunpack.c.l.b16 %v1740
    %v6331 = vunpack.c.h.b16 %v1740
    %v6332 = vunpack.c.l.b16 %v1741
    %v6333 = vunpack.c.h.b16 %v1741
    %v6334 = vunpack.c.l.b16 %v1742
    %v6335 = vunpack.c.h.b16 %v1742
    %v6336 = vunpack.c.l.b16 %v1743
    %v6337 = vunpack.c.h.b16 %v1743
    %v6338 = vunpack.c.l.b16 %v1744
    %v6339 = vunpack.c.h.b16 %v1744
    %v6340 = vunpack.c.l.b16 %v1745
    %v6341 = vunpack.c.h.b16 %v1745
    %v6342 = vunpack.c.l.b16 %v1746
    %v6343 = vunpack.c.h.b16 %v1746
    %v6344 = vunpack.c.l.b16 %v1747
    %v6345 = vunpack.c.h.b16 %v1747
    %v6346 = vunpack.c.l.b16 %v1748
    %v6347 = vunpack.c.h.b16 %v1748
    %v6348 = vunpack.c.l.b16 %v1749
    %v6349 = vunpack.c.h.b16 %v1749
    %v6350 = vunpack.c.l.b16 %v1750
    %v6351 = vunpack.c.h.b16 %v1750
    %v6352 = vunpack.c.l.b16 %v1751
    %v6353 = vunpack.c.h.b16 %v1751
    %v6354 = vunpack.c.l.b16 %v1752
    %v6355 = vunpack.c.h.b16 %v1752
    %v6356 = vunpack.c.l.b16 %v1753
    %v6357 = vunpack.c.h.b16 %v1753
    %v6358 = vunpack.c.l.b16 %v1754
    %v6359 = vunpack.c.h.b16 %v1754
    %v6360 = vunpack.c.l.b16 %v1755
    %v6361 = vunpack.c.h.b16 %v1755
    %v6362 = vunpack.c.l.b16 %v1756
    %v6363 = vunpack.c.h.b16 %v1756
    %v6364 = vunpack.c.l.b16 %v1757
    %v6365 = vunpack.c.h.b16 %v1757
    %v6366 = vpack.c.b16 %v3302, %v3294
    %v6367 = vpack.c.b16 %v3303, %v3295
    %v6368 = vpack.c.b16 %v3304, %v3296
    %v6369 = vpack.c.b16 %v3305, %v3297
    %v6370 = vpack.c.b16 %v3306, %v3298
    %v6371 = vpack.c.b16 %v3307, %v3299
    %v6372 = vpack.c.b16 %v3308, %v3300
    %v6373 = vpack.c.b16 %v3309, %v3301
    %v6374 = vpack.c.b16 %v3318, %v3310
    %v6375 = vpack.c.b16 %v3319, %v3311
    %v6376 = vpack.c.b16 %v3320, %v3312
    %v6377 = vpack.c.b16 %v3321, %v3313
    %v6378 = vpack.c.b16 %v3322, %v3314
    %v6379 = vpack.c.b16 %v3323, %v3315
    %v6380 = vpack.c.b16 %v3324, %v3316
    %v6381 = vpack.c.b16 %v3325, %v3317
    %v6382 = vpack.c.b16 %v3334, %v3326
    %v6383 = vpack.c.b16 %v3335, %v3327
    %v6384 = vpack.c.b16 %v3336, %v3328
    %v6385 = vpack.c.b16 %v3337, %v3329
    %v6386 = vpack.c.b16 %v3338, %v3330
    %v6387 = vpack.c.b16 %v3339, %v3331
    %v6388 = vpack.c.b16 %v3340, %v3332
    %v6389 = vpack.c.b16 %v3341, %v3333
    %v6390 = vpack.c.b16 %v3350, %v3342
    %v6391 = vpack.c.b16 %v3351, %v3343
    %v6392 = vpack.c.b16 %v3352, %v3344
    %v6393 = vpack.c.b16 %v3353, %v3345
    %v6394 = vpack.c.b16 %v3354, %v3346
    %v6395 = vpack.c.b16 %v3355, %v3347
    %v6396 = vpack.c.b16 %v3356, %v3348
    %v6397 = vpack.c.b16 %v3357, %v3349
    %v6398 = vpack.c.b16 %v3366, %v3358
    %v6399 = vpack.c.b16 %v3367, %v3359
    %v6400 = vpack.c.b16 %v3368, %v3360
    %v6401 = vpack.c.b16 %v3369, %v3361
    %v6402 = vpack.c.b16 %v3370, %v3362
    %v6403 = vpack.c.b16 %v3371, %v3363
    %v6404 = vpack.c.b16 %v3372, %v3364
    %v6405 = vpack.c.b16 %v3373, %v3365
    %v6406 = vpack.c.b16 %v3382, %v3374
    %v6407 = vpack.c.b16 %v3383, %v3375
    %v6408 = vpack.c.b16 %v3384, %v3376
    %v6409 = vpack.c.b16 %v3385, %v3377
    %v6410 = vpack.c.b16 %v3386, %v3378
    %v6411 = vpack.c.b16 %v3387, %v3379
    %v6412 = vpack.c.b16 %v3388, %v3380
    %v6413 = vpack.c.b16 %v3389, %v3381
    %v6414 = vpack.c.b16 %v3398, %v3390
    %v6415 = vpack.c.b16 %v3399, %v3391
    %v6416 = vpack.c.b16 %v3400, %v3392
    %v6417 = vpack.c.b16 %v3401, %v3393
    %v6418 = vpack.c.b16 %v3402, %v3394
    %v6419 = vpack.c.b16 %v3403, %v3395
    %v6420 = vpack.c.b16 %v3404, %v3396
    %v6421 = vpack.c.b16 %v3405, %v3397
    %v6422 = vpack.c.b16 %v3414, %v3406
    %v6423 = vpack.c.b16 %v3415, %v3407
    %v6424 = vpack.c.b16 %v3416, %v3408
    %v6425 = vpack.c.b16 %v3417, %v3409
    %v6426 = vpack.c.b16 %v3418, %v3410
    %v6427 = vpack.c.b16 %v3419, %v3411
    %v6428 = vpack.c.b16 %v3420, %v3412
    %v6429 = vpack.c.b16 %v3421, %v3413
    %v6430 = vpack.c.b16 %v3430, %v3422
    %v6431 = vpack.c.b16 %v3431, %v3423
    %v6432 = vpack.c.b16 %v3432, %v3424
    %v6433 = vpack.c.b16 %v3433, %v3425
    %v6434 = vpack.c.b16 %v3434, %v3426
    %v6435 = vpack.c.b16 %v3435, %v3427
    %v6436 = vpack.c.b16 %v3436, %v3428
    %v6437 = vpack.c.b16 %v3437, %v3429
    %v6438 = vpack.c.b16 %v3446, %v3438
    %v6439 = vpack.c.b16 %v3447, %v3439
    %v6440 = vpack.c.b16 %v3448, %v3440
    %v6441 = vpack.c.b16 %v3449, %v3441
    %v6442 = vpack.c.b16 %v3450, %v3442
    %v6443 = vpack.c.b16 %v3451, %v3443
    %v6444 = vpack.c.b16 %v3452, %v3444
    %v6445 = vpack.c.b16 %v3453, %v3445
    %v6446 = vpack.c.b16 %v3462, %v3454
    %v6447 = vpack.c.b16 %v3463, %v3455
    %v6448 = vpack.c.b16 %v3464, %v3456
    %v6449 = vpack.c.b16 %v3465, %v3457
    %v6450 = vpack.c.b16 %v3466, %v3458
    %v6451 = vpack.c.b16 %v3467, %v3459
    %v6452 = vpack.c.b16 %v3468, %v3460
    %v6453 = vpack.c.b16 %v3469, %v3461
    %v6454 = vpack.c.b16 %v3478, %v3470
    %v6455 = vpack.c.b16 %v3479, %v3471
    %v6456 = vpack.c.b16 %v3480, %v3472
    %v6457 = vpack.c.b16 %v3481, %v3473
    %v6458 = vpack.c.b16 %v3482, %v3474
    %v6459 = vpack.c.b16 %v3483, %v3475
    %v6460 = vpack.c.b16 %v3484, %v3476
    %v6461 = vpack.c.b16 %v3485, %v3477
    %v6462 = vpack.c.b16 %v3494, %v3486
    %v6463 = vpack.c.b16 %v3495, %v3487
    %v6464 = vpack.c.b16 %v3496, %v3488
    %v6465 = vpack.c.b16 %v3497, %v3489
    %v6466 = vpack.c.b16 %v3498, %v3490
    %v6467 = vpack.c.b16 %v3499, %v3491
    %v6468 = vpack.c.b16 %v3500, %v3492
    %v6469 = vpack.c.b16 %v3501, %v3493
    %v6470 = vpack.c.b16 %v3510, %v3502
    %v6471 = vpack.c.b16 %v3511, %v3503
    %v6472 = vpack.c.b16 %v3512, %v3504
    %v6473 = vpack.c.b16 %v3513, %v3505
    %v6474 = vpack.c.b16 %v3514, %v3506
    %v6475 = vpack.c.b16 %v3515, %v3507
    %v6476 = vpack.c.b16 %v3516, %v3508
    %v6477 = vpack.c.b16 %v3517, %v3509
    %v6478 = vpack.c.b16 %v3526, %v3518
    %v6479 = vpack.c.b16 %v3527, %v3519
    %v6480 = vpack.c.b16 %v3528, %v3520
    %v6481 = vpack.c.b16 %v3529, %v3521
    %v6482 = vpack.c.b16 %v3530, %v3522
    %v6483 = vpack.c.b16 %v3531, %v3523
    %v6484 = vpack.c.b16 %v3532, %v3524
    %v6485 = vpack.c.b16 %v3533, %v3525
    %v6486 = vpack.c.b16 %v3542, %v3534
    %v6487 = vpack.c.b16 %v3543, %v3535
    %v6488 = vpack.c.b16 %v3544, %v3536
    %v6489 = vpack.c.b16 %v3545, %v3537
    %v6490 = vpack.c.b16 %v3546, %v3538
    %v6491 = vpack.c.b16 %v3547, %v3539
    %v6492 = vpack.c.b16 %v3548, %v3540
    %v6493 = vpack.c.b16 %v3549, %v3541
    %v6494 = vpack.c.b16 %v3558, %v3550
    %v6495 = vpack.c.b16 %v3559, %v3551
    %v6496 = vpack.c.b16 %v3560, %v3552
    %v6497 = vpack.c.b16 %v3561, %v3553
    %v6498 = vpack.c.b16 %v3562, %v3554
    %v6499 = vpack.c.b16 %v3563, %v3555
    %v6500 = vpack.c.b16 %v3564, %v3556
    %v6501 = vpack.c.b16 %v3565, %v3557
    %v6502 = vpack.c.b16 %v3574, %v3566
    %v6503 = vpack.c.b16 %v3575, %v3567
    %v6504 = vpack.c.b16 %v3576, %v3568
    %v6505 = vpack.c.b16 %v3577, %v3569
    %v6506 = vpack.c.b16 %v3578, %v3570
    %v6507 = vpack.c.b16 %v3579, %v3571
    %v6508 = vpack.c.b16 %v3580, %v3572
    %v6509 = vpack.c.b16 %v3581, %v3573
    %v6510 = vpack.c.b16 %v3590, %v3582
    %v6511 = vpack.c.b16 %v3591, %v3583
    %v6512 = vpack.c.b16 %v3592, %v3584
    %v6513 = vpack.c.b16 %v3593, %v3585
    %v6514 = vpack.c.b16 %v3594, %v3586
    %v6515 = vpack.c.b16 %v3595, %v3587
    %v6516 = vpack.c.b16 %v3596, %v3588
    %v6517 = vpack.c.b16 %v3597, %v3589
    %v6518 = vpack.c.b16 %v3606, %v3598
    %v6519 = vpack.c.b16 %v3607, %v3599
    %v6520 = vpack.c.b16 %v3608, %v3600
    %v6521 = vpack.c.b16 %v3609, %v3601
    %v6522 = vpack.c.b16 %v3610, %v3602
    %v6523 = vpack.c.b16 %v3611, %v3603
    %v6524 = vpack.c.b16 %v3612, %v3604
    %v6525 = vpack.c.b16 %v3613, %v3605
    %v6526 = vpack.c.b16 %v3622, %v3614
    %v6527 = vpack.c.b16 %v3623, %v3615
    %v6528 = vpack.c.b16 %v3624, %v3616
    %v6529 = vpack.c.b16 %v3625, %v3617
    %v6530 = vpack.c.b16 %v3626, %v3618
    %v6531 = vpack.c.b16 %v3627, %v3619
    %v6532 = vpack.c.b16 %v3628, %v3620
    %v6533 = vpack.c.b16 %v3629, %v3621
    %v6534 = vpack.c.b16 %v3638, %v3630
    %v6535 = vpack.c.b16 %v3639, %v3631
    %v6536 = vpack.c.b16 %v3640, %v3632
    %v6537 = vpack.c.b16 %v3641, %v3633
    %v6538 = vpack.c.b16 %v3642, %v3634
    %v6539 = vpack.c.b16 %v3643, %v3635
    %v6540 = vpack.c.b16 %v3644, %v3636
    %v6541 = vpack.c.b16 %v3645, %v3637
    %v6542 = vpack.c.b16 %v3654, %v3646
    %v6543 = vpack.c.b16 %v3655, %v3647
    %v6544 = vpack.c.b16 %v3656, %v3648
    %v6545 = vpack.c.b16 %v3657, %v3649
    %v6546 = vpack.c.b16 %v3658, %v3650
    %v6547 = vpack.c.b16 %v3659, %v3651
    %v6548 = vpack.c.b16 %v3660, %v3652
    %v6549 = vpack.c.b16 %v3661, %v3653
    %v6550 = vpack.c.b16 %v3670, %v3662
    %v6551 = vpack.c.b16 %v3671, %v3663
    %v6552 = vpack.c.b16 %v3672, %v3664
    %v6553 = vpack.c.b16 %v3673, %v3665
    %v6554 = vpack.c.b16 %v3674, %v3666
    %v6555 = vpack.c.b16 %v3675, %v3667
    %v6556 = vpack.c.b16 %v3676, %v3668
    %v6557 = vpack.c.b16 %v3677, %v3669
    %v6558 = vpack.c.b16 %v3686, %v3678
    %v6559 = vpack.c.b16 %v3687, %v3679
    %v6560 = vpack.c.b16 %v3688, %v3680
    %v6561 = vpack.c.b16 %v3689, %v3681
    %v6562 = vpack.c.b16 %v3690, %v3682
    %v6563 = vpack.c.b16 %v3691, %v3683
    %v6564 = vpack.c.b16 %v3692, %v3684
    %v6565 = vpack.c.b16 %v3693, %v3685
    %v6566 = vpack.c.b16 %v3702, %v3694
    %v6567 = vpack.c.b16 %v3703, %v3695
    %v6568 = vpack.c.b16 %v3704, %v3696
    %v6569 = vpack.c.b16 %v3705, %v3697
    %v6570 = vpack.c.b16 %v3706, %v3698
    %v6571 = vpack.c.b16 %v3707, %v3699
    %v6572 = vpack.c.b16 %v3708, %v3700
    %v6573 = vpack.c.b16 %v3709, %v3701
    %v6574 = vpack.c.b16 %v3718, %v3710
    %v6575 = vpack.c.b16 %v3719, %v3711
    %v6576 = vpack.c.b16 %v3720, %v3712
    %v6577 = vpack.c.b16 %v3721, %v3713
    %v6578 = vpack.c.b16 %v3722, %v3714
    %v6579 = vpack.c.b16 %v3723, %v3715
    %v6580 = vpack.c.b16 %v3724, %v3716
    %v6581 = vpack.c.b16 %v3725, %v3717
    %v6582 = vpack.c.b16 %v3734, %v3726
    %v6583 = vpack.c.b16 %v3735, %v3727
    %v6584 = vpack.c.b16 %v3736, %v3728
    %v6585 = vpack.c.b16 %v3737, %v3729
    %v6586 = vpack.c.b16 %v3738, %v3730
    %v6587 = vpack.c.b16 %v3739, %v3731
    %v6588 = vpack.c.b16 %v3740, %v3732
    %v6589 = vpack.c.b16 %v3741, %v3733
    %v6590 = vpack.c.b16 %v3750, %v3742
    %v6591 = vpack.c.b16 %v3751, %v3743
    %v6592 = vpack.c.b16 %v3752, %v3744
    %v6593 = vpack.c.b16 %v3753, %v3745
    %v6594 = vpack.c.b16 %v3754, %v3746
    %v6595 = vpack.c.b16 %v3755, %v3747
    %v6596 = vpack.c.b16 %v3756, %v3748
    %v6597 = vpack.c.b16 %v3757, %v3749
    %v6598 = vpack.c.b16 %v3766, %v3758
    %v6599 = vpack.c.b16 %v3767, %v3759
    %v6600 = vpack.c.b16 %v3768, %v3760
    %v6601 = vpack.c.b16 %v3769, %v3761
    %v6602 = vpack.c.b16 %v3770, %v3762
    %v6603 = vpack.c.b16 %v3771, %v3763
    %v6604 = vpack.c.b16 %v3772, %v3764
    %v6605 = vpack.c.b16 %v3773, %v3765
    %v6606 = vpack.c.b16 %v3782, %v3774
    %v6607 = vpack.c.b16 %v3783, %v3775
    %v6608 = vpack.c.b16 %v3784, %v3776
    %v6609 = vpack.c.b16 %v3785, %v3777
    %v6610 = vpack.c.b16 %v3786, %v3778
    %v6611 = vpack.c.b16 %v3787, %v3779
    %v6612 = vpack.c.b16 %v3788, %v3780
    %v6613 = vpack.c.b16 %v3789, %v3781
    %v6614 = vpack.c.b16 %v3798, %v3790
    %v6615 = vpack.c.b16 %v3799, %v3791
    %v6616 = vpack.c.b16 %v3800, %v3792
    %v6617 = vpack.c.b16 %v3801, %v3793
    %v6618 = vpack.c.b16 %v3802, %v3794
    %v6619 = vpack.c.b16 %v3803, %v3795
    %v6620 = vpack.c.b16 %v3804, %v3796
    %v6621 = vpack.c.b16 %v3805, %v3797
    %v6622 = vpack.c.b16 %v3814, %v3806
    %v6623 = vpack.c.b16 %v3815, %v3807
    %v6624 = vpack.c.b16 %v3816, %v3808
    %v6625 = vpack.c.b16 %v3817, %v3809
    %v6626 = vpack.c.b16 %v3818, %v3810
    %v6627 = vpack.c.b16 %v3819, %v3811
    %v6628 = vpack.c.b16 %v3820, %v3812
    %v6629 = vpack.c.b16 %v3821, %v3813
    %v6630 = vpack.c.b16 %v3830, %v3822
    %v6631 = vpack.c.b16 %v3831, %v3823
    %v6632 = vpack.c.b16 %v3832, %v3824
    %v6633 = vpack.c.b16 %v3833, %v3825
    %v6634 = vpack.c.b16 %v3834, %v3826
    %v6635 = vpack.c.b16 %v3835, %v3827
    %v6636 = vpack.c.b16 %v3836, %v3828
    %v6637 = vpack.c.b16 %v3837, %v3829
    %v6638 = vpack.c.b16 %v3846, %v3838
    %v6639 = vpack.c.b16 %v3847, %v3839
    %v6640 = vpack.c.b16 %v3848, %v3840
    %v6641 = vpack.c.b16 %v3849, %v3841
    %v6642 = vpack.c.b16 %v3850, %v3842
    %v6643 = vpack.c.b16 %v3851, %v3843
    %v6644 = vpack.c.b16 %v3852, %v3844
    %v6645 = vpack.c.b16 %v3853, %v3845
    %v6646 = vpack.c.b16 %v3862, %v3854
    %v6647 = vpack.c.b16 %v3863, %v3855
    %v6648 = vpack.c.b16 %v3864, %v3856
    %v6649 = vpack.c.b16 %v3865, %v3857
    %v6650 = vpack.c.b16 %v3866, %v3858
    %v6651 = vpack.c.b16 %v3867, %v3859
    %v6652 = vpack.c.b16 %v3868, %v3860
    %v6653 = vpack.c.b16 %v3869, %v3861
    %v6654 = vpack.c.b16 %v3878, %v3870
    %v6655 = vpack.c.b16 %v3879, %v3871
    %v6656 = vpack.c.b16 %v3880, %v3872
    %v6657 = vpack.c.b16 %v3881, %v3873
    %v6658 = vpack.c.b16 %v3882, %v3874
    %v6659 = vpack.c.b16 %v3883, %v3875
    %v6660 = vpack.c.b16 %v3884, %v3876
    %v6661 = vpack.c.b16 %v3885, %v3877
    %v6662 = vpack.c.b16 %v3894, %v3886
    %v6663 = vpack.c.b16 %v3895, %v3887
    %v6664 = vpack.c.b16 %v3896, %v3888
    %v6665 = vpack.c.b16 %v3897, %v3889
    %v6666 = vpack.c.b16 %v3898, %v3890
    %v6667 = vpack.c.b16 %v3899, %v3891
    %v6668 = vpack.c.b16 %v3900, %v3892
    %v6669 = vpack.c.b16 %v3901, %v3893
    %v6670 = vpack.c.b16 %v3910, %v3902
    %v6671 = vpack.c.b16 %v3911, %v3903
    %v6672 = vpack.c.b16 %v3912, %v3904
    %v6673 = vpack.c.b16 %v3913, %v3905
    %v6674 = vpack.c.b16 %v3914, %v3906
    %v6675 = vpack.c.b16 %v3915, %v3907
    %v6676 = vpack.c.b16 %v3916, %v3908
    %v6677 = vpack.c.b16 %v3917, %v3909
    %v6678 = vpack.c.b16 %v3926, %v3918
    %v6679 = vpack.c.b16 %v3927, %v3919
    %v6680 = vpack.c.b16 %v3928, %v3920
    %v6681 = vpack.c.b16 %v3929, %v3921
    %v6682 = vpack.c.b16 %v3930, %v3922
    %v6683 = vpack.c.b16 %v3931, %v3923
    %v6684 = vpack.c.b16 %v3932, %v3924
    %v6685 = vpack.c.b16 %v3933, %v3925
    %v6686 = vpack.c.b16 %v3942, %v3934
    %v6687 = vpack.c.b16 %v3943, %v3935
    %v6688 = vpack.c.b16 %v3944, %v3936
    %v6689 = vpack.c.b16 %v3945, %v3937
    %v6690 = vpack.c.b16 %v3946, %v3938
    %v6691 = vpack.c.b16 %v3947, %v3939
    %v6692 = vpack.c.b16 %v3948, %v3940
    %v6693 = vpack.c.b16 %v3949, %v3941
    %v6694 = vpack.c.b16 %v3958, %v3950
    %v6695 = vpack.c.b16 %v3959, %v3951
    %v6696 = vpack.c.b16 %v3960, %v3952
    %v6697 = vpack.c.b16 %v3961, %v3953
    %v6698 = vpack.c.b16 %v3962, %v3954
    %v6699 = vpack.c.b16 %v3963, %v3955
    %v6700 = vpack.c.b16 %v3964, %v3956
    %v6701 = vpack.c.b16 %v3965, %v3957
    %v6702 = vpack.c.b16 %v3974, %v3966
    %v6703 = vpack.c.b16 %v3975, %v3967
    %v6704 = vpack.c.b16 %v3976, %v3968
    %v6705 = vpack.c.b16 %v3977, %v3969
    %v6706 = vpack.c.b16 %v3978, %v3970
    %v6707 = vpack.c.b16 %v3979, %v3971
    %v6708 = vpack.c.b16 %v3980, %v3972
    %v6709 = vpack.c.b16 %v3981, %v3973
    %v6710 = vpack.c.b16 %v3990, %v3982
    %v6711 = vpack.c.b16 %v3991, %v3983
    %v6712 = vpack.c.b16 %v3992, %v3984
    %v6713 = vpack.c.b16 %v3993, %v3985
    %v6714 = vpack.c.b16 %v3994, %v3986
    %v6715 = vpack.c.b16 %v3995, %v3987
    %v6716 = vpack.c.b16 %v3996, %v3988
    %v6717 = vpack.c.b16 %v3997, %v3989
    %v6718 = vpack.c.b16 %v4006, %v3998
    %v6719 = vpack.c.b16 %v4007, %v3999
    %v6720 = vpack.c.b16 %v4008, %v4000
    %v6721 = vpack.c.b16 %v4009, %v4001
    %v6722 = vpack.c.b16 %v4010, %v4002
    %v6723 = vpack.c.b16 %v4011, %v4003
    %v6724 = vpack.c.b16 %v4012, %v4004
    %v6725 = vpack.c.b16 %v4013, %v4005
    %v6726 = vpack.c.b16 %v4022, %v4014
    %v6727 = vpack.c.b16 %v4023, %v4015
    %v6728 = vpack.c.b16 %v4024, %v4016
    %v6729 = vpack.c.b16 %v4025, %v4017
    %v6730 = vpack.c.b16 %v4026, %v4018
    %v6731 = vpack.c.b16 %v4027, %v4019
    %v6732 = vpack.c.b16 %v4028, %v4020
    %v6733 = vpack.c.b16 %v4029, %v4021
    %v6734 = vpack.c.b16 %v4038, %v4030
    %v6735 = vpack.c.b16 %v4039, %v4031
    %v6736 = vpack.c.b16 %v4040, %v4032
    %v6737 = vpack.c.b16 %v4041, %v4033
    %v6738 = vpack.c.b16 %v4042, %v4034
    %v6739 = vpack.c.b16 %v4043, %v4035
    %v6740 = vpack.c.b16 %v4044, %v4036
    %v6741 = vpack.c.b16 %v4045, %v4037
    %v6742 = vpack.c.b16 %v4054, %v4046
    %v6743 = vpack.c.b16 %v4055, %v4047
    %v6744 = vpack.c.b16 %v4056, %v4048
    %v6745 = vpack.c.b16 %v4057, %v4049
    %v6746 = vpack.c.b16 %v4058, %v4050
    %v6747 = vpack.c.b16 %v4059, %v4051
    %v6748 = vpack.c.b16 %v4060, %v4052
    %v6749 = vpack.c.b16 %v4061, %v4053
    %v6750 = vpack.c.b16 %v4070, %v4062
    %v6751 = vpack.c.b16 %v4071, %v4063
    %v6752 = vpack.c.b16 %v4072, %v4064
    %v6753 = vpack.c.b16 %v4073, %v4065
    %v6754 = vpack.c.b16 %v4074, %v4066
    %v6755 = vpack.c.b16 %v4075, %v4067
    %v6756 = vpack.c.b16 %v4076, %v4068
    %v6757 = vpack.c.b16 %v4077, %v4069
    %v6758 = vpack.c.b16 %v4086, %v4078
    %v6759 = vpack.c.b16 %v4087, %v4079
    %v6760 = vpack.c.b16 %v4088, %v4080
    %v6761 = vpack.c.b16 %v4089, %v4081
    %v6762 = vpack.c.b16 %v4090, %v4082
    %v6763 = vpack.c.b16 %v4091, %v4083
    %v6764 = vpack.c.b16 %v4092, %v4084
    %v6765 = vpack.c.b16 %v4093, %v4085
    %v6766 = vpack.c.b16 %v4102, %v4094
    %v6767 = vpack.c.b16 %v4103, %v4095
    %v6768 = vpack.c.b16 %v4104, %v4096
    %v6769 = vpack.c.b16 %v4105, %v4097
    %v6770 = vpack.c.b16 %v4106, %v4098
    %v6771 = vpack.c.b16 %v4107, %v4099
    %v6772 = vpack.c.b16 %v4108, %v4100
    %v6773 = vpack.c.b16 %v4109, %v4101
    %v6774 = vpack.c.b16 %v4118, %v4110
    %v6775 = vpack.c.b16 %v4119, %v4111
    %v6776 = vpack.c.b16 %v4120, %v4112
    %v6777 = vpack.c.b16 %v4121, %v4113
    %v6778 = vpack.c.b16 %v4122, %v4114
    %v6779 = vpack.c.b16 %v4123, %v4115
    %v6780 = vpack.c.b16 %v4124, %v4116
    %v6781 = vpack.c.b16 %v4125, %v4117
    %v6782 = vpack.c.b16 %v4134, %v4126
    %v6783 = vpack.c.b16 %v4135, %v4127
    %v6784 = vpack.c.b16 %v4136, %v4128
    %v6785 = vpack.c.b16 %v4137, %v4129
    %v6786 = vpack.c.b16 %v4138, %v4130
    %v6787 = vpack.c.b16 %v4139, %v4131
    %v6788 = vpack.c.b16 %v4140, %v4132
    %v6789 = vpack.c.b16 %v4141, %v4133
    %v6790 = vpack.c.b16 %v4150, %v4142
    %v6791 = vpack.c.b16 %v4151, %v4143
    %v6792 = vpack.c.b16 %v4152, %v4144
    %v6793 = vpack.c.b16 %v4153, %v4145
    %v6794 = vpack.c.b16 %v4154, %v4146
    %v6795 = vpack.c.b16 %v4155, %v4147
    %v6796 = vpack.c.b16 %v4156, %v4148
    %v6797 = vpack.c.b16 %v4157, %v4149
    %v6798 = vpack.c.b16 %v4166, %v4158
    %v6799 = vpack.c.b16 %v4167, %v4159
    %v6800 = vpack.c.b16 %v4168, %v4160
    %v6801 = vpack.c.b16 %v4169, %v4161
    %v6802 = vpack.c.b16 %v4170, %v4162
    %v6803 = vpack.c.b16 %v4171, %v4163
    %v6804 = vpack.c.b16 %v4172, %v4164
    %v6805 = vpack.c.b16 %v4173, %v4165
    %v6806 = vpack.c.b16 %v4182, %v4174
    %v6807 = vpack.c.b16 %v4183, %v4175
    %v6808 = vpack.c.b16 %v4184, %v4176
    %v6809 = vpack.c.b16 %v4185, %v4177
    %v6810 = vpack.c.b16 %v4186, %v4178
    %v6811 = vpack.c.b16 %v4187, %v4179
    %v6812 = vpack.c.b16 %v4188, %v4180
    %v6813 = vpack.c.b16 %v4189, %v4181
    %v6814 = vpack.c.b16 %v4198, %v4190
    %v6815 = vpack.c.b16 %v4199, %v4191
    %v6816 = vpack.c.b16 %v4200, %v4192
    %v6817 = vpack.c.b16 %v4201, %v4193
    %v6818 = vpack.c.b16 %v4202, %v4194
    %v6819 = vpack.c.b16 %v4203, %v4195
    %v6820 = vpack.c.b16 %v4204, %v4196
    %v6821 = vpack.c.b16 %v4205, %v4197
    %v6822 = vpack.c.b16 %v4214, %v4206
    %v6823 = vpack.c.b16 %v4215, %v4207
    %v6824 = vpack.c.b16 %v4216, %v4208
    %v6825 = vpack.c.b16 %v4217, %v4209
    %v6826 = vpack.c.b16 %v4218, %v4210
    %v6827 = vpack.c.b16 %v4219, %v4211
    %v6828 = vpack.c.b16 %v4220, %v4212
    %v6829 = vpack.c.b16 %v4221, %v4213
    %v6830 = vpack.c.b16 %v4230, %v4222
    %v6831 = vpack.c.b16 %v4231, %v4223
    %v6832 = vpack.c.b16 %v4232, %v4224
    %v6833 = vpack.c.b16 %v4233, %v4225
    %v6834 = vpack.c.b16 %v4234, %v4226
    %v6835 = vpack.c.b16 %v4235, %v4227
    %v6836 = vpack.c.b16 %v4236, %v4228
    %v6837 = vpack.c.b16 %v4237, %v4229
    %v6838 = vpack.c.b16 %v4246, %v4238
    %v6839 = vpack.c.b16 %v4247, %v4239
    %v6840 = vpack.c.b16 %v4248, %v4240
    %v6841 = vpack.c.b16 %v4249, %v4241
    %v6842 = vpack.c.b16 %v4250, %v4242
    %v6843 = vpack.c.b16 %v4251, %v4243
    %v6844 = vpack.c.b16 %v4252, %v4244
    %v6845 = vpack.c.b16 %v4253, %v4245
    %v6846 = vpack.c.b16 %v4262, %v4254
    %v6847 = vpack.c.b16 %v4263, %v4255
    %v6848 = vpack.c.b16 %v4264, %v4256
    %v6849 = vpack.c.b16 %v4265, %v4257
    %v6850 = vpack.c.b16 %v4266, %v4258
    %v6851 = vpack.c.b16 %v4267, %v4259
    %v6852 = vpack.c.b16 %v4268, %v4260
    %v6853 = vpack.c.b16 %v4269, %v4261
    %v6854 = vpack.c.b16 %v4278, %v4270
    %v6855 = vpack.c.b16 %v4279, %v4271
    %v6856 = vpack.c.b16 %v4280, %v4272
    %v6857 = vpack.c.b16 %v4281, %v4273
    %v6858 = vpack.c.b16 %v4282, %v4274
    %v6859 = vpack.c.b16 %v4283, %v4275
    %v6860 = vpack.c.b16 %v4284, %v4276
    %v6861 = vpack.c.b16 %v4285, %v4277
    %v6862 = vpack.c.b16 %v4294, %v4286
    %v6863 = vpack.c.b16 %v4295, %v4287
    %v6864 = vpack.c.b16 %v4296, %v4288
    %v6865 = vpack.c.b16 %v4297, %v4289
    %v6866 = vpack.c.b16 %v4298, %v4290
    %v6867 = vpack.c.b16 %v4299, %v4291
    %v6868 = vpack.c.b16 %v4300, %v4292
    %v6869 = vpack.c.b16 %v4301, %v4293
    %v6870 = vpack.c.b16 %v4310, %v4302
    %v6871 = vpack.c.b16 %v4311, %v4303
    %v6872 = vpack.c.b16 %v4312, %v4304
    %v6873 = vpack.c.b16 %v4313, %v4305
    %v6874 = vpack.c.b16 %v4314, %v4306
    %v6875 = vpack.c.b16 %v4315, %v4307
    %v6876 = vpack.c.b16 %v4316, %v4308
    %v6877 = vpack.c.b16 %v4317, %v4309
    %v6878 = vpack.c.b16 %v4326, %v4318
    %v6879 = vpack.c.b16 %v4327, %v4319
    %v6880 = vpack.c.b16 %v4328, %v4320
    %v6881 = vpack.c.b16 %v4329, %v4321
    %v6882 = vpack.c.b16 %v4330, %v4322
    %v6883 = vpack.c.b16 %v4331, %v4323
    %v6884 = vpack.c.b16 %v4332, %v4324
    %v6885 = vpack.c.b16 %v4333, %v4325
    %v6886 = vpack.c.b16 %v4342, %v4334
    %v6887 = vpack.c.b16 %v4343, %v4335
    %v6888 = vpack.c.b16 %v4344, %v4336
    %v6889 = vpack.c.b16 %v4345, %v4337
    %v6890 = vpack.c.b16 %v4346, %v4338
    %v6891 = vpack.c.b16 %v4347, %v4339
    %v6892 = vpack.c.b16 %v4348, %v4340
    %v6893 = vpack.c.b16 %v4349, %v4341
    %v6894 = vpack.c.b16 %v4358, %v4350
    %v6895 = vpack.c.b16 %v4359, %v4351
    %v6896 = vpack.c.b16 %v4360, %v4352
    %v6897 = vpack.c.b16 %v4361, %v4353
    %v6898 = vpack.c.b16 %v4362, %v4354
    %v6899 = vpack.c.b16 %v4363, %v4355
    %v6900 = vpack.c.b16 %v4364, %v4356
    %v6901 = vpack.c.b16 %v4365, %v4357
    %v6902 = vpack.c.b16 %v4374, %v4366
    %v6903 = vpack.c.b16 %v4375, %v4367
    %v6904 = vpack.c.b16 %v4376, %v4368
    %v6905 = vpack.c.b16 %v4377, %v4369
    %v6906 = vpack.c.b16 %v4378, %v4370
    %v6907 = vpack.c.b16 %v4379, %v4371
    %v6908 = vpack.c.b16 %v4380, %v4372
    %v6909 = vpack.c.b16 %v4381, %v4373
    %v6910 = vpack.c.b16 %v4390, %v4382
    %v6911 = vpack.c.b16 %v4391, %v4383
    %v6912 = vpack.c.b16 %v4392, %v4384
    %v6913 = vpack.c.b16 %v4393, %v4385
    %v6914 = vpack.c.b16 %v4394, %v4386
    %v6915 = vpack.c.b16 %v4395, %v4387
    %v6916 = vpack.c.b16 %v4396, %v4388
    %v6917 = vpack.c.b16 %v4397, %v4389
    %v6918 = vpack.c.b16 %v4406, %v4398
    %v6919 = vpack.c.b16 %v4407, %v4399
    %v6920 = vpack.c.b16 %v4408, %v4400
    %v6921 = vpack.c.b16 %v4409, %v4401
    %v6922 = vpack.c.b16 %v4410, %v4402
    %v6923 = vpack.c.b16 %v4411, %v4403
    %v6924 = vpack.c.b16 %v4412, %v4404
    %v6925 = vpack.c.b16 %v4413, %v4405
    %v6926 = vpack.c.b16 %v4422, %v4414
    %v6927 = vpack.c.b16 %v4423, %v4415
    %v6928 = vpack.c.b16 %v4424, %v4416
    %v6929 = vpack.c.b16 %v4425, %v4417
    %v6930 = vpack.c.b16 %v4426, %v4418
    %v6931 = vpack.c.b16 %v4427, %v4419
    %v6932 = vpack.c.b16 %v4428, %v4420
    %v6933 = vpack.c.b16 %v4429, %v4421
    %v6934 = vpack.c.b16 %v4438, %v4430
    %v6935 = vpack.c.b16 %v4439, %v4431
    %v6936 = vpack.c.b16 %v4440, %v4432
    %v6937 = vpack.c.b16 %v4441, %v4433
    %v6938 = vpack.c.b16 %v4442, %v4434
    %v6939 = vpack.c.b16 %v4443, %v4435
    %v6940 = vpack.c.b16 %v4444, %v4436
    %v6941 = vpack.c.b16 %v4445, %v4437
    %v6942 = vpack.c.b16 %v4454, %v4446
    %v6943 = vpack.c.b16 %v4455, %v4447
    %v6944 = vpack.c.b16 %v4456, %v4448
    %v6945 = vpack.c.b16 %v4457, %v4449
    %v6946 = vpack.c.b16 %v4458, %v4450
    %v6947 = vpack.c.b16 %v4459, %v4451
    %v6948 = vpack.c.b16 %v4460, %v4452
    %v6949 = vpack.c.b16 %v4461, %v4453
    %v6950 = vpack.c.b16 %v4470, %v4462
    %v6951 = vpack.c.b16 %v4471, %v4463
    %v6952 = vpack.c.b16 %v4472, %v4464
    %v6953 = vpack.c.b16 %v4473, %v4465
    %v6954 = vpack.c.b16 %v4474, %v4466
    %v6955 = vpack.c.b16 %v4475, %v4467
    %v6956 = vpack.c.b16 %v4476, %v4468
    %v6957 = vpack.c.b16 %v4477, %v4469
    %v6958 = vpack.c.b16 %v4486, %v4478
    %v6959 = vpack.c.b16 %v4487, %v4479
    %v6960 = vpack.c.b16 %v4488, %v4480
    %v6961 = vpack.c.b16 %v4489, %v4481
    %v6962 = vpack.c.b16 %v4490, %v4482
    %v6963 = vpack.c.b16 %v4491, %v4483
    %v6964 = vpack.c.b16 %v4492, %v4484
    %v6965 = vpack.c.b16 %v4493, %v4485
    %v6966 = vpack.c.b16 %v4502, %v4494
    %v6967 = vpack.c.b16 %v4503, %v4495
    %v6968 = vpack.c.b16 %v4504, %v4496
    %v6969 = vpack.c.b16 %v4505, %v4497
    %v6970 = vpack.c.b16 %v4506, %v4498
    %v6971 = vpack.c.b16 %v4507, %v4499
    %v6972 = vpack.c.b16 %v4508, %v4500
    %v6973 = vpack.c.b16 %v4509, %v4501
    %v6974 = vpack.c.b16 %v4518, %v4510
    %v6975 = vpack.c.b16 %v4519, %v4511
    %v6976 = vpack.c.b16 %v4520, %v4512
    %v6977 = vpack.c.b16 %v4521, %v4513
    %v6978 = vpack.c.b16 %v4522, %v4514
    %v6979 = vpack.c.b16 %v4523, %v4515
    %v6980 = vpack.c.b16 %v4524, %v4516
    %v6981 = vpack.c.b16 %v4525, %v4517
    %v6982 = vpack.c.b16 %v4534, %v4526
    %v6983 = vpack.c.b16 %v4535, %v4527
    %v6984 = vpack.c.b16 %v4536, %v4528
    %v6985 = vpack.c.b16 %v4537, %v4529
    %v6986 = vpack.c.b16 %v4538, %v4530
    %v6987 = vpack.c.b16 %v4539, %v4531
    %v6988 = vpack.c.b16 %v4540, %v4532
    %v6989 = vpack.c.b16 %v4541, %v4533
    %v6990 = vpack.c.b16 %v4550, %v4542
    %v6991 = vpack.c.b16 %v4551, %v4543
    %v6992 = vpack.c.b16 %v4552, %v4544
    %v6993 = vpack.c.b16 %v4553, %v4545
    %v6994 = vpack.c.b16 %v4554, %v4546
    %v6995 = vpack.c.b16 %v4555, %v4547
    %v6996 = vpack.c.b16 %v4556, %v4548
    %v6997 = vpack.c.b16 %v4557, %v4549
    %v6998 = vpack.c.b16 %v4566, %v4558
    %v6999 = vpack.c.b16 %v4567, %v4559
    %v7000 = vpack.c.b16 %v4568, %v4560
    %v7001 = vpack.c.b16 %v4569, %v4561
    %v7002 = vpack.c.b16 %v4570, %v4562
    %v7003 = vpack.c.b16 %v4571, %v4563
    %v7004 = vpack.c.b16 %v4572, %v4564
    %v7005 = vpack.c.b16 %v4573, %v4565
    %v7006 = vpack.c.b16 %v4582, %v4574
    %v7007 = vpack.c.b16 %v4583, %v4575
    %v7008 = vpack.c.b16 %v4584, %v4576
    %v7009 = vpack.c.b16 %v4585, %v4577
    %v7010 = vpack.c.b16 %v4586, %v4578
    %v7011 = vpack.c.b16 %v4587, %v4579
    %v7012 = vpack.c.b16 %v4588, %v4580
    %v7013 = vpack.c.b16 %v4589, %v4581
    %v7014 = vpack.c.b16 %v4598, %v4590
    %v7015 = vpack.c.b16 %v4599, %v4591
    %v7016 = vpack.c.b16 %v4600, %v4592
    %v7017 = vpack.c.b16 %v4601, %v4593
    %v7018 = vpack.c.b16 %v4602, %v4594
    %v7019 = vpack.c.b16 %v4603, %v4595
    %v7020 = vpack.c.b16 %v4604, %v4596
    %v7021 = vpack.c.b16 %v4605, %v4597
    %v7022 = vpack.c.b16 %v4614, %v4606
    %v7023 = vpack.c.b16 %v4615, %v4607
    %v7024 = vpack.c.b16 %v4616, %v4608
    %v7025 = vpack.c.b16 %v4617, %v4609
    %v7026 = vpack.c.b16 %v4618, %v4610
    %v7027 = vpack.c.b16 %v4619, %v4611
    %v7028 = vpack.c.b16 %v4620, %v4612
    %v7029 = vpack.c.b16 %v4621, %v4613
    %v7030 = vpack.c.b16 %v4630, %v4622
    %v7031 = vpack.c.b16 %v4631, %v4623
    %v7032 = vpack.c.b16 %v4632, %v4624
    %v7033 = vpack.c.b16 %v4633, %v4625
    %v7034 = vpack.c.b16 %v4634, %v4626
    %v7035 = vpack.c.b16 %v4635, %v4627
    %v7036 = vpack.c.b16 %v4636, %v4628
    %v7037 = vpack.c.b16 %v4637, %v4629
    %v7038 = vpack.c.b16 %v4646, %v4638
    %v7039 = vpack.c.b16 %v4647, %v4639
    %v7040 = vpack.c.b16 %v4648, %v4640
    %v7041 = vpack.c.b16 %v4649, %v4641
    %v7042 = vpack.c.b16 %v4650, %v4642
    %v7043 = vpack.c.b16 %v4651, %v4643
    %v7044 = vpack.c.b16 %v4652, %v4644
    %v7045 = vpack.c.b16 %v4653, %v4645
    %v7046 = vpack.c.b16 %v4662, %v4654
    %v7047 = vpack.c.b16 %v4663, %v4655
    %v7048 = vpack.c.b16 %v4664, %v4656
    %v7049 = vpack.c.b16 %v4665, %v4657
    %v7050 = vpack.c.b16 %v4666, %v4658
    %v7051 = vpack.c.b16 %v4667, %v4659
    %v7052 = vpack.c.b16 %v4668, %v4660
    %v7053 = vpack.c.b16 %v4669, %v4661
    %v7054 = vpack.c.b16 %v4678, %v4670
    %v7055 = vpack.c.b16 %v4679, %v4671
    %v7056 = vpack.c.b16 %v4680, %v4672
    %v7057 = vpack.c.b16 %v4681, %v4673
    %v7058 = vpack.c.b16 %v4682, %v4674
    %v7059 = vpack.c.b16 %v4683, %v4675
    %v7060 = vpack.c.b16 %v4684, %v4676
    %v7061 = vpack.c.b16 %v4685, %v4677
    %v7062 = vpack.c.b16 %v4694, %v4686
    %v7063 = vpack.c.b16 %v4695, %v4687
    %v7064 = vpack.c.b16 %v4696, %v4688
    %v7065 = vpack.c.b16 %v4697, %v4689
    %v7066 = vpack.c.b16 %v4698, %v4690
    %v7067 = vpack.c.b16 %v4699, %v4691
    %v7068 = vpack.c.b16 %v4700, %v4692
    %v7069 = vpack.c.b16 %v4701, %v4693
    %v7070 = vpack.c.b16 %v4710, %v4702
    %v7071 = vpack.c.b16 %v4711, %v4703
    %v7072 = vpack.c.b16 %v4712, %v4704
    %v7073 = vpack.c.b16 %v4713, %v4705
    %v7074 = vpack.c.b16 %v4714, %v4706
    %v7075 = vpack.c.b16 %v4715, %v4707
    %v7076 = vpack.c.b16 %v4716, %v4708
    %v7077 = vpack.c.b16 %v4717, %v4709
    %v7078 = vpack.c.b16 %v4726, %v4718
    %v7079 = vpack.c.b16 %v4727, %v4719
    %v7080 = vpack.c.b16 %v4728, %v4720
    %v7081 = vpack.c.b16 %v4729, %v4721
    %v7082 = vpack.c.b16 %v4730, %v4722
    %v7083 = vpack.c.b16 %v4731, %v4723
    %v7084 = vpack.c.b16 %v4732, %v4724
    %v7085 = vpack.c.b16 %v4733, %v4725
    %v7086 = vpack.c.b16 %v4742, %v4734
    %v7087 = vpack.c.b16 %v4743, %v4735
    %v7088 = vpack.c.b16 %v4744, %v4736
    %v7089 = vpack.c.b16 %v4745, %v4737
    %v7090 = vpack.c.b16 %v4746, %v4738
    %v7091 = vpack.c.b16 %v4747, %v4739
    %v7092 = vpack.c.b16 %v4748, %v4740
    %v7093 = vpack.c.b16 %v4749, %v4741
    %v7094 = vpack.c.b16 %v4758, %v4750
    %v7095 = vpack.c.b16 %v4759, %v4751
    %v7096 = vpack.c.b16 %v4760, %v4752
    %v7097 = vpack.c.b16 %v4761, %v4753
    %v7098 = vpack.c.b16 %v4762, %v4754
    %v7099 = vpack.c.b16 %v4763, %v4755
    %v7100 = vpack.c.b16 %v4764, %v4756
    %v7101 = vpack.c.b16 %v4765, %v4757
    %v7102 = vpack.c.b16 %v4774, %v4766
    %v7103 = vpack.c.b16 %v4775, %v4767
    %v7104 = vpack.c.b16 %v4776, %v4768
    %v7105 = vpack.c.b16 %v4777, %v4769
    %v7106 = vpack.c.b16 %v4778, %v4770
    %v7107 = vpack.c.b16 %v4779, %v4771
    %v7108 = vpack.c.b16 %v4780, %v4772
    %v7109 = vpack.c.b16 %v4781, %v4773
    %v7110 = vpack.c.b16 %v4790, %v4782
    %v7111 = vpack.c.b16 %v4791, %v4783
    %v7112 = vpack.c.b16 %v4792, %v4784
    %v7113 = vpack.c.b16 %v4793, %v4785
    %v7114 = vpack.c.b16 %v4794, %v4786
    %v7115 = vpack.c.b16 %v4795, %v4787
    %v7116 = vpack.c.b16 %v4796, %v4788
    %v7117 = vpack.c.b16 %v4797, %v4789
    %v7118 = vpack.c.b16 %v4806, %v4798
    %v7119 = vpack.c.b16 %v4807, %v4799
    %v7120 = vpack.c.b16 %v4808, %v4800
    %v7121 = vpack.c.b16 %v4809, %v4801
    %v7122 = vpack.c.b16 %v4810, %v4802
    %v7123 = vpack.c.b16 %v4811, %v4803
    %v7124 = vpack.c.b16 %v4812, %v4804
    %v7125 = vpack.c.b16 %v4813, %v4805
    %v7126 = vpack.c.b16 %v4822, %v4814
    %v7127 = vpack.c.b16 %v4823, %v4815
    %v7128 = vpack.c.b16 %v4824, %v4816
    %v7129 = vpack.c.b16 %v4825, %v4817
    %v7130 = vpack.c.b16 %v4826, %v4818
    %v7131 = vpack.c.b16 %v4827, %v4819
    %v7132 = vpack.c.b16 %v4828, %v4820
    %v7133 = vpack.c.b16 %v4829, %v4821
    %v7134 = vpack.c.b16 %v4838, %v4830
    %v7135 = vpack.c.b16 %v4839, %v4831
    %v7136 = vpack.c.b16 %v4840, %v4832
    %v7137 = vpack.c.b16 %v4841, %v4833
    %v7138 = vpack.c.b16 %v4842, %v4834
    %v7139 = vpack.c.b16 %v4843, %v4835
    %v7140 = vpack.c.b16 %v4844, %v4836
    %v7141 = vpack.c.b16 %v4845, %v4837
    %v7142 = vpack.c.b16 %v4854, %v4846
    %v7143 = vpack.c.b16 %v4855, %v4847
    %v7144 = vpack.c.b16 %v4856, %v4848
    %v7145 = vpack.c.b16 %v4857, %v4849
    %v7146 = vpack.c.b16 %v4858, %v4850
    %v7147 = vpack.c.b16 %v4859, %v4851
    %v7148 = vpack.c.b16 %v4860, %v4852
    %v7149 = vpack.c.b16 %v4861, %v4853
    %v7150 = vpack.c.b16 %v4870, %v4862
    %v7151 = vpack.c.b16 %v4871, %v4863
    %v7152 = vpack.c.b16 %v4872, %v4864
    %v7153 = vpack.c.b16 %v4873, %v4865
    %v7154 = vpack.c.b16 %v4874, %v4866
    %v7155 = vpack.c.b16 %v4875, %v4867
    %v7156 = vpack.c.b16 %v4876, %v4868
    %v7157 = vpack.c.b16 %v4877, %v4869
    %v7158 = vpack.c.b16 %v4886, %v4878
    %v7159 = vpack.c.b16 %v4887, %v4879
    %v7160 = vpack.c.b16 %v4888, %v4880
    %v7161 = vpack.c.b16 %v4889, %v4881
    %v7162 = vpack.c.b16 %v4890, %v4882
    %v7163 = vpack.c.b16 %v4891, %v4883
    %v7164 = vpack.c.b16 %v4892, %v4884
    %v7165 = vpack.c.b16 %v4893, %v4885
    %v7166 = vpack.c.b16 %v4902, %v4894
    %v7167 = vpack.c.b16 %v4903, %v4895
    %v7168 = vpack.c.b16 %v4904, %v4896
    %v7169 = vpack.c.b16 %v4905, %v4897
    %v7170 = vpack.c.b16 %v4906, %v4898
    %v7171 = vpack.c.b16 %v4907, %v4899
    %v7172 = vpack.c.b16 %v4908, %v4900
    %v7173 = vpack.c.b16 %v4909, %v4901
    %v7174 = vpack.c.b16 %v4918, %v4910
    %v7175 = vpack.c.b16 %v4919, %v4911
    %v7176 = vpack.c.b16 %v4920, %v4912
    %v7177 = vpack.c.b16 %v4921, %v4913
    %v7178 = vpack.c.b16 %v4922, %v4914
    %v7179 = vpack.c.b16 %v4923, %v4915
    %v7180 = vpack.c.b16 %v4924, %v4916
    %v7181 = vpack.c.b16 %v4925, %v4917
    %v7182 = vpack.c.b16 %v4934, %v4926
    %v7183 = vpack.c.b16 %v4935, %v4927
    %v7184 = vpack.c.b16 %v4936, %v4928
    %v7185 = vpack.c.b16 %v4937, %v4929
    %v7186 = vpack.c.b16 %v4938, %v4930
    %v7187 = vpack.c.b16 %v4939, %v4931
    %v7188 = vpack.c.b16 %v4940, %v4932
    %v7189 = vpack.c.b16 %v4941, %v4933
    %v7190 = vpack.c.b16 %v4950, %v4942
    %v7191 = vpack.c.b16 %v4951, %v4943
    %v7192 = vpack.c.b16 %v4952, %v4944
    %v7193 = vpack.c.b16 %v4953, %v4945
    %v7194 = vpack.c.b16 %v4954, %v4946
    %v7195 = vpack.c.b16 %v4955, %v4947
    %v7196 = vpack.c.b16 %v4956, %v4948
    %v7197 = vpack.c.b16 %v4957, %v4949
    %v7198 = vpack.c.b16 %v4966, %v4958
    %v7199 = vpack.c.b16 %v4967, %v4959
    %v7200 = vpack.c.b16 %v4968, %v4960
    %v7201 = vpack.c.b16 %v4969, %v4961
    %v7202 = vpack.c.b16 %v4970, %v4962
    %v7203 = vpack.c.b16 %v4971, %v4963
    %v7204 = vpack.c.b16 %v4972, %v4964
    %v7205 = vpack.c.b16 %v4973, %v4965
    %v7206 = vpack.c.b16 %v4982, %v4974
    %v7207 = vpack.c.b16 %v4983, %v4975
    %v7208 = vpack.c.b16 %v4984, %v4976
    %v7209 = vpack.c.b16 %v4985, %v4977
    %v7210 = vpack.c.b16 %v4986, %v4978
    %v7211 = vpack.c.b16 %v4987, %v4979
    %v7212 = vpack.c.b16 %v4988, %v4980
    %v7213 = vpack.c.b16 %v4989, %v4981
    %v7214 = vpack.c.b16 %v4998, %v4990
    %v7215 = vpack.c.b16 %v4999, %v4991
    %v7216 = vpack.c.b16 %v5000, %v4992
    %v7217 = vpack.c.b16 %v5001, %v4993
    %v7218 = vpack.c.b16 %v5002, %v4994
    %v7219 = vpack.c.b16 %v5003, %v4995
    %v7220 = vpack.c.b16 %v5004, %v4996
    %v7221 = vpack.c.b16 %v5005, %v4997
    %v7222 = vpack.c.b16 %v5014, %v5006
    %v7223 = vpack.c.b16 %v5015, %v5007
    %v7224 = vpack.c.b16 %v5016, %v5008
    %v7225 = vpack.c.b16 %v5017, %v5009
    %v7226 = vpack.c.b16 %v5018, %v5010
    %v7227 = vpack.c.b16 %v5019, %v5011
    %v7228 = vpack.c.b16 %v5020, %v5012
    %v7229 = vpack.c.b16 %v5021, %v5013
    %v7230 = vpack.c.b16 %v5030, %v5022
    %v7231 = vpack.c.b16 %v5031, %v5023
    %v7232 = vpack.c.b16 %v5032, %v5024
    %v7233 = vpack.c.b16 %v5033, %v5025
    %v7234 = vpack.c.b16 %v5034, %v5026
    %v7235 = vpack.c.b16 %v5035, %v5027
    %v7236 = vpack.c.b16 %v5036, %v5028
    %v7237 = vpack.c.b16 %v5037, %v5029
    %v7238 = vpack.c.b16 %v5046, %v5038
    %v7239 = vpack.c.b16 %v5047, %v5039
    %v7240 = vpack.c.b16 %v5048, %v5040
    %v7241 = vpack.c.b16 %v5049, %v5041
    %v7242 = vpack.c.b16 %v5050, %v5042
    %v7243 = vpack.c.b16 %v5051, %v5043
    %v7244 = vpack.c.b16 %v5052, %v5044
    %v7245 = vpack.c.b16 %v5053, %v5045
    %v7246 = vpack.c.b16 %v5062, %v5054
    %v7247 = vpack.c.b16 %v5063, %v5055
    %v7248 = vpack.c.b16 %v5064, %v5056
    %v7249 = vpack.c.b16 %v5065, %v5057
    %v7250 = vpack.c.b16 %v5066, %v5058
    %v7251 = vpack.c.b16 %v5067, %v5059
    %v7252 = vpack.c.b16 %v5068, %v5060
    %v7253 = vpack.c.b16 %v5069, %v5061
    %v7254 = vpack.c.b16 %v5078, %v5070
    %v7255 = vpack.c.b16 %v5079, %v5071
    %v7256 = vpack.c.b16 %v5080, %v5072
    %v7257 = vpack.c.b16 %v5081, %v5073
    %v7258 = vpack.c.b16 %v5082, %v5074
    %v7259 = vpack.c.b16 %v5083, %v5075
    %v7260 = vpack.c.b16 %v5084, %v5076
    %v7261 = vpack.c.b16 %v5085, %v5077
    %v7262 = vpack.c.b16 %v5094, %v5086
    %v7263 = vpack.c.b16 %v5095, %v5087
    %v7264 = vpack.c.b16 %v5096, %v5088
    %v7265 = vpack.c.b16 %v5097, %v5089
    %v7266 = vpack.c.b16 %v5098, %v5090
    %v7267 = vpack.c.b16 %v5099, %v5091
    %v7268 = vpack.c.b16 %v5100, %v5092
    %v7269 = vpack.c.b16 %v5101, %v5093
    %v7270 = vpack.c.b16 %v5110, %v5102
    %v7271 = vpack.c.b16 %v5111, %v5103
    %v7272 = vpack.c.b16 %v5112, %v5104
    %v7273 = vpack.c.b16 %v5113, %v5105
    %v7274 = vpack.c.b16 %v5114, %v5106
    %v7275 = vpack.c.b16 %v5115, %v5107
    %v7276 = vpack.c.b16 %v5116, %v5108
    %v7277 = vpack.c.b16 %v5117, %v5109
    %v7278 = vpack.c.b16 %v5126, %v5118
    %v7279 = vpack.c.b16 %v5127, %v5119
    %v7280 = vpack.c.b16 %v5128, %v5120
    %v7281 = vpack.c.b16 %v5129, %v5121
    %v7282 = vpack.c.b16 %v5130, %v5122
    %v7283 = vpack.c.b16 %v5131, %v5123
    %v7284 = vpack.c.b16 %v5132, %v5124
    %v7285 = vpack.c.b16 %v5133, %v5125
    %v7286 = vpack.c.b16 %v5142, %v5134
    %v7287 = vpack.c.b16 %v5143, %v5135
    %v7288 = vpack.c.b16 %v5144, %v5136
    %v7289 = vpack.c.b16 %v5145, %v5137
    %v7290 = vpack.c.b16 %v5146, %v5138
    %v7291 = vpack.c.b16 %v5147, %v5139
    %v7292 = vpack.c.b16 %v5148, %v5140
    %v7293 = vpack.c.b16 %v5149, %v5141
    %v7294 = vpack.c.b16 %v5158, %v5150
    %v7295 = vpack.c.b16 %v5159, %v5151
    %v7296 = vpack.c.b16 %v5160, %v5152
    %v7297 = vpack.c.b16 %v5161, %v5153
    %v7298 = vpack.c.b16 %v5162, %v5154
    %v7299 = vpack.c.b16 %v5163, %v5155
    %v7300 = vpack.c.b16 %v5164, %v5156
    %v7301 = vpack.c.b16 %v5165, %v5157
    %v7302 = vpack.c.b16 %v5174, %v5166
    %v7303 = vpack.c.b16 %v5175, %v5167
    %v7304 = vpack.c.b16 %v5176, %v5168
    %v7305 = vpack.c.b16 %v5177, %v5169
    %v7306 = vpack.c.b16 %v5178, %v5170
    %v7307 = vpack.c.b16 %v5179, %v5171
    %v7308 = vpack.c.b16 %v5180, %v5172
    %v7309 = vpack.c.b16 %v5181, %v5173
    %v7310 = vpack.c.b16 %v5190, %v5182
    %v7311 = vpack.c.b16 %v5191, %v5183
    %v7312 = vpack.c.b16 %v5192, %v5184
    %v7313 = vpack.c.b16 %v5193, %v5185
    %v7314 = vpack.c.b16 %v5194, %v5186
    %v7315 = vpack.c.b16 %v5195, %v5187
    %v7316 = vpack.c.b16 %v5196, %v5188
    %v7317 = vpack.c.b16 %v5197, %v5189
    %v7318 = vpack.c.b16 %v5206, %v5198
    %v7319 = vpack.c.b16 %v5207, %v5199
    %v7320 = vpack.c.b16 %v5208, %v5200
    %v7321 = vpack.c.b16 %v5209, %v5201
    %v7322 = vpack.c.b16 %v5210, %v5202
    %v7323 = vpack.c.b16 %v5211, %v5203
    %v7324 = vpack.c.b16 %v5212, %v5204
    %v7325 = vpack.c.b16 %v5213, %v5205
    %v7326 = vpack.c.b16 %v5222, %v5214
    %v7327 = vpack.c.b16 %v5223, %v5215
    %v7328 = vpack.c.b16 %v5224, %v5216
    %v7329 = vpack.c.b16 %v5225, %v5217
    %v7330 = vpack.c.b16 %v5226, %v5218
    %v7331 = vpack.c.b16 %v5227, %v5219
    %v7332 = vpack.c.b16 %v5228, %v5220
    %v7333 = vpack.c.b16 %v5229, %v5221
    %v7334 = vpack.c.b16 %v5238, %v5230
    %v7335 = vpack.c.b16 %v5239, %v5231
    %v7336 = vpack.c.b16 %v5240, %v5232
    %v7337 = vpack.c.b16 %v5241, %v5233
    %v7338 = vpack.c.b16 %v5242, %v5234
    %v7339 = vpack.c.b16 %v5243, %v5235
    %v7340 = vpack.c.b16 %v5244, %v5236
    %v7341 = vpack.c.b16 %v5245, %v5237
    %v7342 = vpack.c.b16 %v5254, %v5246
    %v7343 = vpack.c.b16 %v5255, %v5247
    %v7344 = vpack.c.b16 %v5256, %v5248
    %v7345 = vpack.c.b16 %v5257, %v5249
    %v7346 = vpack.c.b16 %v5258, %v5250
    %v7347 = vpack.c.b16 %v5259, %v5251
    %v7348 = vpack.c.b16 %v5260, %v5252
    %v7349 = vpack.c.b16 %v5261, %v5253
    %v7350 = vpack.c.b16 %v5270, %v5262
    %v7351 = vpack.c.b16 %v5271, %v5263
    %v7352 = vpack.c.b16 %v5272, %v5264
    %v7353 = vpack.c.b16 %v5273, %v5265
    %v7354 = vpack.c.b16 %v5274, %v5266
    %v7355 = vpack.c.b16 %v5275, %v5267
    %v7356 = vpack.c.b16 %v5276, %v5268
    %v7357 = vpack.c.b16 %v5277, %v5269
    %v7358 = vpack.c.b16 %v5286, %v5278
    %v7359 = vpack.c.b16 %v5287, %v5279
    %v7360 = vpack.c.b16 %v5288, %v5280
    %v7361 = vpack.c.b16 %v5289, %v5281
    %v7362 = vpack.c.b16 %v5290, %v5282
    %v7363 = vpack.c.b16 %v5291, %v5283
    %v7364 = vpack.c.b16 %v5292, %v5284
    %v7365 = vpack.c.b16 %v5293, %v5285
    %v7366 = vpack.c.b16 %v5302, %v5294
    %v7367 = vpack.c.b16 %v5303, %v5295
    %v7368 = vpack.c.b16 %v5304, %v5296
    %v7369 = vpack.c.b16 %v5305, %v5297
    %v7370 = vpack.c.b16 %v5306, %v5298
    %v7371 = vpack.c.b16 %v5307, %v5299
    %v7372 = vpack.c.b16 %v5308, %v5300
    %v7373 = vpack.c.b16 %v5309, %v5301
    %v7374 = vpack.c.b16 %v5318, %v5310
    %v7375 = vpack.c.b16 %v5319, %v5311
    %v7376 = vpack.c.b16 %v5320, %v5312
    %v7377 = vpack.c.b16 %v5321, %v5313
    %v7378 = vpack.c.b16 %v5322, %v5314
    %v7379 = vpack.c.b16 %v5323, %v5315
    %v7380 = vpack.c.b16 %v5324, %v5316
    %v7381 = vpack.c.b16 %v5325, %v5317
    %v7382 = vpack.c.b16 %v5334, %v5326
    %v7383 = vpack.c.b16 %v5335, %v5327
    %v7384 = vpack.c.b16 %v5336, %v5328
    %v7385 = vpack.c.b16 %v5337, %v5329
    %v7386 = vpack.c.b16 %v5338, %v5330
    %v7387 = vpack.c.b16 %v5339, %v5331
    %v7388 = vpack.c.b16 %v5340, %v5332
    %v7389 = vpack.c.b16 %v5341, %v5333
    %v7390 = vpack.c.b16 %v5350, %v5342
    %v7391 = vpack.c.b16 %v5351, %v5343
    %v7392 = vpack.c.b16 %v5352, %v5344
    %v7393 = vpack.c.b16 %v5353, %v5345
    %v7394 = vpack.c.b16 %v5354, %v5346
    %v7395 = vpack.c.b16 %v5355, %v5347
    %v7396 = vpack.c.b16 %v5356, %v5348
    %v7397 = vpack.c.b16 %v5357, %v5349
    %v7398 = vpack.c.b16 %v5366, %v5358
    %v7399 = vpack.c.b16 %v5367, %v5359
    %v7400 = vpack.c.b16 %v5368, %v5360
    %v7401 = vpack.c.b16 %v5369, %v5361
    %v7402 = vpack.c.b16 %v5370, %v5362
    %v7403 = vpack.c.b16 %v5371, %v5363
    %v7404 = vpack.c.b16 %v5372, %v5364
    %v7405 = vpack.c.b16 %v5373, %v5365
    %v7406 = vpack.c.b16 %v5382, %v5374
    %v7407 = vpack.c.b16 %v5383, %v5375
    %v7408 = vpack.c.b16 %v5384, %v5376
    %v7409 = vpack.c.b16 %v5385, %v5377
    %v7410 = vpack.c.b16 %v5386, %v5378
    %v7411 = vpack.c.b16 %v5387, %v5379
    %v7412 = vpack.c.b16 %v5388, %v5380
    %v7413 = vpack.c.b16 %v5389, %v5381
    %v7414 = vpack.c.b16 %v5398, %v5390
    %v7415 = vpack.c.b16 %v5399, %v5391
    %v7416 = vpack.c.b16 %v5400, %v5392
    %v7417 = vpack.c.b16 %v5401, %v5393
    %v7418 = vpack.c.b16 %v5402, %v5394
    %v7419 = vpack.c.b16 %v5403, %v5395
    %v7420 = vpack.c.b16 %v5404, %v5396
    %v7421 = vpack.c.b16 %v5405, %v5397
    %v7422 = vpack.c.b16 %v5414, %v5406
    %v7423 = vpack.c.b16 %v5415, %v5407
    %v7424 = vpack.c.b16 %v5416, %v5408
    %v7425 = vpack.c.b16 %v5417, %v5409
    %v7426 = vpack.c.b16 %v5418, %v5410
    %v7427 = vpack.c.b16 %v5419, %v5411
    %v7428 = vpack.c.b16 %v5420, %v5412
    %v7429 = vpack.c.b16 %v5421, %v5413
    %v7430 = vpack.c.b16 %v5430, %v5422
    %v7431 = vpack.c.b16 %v5431, %v5423
    %v7432 = vpack.c.b16 %v5432, %v5424
    %v7433 = vpack.c.b16 %v5433, %v5425
    %v7434 = vpack.c.b16 %v5434, %v5426
    %v7435 = vpack.c.b16 %v5435, %v5427
    %v7436 = vpack.c.b16 %v5436, %v5428
    %v7437 = vpack.c.b16 %v5437, %v5429
    %v7438 = vpack.c.b16 %v5446, %v5438
    %v7439 = vpack.c.b16 %v5447, %v5439
    %v7440 = vpack.c.b16 %v5448, %v5440
    %v7441 = vpack.c.b16 %v5449, %v5441
    %v7442 = vpack.c.b16 %v5450, %v5442
    %v7443 = vpack.c.b16 %v5451, %v5443
    %v7444 = vpack.c.b16 %v5452, %v5444
    %v7445 = vpack.c.b16 %v5453, %v5445
    %v7446 = vpack.c.b16 %v5462, %v5454
    %v7447 = vpack.c.b16 %v5463, %v5455
    %v7448 = vpack.c.b16 %v5464, %v5456
    %v7449 = vpack.c.b16 %v5465, %v5457
    %v7450 = vpack.c.b16 %v5466, %v5458
    %v7451 = vpack.c.b16 %v5467, %v5459
    %v7452 = vpack.c.b16 %v5468, %v5460
    %v7453 = vpack.c.b16 %v5469, %v5461
    %v7454 = vpack.c.b16 %v5478, %v5470
    %v7455 = vpack.c.b16 %v5479, %v5471
    %v7456 = vpack.c.b16 %v5480, %v5472
    %v7457 = vpack.c.b16 %v5481, %v5473
    %v7458 = vpack.c.b16 %v5482, %v5474
    %v7459 = vpack.c.b16 %v5483, %v5475
    %v7460 = vpack.c.b16 %v5484, %v5476
    %v7461 = vpack.c.b16 %v5485, %v5477
    %v7462 = vpack.c.b16 %v5494, %v5486
    %v7463 = vpack.c.b16 %v5495, %v5487
    %v7464 = vpack.c.b16 %v5496, %v5488
    %v7465 = vpack.c.b16 %v5497, %v5489
    %v7466 = vpack.c.b16 %v5498, %v5490
    %v7467 = vpack.c.b16 %v5499, %v5491
    %v7468 = vpack.c.b16 %v5500, %v5492
    %v7469 = vpack.c.b16 %v5501, %v5493
    %v7470 = vpack.c.b16 %v5510, %v5502
    %v7471 = vpack.c.b16 %v5511, %v5503
    %v7472 = vpack.c.b16 %v5512, %v5504
    %v7473 = vpack.c.b16 %v5513, %v5505
    %v7474 = vpack.c.b16 %v5514, %v5506
    %v7475 = vpack.c.b16 %v5515, %v5507
    %v7476 = vpack.c.b16 %v5516, %v5508
    %v7477 = vpack.c.b16 %v5517, %v5509
    %v7478 = vpack.c.b16 %v5526, %v5518
    %v7479 = vpack.c.b16 %v5527, %v5519
    %v7480 = vpack.c.b16 %v5528, %v5520
    %v7481 = vpack.c.b16 %v5529, %v5521
    %v7482 = vpack.c.b16 %v5530, %v5522
    %v7483 = vpack.c.b16 %v5531, %v5523
    %v7484 = vpack.c.b16 %v5532, %v5524
    %v7485 = vpack.c.b16 %v5533, %v5525
    %v7486 = vpack.c.b16 %v5542, %v5534
    %v7487 = vpack.c.b16 %v5543, %v5535
    %v7488 = vpack.c.b16 %v5544, %v5536
    %v7489 = vpack.c.b16 %v5545, %v5537
    %v7490 = vpack.c.b16 %v5546, %v5538
    %v7491 = vpack.c.b16 %v5547, %v5539
    %v7492 = vpack.c.b16 %v5548, %v5540
    %v7493 = vpack.c.b16 %v5549, %v5541
    %v7494 = vpack.c.b16 %v5558, %v5550
    %v7495 = vpack.c.b16 %v5559, %v5551
    %v7496 = vpack.c.b16 %v5560, %v5552
    %v7497 = vpack.c.b16 %v5561, %v5553
    %v7498 = vpack.c.b16 %v5562, %v5554
    %v7499 = vpack.c.b16 %v5563, %v5555
    %v7500 = vpack.c.b16 %v5564, %v5556
    %v7501 = vpack.c.b16 %v5565, %v5557
    %v7502 = vpack.c.b16 %v5574, %v5566
    %v7503 = vpack.c.b16 %v5575, %v5567
    %v7504 = vpack.c.b16 %v5576, %v5568
    %v7505 = vpack.c.b16 %v5577, %v5569
    %v7506 = vpack.c.b16 %v5578, %v5570
    %v7507 = vpack.c.b16 %v5579, %v5571
    %v7508 = vpack.c.b16 %v5580, %v5572
    %v7509 = vpack.c.b16 %v5581, %v5573
    %v7510 = vpack.c.b16 %v5590, %v5582
    %v7511 = vpack.c.b16 %v5591, %v5583
    %v7512 = vpack.c.b16 %v5592, %v5584
    %v7513 = vpack.c.b16 %v5593, %v5585
    %v7514 = vpack.c.b16 %v5594, %v5586
    %v7515 = vpack.c.b16 %v5595, %v5587
    %v7516 = vpack.c.b16 %v5596, %v5588
    %v7517 = vpack.c.b16 %v5597, %v5589
    %v7518 = vpack.c.b16 %v5606, %v5598
    %v7519 = vpack.c.b16 %v5607, %v5599
    %v7520 = vpack.c.b16 %v5608, %v5600
    %v7521 = vpack.c.b16 %v5609, %v5601
    %v7522 = vpack.c.b16 %v5610, %v5602
    %v7523 = vpack.c.b16 %v5611, %v5603
    %v7524 = vpack.c.b16 %v5612, %v5604
    %v7525 = vpack.c.b16 %v5613, %v5605
    %v7526 = vpack.c.b16 %v5622, %v5614
    %v7527 = vpack.c.b16 %v5623, %v5615
    %v7528 = vpack.c.b16 %v5624, %v5616
    %v7529 = vpack.c.b16 %v5625, %v5617
    %v7530 = vpack.c.b16 %v5626, %v5618
    %v7531 = vpack.c.b16 %v5627, %v5619
    %v7532 = vpack.c.b16 %v5628, %v5620
    %v7533 = vpack.c.b16 %v5629, %v5621
    %v7534 = vpack.c.b16 %v5638, %v5630
    %v7535 = vpack.c.b16 %v5639, %v5631
    %v7536 = vpack.c.b16 %v5640, %v5632
    %v7537 = vpack.c.b16 %v5641, %v5633
    %v7538 = vpack.c.b16 %v5642, %v5634
    %v7539 = vpack.c.b16 %v5643, %v5635
    %v7540 = vpack.c.b16 %v5644, %v5636
    %v7541 = vpack.c.b16 %v5645, %v5637
    %v7542 = vpack.c.b16 %v5654, %v5646
    %v7543 = vpack.c.b16 %v5655, %v5647
    %v7544 = vpack.c.b16 %v5656, %v5648
    %v7545 = vpack.c.b16 %v5657, %v5649
    %v7546 = vpack.c.b16 %v5658, %v5650
    %v7547 = vpack.c.b16 %v5659, %v5651
    %v7548 = vpack.c.b16 %v5660, %v5652
    %v7549 = vpack.c.b16 %v5661, %v5653
    %v7550 = vpack.c.b16 %v5670, %v5662
    %v7551 = vpack.c.b16 %v5671, %v5663
    %v7552 = vpack.c.b16 %v5672, %v5664
    %v7553 = vpack.c.b16 %v5673, %v5665
    %v7554 = vpack.c.b16 %v5674, %v5666
    %v7555 = vpack.c.b16 %v5675, %v5667
    %v7556 = vpack.c.b16 %v5676, %v5668
    %v7557 = vpack.c.b16 %v5677, %v5669
    %v7558 = vpack.c.b16 %v5686, %v5678
    %v7559 = vpack.c.b16 %v5687, %v5679
    %v7560 = vpack.c.b16 %v5688, %v5680
    %v7561 = vpack.c.b16 %v5689, %v5681
    %v7562 = vpack.c.b16 %v5690, %v5682
    %v7563 = vpack.c.b16 %v5691, %v5683
    %v7564 = vpack.c.b16 %v5692, %v5684
    %v7565 = vpack.c.b16 %v5693, %v5685
    %v7566 = vpack.c.b16 %v5702, %v5694
    %v7567 = vpack.c.b16 %v5703, %v5695
    %v7568 = vpack.c.b16 %v5704, %v5696
    %v7569 = vpack.c.b16 %v5705, %v5697
    %v7570 = vpack.c.b16 %v5706, %v5698
    %v7571 = vpack.c.b16 %v5707, %v5699
    %v7572 = vpack.c.b16 %v5708, %v5700
    %v7573 = vpack.c.b16 %v5709, %v5701
    %v7574 = vpack.c.b16 %v5718, %v5710
    %v7575 = vpack.c.b16 %v5719, %v5711
    %v7576 = vpack.c.b16 %v5720, %v5712
    %v7577 = vpack.c.b16 %v5721, %v5713
    %v7578 = vpack.c.b16 %v5722, %v5714
    %v7579 = vpack.c.b16 %v5723, %v5715
    %v7580 = vpack.c.b16 %v5724, %v5716
    %v7581 = vpack.c.b16 %v5725, %v5717
    %v7582 = vpack.c.b16 %v5734, %v5726
    %v7583 = vpack.c.b16 %v5735, %v5727
    %v7584 = vpack.c.b16 %v5736, %v5728
    %v7585 = vpack.c.b16 %v5737, %v5729
    %v7586 = vpack.c.b16 %v5738, %v5730
    %v7587 = vpack.c.b16 %v5739, %v5731
    %v7588 = vpack.c.b16 %v5740, %v5732
    %v7589 = vpack.c.b16 %v5741, %v5733
    %v7590 = vpack.c.b16 %v5750, %v5742
    %v7591 = vpack.c.b16 %v5751, %v5743
    %v7592 = vpack.c.b16 %v5752, %v5744
    %v7593 = vpack.c.b16 %v5753, %v5745
    %v7594 = vpack.c.b16 %v5754, %v5746
    %v7595 = vpack.c.b16 %v5755, %v5747
    %v7596 = vpack.c.b16 %v5756, %v5748
    %v7597 = vpack.c.b16 %v5757, %v5749
    %v7598 = vpack.c.b16 %v5766, %v5758
    %v7599 = vpack.c.b16 %v5767, %v5759
    %v7600 = vpack.c.b16 %v5768, %v5760
    %v7601 = vpack.c.b16 %v5769, %v5761
    %v7602 = vpack.c.b16 %v5770, %v5762
    %v7603 = vpack.c.b16 %v5771, %v5763
    %v7604 = vpack.c.b16 %v5772, %v5764
    %v7605 = vpack.c.b16 %v5773, %v5765
    %v7606 = vpack.c.b16 %v5782, %v5774
    %v7607 = vpack.c.b16 %v5783, %v5775
    %v7608 = vpack.c.b16 %v5784, %v5776
    %v7609 = vpack.c.b16 %v5785, %v5777
    %v7610 = vpack.c.b16 %v5786, %v5778
    %v7611 = vpack.c.b16 %v5787, %v5779
    %v7612 = vpack.c.b16 %v5788, %v5780
    %v7613 = vpack.c.b16 %v5789, %v5781
    %v7614 = vpack.c.b16 %v5798, %v5790
    %v7615 = vpack.c.b16 %v5799, %v5791
    %v7616 = vpack.c.b16 %v5800, %v5792
    %v7617 = vpack.c.b16 %v5801, %v5793
    %v7618 = vpack.c.b16 %v5802, %v5794
    %v7619 = vpack.c.b16 %v5803, %v5795
    %v7620 = vpack.c.b16 %v5804, %v5796
    %v7621 = vpack.c.b16 %v5805, %v5797
    %v7622 = vpack.c.b16 %v5814, %v5806
    %v7623 = vpack.c.b16 %v5815, %v5807
    %v7624 = vpack.c.b16 %v5816, %v5808
    %v7625 = vpack.c.b16 %v5817, %v5809
    %v7626 = vpack.c.b16 %v5818, %v5810
    %v7627 = vpack.c.b16 %v5819, %v5811
    %v7628 = vpack.c.b16 %v5820, %v5812
    %v7629 = vpack.c.b16 %v5821, %v5813
    %v7630 = vpack.c.b16 %v5830, %v5822
    %v7631 = vpack.c.b16 %v5831, %v5823
    %v7632 = vpack.c.b16 %v5832, %v5824
    %v7633 = vpack.c.b16 %v5833, %v5825
    %v7634 = vpack.c.b16 %v5834, %v5826
    %v7635 = vpack.c.b16 %v5835, %v5827
    %v7636 = vpack.c.b16 %v5836, %v5828
    %v7637 = vpack.c.b16 %v5837, %v5829
    %v7638 = vpack.c.b16 %v5846, %v5838
    %v7639 = vpack.c.b16 %v5847, %v5839
    %v7640 = vpack.c.b16 %v5848, %v5840
    %v7641 = vpack.c.b16 %v5849, %v5841
    %v7642 = vpack.c.b16 %v5850, %v5842
    %v7643 = vpack.c.b16 %v5851, %v5843
    %v7644 = vpack.c.b16 %v5852, %v5844
    %v7645 = vpack.c.b16 %v5853, %v5845
    %v7646 = vpack.c.b16 %v5862, %v5854
    %v7647 = vpack.c.b16 %v5863, %v5855
    %v7648 = vpack.c.b16 %v5864, %v5856
    %v7649 = vpack.c.b16 %v5865, %v5857
    %v7650 = vpack.c.b16 %v5866, %v5858
    %v7651 = vpack.c.b16 %v5867, %v5859
    %v7652 = vpack.c.b16 %v5868, %v5860
    %v7653 = vpack.c.b16 %v5869, %v5861
    %v7654 = vpack.c.b16 %v5878, %v5870
    %v7655 = vpack.c.b16 %v5879, %v5871
    %v7656 = vpack.c.b16 %v5880, %v5872
    %v7657 = vpack.c.b16 %v5881, %v5873
    %v7658 = vpack.c.b16 %v5882, %v5874
    %v7659 = vpack.c.b16 %v5883, %v5875
    %v7660 = vpack.c.b16 %v5884, %v5876
    %v7661 = vpack.c.b16 %v5885, %v5877
    %v7662 = vpack.c.b16 %v5894, %v5886
    %v7663 = vpack.c.b16 %v5895, %v5887
    %v7664 = vpack.c.b16 %v5896, %v5888
    %v7665 = vpack.c.b16 %v5897, %v5889
    %v7666 = vpack.c.b16 %v5898, %v5890
    %v7667 = vpack.c.b16 %v5899, %v5891
    %v7668 = vpack.c.b16 %v5900, %v5892
    %v7669 = vpack.c.b16 %v5901, %v5893
    %v7670 = vpack.c.b16 %v5910, %v5902
    %v7671 = vpack.c.b16 %v5911, %v5903
    %v7672 = vpack.c.b16 %v5912, %v5904
    %v7673 = vpack.c.b16 %v5913, %v5905
    %v7674 = vpack.c.b16 %v5914, %v5906
    %v7675 = vpack.c.b16 %v5915, %v5907
    %v7676 = vpack.c.b16 %v5916, %v5908
    %v7677 = vpack.c.b16 %v5917, %v5909
    %v7678 = vpack.c.b16 %v5926, %v5918
    %v7679 = vpack.c.b16 %v5927, %v5919
    %v7680 = vpack.c.b16 %v5928, %v5920
    %v7681 = vpack.c.b16 %v5929, %v5921
    %v7682 = vpack.c.b16 %v5930, %v5922
    %v7683 = vpack.c.b16 %v5931, %v5923
    %v7684 = vpack.c.b16 %v5932, %v5924
    %v7685 = vpack.c.b16 %v5933, %v5925
    %v7686 = vpack.c.b16 %v5942, %v5934
    %v7687 = vpack.c.b16 %v5943, %v5935
    %v7688 = vpack.c.b16 %v5944, %v5936
    %v7689 = vpack.c.b16 %v5945, %v5937
    %v7690 = vpack.c.b16 %v5946, %v5938
    %v7691 = vpack.c.b16 %v5947, %v5939
    %v7692 = vpack.c.b16 %v5948, %v5940
    %v7693 = vpack.c.b16 %v5949, %v5941
    %v7694 = vpack.c.b16 %v5958, %v5950
    %v7695 = vpack.c.b16 %v5959, %v5951
    %v7696 = vpack.c.b16 %v5960, %v5952
    %v7697 = vpack.c.b16 %v5961, %v5953
    %v7698 = vpack.c.b16 %v5962, %v5954
    %v7699 = vpack.c.b16 %v5963, %v5955
    %v7700 = vpack.c.b16 %v5964, %v5956
    %v7701 = vpack.c.b16 %v5965, %v5957
    %v7702 = vpack.c.b16 %v5974, %v5966
    %v7703 = vpack.c.b16 %v5975, %v5967
    %v7704 = vpack.c.b16 %v5976, %v5968
    %v7705 = vpack.c.b16 %v5977, %v5969
    %v7706 = vpack.c.b16 %v5978, %v5970
    %v7707 = vpack.c.b16 %v5979, %v5971
    %v7708 = vpack.c.b16 %v5980, %v5972
    %v7709 = vpack.c.b16 %v5981, %v5973
    %v7710 = vpack.c.b16 %v5990, %v5982
    %v7711 = vpack.c.b16 %v5991, %v5983
    %v7712 = vpack.c.b16 %v5992, %v5984
    %v7713 = vpack.c.b16 %v5993, %v5985
    %v7714 = vpack.c.b16 %v5994, %v5986
    %v7715 = vpack.c.b16 %v5995, %v5987
    %v7716 = vpack.c.b16 %v5996, %v5988
    %v7717 = vpack.c.b16 %v5997, %v5989
    %v7718 = vpack.c.b16 %v6006, %v5998
    %v7719 = vpack.c.b16 %v6007, %v5999
    %v7720 = vpack.c.b16 %v6008, %v6000
    %v7721 = vpack.c.b16 %v6009, %v6001
    %v7722 = vpack.c.b16 %v6010, %v6002
    %v7723 = vpack.c.b16 %v6011, %v6003
    %v7724 = vpack.c.b16 %v6012, %v6004
    %v7725 = vpack.c.b16 %v6013, %v6005
    %v7726 = vpack.c.b16 %v6022, %v6014
    %v7727 = vpack.c.b16 %v6023, %v6015
    %v7728 = vpack.c.b16 %v6024, %v6016
    %v7729 = vpack.c.b16 %v6025, %v6017
    %v7730 = vpack.c.b16 %v6026, %v6018
    %v7731 = vpack.c.b16 %v6027, %v6019
    %v7732 = vpack.c.b16 %v6028, %v6020
    %v7733 = vpack.c.b16 %v6029, %v6021
    %v7734 = vpack.c.b16 %v6038, %v6030
    %v7735 = vpack.c.b16 %v6039, %v6031
    %v7736 = vpack.c.b16 %v6040, %v6032
    %v7737 = vpack.c.b16 %v6041, %v6033
    %v7738 = vpack.c.b16 %v6042, %v6034
    %v7739 = vpack.c.b16 %v6043, %v6035
    %v7740 = vpack.c.b16 %v6044, %v6036
    %v7741 = vpack.c.b16 %v6045, %v6037
    %v7742 = vpack.c.b16 %v6054, %v6046
    %v7743 = vpack.c.b16 %v6055, %v6047
    %v7744 = vpack.c.b16 %v6056, %v6048
    %v7745 = vpack.c.b16 %v6057, %v6049
    %v7746 = vpack.c.b16 %v6058, %v6050
    %v7747 = vpack.c.b16 %v6059, %v6051
    %v7748 = vpack.c.b16 %v6060, %v6052
    %v7749 = vpack.c.b16 %v6061, %v6053
    %v7750 = vpack.c.b16 %v6070, %v6062
    %v7751 = vpack.c.b16 %v6071, %v6063
    %v7752 = vpack.c.b16 %v6072, %v6064
    %v7753 = vpack.c.b16 %v6073, %v6065
    %v7754 = vpack.c.b16 %v6074, %v6066
    %v7755 = vpack.c.b16 %v6075, %v6067
    %v7756 = vpack.c.b16 %v6076, %v6068
    %v7757 = vpack.c.b16 %v6077, %v6069
    %v7758 = vpack.c.b16 %v6086, %v6078
    %v7759 = vpack.c.b16 %v6087, %v6079
    %v7760 = vpack.c.b16 %v6088, %v6080
    %v7761 = vpack.c.b16 %v6089, %v6081
    %v7762 = vpack.c.b16 %v6090, %v6082
    %v7763 = vpack.c.b16 %v6091, %v6083
    %v7764 = vpack.c.b16 %v6092, %v6084
    %v7765 = vpack.c.b16 %v6093, %v6085
    %v7766 = vpack.c.b16 %v6102, %v6094
    %v7767 = vpack.c.b16 %v6103, %v6095
    %v7768 = vpack.c.b16 %v6104, %v6096
    %v7769 = vpack.c.b16 %v6105, %v6097
    %v7770 = vpack.c.b16 %v6106, %v6098
    %v7771 = vpack.c.b16 %v6107, %v6099
    %v7772 = vpack.c.b16 %v6108, %v6100
    %v7773 = vpack.c.b16 %v6109, %v6101
    %v7774 = vpack.c.b16 %v6118, %v6110
    %v7775 = vpack.c.b16 %v6119, %v6111
    %v7776 = vpack.c.b16 %v6120, %v6112
    %v7777 = vpack.c.b16 %v6121, %v6113
    %v7778 = vpack.c.b16 %v6122, %v6114
    %v7779 = vpack.c.b16 %v6123, %v6115
    %v7780 = vpack.c.b16 %v6124, %v6116
    %v7781 = vpack.c.b16 %v6125, %v6117
    %v7782 = vpack.c.b16 %v6134, %v6126
    %v7783 = vpack.c.b16 %v6135, %v6127
    %v7784 = vpack.c.b16 %v6136, %v6128
    %v7785 = vpack.c.b16 %v6137, %v6129
    %v7786 = vpack.c.b16 %v6138, %v6130
    %v7787 = vpack.c.b16 %v6139, %v6131
    %v7788 = vpack.c.b16 %v6140, %v6132
    %v7789 = vpack.c.b16 %v6141, %v6133
    %v7790 = vpack.c.b16 %v6150, %v6142
    %v7791 = vpack.c.b16 %v6151, %v6143
    %v7792 = vpack.c.b16 %v6152, %v6144
    %v7793 = vpack.c.b16 %v6153, %v6145
    %v7794 = vpack.c.b16 %v6154, %v6146
    %v7795 = vpack.c.b16 %v6155, %v6147
    %v7796 = vpack.c.b16 %v6156, %v6148
    %v7797 = vpack.c.b16 %v6157, %v6149
    %v7798 = vpack.c.b16 %v6166, %v6158
    %v7799 = vpack.c.b16 %v6167, %v6159
    %v7800 = vpack.c.b16 %v6168, %v6160
    %v7801 = vpack.c.b16 %v6169, %v6161
    %v7802 = vpack.c.b16 %v6170, %v6162
    %v7803 = vpack.c.b16 %v6171, %v6163
    %v7804 = vpack.c.b16 %v6172, %v6164
    %v7805 = vpack.c.b16 %v6173, %v6165
    %v7806 = vpack.c.b16 %v6182, %v6174
    %v7807 = vpack.c.b16 %v6183, %v6175
    %v7808 = vpack.c.b16 %v6184, %v6176
    %v7809 = vpack.c.b16 %v6185, %v6177
    %v7810 = vpack.c.b16 %v6186, %v6178
    %v7811 = vpack.c.b16 %v6187, %v6179
    %v7812 = vpack.c.b16 %v6188, %v6180
    %v7813 = vpack.c.b16 %v6189, %v6181
    %v7814 = vpack.c.b16 %v6198, %v6190
    %v7815 = vpack.c.b16 %v6199, %v6191
    %v7816 = vpack.c.b16 %v6200, %v6192
    %v7817 = vpack.c.b16 %v6201, %v6193
    %v7818 = vpack.c.b16 %v6202, %v6194
    %v7819 = vpack.c.b16 %v6203, %v6195
    %v7820 = vpack.c.b16 %v6204, %v6196
    %v7821 = vpack.c.b16 %v6205, %v6197
    %v7822 = vpack.c.b16 %v6214, %v6206
    %v7823 = vpack.c.b16 %v6215, %v6207
    %v7824 = vpack.c.b16 %v6216, %v6208
    %v7825 = vpack.c.b16 %v6217, %v6209
    %v7826 = vpack.c.b16 %v6218, %v6210
    %v7827 = vpack.c.b16 %v6219, %v6211
    %v7828 = vpack.c.b16 %v6220, %v6212
    %v7829 = vpack.c.b16 %v6221, %v6213
    %v7830 = vpack.c.b16 %v6230, %v6222
    %v7831 = vpack.c.b16 %v6231, %v6223
    %v7832 = vpack.c.b16 %v6232, %v6224
    %v7833 = vpack.c.b16 %v6233, %v6225
    %v7834 = vpack.c.b16 %v6234, %v6226
    %v7835 = vpack.c.b16 %v6235, %v6227
    %v7836 = vpack.c.b16 %v6236, %v6228
    %v7837 = vpack.c.b16 %v6237, %v6229
    %v7838 = vpack.c.b16 %v6246, %v6238
    %v7839 = vpack.c.b16 %v6247, %v6239
    %v7840 = vpack.c.b16 %v6248, %v6240
    %v7841 = vpack.c.b16 %v6249, %v6241
    %v7842 = vpack.c.b16 %v6250, %v6242
    %v7843 = vpack.c.b16 %v6251, %v6243
    %v7844 = vpack.c.b16 %v6252, %v6244
    %v7845 = vpack.c.b16 %v6253, %v6245
    %v7846 = vpack.c.b16 %v6262, %v6254
    %v7847 = vpack.c.b16 %v6263, %v6255
    %v7848 = vpack.c.b16 %v6264, %v6256
    %v7849 = vpack.c.b16 %v6265, %v6257
    %v7850 = vpack.c.b16 %v6266, %v6258
    %v7851 = vpack.c.b16 %v6267, %v6259
    %v7852 = vpack.c.b16 %v6268, %v6260
    %v7853 = vpack.c.b16 %v6269, %v6261
    %v7854 = vpack.c.b16 %v6278, %v6270
    %v7855 = vpack.c.b16 %v6279, %v6271
    %v7856 = vpack.c.b16 %v6280, %v6272
    %v7857 = vpack.c.b16 %v6281, %v6273
    %v7858 = vpack.c.b16 %v6282, %v6274
    %v7859 = vpack.c.b16 %v6283, %v6275
    %v7860 = vpack.c.b16 %v6284, %v6276
    %v7861 = vpack.c.b16 %v6285, %v6277
    %v7862 = vpack.c.b16 %v6294, %v6286
    %v7863 = vpack.c.b16 %v6295, %v6287
    %v7864 = vpack.c.b16 %v6296, %v6288
    %v7865 = vpack.c.b16 %v6297, %v6289
    %v7866 = vpack.c.b16 %v6298, %v6290
    %v7867 = vpack.c.b16 %v6299, %v6291
    %v7868 = vpack.c.b16 %v6300, %v6292
    %v7869 = vpack.c.b16 %v6301, %v6293
    %v7870 = vpack.c.b16 %v6310, %v6302
    %v7871 = vpack.c.b16 %v6311, %v6303
    %v7872 = vpack.c.b16 %v6312, %v6304
    %v7873 = vpack.c.b16 %v6313, %v6305
    %v7874 = vpack.c.b16 %v6314, %v6306
    %v7875 = vpack.c.b16 %v6315, %v6307
    %v7876 = vpack.c.b16 %v6316, %v6308
    %v7877 = vpack.c.b16 %v6317, %v6309
    %v7878 = vpack.c.b16 %v6326, %v6318
    %v7879 = vpack.c.b16 %v6327, %v6319
    %v7880 = vpack.c.b16 %v6328, %v6320
    %v7881 = vpack.c.b16 %v6329, %v6321
    %v7882 = vpack.c.b16 %v6330, %v6322
    %v7883 = vpack.c.b16 %v6331, %v6323
    %v7884 = vpack.c.b16 %v6332, %v6324
    %v7885 = vpack.c.b16 %v6333, %v6325
    %v7886 = vpack.c.b16 %v6342, %v6334
    %v7887 = vpack.c.b16 %v6343, %v6335
    %v7888 = vpack.c.b16 %v6344, %v6336
    %v7889 = vpack.c.b16 %v6345, %v6337
    %v7890 = vpack.c.b16 %v6346, %v6338
    %v7891 = vpack.c.b16 %v6347, %v6339
    %v7892 = vpack.c.b16 %v6348, %v6340
    %v7893 = vpack.c.b16 %v6349, %v6341
    %v7894 = vpack.c.b16 %v6358, %v6350
    %v7895 = vpack.c.b16 %v6359, %v6351
    %v7896 = vpack.c.b16 %v6360, %v6352
    %v7897 = vpack.c.b16 %v6361, %v6353
    %v7898 = vpack.c.b16 %v6362, %v6354
    %v7899 = vpack.c.b16 %v6363, %v6355
    %v7900 = vpack.c.b16 %v6364, %v6356
    %v7901 = vpack.c.b16 %v6365, %v6357
    %9438 = vmatprep.subr.bf16.mxu0 %v6367
    %9439 = vmatpush1.bf16.msra.mxu0 %v6366
    %9440 = vmatprep.subr.bf16.mxu0 %v6375
    %9441 = vmatpush1.bf16.msra.mxu0 %v6374
    %9442 = vmatprep.subr.bf16.mxu0 %v6383
    %9443 = vmatpush1.bf16.msra.mxu0 %v6382
    %9444 = vmatprep.subr.bf16.mxu0 %v6391
    %9445 = vmatpush1.bf16.msra.mxu0 %v6390
    %9446 = vmatprep.subr.bf16.mxu0 %v6399
    %9447 = vmatpush1.bf16.msra.mxu0 %v6398
    %9448 = vmatprep.subr.bf16.mxu0 %v6407
    %9449 = vmatpush1.bf16.msra.mxu0 %v6406
    %9450 = vmatprep.subr.bf16.mxu0 %v6415
    %9451 = vmatpush1.bf16.msra.mxu0 %v6414
    %9452 = vmatprep.subr.bf16.mxu0 %v6423
    %9453 = vmatpush1.bf16.msra.mxu0 %v6422
    %9454 = vmatprep.subr.bf16.mxu0 %v6431
    %9455 = vmatpush1.bf16.msra.mxu0 %v6430
    %9456 = vmatprep.subr.bf16.mxu0 %v6439
    %9457 = vmatpush1.bf16.msra.mxu0 %v6438
    %9458 = vmatprep.subr.bf16.mxu0 %v6447
    %9459 = vmatpush1.bf16.msra.mxu0 %v6446
    %9460 = vmatprep.subr.bf16.mxu0 %v6455
    %9461 = vmatpush1.bf16.msra.mxu0 %v6454
    %9462 = vmatprep.subr.bf16.mxu0 %v6463
    %9463 = vmatpush1.bf16.msra.mxu0 %v6462
    %9464 = vmatprep.subr.bf16.mxu0 %v6471
    %9465 = vmatpush1.bf16.msra.mxu0 %v6470
    %9466 = vmatprep.subr.bf16.mxu0 %v6479
    %9467 = vmatpush1.bf16.msra.mxu0 %v6478
    %9468 = vmatprep.subr.bf16.mxu0 %v6487
    %9469 = vmatpush1.bf16.msra.mxu0 %v6486
    %9470 = vmatprep.mubr.bf16.mxu0 %v199
    %9471 = vmatmul.mubr.bf16.gmra.mrb[0].mxu0 %v198
    %v9472 = vpop.f32.mrb[0].mxu0
    %v9473 = vadd.f32 0.0, %v9472
    %v9474 = vpop.f32.mrb[0].mxu0
    %v9475 = vadd.f32 0.0, %v9474
    %v9476 = vpop.f32.mrb[0].mxu0
    %v9477 = vpop.f32.mrb[0].mxu0
    %9478 = vdwg.mxu0
    %9479 = vmatprep.subr.bf16.mxu0 %v6495
    %9480 = vmatpush1.bf16.msra.mxu0 %v6494
    %9481 = vmatprep.subr.bf16.mxu0 %v6503
    %9482 = vmatpush1.bf16.msra.mxu0 %v6502
    %9483 = vmatprep.subr.bf16.mxu0 %v6511
    %9484 = vmatpush1.bf16.msra.mxu0 %v6510
    %9485 = vmatprep.subr.bf16.mxu0 %v6519
    %9486 = vmatpush1.bf16.msra.mxu0 %v6518
    %9487 = vmatprep.subr.bf16.mxu0 %v6527
    %9488 = vmatpush1.bf16.msra.mxu0 %v6526
    %9489 = vmatprep.subr.bf16.mxu0 %v6535
    %9490 = vmatpush1.bf16.msra.mxu0 %v6534
    %9491 = vmatprep.subr.bf16.mxu0 %v6543
    %9492 = vmatpush1.bf16.msra.mxu0 %v6542
    %9493 = vmatprep.subr.bf16.mxu0 %v6551
    %9494 = vmatpush1.bf16.msra.mxu0 %v6550
    %9495 = vmatprep.subr.bf16.mxu0 %v6559
    %9496 = vmatpush1.bf16.msra.mxu0 %v6558
    %9497 = vmatprep.subr.bf16.mxu0 %v6567
    %9498 = vmatpush1.bf16.msra.mxu0 %v6566
    %9499 = vmatprep.subr.bf16.mxu0 %v6575
    %9500 = vmatpush1.bf16.msra.mxu0 %v6574
    %9501 = vmatprep.subr.bf16.mxu0 %v6583
    %9502 = vmatpush1.bf16.msra.mxu0 %v6582
    %9503 = vmatprep.subr.bf16.mxu0 %v6591
    %9504 = vmatpush1.bf16.msra.mxu0 %v6590
    %9505 = vmatprep.subr.bf16.mxu0 %v6599
    %9506 = vmatpush1.bf16.msra.mxu0 %v6598
    %9507 = vmatprep.subr.bf16.mxu0 %v6607
    %9508 = vmatpush1.bf16.msra.mxu0 %v6606
    %9509 = vmatprep.subr.bf16.mxu0 %v6615
    %9510 = vmatpush1.bf16.msra.mxu0 %v6614
    %9511 = vmatprep.mubr.bf16.mxu0 %v201
    %9512 = vmatmul.mubr.bf16.gmra.mrb[0].mxu0 %v200
    %v9513 = vpop.f32.mrb[0].mxu0
    %v9514 = vadd.f32 %v9473, %v9513
    %v9515 = vpop.f32.mrb[0].mxu0
    %v9516 = vadd.f32 %v9475, %v9515
    %v9517 = vpop.f32.mrb[0].mxu0
    %v9518 = vpop.f32.mrb[0].mxu0
    %9519 = vdwg.mxu0
    %9520 = vmatprep.subr.bf16.mxu0 %v6623
    %9521 = vmatpush1.bf16.msra.mxu0 %v6622
    %9522 = vmatprep.subr.bf16.mxu0 %v6631
    %9523 = vmatpush1.bf16.msra.mxu0 %v6630
    %9524 = vmatprep.subr.bf16.mxu0 %v6639
    %9525 = vmatpush1.bf16.msra.mxu0 %v6638
    %9526 = vmatprep.subr.bf16.mxu0 %v6647
    %9527 = vmatpush1.bf16.msra.mxu0 %v6646
    %9528 = vmatprep.subr.bf16.mxu0 %v6655
    %9529 = vmatpush1.bf16.msra.mxu0 %v6654
    %9530 = vmatprep.subr.bf16.mxu0 %v6663
    %9531 = vmatpush1.bf16.msra.mxu0 %v6662
    %9532 = vmatprep.subr.bf16.mxu0 %v6671
    %9533 = vmatpush1.bf16.msra.mxu0 %v6670
    %9534 = vmatprep.subr.bf16.mxu0 %v6679
    %9535 = vmatpush1.bf16.msra.mxu0 %v6678
    %9536 = vmatprep.subr.bf16.mxu0 %v6687
    %9537 = vmatpush1.bf16.msra.mxu0 %v6686
    %9538 = vmatprep.subr.bf16.mxu0 %v6695
    %9539 = vmatpush1.bf16.msra.mxu0 %v6694
    %9540 = vmatprep.subr.bf16.mxu0 %v6703
    %9541 = vmatpush1.bf16.msra.mxu0 %v6702
    %9542 = vmatprep.subr.bf16.mxu0 %v6711
    %9543 = vmatpush1.bf16.msra.mxu0 %v6710
    %9544 = vmatprep.subr.bf16.mxu0 %v6719
    %9545 = vmatpush1.bf16.msra.mxu0 %v6718
    %9546 = vmatprep.subr.bf16.mxu0 %v6727
    %9547 = vmatpush1.bf16.msra.mxu0 %v6726
    %9548 = vmatprep.subr.bf16.mxu0 %v6735
    %9549 = vmatpush1.bf16.msra.mxu0 %v6734
    %9550 = vmatprep.subr.bf16.mxu0 %v6743
    %9551 = vmatpush1.bf16.msra.mxu0 %v6742
    %9552 = vmatprep.mubr.bf16.mxu0 %v203
    %9553 = vmatmul.mubr.bf16.gmra.mrb[0].mxu0 %v202
    %v9554 = vpop.f32.mrb[0].mxu0
    %v9555 = vadd.f32 %v9514, %v9554
    %v9556 = vpop.f32.mrb[0].mxu0
    %v9557 = vadd.f32 %v9516, %v9556
    %v9558 = vpop.f32.mrb[0].mxu0
    %v9559 = vpop.f32.mrb[0].mxu0
    %9560 = vdwg.mxu0
    %9561 = vmatprep.subr.bf16.mxu0 %v6751
    %9562 = vmatpush1.bf16.msra.mxu0 %v6750
    %9563 = vmatprep.subr.bf16.mxu0 %v6759
    %9564 = vmatpush1.bf16.msra.mxu0 %v6758
    %9565 = vmatprep.subr.bf16.mxu0 %v6767
    %9566 = vmatpush1.bf16.msra.mxu0 %v6766
    %9567 = vmatprep.subr.bf16.mxu0 %v6775
    %9568 = vmatpush1.bf16.msra.mxu0 %v6774
    %9569 = vmatprep.subr.bf16.mxu0 %v6783
    %9570 = vmatpush1.bf16.msra.mxu0 %v6782
    %9571 = vmatprep.subr.bf16.mxu0 %v6791
    %9572 = vmatpush1.bf16.msra.mxu0 %v6790
    %9573 = vmatprep.subr.bf16.mxu0 %v6799
    %9574 = vmatpush1.bf16.msra.mxu0 %v6798
    %9575 = vmatprep.subr.bf16.mxu0 %v6807
    %9576 = vmatpush1.bf16.msra.mxu0 %v6806
    %9577 = vmatprep.subr.bf16.mxu0 %v6815
    %9578 = vmatpush1.bf16.msra.mxu0 %v6814
    %9579 = vmatprep.subr.bf16.mxu0 %v6823
    %9580 = vmatpush1.bf16.msra.mxu0 %v6822
    %9581 = vmatprep.subr.bf16.mxu0 %v6831
    %9582 = vmatpush1.bf16.msra.mxu0 %v6830
    %9583 = vmatprep.subr.bf16.mxu0 %v6839
    %9584 = vmatpush1.bf16.msra.mxu0 %v6838
    %9585 = vmatprep.subr.bf16.mxu0 %v6847
    %9586 = vmatpush1.bf16.msra.mxu0 %v6846
    %9587 = vmatprep.subr.bf16.mxu0 %v6855
    %9588 = vmatpush1.bf16.msra.mxu0 %v6854
    %9589 = vmatprep.subr.bf16.mxu0 %v6863
    %9590 = vmatpush1.bf16.msra.mxu0 %v6862
    %9591 = vmatprep.subr.bf16.mxu0 %v6871
    %9592 = vmatpush1.bf16.msra.mxu0 %v6870
    %9593 = vmatprep.mubr.bf16.mxu0 %v205
    %9594 = vmatmul.mubr.bf16.gmra.mrb[0].mxu0 %v204
    %v9595 = vpop.f32.mrb[0].mxu0
    %v9596 = vadd.f32 %v9555, %v9595
    %v9597 = vpop.f32.mrb[0].mxu0
    %v9598 = vadd.f32 %v9557, %v9597
    %v9599 = vpop.f32.mrb[0].mxu0
    %v9600 = vpop.f32.mrb[0].mxu0
    %9601 = vdwg.mxu0
    %9602 = vmatprep.subr.bf16.mxu0 %v6879
    %9603 = vmatpush1.bf16.msra.mxu0 %v6878
    %9604 = vmatprep.subr.bf16.mxu0 %v6887
    %9605 = vmatpush1.bf16.msra.mxu0 %v6886
    %9606 = vmatprep.subr.bf16.mxu0 %v6895
    %9607 = vmatpush1.bf16.msra.mxu0 %v6894
    %9608 = vmatprep.subr.bf16.mxu0 %v6903
    %9609 = vmatpush1.bf16.msra.mxu0 %v6902
    %9610 = vmatprep.subr.bf16.mxu0 %v6911
    %9611 = vmatpush1.bf16.msra.mxu0 %v6910
    %9612 = vmatprep.subr.bf16.mxu0 %v6919
    %9613 = vmatpush1.bf16.msra.mxu0 %v6918
    %9614 = vmatprep.subr.bf16.mxu0 %v6927
    %9615 = vmatpush1.bf16.msra.mxu0 %v6926
    %9616 = vmatprep.subr.bf16.mxu0 %v6935
    %9617 = vmatpush1.bf16.msra.mxu0 %v6934
    %9618 = vmatprep.subr.bf16.mxu0 %v6943
    %9619 = vmatpush1.bf16.msra.mxu0 %v6942
    %9620 = vmatprep.subr.bf16.mxu0 %v6951
    %9621 = vmatpush1.bf16.msra.mxu0 %v6950
    %9622 = vmatprep.subr.bf16.mxu0 %v6959
    %9623 = vmatpush1.bf16.msra.mxu0 %v6958
    %9624 = vmatprep.subr.bf16.mxu0 %v6967
    %9625 = vmatpush1.bf16.msra.mxu0 %v6966
    %9626 = vmatprep.subr.bf16.mxu0 %v6975
    %9627 = vmatpush1.bf16.msra.mxu0 %v6974
    %9628 = vmatprep.subr.bf16.mxu0 %v6983
    %9629 = vmatpush1.bf16.msra.mxu0 %v6982
    %9630 = vmatprep.subr.bf16.mxu0 %v6991
    %9631 = vmatpush1.bf16.msra.mxu0 %v6990
    %9632 = vmatprep.subr.bf16.mxu0 %v6999
    %9633 = vmatpush1.bf16.msra.mxu0 %v6998
    %9634 = vmatprep.mubr.bf16.mxu0 %v207
    %9635 = vmatmul.mubr.bf16.gmra.mrb[0].mxu0 %v206
    %v9636 = vpop.f32.mrb[0].mxu0
    %v9637 = vadd.f32 %v9596, %v9636
    %v9638 = vpop.f32.mrb[0].mxu0
    %v9639 = vadd.f32 %v9598, %v9638
    %v9640 = vpop.f32.mrb[0].mxu0
    %v9641 = vpop.f32.mrb[0].mxu0
    %9642 = vdwg.mxu0
    %9643 = vmatprep.subr.bf16.mxu0 %v7007
    %9644 = vmatpush1.bf16.msra.mxu0 %v7006
    %9645 = vmatprep.subr.bf16.mxu0 %v7015
    %9646 = vmatpush1.bf16.msra.mxu0 %v7014
    %9647 = vmatprep.subr.bf16.mxu0 %v7023
    %9648 = vmatpush1.bf16.msra.mxu0 %v7022
    %9649 = vmatprep.subr.bf16.mxu0 %v7031
    %9650 = vmatpush1.bf16.msra.mxu0 %v7030
    %9651 = vmatprep.subr.bf16.mxu0 %v7039
    %9652 = vmatpush1.bf16.msra.mxu0 %v7038
    %9653 = vmatprep.subr.bf16.mxu0 %v7047
    %9654 = vmatpush1.bf16.msra.mxu0 %v7046
    %9655 = vmatprep.subr.bf16.mxu0 %v7055
    %9656 = vmatpush1.bf16.msra.mxu0 %v7054
    %9657 = vmatprep.subr.bf16.mxu0 %v7063
    %9658 = vmatpush1.bf16.msra.mxu0 %v7062
    %9659 = vmatprep.subr.bf16.mxu0 %v7071
    %9660 = vmatpush1.bf16.msra.mxu0 %v7070
    %9661 = vmatprep.subr.bf16.mxu0 %v7079
    %9662 = vmatpush1.bf16.msra.mxu0 %v7078
    %9663 = vmatprep.subr.bf16.mxu0 %v7087
    %9664 = vmatpush1.bf16.msra.mxu0 %v7086
    %9665 = vmatprep.subr.bf16.mxu0 %v7095
    %9666 = vmatpush1.bf16.msra.mxu0 %v7094
    %9667 = vmatprep.subr.bf16.mxu0 %v7103
    %9668 = vmatpush1.bf16.msra.mxu0 %v7102
    %9669 = vmatprep.subr.bf16.mxu0 %v7111
    %9670 = vmatpush1.bf16.msra.mxu0 %v7110
    %9671 = vmatprep.subr.bf16.mxu0 %v7119
    %9672 = vmatpush1.bf16.msra.mxu0 %v7118
    %9673 = vmatprep.subr.bf16.mxu0 %v7127
    %9674 = vmatpush1.bf16.msra.mxu0 %v7126
    %9675 = vmatprep.mubr.bf16.mxu0 %v209
    %9676 = vmatmul.mubr.bf16.gmra.mrb[0].mxu0 %v208
    %v9677 = vpop.f32.mrb[0].mxu0
    %v9678 = vadd.f32 %v9637, %v9677
    %v9679 = vpop.f32.mrb[0].mxu0
    %v9680 = vadd.f32 %v9639, %v9679
    %v9681 = vpop.f32.mrb[0].mxu0
    %v9682 = vpop.f32.mrb[0].mxu0
    %9683 = vdwg.mxu0
    %9684 = vmatprep.subr.bf16.mxu0 %v7135
    %9685 = vmatpush1.bf16.msra.mxu0 %v7134
    %9686 = vmatprep.subr.bf16.mxu0 %v7143
    %9687 = vmatpush1.bf16.msra.mxu0 %v7142
    %9688 = vmatprep.subr.bf16.mxu0 %v7151
    %9689 = vmatpush1.bf16.msra.mxu0 %v7150
    %9690 = vmatprep.subr.bf16.mxu0 %v7159
    %9691 = vmatpush1.bf16.msra.mxu0 %v7158
    %9692 = vmatprep.subr.bf16.mxu0 %v7167
    %9693 = vmatpush1.bf16.msra.mxu0 %v7166
    %9694 = vmatprep.subr.bf16.mxu0 %v7175
    %9695 = vmatpush1.bf16.msra.mxu0 %v7174
    %9696 = vmatprep.subr.bf16.mxu0 %v7183
    %9697 = vmatpush1.bf16.msra.mxu0 %v7182
    %9698 = vmatprep.subr.bf16.mxu0 %v7191
    %9699 = vmatpush1.bf16.msra.mxu0 %v7190
    %9700 = vmatprep.subr.bf16.mxu0 %v7199
    %9701 = vmatpush1.bf16.msra.mxu0 %v7198
    %9702 = vmatprep.subr.bf16.mxu0 %v7207
    %9703 = vmatpush1.bf16.msra.mxu0 %v7206
    %9704 = vmatprep.subr.bf16.mxu0 %v7215
    %9705 = vmatpush1.bf16.msra.mxu0 %v7214
    %9706 = vmatprep.subr.bf16.mxu0 %v7223
    %9707 = vmatpush1.bf16.msra.mxu0 %v7222
    %9708 = vmatprep.subr.bf16.mxu0 %v7231
    %9709 = vmatpush1.bf16.msra.mxu0 %v7230
    %9710 = vmatprep.subr.bf16.mxu0 %v7239
    %9711 = vmatpush1.bf16.msra.mxu0 %v7238
    %9712 = vmatprep.subr.bf16.mxu0 %v7247
    %9713 = vmatpush1.bf16.msra.mxu0 %v7246
    %9714 = vmatprep.subr.bf16.mxu0 %v7255
    %9715 = vmatpush1.bf16.msra.mxu0 %v7254
    %9716 = vmatprep.mubr.bf16.mxu0 %v211
    %9717 = vmatmul.mubr.bf16.gmra.mrb[0].mxu0 %v210
    %v9718 = vpop.f32.mrb[0].mxu0
    %v9719 = vadd.f32 %v9678, %v9718
    %v9720 = vpop.f32.mrb[0].mxu0
    %v9721 = vadd.f32 %v9680, %v9720
    %v9722 = vpop.f32.mrb[0].mxu0
    %v9723 = vpop.f32.mrb[0].mxu0
    %9724 = vdwg.mxu0
    %9725 = vmatprep.subr.bf16.mxu0 %v7263
    %9726 = vmatpush1.bf16.msra.mxu0 %v7262
    %9727 = vmatprep.subr.bf16.mxu0 %v7271
    %9728 = vmatpush1.bf16.msra.mxu0 %v7270
    %9729 = vmatprep.subr.bf16.mxu0 %v7279
    %9730 = vmatpush1.bf16.msra.mxu0 %v7278
    %9731 = vmatprep.subr.bf16.mxu0 %v7287
    %9732 = vmatpush1.bf16.msra.mxu0 %v7286
    %9733 = vmatprep.subr.bf16.mxu0 %v7295
    %9734 = vmatpush1.bf16.msra.mxu0 %v7294
    %9735 = vmatprep.subr.bf16.mxu0 %v7303
    %9736 = vmatpush1.bf16.msra.mxu0 %v7302
    %9737 = vmatprep.subr.bf16.mxu0 %v7311
    %9738 = vmatpush1.bf16.msra.mxu0 %v7310
    %9739 = vmatprep.subr.bf16.mxu0 %v7319
    %9740 = vmatpush1.bf16.msra.mxu0 %v7318
    %9741 = vmatprep.subr.bf16.mxu0 %v7327
    %9742 = vmatpush1.bf16.msra.mxu0 %v7326
    %9743 = vmatprep.subr.bf16.mxu0 %v7335
    %9744 = vmatpush1.bf16.msra.mxu0 %v7334
    %9745 = vmatprep.subr.bf16.mxu0 %v7343
    %9746 = vmatpush1.bf16.msra.mxu0 %v7342
    %9747 = vmatprep.subr.bf16.mxu0 %v7351
    %9748 = vmatpush1.bf16.msra.mxu0 %v7350
    %9749 = vmatprep.subr.bf16.mxu0 %v7359
    %9750 = vmatpush1.bf16.msra.mxu0 %v7358
    %9751 = vmatprep.subr.bf16.mxu0 %v7367
    %9752 = vmatpush1.bf16.msra.mxu0 %v7366
    %9753 = vmatprep.subr.bf16.mxu0 %v7375
    %9754 = vmatpush1.bf16.msra.mxu0 %v7374
    %9755 = vmatprep.subr.bf16.mxu0 %v7383
    %9756 = vmatpush1.bf16.msra.mxu0 %v7382
    %9757 = vmatprep.mubr.bf16.mxu0 %v213
    %9758 = vmatmul.mubr.bf16.gmra.mrb[0].mxu0 %v212
    %v9759 = vpop.f32.mrb[0].mxu0
    %v9760 = vadd.f32 %v9719, %v9759
    %v9761 = vpop.f32.mrb[0].mxu0
    %v9762 = vadd.f32 %v9721, %v9761
    %v9763 = vpop.f32.mrb[0].mxu0
    %v9764 = vpop.f32.mrb[0].mxu0
    %9765 = vdwg.mxu0
    %9766 = vmatprep.subr.bf16.mxu0 %v7391
    %9767 = vmatpush1.bf16.msra.mxu0 %v7390
    %9768 = vmatprep.subr.bf16.mxu0 %v7399
    %9769 = vmatpush1.bf16.msra.mxu0 %v7398
    %9770 = vmatprep.subr.bf16.mxu0 %v7407
    %9771 = vmatpush1.bf16.msra.mxu0 %v7406
    %9772 = vmatprep.subr.bf16.mxu0 %v7415
    %9773 = vmatpush1.bf16.msra.mxu0 %v7414
    %9774 = vmatprep.subr.bf16.mxu0 %v7423
    %9775 = vmatpush1.bf16.msra.mxu0 %v7422
    %9776 = vmatprep.subr.bf16.mxu0 %v7431
    %9777 = vmatpush1.bf16.msra.mxu0 %v7430
    %9778 = vmatprep.subr.bf16.mxu0 %v7439
    %9779 = vmatpush1.bf16.msra.mxu0 %v7438
    %9780 = vmatprep.subr.bf16.mxu0 %v7447
    %9781 = vmatpush1.bf16.msra.mxu0 %v7446
    %9782 = vmatprep.subr.bf16.mxu0 %v7455
    %9783 = vmatpush1.bf16.msra.mxu0 %v7454
    %9784 = vmatprep.subr.bf16.mxu0 %v7463
    %9785 = vmatpush1.bf16.msra.mxu0 %v7462
    %9786 = vmatprep.subr.bf16.mxu0 %v7471
    %9787 = vmatpush1.bf16.msra.mxu0 %v7470
    %9788 = vmatprep.subr.bf16.mxu0 %v7479
    %9789 = vmatpush1.bf16.msra.mxu0 %v7478
    %9790 = vmatprep.subr.bf16.mxu0 %v7487
    %9791 = vmatpush1.bf16.msra.mxu0 %v7486
    %9792 = vmatprep.subr.bf16.mxu0 %v7495
    %9793 = vmatpush1.bf16.msra.mxu0 %v7494
    %9794 = vmatprep.subr.bf16.mxu0 %v7503
    %9795 = vmatpush1.bf16.msra.mxu0 %v7502
    %9796 = vmatprep.subr.bf16.mxu0 %v7511
    %9797 = vmatpush1.bf16.msra.mxu0 %v7510
    %9798 = vmatprep.mubr.bf16.mxu0 %v215
    %9799 = vmatmul.mubr.bf16.gmra.mrb[0].mxu0 %v214
    %v9800 = vpop.f32.mrb[0].mxu0
    %v9801 = vadd.f32 %v9760, %v9800
    %v9802 = vpop.f32.mrb[0].mxu0
    %v9803 = vadd.f32 %v9762, %v9802
    %v9804 = vpop.f32.mrb[0].mxu0
    %v9805 = vpop.f32.mrb[0].mxu0
    %9806 = vdwg.mxu0
    %9807 = vmatprep.subr.bf16.mxu0 %v7519
    %9808 = vmatpush1.bf16.msra.mxu0 %v7518
    %9809 = vmatprep.subr.bf16.mxu0 %v7527
    %9810 = vmatpush1.bf16.msra.mxu0 %v7526
    %9811 = vmatprep.subr.bf16.mxu0 %v7535
    %9812 = vmatpush1.bf16.msra.mxu0 %v7534
    %9813 = vmatprep.subr.bf16.mxu0 %v7543
    %9814 = vmatpush1.bf16.msra.mxu0 %v7542
    %9815 = vmatprep.subr.bf16.mxu0 %v7551
    %9816 = vmatpush1.bf16.msra.mxu0 %v7550
    %9817 = vmatprep.subr.bf16.mxu0 %v7559
    %9818 = vmatpush1.bf16.msra.mxu0 %v7558
    %9819 = vmatprep.subr.bf16.mxu0 %v7567
    %9820 = vmatpush1.bf16.msra.mxu0 %v7566
    %9821 = vmatprep.subr.bf16.mxu0 %v7575
    %9822 = vmatpush1.bf16.msra.mxu0 %v7574
    %9823 = vmatprep.subr.bf16.mxu0 %v7583
    %9824 = vmatpush1.bf16.msra.mxu0 %v7582
    %9825 = vmatprep.subr.bf16.mxu0 %v7591
    %9826 = vmatpush1.bf16.msra.mxu0 %v7590
    %9827 = vmatprep.subr.bf16.mxu0 %v7599
    %9828 = vmatpush1.bf16.msra.mxu0 %v7598
    %9829 = vmatprep.subr.bf16.mxu0 %v7607
    %9830 = vmatpush1.bf16.msra.mxu0 %v7606
    %9831 = vmatprep.subr.bf16.mxu0 %v7615
    %9832 = vmatpush1.bf16.msra.mxu0 %v7614
    %9833 = vmatprep.subr.bf16.mxu0 %v7623
    %9834 = vmatpush1.bf16.msra.mxu0 %v7622
    %9835 = vmatprep.subr.bf16.mxu0 %v7631
    %9836 = vmatpush1.bf16.msra.mxu0 %v7630
    %9837 = vmatprep.subr.bf16.mxu0 %v7639
    %9838 = vmatpush1.bf16.msra.mxu0 %v7638
    %9839 = vmatprep.mubr.bf16.mxu0 %v217
    %9840 = vmatmul.mubr.bf16.gmra.mrb[0].mxu0 %v216
    %v9841 = vpop.f32.mrb[0].mxu0
    %v9842 = vadd.f32 %v9801, %v9841
    %v9843 = vpop.f32.mrb[0].mxu0
    %v9844 = vadd.f32 %v9803, %v9843
    %v9845 = vpop.f32.mrb[0].mxu0
    %v9846 = vpop.f32.mrb[0].mxu0
    %9847 = vdwg.mxu0
    %9848 = vmatprep.subr.bf16.mxu0 %v7647
    %9849 = vmatpush1.bf16.msra.mxu0 %v7646
    %9850 = vmatprep.subr.bf16.mxu0 %v7655
    %9851 = vmatpush1.bf16.msra.mxu0 %v7654
    %9852 = vmatprep.subr.bf16.mxu0 %v7663
    %9853 = vmatpush1.bf16.msra.mxu0 %v7662
    %9854 = vmatprep.subr.bf16.mxu0 %v7671
    %9855 = vmatpush1.bf16.msra.mxu0 %v7670
    %9856 = vmatprep.subr.bf16.mxu0 %v7679
    %9857 = vmatpush1.bf16.msra.mxu0 %v7678
    %9858 = vmatprep.subr.bf16.mxu0 %v7687
    %9859 = vmatpush1.bf16.msra.mxu0 %v7686
    %9860 = vmatprep.subr.bf16.mxu0 %v7695
    %9861 = vmatpush1.bf16.msra.mxu0 %v7694
    %9862 = vmatprep.subr.bf16.mxu0 %v7703
    %9863 = vmatpush1.bf16.msra.mxu0 %v7702
    %9864 = vmatprep.subr.bf16.mxu0 %v7711
    %9865 = vmatpush1.bf16.msra.mxu0 %v7710
    %9866 = vmatprep.subr.bf16.mxu0 %v7719
    %9867 = vmatpush1.bf16.msra.mxu0 %v7718
    %9868 = vmatprep.subr.bf16.mxu0 %v7727
    %9869 = vmatpush1.bf16.msra.mxu0 %v7726
    %9870 = vmatprep.subr.bf16.mxu0 %v7735
    %9871 = vmatpush1.bf16.msra.mxu0 %v7734
    %9872 = vmatprep.subr.bf16.mxu0 %v7743
    %9873 = vmatpush1.bf16.msra.mxu0 %v7742
    %9874 = vmatprep.subr.bf16.mxu0 %v7751
    %9875 = vmatpush1.bf16.msra.mxu0 %v7750
    %9876 = vmatprep.subr.bf16.mxu0 %v7759
    %9877 = vmatpush1.bf16.msra.mxu0 %v7758
    %9878 = vmatprep.subr.bf16.mxu0 %v7767
    %9879 = vmatpush1.bf16.msra.mxu0 %v7766
    %9880 = vmatprep.mubr.bf16.mxu0 %v219
    %9881 = vmatmul.mubr.bf16.gmra.mrb[0].mxu0 %v218
    %v9882 = vpop.f32.mrb[0].mxu0
    %v9883 = vadd.f32 %v9842, %v9882
    %v9884 = vpop.f32.mrb[0].mxu0
    %v9885 = vadd.f32 %v9844, %v9884
    %v9886 = vpop.f32.mrb[0].mxu0
    %v9887 = vpop.f32.mrb[0].mxu0
    %9888 = vdwg.mxu0
    %9889 = vmatprep.subr.bf16.mxu0 %v7775
    %9890 = vmatpush1.bf16.msra.mxu0 %v7774
    %9891 = vmatprep.subr.bf16.mxu0 %v7783
    %9892 = vmatpush1.bf16.msra.mxu0 %v7782
    %9893 = vmatprep.subr.bf16.mxu0 %v7791
    %9894 = vmatpush1.bf16.msra.mxu0 %v7790
    %9895 = vmatprep.subr.bf16.mxu0 %v7799
    %9896 = vmatpush1.bf16.msra.mxu0 %v7798
    %9897 = vmatprep.subr.bf16.mxu0 %v7807
    %9898 = vmatpush1.bf16.msra.mxu0 %v7806
    %9899 = vmatprep.subr.bf16.mxu0 %v7815
    %9900 = vmatpush1.bf16.msra.mxu0 %v7814
    %9901 = vmatprep.subr.bf16.mxu0 %v7823
    %9902 = vmatpush1.bf16.msra.mxu0 %v7822
    %9903 = vmatprep.subr.bf16.mxu0 %v7831
    %9904 = vmatpush1.bf16.msra.mxu0 %v7830
    %9905 = vmatprep.subr.bf16.mxu0 %v7839
    %9906 = vmatpush1.bf16.msra.mxu0 %v7838
    %9907 = vmatprep.subr.bf16.mxu0 %v7847
    %9908 = vmatpush1.bf16.msra.mxu0 %v7846
    %9909 = vmatprep.subr.bf16.mxu0 %v7855
    %9910 = vmatpush1.bf16.msra.mxu0 %v7854
    %9911 = vmatprep.subr.bf16.mxu0 %v7863
    %9912 = vmatpush1.bf16.msra.mxu0 %v7862
    %9913 = vmatprep.subr.bf16.mxu0 %v7871
    %9914 = vmatpush1.bf16.msra.mxu0 %v7870
    %9915 = vmatprep.subr.bf16.mxu0 %v7879
    %9916 = vmatpush1.bf16.msra.mxu0 %v7878
    %9917 = vmatprep.subr.bf16.mxu0 %v7887
    %9918 = vmatpush1.bf16.msra.mxu0 %v7886
    %9919 = vmatprep.subr.bf16.mxu0 %v7895
    %9920 = vmatpush1.bf16.msra.mxu0 %v7894
    %9921 = vmatprep.mubr.bf16.mxu0 %v221
    %9922 = vmatmul.mubr.bf16.gmra.mrb[0].mxu0 %v220
    %v9923 = vpop.f32.mrb[0].mxu0
    %v9924 = vadd.f32 %v9883, %v9923
    %v9925 = vpop.f32.mrb[0].mxu0
    %v9926 = vadd.f32 %v9885, %v9925
    %v9927 = vpop.f32.mrb[0].mxu0
    %v9928 = vpop.f32.mrb[0].mxu0
    %9929 = vdwg.mxu0
    %9930 = vmatprep.subr.bf16.mxu0 %v6369
    %9931 = vmatpush1.bf16.msra.mxu0 %v6368
    %9932 = vmatprep.subr.bf16.mxu0 %v6377
    %9933 = vmatpush1.bf16.msra.mxu0 %v6376
    %9934 = vmatprep.subr.bf16.mxu0 %v6385
    %9935 = vmatpush1.bf16.msra.mxu0 %v6384
    %9936 = vmatprep.subr.bf16.mxu0 %v6393
    %9937 = vmatpush1.bf16.msra.mxu0 %v6392
    %9938 = vmatprep.subr.bf16.mxu0 %v6401
    %9939 = vmatpush1.bf16.msra.mxu0 %v6400
    %9940 = vmatprep.subr.bf16.mxu0 %v6409
    %9941 = vmatpush1.bf16.msra.mxu0 %v6408
    %9942 = vmatprep.subr.bf16.mxu0 %v6417
    %9943 = vmatpush1.bf16.msra.mxu0 %v6416
    %9944 = vmatprep.subr.bf16.mxu0 %v6425
    %9945 = vmatpush1.bf16.msra.mxu0 %v6424
    %9946 = vmatprep.subr.bf16.mxu0 %v6433
    %9947 = vmatpush1.bf16.msra.mxu0 %v6432
    %9948 = vmatprep.subr.bf16.mxu0 %v6441
    %9949 = vmatpush1.bf16.msra.mxu0 %v6440
    %9950 = vmatprep.subr.bf16.mxu0 %v6449
    %9951 = vmatpush1.bf16.msra.mxu0 %v6448
    %9952 = vmatprep.subr.bf16.mxu0 %v6457
    %9953 = vmatpush1.bf16.msra.mxu0 %v6456
    %9954 = vmatprep.subr.bf16.mxu0 %v6465
    %9955 = vmatpush1.bf16.msra.mxu0 %v6464
    %9956 = vmatprep.subr.bf16.mxu0 %v6473
    %9957 = vmatpush1.bf16.msra.mxu0 %v6472
    %9958 = vmatprep.subr.bf16.mxu0 %v6481
    %9959 = vmatpush1.bf16.msra.mxu0 %v6480
    %9960 = vmatprep.subr.bf16.mxu0 %v6489
    %9961 = vmatpush1.bf16.msra.mxu0 %v6488
    %9962 = vmatprep.mubr.bf16.mxu0 %v199
    %9963 = vmatmul.mubr.bf16.gmra.mrb[0].mxu0 %v198
    %v9964 = vpop.f32.mrb[0].mxu0
    %v9965 = vadd.f32 0.0, %v9964
    %v9966 = vpop.f32.mrb[0].mxu0
    %v9967 = vadd.f32 0.0, %v9966
    %v9968 = vpop.f32.mrb[0].mxu0
    %v9969 = vpop.f32.mrb[0].mxu0
    %9970 = vdwg.mxu0
    %9971 = vmatprep.subr.bf16.mxu0 %v6497
    %9972 = vmatpush1.bf16.msra.mxu0 %v6496
    %9973 = vmatprep.subr.bf16.mxu0 %v6505
    %9974 = vmatpush1.bf16.msra.mxu0 %v6504
    %9975 = vmatprep.subr.bf16.mxu0 %v6513
    %9976 = vmatpush1.bf16.msra.mxu0 %v6512
    %9977 = vmatprep.subr.bf16.mxu0 %v6521
    %9978 = vmatpush1.bf16.msra.mxu0 %v6520
    %9979 = vmatprep.subr.bf16.mxu0 %v6529
    %9980 = vmatpush1.bf16.msra.mxu0 %v6528
    %9981 = vmatprep.subr.bf16.mxu0 %v6537
    %9982 = vmatpush1.bf16.msra.mxu0 %v6536
    %9983 = vmatprep.subr.bf16.mxu0 %v6545
    %9984 = vmatpush1.bf16.msra.mxu0 %v6544
    %9985 = vmatprep.subr.bf16.mxu0 %v6553
    %9986 = vmatpush1.bf16.msra.mxu0 %v6552
    %9987 = vmatprep.subr.bf16.mxu0 %v6561
    %9988 = vmatpush1.bf16.msra.mxu0 %v6560
    %9989 = vmatprep.subr.bf16.mxu0 %v6569
    %9990 = vmatpush1.bf16.msra.mxu0 %v6568
    %9991 = vmatprep.subr.bf16.mxu0 %v6577
    %9992 = vmatpush1.bf16.msra.mxu0 %v6576
    %9993 = vmatprep.subr.bf16.mxu0 %v6585
    %9994 = vmatpush1.bf16.msra.mxu0 %v6584
    %9995 = vmatprep.subr.bf16.mxu0 %v6593
    %9996 = vmatpush1.bf16.msra.mxu0 %v6592
    %9997 = vmatprep.subr.bf16.mxu0 %v6601
    %9998 = vmatpush1.bf16.msra.mxu0 %v6600
    %9999 = vmatprep.subr.bf16.mxu0 %v6609
    %10000 = vmatpush1.bf16.msra.mxu0 %v6608
    %10001 = vmatprep.subr.bf16.mxu0 %v6617
    %10002 = vmatpush1.bf16.msra.mxu0 %v6616
    %10003 = vmatprep.mubr.bf16.mxu0 %v201
    %10004 = vmatmul.mubr.bf16.gmra.mrb[0].mxu0 %v200
    %v10005 = vpop.f32.mrb[0].mxu0
    %v10006 = vadd.f32 %v9965, %v10005
    %v10007 = vpop.f32.mrb[0].mxu0
    %v10008 = vadd.f32 %v9967, %v10007
    %v10009 = vpop.f32.mrb[0].mxu0
    %v10010 = vpop.f32.mrb[0].mxu0
    %10011 = vdwg.mxu0
    %10012 = vmatprep.subr.bf16.mxu0 %v6625
    %10013 = vmatpush1.bf16.msra.mxu0 %v6624
    %10014 = vmatprep.subr.bf16.mxu0 %v6633
    %10015 = vmatpush1.bf16.msra.mxu0 %v6632
    %10016 = vmatprep.subr.bf16.mxu0 %v6641
    %10017 = vmatpush1.bf16.msra.mxu0 %v6640
    %10018 = vmatprep.subr.bf16.mxu0 %v6649
    %10019 = vmatpush1.bf16.msra.mxu0 %v6648
    %10020 = vmatprep.subr.bf16.mxu0 %v6657
    %10021 = vmatpush1.bf16.msra.mxu0 %v6656
    %10022 = vmatprep.subr.bf16.mxu0 %v6665
    %10023 = vmatpush1.bf16.msra.mxu0 %v6664
    %10024 = vmatprep.subr.bf16.mxu0 %v6673
    %10025 = vmatpush1.bf16.msra.mxu0 %v6672
    %10026 = vmatprep.subr.bf16.mxu0 %v6681
    %10027 = vmatpush1.bf16.msra.mxu0 %v6680
    %10028 = vmatprep.subr.bf16.mxu0 %v6689
    %10029 = vmatpush1.bf16.msra.mxu0 %v6688
    %10030 = vmatprep.subr.bf16.mxu0 %v6697
    %10031 = vmatpush1.bf16.msra.mxu0 %v6696
    %10032 = vmatprep.subr.bf16.mxu0 %v6705
    %10033 = vmatpush1.bf16.msra.mxu0 %v6704
    %10034 = vmatprep.subr.bf16.mxu0 %v6713
    %10035 = vmatpush1.bf16.msra.mxu0 %v6712
    %10036 = vmatprep.subr.bf16.mxu0 %v6721
    %10037 = vmatpush1.bf16.msra.mxu0 %v6720
    %10038 = vmatprep.subr.bf16.mxu0 %v6729
    %10039 = vmatpush1.bf16.msra.mxu0 %v6728
    %10040 = vmatprep.subr.bf16.mxu0 %v6737
    %10041 = vmatpush1.bf16.msra.mxu0 %v6736
    %10042 = vmatprep.subr.bf16.mxu0 %v6745
    %10043 = vmatpush1.bf16.msra.mxu0 %v6744
    %10044 = vmatprep.mubr.bf16.mxu0 %v203
    %10045 = vmatmul.mubr.bf16.gmra.mrb[0].mxu0 %v202
    %v10046 = vpop.f32.mrb[0].mxu0
    %v10047 = vadd.f32 %v10006, %v10046
    %v10048 = vpop.f32.mrb[0].mxu0
    %v10049 = vadd.f32 %v10008, %v10048
    %v10050 = vpop.f32.mrb[0].mxu0
    %v10051 = vpop.f32.mrb[0].mxu0
    %10052 = vdwg.mxu0
    %10053 = vmatprep.subr.bf16.mxu0 %v6753
    %10054 = vmatpush1.bf16.msra.mxu0 %v6752
    %10055 = vmatprep.subr.bf16.mxu0 %v6761
    %10056 = vmatpush1.bf16.msra.mxu0 %v6760
    %10057 = vmatprep.subr.bf16.mxu0 %v6769
    %10058 = vmatpush1.bf16.msra.mxu0 %v6768
    %10059 = vmatprep.subr.bf16.mxu0 %v6777
    %10060 = vmatpush1.bf16.msra.mxu0 %v6776
    %10061 = vmatprep.subr.bf16.mxu0 %v6785
    %10062 = vmatpush1.bf16.msra.mxu0 %v6784
    %10063 = vmatprep.subr.bf16.mxu0 %v6793
    %10064 = vmatpush1.bf16.msra.mxu0 %v6792
    %10065 = vmatprep.subr.bf16.mxu0 %v6801
    %10066 = vmatpush1.bf16.msra.mxu0 %v6800
    %10067 = vmatprep.subr.bf16.mxu0 %v6809
    %10068 = vmatpush1.bf16.msra.mxu0 %v6808
    %10069 = vmatprep.subr.bf16.mxu0 %v6817
    %10070 = vmatpush1.bf16.msra.mxu0 %v6816
    %10071 = vmatprep.subr.bf16.mxu0 %v6825
    %10072 = vmatpush1.bf16.msra.mxu0 %v6824
    %10073 = vmatprep.subr.bf16.mxu0 %v6833
    %10074 = vmatpush1.bf16.msra.mxu0 %v6832
    %10075 = vmatprep.subr.bf16.mxu0 %v6841
    %10076 = vmatpush1.bf16.msra.mxu0 %v6840
    %10077 = vmatprep.subr.bf16.mxu0 %v6849
    %10078 = vmatpush1.bf16.msra.mxu0 %v6848
    %10079 = vmatprep.subr.bf16.mxu0 %v6857
    %10080 = vmatpush1.bf16.msra.mxu0 %v6856
    %10081 = vmatprep.subr.bf16.mxu0 %v6865
    %10082 = vmatpush1.bf16.msra.mxu0 %v6864
    %10083 = vmatprep.subr.bf16.mxu0 %v6873
    %10084 = vmatpush1.bf16.msra.mxu0 %v6872
    %10085 = vmatprep.mubr.bf16.mxu0 %v205
    %10086 = vmatmul.mubr.bf16.gmra.mrb[0].mxu0 %v204
    %v10087 = vpop.f32.mrb[0].mxu0
    %v10088 = vadd.f32 %v10047, %v10087
    %v10089 = vpop.f32.mrb[0].mxu0
    %v10090 = vadd.f32 %v10049, %v10089
    %v10091 = vpop.f32.mrb[0].mxu0
    %v10092 = vpop.f32.mrb[0].mxu0
    %10093 = vdwg.mxu0
    %10094 = vmatprep.subr.bf16.mxu0 %v6881
    %10095 = vmatpush1.bf16.msra.mxu0 %v6880
    %10096 = vmatprep.subr.bf16.mxu0 %v6889
    %10097 = vmatpush1.bf16.msra.mxu0 %v6888
    %10098 = vmatprep.subr.bf16.mxu0 %v6897
    %10099 = vmatpush1.bf16.msra.mxu0 %v6896
    %10100 = vmatprep.subr.bf16.mxu0 %v6905
    %10101 = vmatpush1.bf16.msra.mxu0 %v6904
    %10102 = vmatprep.subr.bf16.mxu0 %v6913
    %10103 = vmatpush1.bf16.msra.mxu0 %v6912
    %10104 = vmatprep.subr.bf16.mxu0 %v6921
    %10105 = vmatpush1.bf16.msra.mxu0 %v6920
    %10106 = vmatprep.subr.bf16.mxu0 %v6929
    %10107 = vmatpush1.bf16.msra.mxu0 %v6928
    %10108 = vmatprep.subr.bf16.mxu0 %v6937
    %10109 = vmatpush1.bf16.msra.mxu0 %v6936
    %10110 = vmatprep.subr.bf16.mxu0 %v6945
    %10111 = vmatpush1.bf16.msra.mxu0 %v6944
    %10112 = vmatprep.subr.bf16.mxu0 %v6953
    %10113 = vmatpush1.bf16.msra.mxu0 %v6952
    %10114 = vmatprep.subr.bf16.mxu0 %v6961
    %10115 = vmatpush1.bf16.msra.mxu0 %v6960
    %10116 = vmatprep.subr.bf16.mxu0 %v6969
    %10117 = vmatpush1.bf16.msra.mxu0 %v6968
    %10118 = vmatprep.subr.bf16.mxu0 %v6977
    %10119 = vmatpush1.bf16.msra.mxu0 %v6976
    %10120 = vmatprep.subr.bf16.mxu0 %v6985
    %10121 = vmatpush1.bf16.msra.mxu0 %v6984
    %10122 = vmatprep.subr.bf16.mxu0 %v6993
    %10123 = vmatpush1.bf16.msra.mxu0 %v6992
    %10124 = vmatprep.subr.bf16.mxu0 %v7001
    %10125 = vmatpush1.bf16.msra.mxu0 %v7000
    %10126 = vmatprep.mubr.bf16.mxu0 %v207
    %10127 = vmatmul.mubr.bf16.gmra.mrb[0].mxu0 %v206
    %v10128 = vpop.f32.mrb[0].mxu0
    %v10129 = vadd.f32 %v10088, %v10128
    %v10130 = vpop.f32.mrb[0].mxu0
    %v10131 = vadd.f32 %v10090, %v10130
    %v10132 = vpop.f32.mrb[0].mxu0
    %v10133 = vpop.f32.mrb[0].mxu0
    %10134 = vdwg.mxu0
    %10135 = vmatprep.subr.bf16.mxu0 %v7009
    %10136 = vmatpush1.bf16.msra.mxu0 %v7008
    %10137 = vmatprep.subr.bf16.mxu0 %v7017
    %10138 = vmatpush1.bf16.msra.mxu0 %v7016
    %10139 = vmatprep.subr.bf16.mxu0 %v7025
    %10140 = vmatpush1.bf16.msra.mxu0 %v7024
    %10141 = vmatprep.subr.bf16.mxu0 %v7033
    %10142 = vmatpush1.bf16.msra.mxu0 %v7032
    %10143 = vmatprep.subr.bf16.mxu0 %v7041
    %10144 = vmatpush1.bf16.msra.mxu0 %v7040
    %10145 = vmatprep.subr.bf16.mxu0 %v7049
    %10146 = vmatpush1.bf16.msra.mxu0 %v7048
    %10147 = vmatprep.subr.bf16.mxu0 %v7057
    %10148 = vmatpush1.bf16.msra.mxu0 %v7056
    %10149 = vmatprep.subr.bf16.mxu0 %v7065
    %10150 = vmatpush1.bf16.msra.mxu0 %v7064
    %10151 = vmatprep.subr.bf16.mxu0 %v7073
    %10152 = vmatpush1.bf16.msra.mxu0 %v7072
    %10153 = vmatprep.subr.bf16.mxu0 %v7081
    %10154 = vmatpush1.bf16.msra.mxu0 %v7080
    %10155 = vmatprep.subr.bf16.mxu0 %v7089
    %10156 = vmatpush1.bf16.msra.mxu0 %v7088
    %10157 = vmatprep.subr.bf16.mxu0 %v7097
    %10158 = vmatpush1.bf16.msra.mxu0 %v7096
    %10159 = vmatprep.subr.bf16.mxu0 %v7105
    %10160 = vmatpush1.bf16.msra.mxu0 %v7104
    %10161 = vmatprep.subr.bf16.mxu0 %v7113
    %10162 = vmatpush1.bf16.msra.mxu0 %v7112
    %10163 = vmatprep.subr.bf16.mxu0 %v7121
    %10164 = vmatpush1.bf16.msra.mxu0 %v7120
    %10165 = vmatprep.subr.bf16.mxu0 %v7129
    %10166 = vmatpush1.bf16.msra.mxu0 %v7128
    %10167 = vmatprep.mubr.bf16.mxu0 %v209
    %10168 = vmatmul.mubr.bf16.gmra.mrb[0].mxu0 %v208
    %v10169 = vpop.f32.mrb[0].mxu0
    %v10170 = vadd.f32 %v10129, %v10169
    %v10171 = vpop.f32.mrb[0].mxu0
    %v10172 = vadd.f32 %v10131, %v10171
    %v10173 = vpop.f32.mrb[0].mxu0
    %v10174 = vpop.f32.mrb[0].mxu0
    %10175 = vdwg.mxu0
    %10176 = vmatprep.subr.bf16.mxu0 %v7137
    %10177 = vmatpush1.bf16.msra.mxu0 %v7136
    %10178 = vmatprep.subr.bf16.mxu0 %v7145
    %10179 = vmatpush1.bf16.msra.mxu0 %v7144
    %10180 = vmatprep.subr.bf16.mxu0 %v7153
    %10181 = vmatpush1.bf16.msra.mxu0 %v7152
    %10182 = vmatprep.subr.bf16.mxu0 %v7161
    %10183 = vmatpush1.bf16.msra.mxu0 %v7160
    %10184 = vmatprep.subr.bf16.mxu0 %v7169
    %10185 = vmatpush1.bf16.msra.mxu0 %v7168
    %10186 = vmatprep.subr.bf16.mxu0 %v7177
    %10187 = vmatpush1.bf16.msra.mxu0 %v7176
    %10188 = vmatprep.subr.bf16.mxu0 %v7185
    %10189 = vmatpush1.bf16.msra.mxu0 %v7184
    %10190 = vmatprep.subr.bf16.mxu0 %v7193
    %10191 = vmatpush1.bf16.msra.mxu0 %v7192
    %10192 = vmatprep.subr.bf16.mxu0 %v7201
    %10193 = vmatpush1.bf16.msra.mxu0 %v7200
    %10194 = vmatprep.subr.bf16.mxu0 %v7209
    %10195 = vmatpush1.bf16.msra.mxu0 %v7208
    %10196 = vmatprep.subr.bf16.mxu0 %v7217
    %10197 = vmatpush1.bf16.msra.mxu0 %v7216
    %10198 = vmatprep.subr.bf16.mxu0 %v7225
    %10199 = vmatpush1.bf16.msra.mxu0 %v7224
    %10200 = vmatprep.subr.bf16.mxu0 %v7233
    %10201 = vmatpush1.bf16.msra.mxu0 %v7232
    %10202 = vmatprep.subr.bf16.mxu0 %v7241
    %10203 = vmatpush1.bf16.msra.mxu0 %v7240
    %10204 = vmatprep.subr.bf16.mxu0 %v7249
    %10205 = vmatpush1.bf16.msra.mxu0 %v7248
    %10206 = vmatprep.subr.bf16.mxu0 %v7257
    %10207 = vmatpush1.bf16.msra.mxu0 %v7256
    %10208 = vmatprep.mubr.bf16.mxu0 %v211
    %10209 = vmatmul.mubr.bf16.gmra.mrb[0].mxu0 %v210
    %v10210 = vpop.f32.mrb[0].mxu0
    %v10211 = vadd.f32 %v10170, %v10210
    %v10212 = vpop.f32.mrb[0].mxu0
    %v10213 = vadd.f32 %v10172, %v10212
    %v10214 = vpop.f32.mrb[0].mxu0
    %v10215 = vpop.f32.mrb[0].mxu0
    %10216 = vdwg.mxu0
    %10217 = vmatprep.subr.bf16.mxu0 %v7265
    %10218 = vmatpush1.bf16.msra.mxu0 %v7264
    %10219 = vmatprep.subr.bf16.mxu0 %v7273
    %10220 = vmatpush1.bf16.msra.mxu0 %v7272
    %10221 = vmatprep.subr.bf16.mxu0 %v7281
    %10222 = vmatpush1.bf16.msra.mxu0 %v7280
    %10223 = vmatprep.subr.bf16.mxu0 %v7289
    %10224 = vmatpush1.bf16.msra.mxu0 %v7288
    %10225 = vmatprep.subr.bf16.mxu0 %v7297
    %10226 = vmatpush1.bf16.msra.mxu0 %v7296
    %10227 = vmatprep.subr.bf16.mxu0 %v7305
    %10228 = vmatpush1.bf16.msra.mxu0 %v7304
    %10229 = vmatprep.subr.bf16.mxu0 %v7313
    %10230 = vmatpush1.bf16.msra.mxu0 %v7312
    %10231 = vmatprep.subr.bf16.mxu0 %v7321
    %10232 = vmatpush1.bf16.msra.mxu0 %v7320
    %10233 = vmatprep.subr.bf16.mxu0 %v7329
    %10234 = vmatpush1.bf16.msra.mxu0 %v7328
    %10235 = vmatprep.subr.bf16.mxu0 %v7337
    %10236 = vmatpush1.bf16.msra.mxu0 %v7336
    %10237 = vmatprep.subr.bf16.mxu0 %v7345
    %10238 = vmatpush1.bf16.msra.mxu0 %v7344
    %10239 = vmatprep.subr.bf16.mxu0 %v7353
    %10240 = vmatpush1.bf16.msra.mxu0 %v7352
    %10241 = vmatprep.subr.bf16.mxu0 %v7361
    %10242 = vmatpush1.bf16.msra.mxu0 %v7360
    %10243 = vmatprep.subr.bf16.mxu0 %v7369
    %10244 = vmatpush1.bf16.msra.mxu0 %v7368
    %10245 = vmatprep.subr.bf16.mxu0 %v7377
    %10246 = vmatpush1.bf16.msra.mxu0 %v7376
    %10247 = vmatprep.subr.bf16.mxu0 %v7385
    %10248 = vmatpush1.bf16.msra.mxu0 %v7384
    %10249 = vmatprep.mubr.bf16.mxu0 %v213
    %10250 = vmatmul.mubr.bf16.gmra.mrb[0].mxu0 %v212
    %v10251 = vpop.f32.mrb[0].mxu0
    %v10252 = vadd.f32 %v10211, %v10251
    %v10253 = vpop.f32.mrb[0].mxu0
    %v10254 = vadd.f32 %v10213, %v10253
    %v10255 = vpop.f32.mrb[0].mxu0
    %v10256 = vpop.f32.mrb[0].mxu0
    %10257 = vdwg.mxu0
    %10258 = vmatprep.subr.bf16.mxu0 %v7393
    %10259 = vmatpush1.bf16.msra.mxu0 %v7392
    %10260 = vmatprep.subr.bf16.mxu0 %v7401
    %10261 = vmatpush1.bf16.msra.mxu0 %v7400
    %10262 = vmatprep.subr.bf16.mxu0 %v7409
    %10263 = vmatpush1.bf16.msra.mxu0 %v7408
    %10264 = vmatprep.subr.bf16.mxu0 %v7417
    %10265 = vmatpush1.bf16.msra.mxu0 %v7416
    %10266 = vmatprep.subr.bf16.mxu0 %v7425
    %10267 = vmatpush1.bf16.msra.mxu0 %v7424
    %10268 = vmatprep.subr.bf16.mxu0 %v7433
    %10269 = vmatpush1.bf16.msra.mxu0 %v7432
    %10270 = vmatprep.subr.bf16.mxu0 %v7441
    %10271 = vmatpush1.bf16.msra.mxu0 %v7440
    %10272 = vmatprep.subr.bf16.mxu0 %v7449
    %10273 = vmatpush1.bf16.msra.mxu0 %v7448
    %10274 = vmatprep.subr.bf16.mxu0 %v7457
    %10275 = vmatpush1.bf16.msra.mxu0 %v7456
    %10276 = vmatprep.subr.bf16.mxu0 %v7465
    %10277 = vmatpush1.bf16.msra.mxu0 %v7464
    %10278 = vmatprep.subr.bf16.mxu0 %v7473
    %10279 = vmatpush1.bf16.msra.mxu0 %v7472
    %10280 = vmatprep.subr.bf16.mxu0 %v7481
    %10281 = vmatpush1.bf16.msra.mxu0 %v7480
    %10282 = vmatprep.subr.bf16.mxu0 %v7489
    %10283 = vmatpush1.bf16.msra.mxu0 %v7488
    %10284 = vmatprep.subr.bf16.mxu0 %v7497
    %10285 = vmatpush1.bf16.msra.mxu0 %v7496
    %10286 = vmatprep.subr.bf16.mxu0 %v7505
    %10287 = vmatpush1.bf16.msra.mxu0 %v7504
    %10288 = vmatprep.subr.bf16.mxu0 %v7513
    %10289 = vmatpush1.bf16.msra.mxu0 %v7512
    %10290 = vmatprep.mubr.bf16.mxu0 %v215
    %10291 = vmatmul.mubr.bf16.gmra.mrb[0].mxu0 %v214
    %v10292 = vpop.f32.mrb[0].mxu0
    %v10293 = vadd.f32 %v10252, %v10292
    %v10294 = vpop.f32.mrb[0].mxu0
    %v10295 = vadd.f32 %v10254, %v10294
    %v10296 = vpop.f32.mrb[0].mxu0
    %v10297 = vpop.f32.mrb[0].mxu0
    %10298 = vdwg.mxu0
    %10299 = vmatprep.subr.bf16.mxu0 %v7521
    %10300 = vmatpush1.bf16.msra.mxu0 %v7520
    %10301 = vmatprep.subr.bf16.mxu0 %v7529
    %10302 = vmatpush1.bf16.msra.mxu0 %v7528
    %10303 = vmatprep.subr.bf16.mxu0 %v7537
    %10304 = vmatpush1.bf16.msra.mxu0 %v7536
    %10305 = vmatprep.subr.bf16.mxu0 %v7545
    %10306 = vmatpush1.bf16.msra.mxu0 %v7544
    %10307 = vmatprep.subr.bf16.mxu0 %v7553
    %10308 = vmatpush1.bf16.msra.mxu0 %v7552
    %10309 = vmatprep.subr.bf16.mxu0 %v7561
    %10310 = vmatpush1.bf16.msra.mxu0 %v7560
    %10311 = vmatprep.subr.bf16.mxu0 %v7569
    %10312 = vmatpush1.bf16.msra.mxu0 %v7568
    %10313 = vmatprep.subr.bf16.mxu0 %v7577
    %10314 = vmatpush1.bf16.msra.mxu0 %v7576
    %10315 = vmatprep.subr.bf16.mxu0 %v7585
    %10316 = vmatpush1.bf16.msra.mxu0 %v7584
    %10317 = vmatprep.subr.bf16.mxu0 %v7593
    %10318 = vmatpush1.bf16.msra.mxu0 %v7592
    %10319 = vmatprep.subr.bf16.mxu0 %v7601
    %10320 = vmatpush1.bf16.msra.mxu0 %v7600
    %10321 = vmatprep.subr.bf16.mxu0 %v7609
    %10322 = vmatpush1.bf16.msra.mxu0 %v7608
    %10323 = vmatprep.subr.bf16.mxu0 %v7617
    %10324 = vmatpush1.bf16.msra.mxu0 %v7616
    %10325 = vmatprep.subr.bf16.mxu0 %v7625
    %10326 = vmatpush1.bf16.msra.mxu0 %v7624
    %10327 = vmatprep.subr.bf16.mxu0 %v7633
    %10328 = vmatpush1.bf16.msra.mxu0 %v7632
    %10329 = vmatprep.subr.bf16.mxu0 %v7641
    %10330 = vmatpush1.bf16.msra.mxu0 %v7640
    %10331 = vmatprep.mubr.bf16.mxu0 %v217
    %10332 = vmatmul.mubr.bf16.gmra.mrb[0].mxu0 %v216
    %v10333 = vpop.f32.mrb[0].mxu0
    %v10334 = vadd.f32 %v10293, %v10333
    %v10335 = vpop.f32.mrb[0].mxu0
    %v10336 = vadd.f32 %v10295, %v10335
    %v10337 = vpop.f32.mrb[0].mxu0
    %v10338 = vpop.f32.mrb[0].mxu0
    %10339 = vdwg.mxu0
    %10340 = vmatprep.subr.bf16.mxu0 %v7649
    %10341 = vmatpush1.bf16.msra.mxu0 %v7648
    %10342 = vmatprep.subr.bf16.mxu0 %v7657
    %10343 = vmatpush1.bf16.msra.mxu0 %v7656
    %10344 = vmatprep.subr.bf16.mxu0 %v7665
    %10345 = vmatpush1.bf16.msra.mxu0 %v7664
    %10346 = vmatprep.subr.bf16.mxu0 %v7673
    %10347 = vmatpush1.bf16.msra.mxu0 %v7672
    %10348 = vmatprep.subr.bf16.mxu0 %v7681
    %10349 = vmatpush1.bf16.msra.mxu0 %v7680
    %10350 = vmatprep.subr.bf16.mxu0 %v7689
    %10351 = vmatpush1.bf16.msra.mxu0 %v7688
    %10352 = vmatprep.subr.bf16.mxu0 %v7697
    %10353 = vmatpush1.bf16.msra.mxu0 %v7696
    %10354 = vmatprep.subr.bf16.mxu0 %v7705
    %10355 = vmatpush1.bf16.msra.mxu0 %v7704
    %10356 = vmatprep.subr.bf16.mxu0 %v7713
    %10357 = vmatpush1.bf16.msra.mxu0 %v7712
    %10358 = vmatprep.subr.bf16.mxu0 %v7721
    %10359 = vmatpush1.bf16.msra.mxu0 %v7720
    %10360 = vmatprep.subr.bf16.mxu0 %v7729
    %10361 = vmatpush1.bf16.msra.mxu0 %v7728
    %10362 = vmatprep.subr.bf16.mxu0 %v7737
    %10363 = vmatpush1.bf16.msra.mxu0 %v7736
    %10364 = vmatprep.subr.bf16.mxu0 %v7745
    %10365 = vmatpush1.bf16.msra.mxu0 %v7744
    %10366 = vmatprep.subr.bf16.mxu0 %v7753
    %10367 = vmatpush1.bf16.msra.mxu0 %v7752
    %10368 = vmatprep.subr.bf16.mxu0 %v7761
    %10369 = vmatpush1.bf16.msra.mxu0 %v7760
    %10370 = vmatprep.subr.bf16.mxu0 %v7769
    %10371 = vmatpush1.bf16.msra.mxu0 %v7768
    %10372 = vmatprep.mubr.bf16.mxu0 %v219
    %10373 = vmatmul.mubr.bf16.gmra.mrb[0].mxu0 %v218
    %v10374 = vpop.f32.mrb[0].mxu0
    %v10375 = vadd.f32 %v10334, %v10374
    %v10376 = vpop.f32.mrb[0].mxu0
    %v10377 = vadd.f32 %v10336, %v10376
    %v10378 = vpop.f32.mrb[0].mxu0
    %v10379 = vpop.f32.mrb[0].mxu0
    %10380 = vdwg.mxu0
    %10381 = vmatprep.subr.bf16.mxu0 %v7777
    %10382 = vmatpush1.bf16.msra.mxu0 %v7776
    %10383 = vmatprep.subr.bf16.mxu0 %v7785
    %10384 = vmatpush1.bf16.msra.mxu0 %v7784
    %10385 = vmatprep.subr.bf16.mxu0 %v7793
    %10386 = vmatpush1.bf16.msra.mxu0 %v7792
    %10387 = vmatprep.subr.bf16.mxu0 %v7801
    %10388 = vmatpush1.bf16.msra.mxu0 %v7800
    %10389 = vmatprep.subr.bf16.mxu0 %v7809
    %10390 = vmatpush1.bf16.msra.mxu0 %v7808
    %10391 = vmatprep.subr.bf16.mxu0 %v7817
    %10392 = vmatpush1.bf16.msra.mxu0 %v7816
    %10393 = vmatprep.subr.bf16.mxu0 %v7825
    %10394 = vmatpush1.bf16.msra.mxu0 %v7824
    %10395 = vmatprep.subr.bf16.mxu0 %v7833
    %10396 = vmatpush1.bf16.msra.mxu0 %v7832
    %10397 = vmatprep.subr.bf16.mxu0 %v7841
    %10398 = vmatpush1.bf16.msra.mxu0 %v7840
    %10399 = vmatprep.subr.bf16.mxu0 %v7849
    %10400 = vmatpush1.bf16.msra.mxu0 %v7848
    %10401 = vmatprep.subr.bf16.mxu0 %v7857
    %10402 = vmatpush1.bf16.msra.mxu0 %v7856
    %10403 = vmatprep.subr.bf16.mxu0 %v7865
    %10404 = vmatpush1.bf16.msra.mxu0 %v7864
    %10405 = vmatprep.subr.bf16.mxu0 %v7873
    %10406 = vmatpush1.bf16.msra.mxu0 %v7872
    %10407 = vmatprep.subr.bf16.mxu0 %v7881
    %10408 = vmatpush1.bf16.msra.mxu0 %v7880
    %10409 = vmatprep.subr.bf16.mxu0 %v7889
    %10410 = vmatpush1.bf16.msra.mxu0 %v7888
    %10411 = vmatprep.subr.bf16.mxu0 %v7897
    %10412 = vmatpush1.bf16.msra.mxu0 %v7896
    %10413 = vmatprep.mubr.bf16.mxu0 %v221
    %10414 = vmatmul.mubr.bf16.gmra.mrb[0].mxu0 %v220
    %v10415 = vpop.f32.mrb[0].mxu0
    %v10416 = vadd.f32 %v10375, %v10415
    %v10417 = vpop.f32.mrb[0].mxu0
    %v10418 = vadd.f32 %v10377, %v10417
    %v10419 = vpop.f32.mrb[0].mxu0
    %v10420 = vpop.f32.mrb[0].mxu0
    %10421 = vdwg.mxu0
    %10422 = vmatprep.subr.bf16.mxu0 %v6371
    %10423 = vmatpush1.bf16.msra.mxu0 %v6370
    %10424 = vmatprep.subr.bf16.mxu0 %v6379
    %10425 = vmatpush1.bf16.msra.mxu0 %v6378
    %10426 = vmatprep.subr.bf16.mxu0 %v6387
    %10427 = vmatpush1.bf16.msra.mxu0 %v6386
    %10428 = vmatprep.subr.bf16.mxu0 %v6395
    %10429 = vmatpush1.bf16.msra.mxu0 %v6394
    %10430 = vmatprep.subr.bf16.mxu0 %v6403
    %10431 = vmatpush1.bf16.msra.mxu0 %v6402
    %10432 = vmatprep.subr.bf16.mxu0 %v6411
    %10433 = vmatpush1.bf16.msra.mxu0 %v6410
    %10434 = vmatprep.subr.bf16.mxu0 %v6419
    %10435 = vmatpush1.bf16.msra.mxu0 %v6418
    %10436 = vmatprep.subr.bf16.mxu0 %v6427
    %10437 = vmatpush1.bf16.msra.mxu0 %v6426
    %10438 = vmatprep.subr.bf16.mxu0 %v6435
    %10439 = vmatpush1.bf16.msra.mxu0 %v6434
    %10440 = vmatprep.subr.bf16.mxu0 %v6443
    %10441 = vmatpush1.bf16.msra.mxu0 %v6442
    %10442 = vmatprep.subr.bf16.mxu0 %v6451
    %10443 = vmatpush1.bf16.msra.mxu0 %v6450
    %10444 = vmatprep.subr.bf16.mxu0 %v6459
    %10445 = vmatpush1.bf16.msra.mxu0 %v6458
    %10446 = vmatprep.subr.bf16.mxu0 %v6467
    %10447 = vmatpush1.bf16.msra.mxu0 %v6466
    %10448 = vmatprep.subr.bf16.mxu0 %v6475
    %10449 = vmatpush1.bf16.msra.mxu0 %v6474
    %10450 = vmatprep.subr.bf16.mxu0 %v6483
    %10451 = vmatpush1.bf16.msra.mxu0 %v6482
    %10452 = vmatprep.subr.bf16.mxu0 %v6491
    %10453 = vmatpush1.bf16.msra.mxu0 %v6490
    %10454 = vmatprep.mubr.bf16.mxu0 %v199
    %10455 = vmatmul.mubr.bf16.gmra.mrb[0].mxu0 %v198
    %v10456 = vpop.f32.mrb[0].mxu0
    %v10457 = vadd.f32 0.0, %v10456
    %v10458 = vpop.f32.mrb[0].mxu0
    %v10459 = vadd.f32 0.0, %v10458
    %v10460 = vpop.f32.mrb[0].mxu0
    %v10461 = vpop.f32.mrb[0].mxu0
    %10462 = vdwg.mxu0
    %10463 = vmatprep.subr.bf16.mxu0 %v6499
    %10464 = vmatpush1.bf16.msra.mxu0 %v6498
    %10465 = vmatprep.subr.bf16.mxu0 %v6507
    %10466 = vmatpush1.bf16.msra.mxu0 %v6506
    %10467 = vmatprep.subr.bf16.mxu0 %v6515
    %10468 = vmatpush1.bf16.msra.mxu0 %v6514
    %10469 = vmatprep.subr.bf16.mxu0 %v6523
    %10470 = vmatpush1.bf16.msra.mxu0 %v6522
    %10471 = vmatprep.subr.bf16.mxu0 %v6531
    %10472 = vmatpush1.bf16.msra.mxu0 %v6530
    %10473 = vmatprep.subr.bf16.mxu0 %v6539
    %10474 = vmatpush1.bf16.msra.mxu0 %v6538
    %10475 = vmatprep.subr.bf16.mxu0 %v6547
    %10476 = vmatpush1.bf16.msra.mxu0 %v6546
    %10477 = vmatprep.subr.bf16.mxu0 %v6555
    %10478 = vmatpush1.bf16.msra.mxu0 %v6554
    %10479 = vmatprep.subr.bf16.mxu0 %v6563
    %10480 = vmatpush1.bf16.msra.mxu0 %v6562
    %10481 = vmatprep.subr.bf16.mxu0 %v6571
    %10482 = vmatpush1.bf16.msra.mxu0 %v6570
    %10483 = vmatprep.subr.bf16.mxu0 %v6579
    %10484 = vmatpush1.bf16.msra.mxu0 %v6578
    %10485 = vmatprep.subr.bf16.mxu0 %v6587
    %10486 = vmatpush1.bf16.msra.mxu0 %v6586
    %10487 = vmatprep.subr.bf16.mxu0 %v6595
    %10488 = vmatpush1.bf16.msra.mxu0 %v6594
    %10489 = vmatprep.subr.bf16.mxu0 %v6603
    %10490 = vmatpush1.bf16.msra.mxu0 %v6602
    %10491 = vmatprep.subr.bf16.mxu0 %v6611
    %10492 = vmatpush1.bf16.msra.mxu0 %v6610
    %10493 = vmatprep.subr.bf16.mxu0 %v6619
    %10494 = vmatpush1.bf16.msra.mxu0 %v6618
    %10495 = vmatprep.mubr.bf16.mxu0 %v201
    %10496 = vmatmul.mubr.bf16.gmra.mrb[0].mxu0 %v200
    %v10497 = vpop.f32.mrb[0].mxu0
    %v10498 = vadd.f32 %v10457, %v10497
    %v10499 = vpop.f32.mrb[0].mxu0
    %v10500 = vadd.f32 %v10459, %v10499
    %v10501 = vpop.f32.mrb[0].mxu0
    %v10502 = vpop.f32.mrb[0].mxu0
    %10503 = vdwg.mxu0
    %10504 = vmatprep.subr.bf16.mxu0 %v6627
    %10505 = vmatpush1.bf16.msra.mxu0 %v6626
    %10506 = vmatprep.subr.bf16.mxu0 %v6635
    %10507 = vmatpush1.bf16.msra.mxu0 %v6634
    %10508 = vmatprep.subr.bf16.mxu0 %v6643
    %10509 = vmatpush1.bf16.msra.mxu0 %v6642
    %10510 = vmatprep.subr.bf16.mxu0 %v6651
    %10511 = vmatpush1.bf16.msra.mxu0 %v6650
    %10512 = vmatprep.subr.bf16.mxu0 %v6659
    %10513 = vmatpush1.bf16.msra.mxu0 %v6658
    %10514 = vmatprep.subr.bf16.mxu0 %v6667
    %10515 = vmatpush1.bf16.msra.mxu0 %v6666
    %10516 = vmatprep.subr.bf16.mxu0 %v6675
    %10517 = vmatpush1.bf16.msra.mxu0 %v6674
    %10518 = vmatprep.subr.bf16.mxu0 %v6683
    %10519 = vmatpush1.bf16.msra.mxu0 %v6682
    %10520 = vmatprep.subr.bf16.mxu0 %v6691
    %10521 = vmatpush1.bf16.msra.mxu0 %v6690
    %10522 = vmatprep.subr.bf16.mxu0 %v6699
    %10523 = vmatpush1.bf16.msra.mxu0 %v6698
    %10524 = vmatprep.subr.bf16.mxu0 %v6707
    %10525 = vmatpush1.bf16.msra.mxu0 %v6706
    %10526 = vmatprep.subr.bf16.mxu0 %v6715
    %10527 = vmatpush1.bf16.msra.mxu0 %v6714
    %10528 = vmatprep.subr.bf16.mxu0 %v6723
    %10529 = vmatpush1.bf16.msra.mxu0 %v6722
    %10530 = vmatprep.subr.bf16.mxu0 %v6731
    %10531 = vmatpush1.bf16.msra.mxu0 %v6730
    %10532 = vmatprep.subr.bf16.mxu0 %v6739
    %10533 = vmatpush1.bf16.msra.mxu0 %v6738
    %10534 = vmatprep.subr.bf16.mxu0 %v6747
    %10535 = vmatpush1.bf16.msra.mxu0 %v6746
    %10536 = vmatprep.mubr.bf16.mxu0 %v203
    %10537 = vmatmul.mubr.bf16.gmra.mrb[0].mxu0 %v202
    %v10538 = vpop.f32.mrb[0].mxu0
    %v10539 = vadd.f32 %v10498, %v10538
    %v10540 = vpop.f32.mrb[0].mxu0
    %v10541 = vadd.f32 %v10500, %v10540
    %v10542 = vpop.f32.mrb[0].mxu0
    %v10543 = vpop.f32.mrb[0].mxu0
    %10544 = vdwg.mxu0
    %10545 = vmatprep.subr.bf16.mxu0 %v6755
    %10546 = vmatpush1.bf16.msra.mxu0 %v6754
    %10547 = vmatprep.subr.bf16.mxu0 %v6763
    %10548 = vmatpush1.bf16.msra.mxu0 %v6762
    %10549 = vmatprep.subr.bf16.mxu0 %v6771
    %10550 = vmatpush1.bf16.msra.mxu0 %v6770
    %10551 = vmatprep.subr.bf16.mxu0 %v6779
    %10552 = vmatpush1.bf16.msra.mxu0 %v6778
    %10553 = vmatprep.subr.bf16.mxu0 %v6787
    %10554 = vmatpush1.bf16.msra.mxu0 %v6786
    %10555 = vmatprep.subr.bf16.mxu0 %v6795
    %10556 = vmatpush1.bf16.msra.mxu0 %v6794
    %10557 = vmatprep.subr.bf16.mxu0 %v6803
    %10558 = vmatpush1.bf16.msra.mxu0 %v6802
    %10559 = vmatprep.subr.bf16.mxu0 %v6811
    %10560 = vmatpush1.bf16.msra.mxu0 %v6810
    %10561 = vmatprep.subr.bf16.mxu0 %v6819
    %10562 = vmatpush1.bf16.msra.mxu0 %v6818
    %10563 = vmatprep.subr.bf16.mxu0 %v6827
    %10564 = vmatpush1.bf16.msra.mxu0 %v6826
    %10565 = vmatprep.subr.bf16.mxu0 %v6835
    %10566 = vmatpush1.bf16.msra.mxu0 %v6834
    %10567 = vmatprep.subr.bf16.mxu0 %v6843
    %10568 = vmatpush1.bf16.msra.mxu0 %v6842
    %10569 = vmatprep.subr.bf16.mxu0 %v6851
    %10570 = vmatpush1.bf16.msra.mxu0 %v6850
    %10571 = vmatprep.subr.bf16.mxu0 %v6859
    %10572 = vmatpush1.bf16.msra.mxu0 %v6858
    %10573 = vmatprep.subr.bf16.mxu0 %v6867
    %10574 = vmatpush1.bf16.msra.mxu0 %v6866
    %10575 = vmatprep.subr.bf16.mxu0 %v6875
    %10576 = vmatpush1.bf16.msra.mxu0 %v6874
    %10577 = vmatprep.mubr.bf16.mxu0 %v205
    %10578 = vmatmul.mubr.bf16.gmra.mrb[0].mxu0 %v204
    %v10579 = vpop.f32.mrb[0].mxu0
    %v10580 = vadd.f32 %v10539, %v10579
    %v10581 = vpop.f32.mrb[0].mxu0
    %v10582 = vadd.f32 %v10541, %v10581
    %v10583 = vpop.f32.mrb[0].mxu0
    %v10584 = vpop.f32.mrb[0].mxu0
    %10585 = vdwg.mxu0
    %10586 = vmatprep.subr.bf16.mxu0 %v6883
    %10587 = vmatpush1.bf16.msra.mxu0 %v6882
    %10588 = vmatprep.subr.bf16.mxu0 %v6891
    %10589 = vmatpush1.bf16.msra.mxu0 %v6890
    %10590 = vmatprep.subr.bf16.mxu0 %v6899
    %10591 = vmatpush1.bf16.msra.mxu0 %v6898
    %10592 = vmatprep.subr.bf16.mxu0 %v6907
    %10593 = vmatpush1.bf16.msra.mxu0 %v6906
    %10594 = vmatprep.subr.bf16.mxu0 %v6915
    %10595 = vmatpush1.bf16.msra.mxu0 %v6914
    %10596 = vmatprep.subr.bf16.mxu0 %v6923
    %10597 = vmatpush1.bf16.msra.mxu0 %v6922
    %10598 = vmatprep.subr.bf16.mxu0 %v6931
    %10599 = vmatpush1.bf16.msra.mxu0 %v6930
    %10600 = vmatprep.subr.bf16.mxu0 %v6939
    %10601 = vmatpush1.bf16.msra.mxu0 %v6938
    %10602 = vmatprep.subr.bf16.mxu0 %v6947
    %10603 = vmatpush1.bf16.msra.mxu0 %v6946
    %10604 = vmatprep.subr.bf16.mxu0 %v6955
    %10605 = vmatpush1.bf16.msra.mxu0 %v6954
    %10606 = vmatprep.subr.bf16.mxu0 %v6963
    %10607 = vmatpush1.bf16.msra.mxu0 %v6962
    %10608 = vmatprep.subr.bf16.mxu0 %v6971
    %10609 = vmatpush1.bf16.msra.mxu0 %v6970
    %10610 = vmatprep.subr.bf16.mxu0 %v6979
    %10611 = vmatpush1.bf16.msra.mxu0 %v6978
    %10612 = vmatprep.subr.bf16.mxu0 %v6987
    %10613 = vmatpush1.bf16.msra.mxu0 %v6986
    %10614 = vmatprep.subr.bf16.mxu0 %v6995
    %10615 = vmatpush1.bf16.msra.mxu0 %v6994
    %10616 = vmatprep.subr.bf16.mxu0 %v7003
    %10617 = vmatpush1.bf16.msra.mxu0 %v7002
    %10618 = vmatprep.mubr.bf16.mxu0 %v207
    %10619 = vmatmul.mubr.bf16.gmra.mrb[0].mxu0 %v206
    %v10620 = vpop.f32.mrb[0].mxu0
    %v10621 = vadd.f32 %v10580, %v10620
    %v10622 = vpop.f32.mrb[0].mxu0
    %v10623 = vadd.f32 %v10582, %v10622
    %v10624 = vpop.f32.mrb[0].mxu0
    %v10625 = vpop.f32.mrb[0].mxu0
    %10626 = vdwg.mxu0
    %10627 = vmatprep.subr.bf16.mxu0 %v7011
    %10628 = vmatpush1.bf16.msra.mxu0 %v7010
    %10629 = vmatprep.subr.bf16.mxu0 %v7019
    %10630 = vmatpush1.bf16.msra.mxu0 %v7018
    %10631 = vmatprep.subr.bf16.mxu0 %v7027
    %10632 = vmatpush1.bf16.msra.mxu0 %v7026
    %10633 = vmatprep.subr.bf16.mxu0 %v7035
    %10634 = vmatpush1.bf16.msra.mxu0 %v7034
    %10635 = vmatprep.subr.bf16.mxu0 %v7043
    %10636 = vmatpush1.bf16.msra.mxu0 %v7042
    %10637 = vmatprep.subr.bf16.mxu0 %v7051
    %10638 = vmatpush1.bf16.msra.mxu0 %v7050
    %10639 = vmatprep.subr.bf16.mxu0 %v7059
    %10640 = vmatpush1.bf16.msra.mxu0 %v7058
    %10641 = vmatprep.subr.bf16.mxu0 %v7067
    %10642 = vmatpush1.bf16.msra.mxu0 %v7066
    %10643 = vmatprep.subr.bf16.mxu0 %v7075
    %10644 = vmatpush1.bf16.msra.mxu0 %v7074
    %10645 = vmatprep.subr.bf16.mxu0 %v7083
    %10646 = vmatpush1.bf16.msra.mxu0 %v7082
    %10647 = vmatprep.subr.bf16.mxu0 %v7091
    %10648 = vmatpush1.bf16.msra.mxu0 %v7090
    %10649 = vmatprep.subr.bf16.mxu0 %v7099
    %10650 = vmatpush1.bf16.msra.mxu0 %v7098
    %10651 = vmatprep.subr.bf16.mxu0 %v7107
    %10652 = vmatpush1.bf16.msra.mxu0 %v7106
    %10653 = vmatprep.subr.bf16.mxu0 %v7115
    %10654 = vmatpush1.bf16.msra.mxu0 %v7114
    %10655 = vmatprep.subr.bf16.mxu0 %v7123
    %10656 = vmatpush1.bf16.msra.mxu0 %v7122
    %10657 = vmatprep.subr.bf16.mxu0 %v7131
    %10658 = vmatpush1.bf16.msra.mxu0 %v7130
    %10659 = vmatprep.mubr.bf16.mxu0 %v209
    %10660 = vmatmul.mubr.bf16.gmra.mrb[0].mxu0 %v208
    %v10661 = vpop.f32.mrb[0].mxu0
    %v10662 = vadd.f32 %v10621, %v10661
    %v10663 = vpop.f32.mrb[0].mxu0
    %v10664 = vadd.f32 %v10623, %v10663
    %v10665 = vpop.f32.mrb[0].mxu0
    %v10666 = vpop.f32.mrb[0].mxu0
    %10667 = vdwg.mxu0
    %10668 = vmatprep.subr.bf16.mxu0 %v7139
    %10669 = vmatpush1.bf16.msra.mxu0 %v7138
    %10670 = vmatprep.subr.bf16.mxu0 %v7147
    %10671 = vmatpush1.bf16.msra.mxu0 %v7146
    %10672 = vmatprep.subr.bf16.mxu0 %v7155
    %10673 = vmatpush1.bf16.msra.mxu0 %v7154
    %10674 = vmatprep.subr.bf16.mxu0 %v7163
    %10675 = vmatpush1.bf16.msra.mxu0 %v7162
    %10676 = vmatprep.subr.bf16.mxu0 %v7171
    %10677 = vmatpush1.bf16.msra.mxu0 %v7170
    %10678 = vmatprep.subr.bf16.mxu0 %v7179
    %10679 = vmatpush1.bf16.msra.mxu0 %v7178
    %10680 = vmatprep.subr.bf16.mxu0 %v7187
    %10681 = vmatpush1.bf16.msra.mxu0 %v7186
    %10682 = vmatprep.subr.bf16.mxu0 %v7195
    %10683 = vmatpush1.bf16.msra.mxu0 %v7194
    %10684 = vmatprep.subr.bf16.mxu0 %v7203
    %10685 = vmatpush1.bf16.msra.mxu0 %v7202
    %10686 = vmatprep.subr.bf16.mxu0 %v7211
    %10687 = vmatpush1.bf16.msra.mxu0 %v7210
    %10688 = vmatprep.subr.bf16.mxu0 %v7219
    %10689 = vmatpush1.bf16.msra.mxu0 %v7218
    %10690 = vmatprep.subr.bf16.mxu0 %v7227
    %10691 = vmatpush1.bf16.msra.mxu0 %v7226
    %10692 = vmatprep.subr.bf16.mxu0 %v7235
    %10693 = vmatpush1.bf16.msra.mxu0 %v7234
    %10694 = vmatprep.subr.bf16.mxu0 %v7243
    %10695 = vmatpush1.bf16.msra.mxu0 %v7242
    %10696 = vmatprep.subr.bf16.mxu0 %v7251
    %10697 = vmatpush1.bf16.msra.mxu0 %v7250
    %10698 = vmatprep.subr.bf16.mxu0 %v7259
    %10699 = vmatpush1.bf16.msra.mxu0 %v7258
    %10700 = vmatprep.mubr.bf16.mxu0 %v211
    %10701 = vmatmul.mubr.bf16.gmra.mrb[0].mxu0 %v210
    %v10702 = vpop.f32.mrb[0].mxu0
    %v10703 = vadd.f32 %v10662, %v10702
    %v10704 = vpop.f32.mrb[0].mxu0
    %v10705 = vadd.f32 %v10664, %v10704
    %v10706 = vpop.f32.mrb[0].mxu0
    %v10707 = vpop.f32.mrb[0].mxu0
    %10708 = vdwg.mxu0
    %10709 = vmatprep.subr.bf16.mxu0 %v7267
    %10710 = vmatpush1.bf16.msra.mxu0 %v7266
    %10711 = vmatprep.subr.bf16.mxu0 %v7275
    %10712 = vmatpush1.bf16.msra.mxu0 %v7274
    %10713 = vmatprep.subr.bf16.mxu0 %v7283
    %10714 = vmatpush1.bf16.msra.mxu0 %v7282
    %10715 = vmatprep.subr.bf16.mxu0 %v7291
    %10716 = vmatpush1.bf16.msra.mxu0 %v7290
    %10717 = vmatprep.subr.bf16.mxu0 %v7299
    %10718 = vmatpush1.bf16.msra.mxu0 %v7298
    %10719 = vmatprep.subr.bf16.mxu0 %v7307
    %10720 = vmatpush1.bf16.msra.mxu0 %v7306
    %10721 = vmatprep.subr.bf16.mxu0 %v7315
    %10722 = vmatpush1.bf16.msra.mxu0 %v7314
    %10723 = vmatprep.subr.bf16.mxu0 %v7323
    %10724 = vmatpush1.bf16.msra.mxu0 %v7322
    %10725 = vmatprep.subr.bf16.mxu0 %v7331
    %10726 = vmatpush1.bf16.msra.mxu0 %v7330
    %10727 = vmatprep.subr.bf16.mxu0 %v7339
    %10728 = vmatpush1.bf16.msra.mxu0 %v7338
    %10729 = vmatprep.subr.bf16.mxu0 %v7347
    %10730 = vmatpush1.bf16.msra.mxu0 %v7346
    %10731 = vmatprep.subr.bf16.mxu0 %v7355
    %10732 = vmatpush1.bf16.msra.mxu0 %v7354
    %10733 = vmatprep.subr.bf16.mxu0 %v7363
    %10734 = vmatpush1.bf16.msra.mxu0 %v7362
    %10735 = vmatprep.subr.bf16.mxu0 %v7371
    %10736 = vmatpush1.bf16.msra.mxu0 %v7370
    %10737 = vmatprep.subr.bf16.mxu0 %v7379
    %10738 = vmatpush1.bf16.msra.mxu0 %v7378
    %10739 = vmatprep.subr.bf16.mxu0 %v7387
    %10740 = vmatpush1.bf16.msra.mxu0 %v7386
    %10741 = vmatprep.mubr.bf16.mxu0 %v213
    %10742 = vmatmul.mubr.bf16.gmra.mrb[0].mxu0 %v212
    %v10743 = vpop.f32.mrb[0].mxu0
    %v10744 = vadd.f32 %v10703, %v10743
    %v10745 = vpop.f32.mrb[0].mxu0
    %v10746 = vadd.f32 %v10705, %v10745
    %v10747 = vpop.f32.mrb[0].mxu0
    %v10748 = vpop.f32.mrb[0].mxu0
    %10749 = vdwg.mxu0
    %10750 = vmatprep.subr.bf16.mxu0 %v7395
    %10751 = vmatpush1.bf16.msra.mxu0 %v7394
    %10752 = vmatprep.subr.bf16.mxu0 %v7403
    %10753 = vmatpush1.bf16.msra.mxu0 %v7402
    %10754 = vmatprep.subr.bf16.mxu0 %v7411
    %10755 = vmatpush1.bf16.msra.mxu0 %v7410
    %10756 = vmatprep.subr.bf16.mxu0 %v7419
    %10757 = vmatpush1.bf16.msra.mxu0 %v7418
    %10758 = vmatprep.subr.bf16.mxu0 %v7427
    %10759 = vmatpush1.bf16.msra.mxu0 %v7426
    %10760 = vmatprep.subr.bf16.mxu0 %v7435
    %10761 = vmatpush1.bf16.msra.mxu0 %v7434
    %10762 = vmatprep.subr.bf16.mxu0 %v7443
    %10763 = vmatpush1.bf16.msra.mxu0 %v7442
    %10764 = vmatprep.subr.bf16.mxu0 %v7451
    %10765 = vmatpush1.bf16.msra.mxu0 %v7450
    %10766 = vmatprep.subr.bf16.mxu0 %v7459
    %10767 = vmatpush1.bf16.msra.mxu0 %v7458
    %10768 = vmatprep.subr.bf16.mxu0 %v7467
    %10769 = vmatpush1.bf16.msra.mxu0 %v7466
    %10770 = vmatprep.subr.bf16.mxu0 %v7475
    %10771 = vmatpush1.bf16.msra.mxu0 %v7474
    %10772 = vmatprep.subr.bf16.mxu0 %v7483
    %10773 = vmatpush1.bf16.msra.mxu0 %v7482
    %10774 = vmatprep.subr.bf16.mxu0 %v7491
    %10775 = vmatpush1.bf16.msra.mxu0 %v7490
    %10776 = vmatprep.subr.bf16.mxu0 %v7499
    %10777 = vmatpush1.bf16.msra.mxu0 %v7498
    %10778 = vmatprep.subr.bf16.mxu0 %v7507
    %10779 = vmatpush1.bf16.msra.mxu0 %v7506
    %10780 = vmatprep.subr.bf16.mxu0 %v7515
    %10781 = vmatpush1.bf16.msra.mxu0 %v7514
    %10782 = vmatprep.mubr.bf16.mxu0 %v215
    %10783 = vmatmul.mubr.bf16.gmra.mrb[0].mxu0 %v214
    %v10784 = vpop.f32.mrb[0].mxu0
    %v10785 = vadd.f32 %v10744, %v10784
    %v10786 = vpop.f32.mrb[0].mxu0
    %v10787 = vadd.f32 %v10746, %v10786
    %v10788 = vpop.f32.mrb[0].mxu0
    %v10789 = vpop.f32.mrb[0].mxu0
    %10790 = vdwg.mxu0
    %10791 = vmatprep.subr.bf16.mxu0 %v7523
    %10792 = vmatpush1.bf16.msra.mxu0 %v7522
    %10793 = vmatprep.subr.bf16.mxu0 %v7531
    %10794 = vmatpush1.bf16.msra.mxu0 %v7530
    %10795 = vmatprep.subr.bf16.mxu0 %v7539
    %10796 = vmatpush1.bf16.msra.mxu0 %v7538
    %10797 = vmatprep.subr.bf16.mxu0 %v7547
    %10798 = vmatpush1.bf16.msra.mxu0 %v7546
    %10799 = vmatprep.subr.bf16.mxu0 %v7555
    %10800 = vmatpush1.bf16.msra.mxu0 %v7554
    %10801 = vmatprep.subr.bf16.mxu0 %v7563
    %10802 = vmatpush1.bf16.msra.mxu0 %v7562
    %10803 = vmatprep.subr.bf16.mxu0 %v7571
    %10804 = vmatpush1.bf16.msra.mxu0 %v7570
    %10805 = vmatprep.subr.bf16.mxu0 %v7579
    %10806 = vmatpush1.bf16.msra.mxu0 %v7578
    %10807 = vmatprep.subr.bf16.mxu0 %v7587
    %10808 = vmatpush1.bf16.msra.mxu0 %v7586
    %10809 = vmatprep.subr.bf16.mxu0 %v7595
    %10810 = vmatpush1.bf16.msra.mxu0 %v7594
    %10811 = vmatprep.subr.bf16.mxu0 %v7603
    %10812 = vmatpush1.bf16.msra.mxu0 %v7602
    %10813 = vmatprep.subr.bf16.mxu0 %v7611
    %10814 = vmatpush1.bf16.msra.mxu0 %v7610
    %10815 = vmatprep.subr.bf16.mxu0 %v7619
    %10816 = vmatpush1.bf16.msra.mxu0 %v7618
    %10817 = vmatprep.subr.bf16.mxu0 %v7627
    %10818 = vmatpush1.bf16.msra.mxu0 %v7626
    %10819 = vmatprep.subr.bf16.mxu0 %v7635
    %10820 = vmatpush1.bf16.msra.mxu0 %v7634
    %10821 = vmatprep.subr.bf16.mxu0 %v7643
    %10822 = vmatpush1.bf16.msra.mxu0 %v7642
    %10823 = vmatprep.mubr.bf16.mxu0 %v217
    %10824 = vmatmul.mubr.bf16.gmra.mrb[0].mxu0 %v216
    %v10825 = vpop.f32.mrb[0].mxu0
    %v10826 = vadd.f32 %v10785, %v10825
    %v10827 = vpop.f32.mrb[0].mxu0
    %v10828 = vadd.f32 %v10787, %v10827
    %v10829 = vpop.f32.mrb[0].mxu0
    %v10830 = vpop.f32.mrb[0].mxu0
    %10831 = vdwg.mxu0
    %10832 = vmatprep.subr.bf16.mxu0 %v7651
    %10833 = vmatpush1.bf16.msra.mxu0 %v7650
    %10834 = vmatprep.subr.bf16.mxu0 %v7659
    %10835 = vmatpush1.bf16.msra.mxu0 %v7658
    %10836 = vmatprep.subr.bf16.mxu0 %v7667
    %10837 = vmatpush1.bf16.msra.mxu0 %v7666
    %10838 = vmatprep.subr.bf16.mxu0 %v7675
    %10839 = vmatpush1.bf16.msra.mxu0 %v7674
    %10840 = vmatprep.subr.bf16.mxu0 %v7683
    %10841 = vmatpush1.bf16.msra.mxu0 %v7682
    %10842 = vmatprep.subr.bf16.mxu0 %v7691
    %10843 = vmatpush1.bf16.msra.mxu0 %v7690
    %10844 = vmatprep.subr.bf16.mxu0 %v7699
    %10845 = vmatpush1.bf16.msra.mxu0 %v7698
    %10846 = vmatprep.subr.bf16.mxu0 %v7707
    %10847 = vmatpush1.bf16.msra.mxu0 %v7706
    %10848 = vmatprep.subr.bf16.mxu0 %v7715
    %10849 = vmatpush1.bf16.msra.mxu0 %v7714
    %10850 = vmatprep.subr.bf16.mxu0 %v7723
    %10851 = vmatpush1.bf16.msra.mxu0 %v7722
    %10852 = vmatprep.subr.bf16.mxu0 %v7731
    %10853 = vmatpush1.bf16.msra.mxu0 %v7730
    %10854 = vmatprep.subr.bf16.mxu0 %v7739
    %10855 = vmatpush1.bf16.msra.mxu0 %v7738
    %10856 = vmatprep.subr.bf16.mxu0 %v7747
    %10857 = vmatpush1.bf16.msra.mxu0 %v7746
    %10858 = vmatprep.subr.bf16.mxu0 %v7755
    %10859 = vmatpush1.bf16.msra.mxu0 %v7754
    %10860 = vmatprep.subr.bf16.mxu0 %v7763
    %10861 = vmatpush1.bf16.msra.mxu0 %v7762
    %10862 = vmatprep.subr.bf16.mxu0 %v7771
    %10863 = vmatpush1.bf16.msra.mxu0 %v7770
    %10864 = vmatprep.mubr.bf16.mxu0 %v219
    %10865 = vmatmul.mubr.bf16.gmra.mrb[0].mxu0 %v218
    %v10866 = vpop.f32.mrb[0].mxu0
    %v10867 = vadd.f32 %v10826, %v10866
    %v10868 = vpop.f32.mrb[0].mxu0
    %v10869 = vadd.f32 %v10828, %v10868
    %v10870 = vpop.f32.mrb[0].mxu0
    %v10871 = vpop.f32.mrb[0].mxu0
    %10872 = vdwg.mxu0
    %10873 = vmatprep.subr.bf16.mxu0 %v7779
    %10874 = vmatpush1.bf16.msra.mxu0 %v7778
    %10875 = vmatprep.subr.bf16.mxu0 %v7787
    %10876 = vmatpush1.bf16.msra.mxu0 %v7786
    %10877 = vmatprep.subr.bf16.mxu0 %v7795
    %10878 = vmatpush1.bf16.msra.mxu0 %v7794
    %10879 = vmatprep.subr.bf16.mxu0 %v7803
    %10880 = vmatpush1.bf16.msra.mxu0 %v7802
    %10881 = vmatprep.subr.bf16.mxu0 %v7811
    %10882 = vmatpush1.bf16.msra.mxu0 %v7810
    %10883 = vmatprep.subr.bf16.mxu0 %v7819
    %10884 = vmatpush1.bf16.msra.mxu0 %v7818
    %10885 = vmatprep.subr.bf16.mxu0 %v7827
    %10886 = vmatpush1.bf16.msra.mxu0 %v7826
    %10887 = vmatprep.subr.bf16.mxu0 %v7835
    %10888 = vmatpush1.bf16.msra.mxu0 %v7834
    %10889 = vmatprep.subr.bf16.mxu0 %v7843
    %10890 = vmatpush1.bf16.msra.mxu0 %v7842
    %10891 = vmatprep.subr.bf16.mxu0 %v7851
    %10892 = vmatpush1.bf16.msra.mxu0 %v7850
    %10893 = vmatprep.subr.bf16.mxu0 %v7859
    %10894 = vmatpush1.bf16.msra.mxu0 %v7858
    %10895 = vmatprep.subr.bf16.mxu0 %v7867
    %10896 = vmatpush1.bf16.msra.mxu0 %v7866
    %10897 = vmatprep.subr.bf16.mxu0 %v7875
    %10898 = vmatpush1.bf16.msra.mxu0 %v7874
    %10899 = vmatprep.subr.bf16.mxu0 %v7883
    %10900 = vmatpush1.bf16.msra.mxu0 %v7882
    %10901 = vmatprep.subr.bf16.mxu0 %v7891
    %10902 = vmatpush1.bf16.msra.mxu0 %v7890
    %10903 = vmatprep.subr.bf16.mxu0 %v7899
    %10904 = vmatpush1.bf16.msra.mxu0 %v7898
    %10905 = vmatprep.mubr.bf16.mxu0 %v221
    %10906 = vmatmul.mubr.bf16.gmra.mrb[0].mxu0 %v220
    %v10907 = vpop.f32.mrb[0].mxu0
    %v10908 = vadd.f32 %v10867, %v10907
    %v10909 = vpop.f32.mrb[0].mxu0
    %v10910 = vadd.f32 %v10869, %v10909
    %v10911 = vpop.f32.mrb[0].mxu0
    %v10912 = vpop.f32.mrb[0].mxu0
    %10913 = vdwg.mxu0
    %10914 = vmatprep.subr.bf16.mxu0 %v6373
    %10915 = vmatpush1.bf16.msra.mxu0 %v6372
    %10916 = vmatprep.subr.bf16.mxu0 %v6381
    %10917 = vmatpush1.bf16.msra.mxu0 %v6380
    %10918 = vmatprep.subr.bf16.mxu0 %v6389
    %10919 = vmatpush1.bf16.msra.mxu0 %v6388
    %10920 = vmatprep.subr.bf16.mxu0 %v6397
    %10921 = vmatpush1.bf16.msra.mxu0 %v6396
    %10922 = vmatprep.subr.bf16.mxu0 %v6405
    %10923 = vmatpush1.bf16.msra.mxu0 %v6404
    %10924 = vmatprep.subr.bf16.mxu0 %v6413
    %10925 = vmatpush1.bf16.msra.mxu0 %v6412
    %10926 = vmatprep.subr.bf16.mxu0 %v6421
    %10927 = vmatpush1.bf16.msra.mxu0 %v6420
    %10928 = vmatprep.subr.bf16.mxu0 %v6429
    %10929 = vmatpush1.bf16.msra.mxu0 %v6428
    %10930 = vmatprep.subr.bf16.mxu0 %v6437
    %10931 = vmatpush1.bf16.msra.mxu0 %v6436
    %10932 = vmatprep.subr.bf16.mxu0 %v6445
    %10933 = vmatpush1.bf16.msra.mxu0 %v6444
    %10934 = vmatprep.subr.bf16.mxu0 %v6453
    %10935 = vmatpush1.bf16.msra.mxu0 %v6452
    %10936 = vmatprep.subr.bf16.mxu0 %v6461
    %10937 = vmatpush1.bf16.msra.mxu0 %v6460
    %10938 = vmatprep.subr.bf16.mxu0 %v6469
    %10939 = vmatpush1.bf16.msra.mxu0 %v6468
    %10940 = vmatprep.subr.bf16.mxu0 %v6477
    %10941 = vmatpush1.bf16.msra.mxu0 %v6476
    %10942 = vmatprep.subr.bf16.mxu0 %v6485
    %10943 = vmatpush1.bf16.msra.mxu0 %v6484
    %10944 = vmatprep.subr.bf16.mxu0 %v6493
    %10945 = vmatpush1.bf16.msra.mxu0 %v6492
    %10946 = vmatprep.mubr.bf16.mxu0 %v199
    %10947 = vmatmul.mubr.bf16.gmra.mrb[0].mxu0 %v198
    %v10948 = vpop.f32.mrb[0].mxu0
    %v10949 = vadd.f32 0.0, %v10948
    %v10950 = vpop.f32.mrb[0].mxu0
    %v10951 = vadd.f32 0.0, %v10950
    %v10952 = vpop.f32.mrb[0].mxu0
    %v10953 = vpop.f32.mrb[0].mxu0
    %10954 = vdwg.mxu0
    %10955 = vmatprep.subr.bf16.mxu0 %v6501
    %10956 = vmatpush1.bf16.msra.mxu0 %v6500
    %10957 = vmatprep.subr.bf16.mxu0 %v6509
    %10958 = vmatpush1.bf16.msra.mxu0 %v6508
    %10959 = vmatprep.subr.bf16.mxu0 %v6517
    %10960 = vmatpush1.bf16.msra.mxu0 %v6516
    %10961 = vmatprep.subr.bf16.mxu0 %v6525
    %10962 = vmatpush1.bf16.msra.mxu0 %v6524
    %10963 = vmatprep.subr.bf16.mxu0 %v6533
    %10964 = vmatpush1.bf16.msra.mxu0 %v6532
    %10965 = vmatprep.subr.bf16.mxu0 %v6541
    %10966 = vmatpush1.bf16.msra.mxu0 %v6540
    %10967 = vmatprep.subr.bf16.mxu0 %v6549
    %10968 = vmatpush1.bf16.msra.mxu0 %v6548
    %10969 = vmatprep.subr.bf16.mxu0 %v6557
    %10970 = vmatpush1.bf16.msra.mxu0 %v6556
    %10971 = vmatprep.subr.bf16.mxu0 %v6565
    %10972 = vmatpush1.bf16.msra.mxu0 %v6564
    %10973 = vmatprep.subr.bf16.mxu0 %v6573
    %10974 = vmatpush1.bf16.msra.mxu0 %v6572
    %10975 = vmatprep.subr.bf16.mxu0 %v6581
    %10976 = vmatpush1.bf16.msra.mxu0 %v6580
    %10977 = vmatprep.subr.bf16.mxu0 %v6589
    %10978 = vmatpush1.bf16.msra.mxu0 %v6588
    %10979 = vmatprep.subr.bf16.mxu0 %v6597
    %10980 = vmatpush1.bf16.msra.mxu0 %v6596
    %10981 = vmatprep.subr.bf16.mxu0 %v6605
    %10982 = vmatpush1.bf16.msra.mxu0 %v6604
    %10983 = vmatprep.subr.bf16.mxu0 %v6613
    %10984 = vmatpush1.bf16.msra.mxu0 %v6612
    %10985 = vmatprep.subr.bf16.mxu0 %v6621
    %10986 = vmatpush1.bf16.msra.mxu0 %v6620
    %10987 = vmatprep.mubr.bf16.mxu0 %v201
    %10988 = vmatmul.mubr.bf16.gmra.mrb[0].mxu0 %v200
    %v10989 = vpop.f32.mrb[0].mxu0
    %v10990 = vadd.f32 %v10949, %v10989
    %v10991 = vpop.f32.mrb[0].mxu0
    %v10992 = vadd.f32 %v10951, %v10991
    %v10993 = vpop.f32.mrb[0].mxu0
    %v10994 = vpop.f32.mrb[0].mxu0
    %10995 = vdwg.mxu0
    %10996 = vmatprep.subr.bf16.mxu0 %v6629
    %10997 = vmatpush1.bf16.msra.mxu0 %v6628
    %10998 = vmatprep.subr.bf16.mxu0 %v6637
    %10999 = vmatpush1.bf16.msra.mxu0 %v6636
    %11000 = vmatprep.subr.bf16.mxu0 %v6645
    %11001 = vmatpush1.bf16.msra.mxu0 %v6644
    %11002 = vmatprep.subr.bf16.mxu0 %v6653
    %11003 = vmatpush1.bf16.msra.mxu0 %v6652
    %11004 = vmatprep.subr.bf16.mxu0 %v6661
    %11005 = vmatpush1.bf16.msra.mxu0 %v6660
    %11006 = vmatprep.subr.bf16.mxu0 %v6669
    %11007 = vmatpush1.bf16.msra.mxu0 %v6668
    %11008 = vmatprep.subr.bf16.mxu0 %v6677
    %11009 = vmatpush1.bf16.msra.mxu0 %v6676
    %11010 = vmatprep.subr.bf16.mxu0 %v6685
    %11011 = vmatpush1.bf16.msra.mxu0 %v6684
    %11012 = vmatprep.subr.bf16.mxu0 %v6693
    %11013 = vmatpush1.bf16.msra.mxu0 %v6692
    %11014 = vmatprep.subr.bf16.mxu0 %v6701
    %11015 = vmatpush1.bf16.msra.mxu0 %v6700
    %11016 = vmatprep.subr.bf16.mxu0 %v6709
    %11017 = vmatpush1.bf16.msra.mxu0 %v6708
    %11018 = vmatprep.subr.bf16.mxu0 %v6717
    %11019 = vmatpush1.bf16.msra.mxu0 %v6716
    %11020 = vmatprep.subr.bf16.mxu0 %v6725
    %11021 = vmatpush1.bf16.msra.mxu0 %v6724
    %11022 = vmatprep.subr.bf16.mxu0 %v6733
    %11023 = vmatpush1.bf16.msra.mxu0 %v6732
    %11024 = vmatprep.subr.bf16.mxu0 %v6741
    %11025 = vmatpush1.bf16.msra.mxu0 %v6740
    %11026 = vmatprep.subr.bf16.mxu0 %v6749
    %11027 = vmatpush1.bf16.msra.mxu0 %v6748
    %11028 = vmatprep.mubr.bf16.mxu0 %v203
    %11029 = vmatmul.mubr.bf16.gmra.mrb[0].mxu0 %v202
    %v11030 = vpop.f32.mrb[0].mxu0
    %v11031 = vadd.f32 %v10990, %v11030
    %v11032 = vpop.f32.mrb[0].mxu0
    %v11033 = vadd.f32 %v10992, %v11032
    %v11034 = vpop.f32.mrb[0].mxu0
    %v11035 = vpop.f32.mrb[0].mxu0
    %11036 = vdwg.mxu0
    %11037 = vmatprep.subr.bf16.mxu0 %v6757
    %11038 = vmatpush1.bf16.msra.mxu0 %v6756
    %11039 = vmatprep.subr.bf16.mxu0 %v6765
    %11040 = vmatpush1.bf16.msra.mxu0 %v6764
    %11041 = vmatprep.subr.bf16.mxu0 %v6773
    %11042 = vmatpush1.bf16.msra.mxu0 %v6772
    %11043 = vmatprep.subr.bf16.mxu0 %v6781
    %11044 = vmatpush1.bf16.msra.mxu0 %v6780
    %11045 = vmatprep.subr.bf16.mxu0 %v6789
    %11046 = vmatpush1.bf16.msra.mxu0 %v6788
    %11047 = vmatprep.subr.bf16.mxu0 %v6797
    %11048 = vmatpush1.bf16.msra.mxu0 %v6796
    %11049 = vmatprep.subr.bf16.mxu0 %v6805
    %11050 = vmatpush1.bf16.msra.mxu0 %v6804
    %11051 = vmatprep.subr.bf16.mxu0 %v6813
    %11052 = vmatpush1.bf16.msra.mxu0 %v6812
    %11053 = vmatprep.subr.bf16.mxu0 %v6821
    %11054 = vmatpush1.bf16.msra.mxu0 %v6820
    %11055 = vmatprep.subr.bf16.mxu0 %v6829
    %11056 = vmatpush1.bf16.msra.mxu0 %v6828
    %11057 = vmatprep.subr.bf16.mxu0 %v6837
    %11058 = vmatpush1.bf16.msra.mxu0 %v6836
    %11059 = vmatprep.subr.bf16.mxu0 %v6845
    %11060 = vmatpush1.bf16.msra.mxu0 %v6844
    %11061 = vmatprep.subr.bf16.mxu0 %v6853
    %11062 = vmatpush1.bf16.msra.mxu0 %v6852
    %11063 = vmatprep.subr.bf16.mxu0 %v6861
    %11064 = vmatpush1.bf16.msra.mxu0 %v6860
    %11065 = vmatprep.subr.bf16.mxu0 %v6869
    %11066 = vmatpush1.bf16.msra.mxu0 %v6868
    %11067 = vmatprep.subr.bf16.mxu0 %v6877
    %11068 = vmatpush1.bf16.msra.mxu0 %v6876
    %11069 = vmatprep.mubr.bf16.mxu0 %v205
    %11070 = vmatmul.mubr.bf16.gmra.mrb[0].mxu0 %v204
    %v11071 = vpop.f32.mrb[0].mxu0
    %v11072 = vadd.f32 %v11031, %v11071
    %v11073 = vpop.f32.mrb[0].mxu0
    %v11074 = vadd.f32 %v11033, %v11073
    %v11075 = vpop.f32.mrb[0].mxu0
    %v11076 = vpop.f32.mrb[0].mxu0
    %11077 = vdwg.mxu0
    %11078 = vmatprep.subr.bf16.mxu0 %v6885
    %11079 = vmatpush1.bf16.msra.mxu0 %v6884
    %11080 = vmatprep.subr.bf16.mxu0 %v6893
    %11081 = vmatpush1.bf16.msra.mxu0 %v6892
    %11082 = vmatprep.subr.bf16.mxu0 %v6901
    %11083 = vmatpush1.bf16.msra.mxu0 %v6900
    %11084 = vmatprep.subr.bf16.mxu0 %v6909
    %11085 = vmatpush1.bf16.msra.mxu0 %v6908
    %11086 = vmatprep.subr.bf16.mxu0 %v6917
    %11087 = vmatpush1.bf16.msra.mxu0 %v6916
    %11088 = vmatprep.subr.bf16.mxu0 %v6925
    %11089 = vmatpush1.bf16.msra.mxu0 %v6924
    %11090 = vmatprep.subr.bf16.mxu0 %v6933
    %11091 = vmatpush1.bf16.msra.mxu0 %v6932
    %11092 = vmatprep.subr.bf16.mxu0 %v6941
    %11093 = vmatpush1.bf16.msra.mxu0 %v6940
    %11094 = vmatprep.subr.bf16.mxu0 %v6949
    %11095 = vmatpush1.bf16.msra.mxu0 %v6948
    %11096 = vmatprep.subr.bf16.mxu0 %v6957
    %11097 = vmatpush1.bf16.msra.mxu0 %v6956
    %11098 = vmatprep.subr.bf16.mxu0 %v6965
    %11099 = vmatpush1.bf16.msra.mxu0 %v6964
    %11100 = vmatprep.subr.bf16.mxu0 %v6973
    %11101 = vmatpush1.bf16.msra.mxu0 %v6972
    %11102 = vmatprep.subr.bf16.mxu0 %v6981
    %11103 = vmatpush1.bf16.msra.mxu0 %v6980
    %11104 = vmatprep.subr.bf16.mxu0 %v6989
    %11105 = vmatpush1.bf16.msra.mxu0 %v6988
    %11106 = vmatprep.subr.bf16.mxu0 %v6997
    %11107 = vmatpush1.bf16.msra.mxu0 %v6996
    %11108 = vmatprep.subr.bf16.mxu0 %v7005
    %11109 = vmatpush1.bf16.msra.mxu0 %v7004
    %11110 = vmatprep.mubr.bf16.mxu0 %v207
    %11111 = vmatmul.mubr.bf16.gmra.mrb[0].mxu0 %v206
    %v11112 = vpop.f32.mrb[0].mxu0
    %v11113 = vadd.f32 %v11072, %v11112
    %v11114 = vpop.f32.mrb[0].mxu0
    %v11115 = vadd.f32 %v11074, %v11114
    %v11116 = vpop.f32.mrb[0].mxu0
    %v11117 = vpop.f32.mrb[0].mxu0
    %11118 = vdwg.mxu0
    %11119 = vmatprep.subr.bf16.mxu0 %v7013
    %11120 = vmatpush1.bf16.msra.mxu0 %v7012
    %11121 = vmatprep.subr.bf16.mxu0 %v7021
    %11122 = vmatpush1.bf16.msra.mxu0 %v7020
    %11123 = vmatprep.subr.bf16.mxu0 %v7029
    %11124 = vmatpush1.bf16.msra.mxu0 %v7028
    %11125 = vmatprep.subr.bf16.mxu0 %v7037
    %11126 = vmatpush1.bf16.msra.mxu0 %v7036
    %11127 = vmatprep.subr.bf16.mxu0 %v7045
    %11128 = vmatpush1.bf16.msra.mxu0 %v7044
    %11129 = vmatprep.subr.bf16.mxu0 %v7053
    %11130 = vmatpush1.bf16.msra.mxu0 %v7052
    %11131 = vmatprep.subr.bf16.mxu0 %v7061
    %11132 = vmatpush1.bf16.msra.mxu0 %v7060
    %11133 = vmatprep.subr.bf16.mxu0 %v7069
    %11134 = vmatpush1.bf16.msra.mxu0 %v7068
    %11135 = vmatprep.subr.bf16.mxu0 %v7077
    %11136 = vmatpush1.bf16.msra.mxu0 %v7076
    %11137 = vmatprep.subr.bf16.mxu0 %v7085
    %11138 = vmatpush1.bf16.msra.mxu0 %v7084
    %11139 = vmatprep.subr.bf16.mxu0 %v7093
    %11140 = vmatpush1.bf16.msra.mxu0 %v7092
    %11141 = vmatprep.subr.bf16.mxu0 %v7101
    %11142 = vmatpush1.bf16.msra.mxu0 %v7100
    %11143 = vmatprep.subr.bf16.mxu0 %v7109
    %11144 = vmatpush1.bf16.msra.mxu0 %v7108
    %11145 = vmatprep.subr.bf16.mxu0 %v7117
    %11146 = vmatpush1.bf16.msra.mxu0 %v7116
    %11147 = vmatprep.subr.bf16.mxu0 %v7125
    %11148 = vmatpush1.bf16.msra.mxu0 %v7124
    %11149 = vmatprep.subr.bf16.mxu0 %v7133
    %11150 = vmatpush1.bf16.msra.mxu0 %v7132
    %11151 = vmatprep.mubr.bf16.mxu0 %v209
    %11152 = vmatmul.mubr.bf16.gmra.mrb[0].mxu0 %v208
    %v11153 = vpop.f32.mrb[0].mxu0
    %v11154 = vadd.f32 %v11113, %v11153
    %v11155 = vpop.f32.mrb[0].mxu0
    %v11156 = vadd.f32 %v11115, %v11155
    %v11157 = vpop.f32.mrb[0].mxu0
    %v11158 = vpop.f32.mrb[0].mxu0
    %11159 = vdwg.mxu0
    %11160 = vmatprep.subr.bf16.mxu0 %v7141
    %11161 = vmatpush1.bf16.msra.mxu0 %v7140
    %11162 = vmatprep.subr.bf16.mxu0 %v7149
    %11163 = vmatpush1.bf16.msra.mxu0 %v7148
    %11164 = vmatprep.subr.bf16.mxu0 %v7157
    %11165 = vmatpush1.bf16.msra.mxu0 %v7156
    %11166 = vmatprep.subr.bf16.mxu0 %v7165
    %11167 = vmatpush1.bf16.msra.mxu0 %v7164
    %11168 = vmatprep.subr.bf16.mxu0 %v7173
    %11169 = vmatpush1.bf16.msra.mxu0 %v7172
    %11170 = vmatprep.subr.bf16.mxu0 %v7181
    %11171 = vmatpush1.bf16.msra.mxu0 %v7180
    %11172 = vmatprep.subr.bf16.mxu0 %v7189
    %11173 = vmatpush1.bf16.msra.mxu0 %v7188
    %11174 = vmatprep.subr.bf16.mxu0 %v7197
    %11175 = vmatpush1.bf16.msra.mxu0 %v7196
    %11176 = vmatprep.subr.bf16.mxu0 %v7205
    %11177 = vmatpush1.bf16.msra.mxu0 %v7204
    %11178 = vmatprep.subr.bf16.mxu0 %v7213
    %11179 = vmatpush1.bf16.msra.mxu0 %v7212
    %11180 = vmatprep.subr.bf16.mxu0 %v7221
    %11181 = vmatpush1.bf16.msra.mxu0 %v7220
    %11182 = vmatprep.subr.bf16.mxu0 %v7229
    %11183 = vmatpush1.bf16.msra.mxu0 %v7228
    %11184 = vmatprep.subr.bf16.mxu0 %v7237
    %11185 = vmatpush1.bf16.msra.mxu0 %v7236
    %11186 = vmatprep.subr.bf16.mxu0 %v7245
    %11187 = vmatpush1.bf16.msra.mxu0 %v7244
    %11188 = vmatprep.subr.bf16.mxu0 %v7253
    %11189 = vmatpush1.bf16.msra.mxu0 %v7252
    %11190 = vmatprep.subr.bf16.mxu0 %v7261
    %11191 = vmatpush1.bf16.msra.mxu0 %v7260
    %11192 = vmatprep.mubr.bf16.mxu0 %v211
    %11193 = vmatmul.mubr.bf16.gmra.mrb[0].mxu0 %v210
    %v11194 = vpop.f32.mrb[0].mxu0
    %v11195 = vadd.f32 %v11154, %v11194
    %v11196 = vpop.f32.mrb[0].mxu0
    %v11197 = vadd.f32 %v11156, %v11196
    %v11198 = vpop.f32.mrb[0].mxu0
    %v11199 = vpop.f32.mrb[0].mxu0
    %11200 = vdwg.mxu0
    %11201 = vmatprep.subr.bf16.mxu0 %v7269
    %11202 = vmatpush1.bf16.msra.mxu0 %v7268
    %11203 = vmatprep.subr.bf16.mxu0 %v7277
    %11204 = vmatpush1.bf16.msra.mxu0 %v7276
    %11205 = vmatprep.subr.bf16.mxu0 %v7285
    %11206 = vmatpush1.bf16.msra.mxu0 %v7284
    %11207 = vmatprep.subr.bf16.mxu0 %v7293
    %11208 = vmatpush1.bf16.msra.mxu0 %v7292
    %11209 = vmatprep.subr.bf16.mxu0 %v7301
    %11210 = vmatpush1.bf16.msra.mxu0 %v7300
    %11211 = vmatprep.subr.bf16.mxu0 %v7309
    %11212 = vmatpush1.bf16.msra.mxu0 %v7308
    %11213 = vmatprep.subr.bf16.mxu0 %v7317
    %11214 = vmatpush1.bf16.msra.mxu0 %v7316
    %11215 = vmatprep.subr.bf16.mxu0 %v7325
    %11216 = vmatpush1.bf16.msra.mxu0 %v7324
    %11217 = vmatprep.subr.bf16.mxu0 %v7333
    %11218 = vmatpush1.bf16.msra.mxu0 %v7332
    %11219 = vmatprep.subr.bf16.mxu0 %v7341
    %11220 = vmatpush1.bf16.msra.mxu0 %v7340
    %11221 = vmatprep.subr.bf16.mxu0 %v7349
    %11222 = vmatpush1.bf16.msra.mxu0 %v7348
    %11223 = vmatprep.subr.bf16.mxu0 %v7357
    %11224 = vmatpush1.bf16.msra.mxu0 %v7356
    %11225 = vmatprep.subr.bf16.mxu0 %v7365
    %11226 = vmatpush1.bf16.msra.mxu0 %v7364
    %11227 = vmatprep.subr.bf16.mxu0 %v7373
    %11228 = vmatpush1.bf16.msra.mxu0 %v7372
    %11229 = vmatprep.subr.bf16.mxu0 %v7381
    %11230 = vmatpush1.bf16.msra.mxu0 %v7380
    %11231 = vmatprep.subr.bf16.mxu0 %v7389
    %11232 = vmatpush1.bf16.msra.mxu0 %v7388
    %11233 = vmatprep.mubr.bf16.mxu0 %v213
    %11234 = vmatmul.mubr.bf16.gmra.mrb[0].mxu0 %v212
    %v11235 = vpop.f32.mrb[0].mxu0
    %v11236 = vadd.f32 %v11195, %v11235
    %v11237 = vpop.f32.mrb[0].mxu0
    %v11238 = vadd.f32 %v11197, %v11237
    %v11239 = vpop.f32.mrb[0].mxu0
    %v11240 = vpop.f32.mrb[0].mxu0
    %11241 = vdwg.mxu0
    %11242 = vmatprep.subr.bf16.mxu0 %v7397
    %11243 = vmatpush1.bf16.msra.mxu0 %v7396
    %11244 = vmatprep.subr.bf16.mxu0 %v7405
    %11245 = vmatpush1.bf16.msra.mxu0 %v7404
    %11246 = vmatprep.subr.bf16.mxu0 %v7413
    %11247 = vmatpush1.bf16.msra.mxu0 %v7412
    %11248 = vmatprep.subr.bf16.mxu0 %v7421
    %11249 = vmatpush1.bf16.msra.mxu0 %v7420
    %11250 = vmatprep.subr.bf16.mxu0 %v7429
    %11251 = vmatpush1.bf16.msra.mxu0 %v7428
    %11252 = vmatprep.subr.bf16.mxu0 %v7437
    %11253 = vmatpush1.bf16.msra.mxu0 %v7436
    %11254 = vmatprep.subr.bf16.mxu0 %v7445
    %11255 = vmatpush1.bf16.msra.mxu0 %v7444
    %11256 = vmatprep.subr.bf16.mxu0 %v7453
    %11257 = vmatpush1.bf16.msra.mxu0 %v7452
    %11258 = vmatprep.subr.bf16.mxu0 %v7461
    %11259 = vmatpush1.bf16.msra.mxu0 %v7460
    %11260 = vmatprep.subr.bf16.mxu0 %v7469
    %11261 = vmatpush1.bf16.msra.mxu0 %v7468
    %11262 = vmatprep.subr.bf16.mxu0 %v7477
    %11263 = vmatpush1.bf16.msra.mxu0 %v7476
    %11264 = vmatprep.subr.bf16.mxu0 %v7485
    %11265 = vmatpush1.bf16.msra.mxu0 %v7484
    %11266 = vmatprep.subr.bf16.mxu0 %v7493
    %11267 = vmatpush1.bf16.msra.mxu0 %v7492
    %11268 = vmatprep.subr.bf16.mxu0 %v7501
    %11269 = vmatpush1.bf16.msra.mxu0 %v7500
    %11270 = vmatprep.subr.bf16.mxu0 %v7509
    %11271 = vmatpush1.bf16.msra.mxu0 %v7508
    %11272 = vmatprep.subr.bf16.mxu0 %v7517
    %11273 = vmatpush1.bf16.msra.mxu0 %v7516
    %11274 = vmatprep.mubr.bf16.mxu0 %v215
    %11275 = vmatmul.mubr.bf16.gmra.mrb[0].mxu0 %v214
    %v11276 = vpop.f32.mrb[0].mxu0
    %v11277 = vadd.f32 %v11236, %v11276
    %v11278 = vpop.f32.mrb[0].mxu0
    %v11279 = vadd.f32 %v11238, %v11278
    %v11280 = vpop.f32.mrb[0].mxu0
    %v11281 = vpop.f32.mrb[0].mxu0
    %11282 = vdwg.mxu0
    %11283 = vmatprep.subr.bf16.mxu0 %v7525
    %11284 = vmatpush1.bf16.msra.mxu0 %v7524
    %11285 = vmatprep.subr.bf16.mxu0 %v7533
    %11286 = vmatpush1.bf16.msra.mxu0 %v7532
    %11287 = vmatprep.subr.bf16.mxu0 %v7541
    %11288 = vmatpush1.bf16.msra.mxu0 %v7540
    %11289 = vmatprep.subr.bf16.mxu0 %v7549
    %11290 = vmatpush1.bf16.msra.mxu0 %v7548
    %11291 = vmatprep.subr.bf16.mxu0 %v7557
    %11292 = vmatpush1.bf16.msra.mxu0 %v7556
    %11293 = vmatprep.subr.bf16.mxu0 %v7565
    %11294 = vmatpush1.bf16.msra.mxu0 %v7564
    %11295 = vmatprep.subr.bf16.mxu0 %v7573
    %11296 = vmatpush1.bf16.msra.mxu0 %v7572
    %11297 = vmatprep.subr.bf16.mxu0 %v7581
    %11298 = vmatpush1.bf16.msra.mxu0 %v7580
    %11299 = vmatprep.subr.bf16.mxu0 %v7589
    %11300 = vmatpush1.bf16.msra.mxu0 %v7588
    %11301 = vmatprep.subr.bf16.mxu0 %v7597
    %11302 = vmatpush1.bf16.msra.mxu0 %v7596
    %11303 = vmatprep.subr.bf16.mxu0 %v7605
    %11304 = vmatpush1.bf16.msra.mxu0 %v7604
    %11305 = vmatprep.subr.bf16.mxu0 %v7613
    %11306 = vmatpush1.bf16.msra.mxu0 %v7612
    %11307 = vmatprep.subr.bf16.mxu0 %v7621
    %11308 = vmatpush1.bf16.msra.mxu0 %v7620
    %11309 = vmatprep.subr.bf16.mxu0 %v7629
    %11310 = vmatpush1.bf16.msra.mxu0 %v7628
    %11311 = vmatprep.subr.bf16.mxu0 %v7637
    %11312 = vmatpush1.bf16.msra.mxu0 %v7636
    %11313 = vmatprep.subr.bf16.mxu0 %v7645
    %11314 = vmatpush1.bf16.msra.mxu0 %v7644
    %11315 = vmatprep.mubr.bf16.mxu0 %v217
    %11316 = vmatmul.mubr.bf16.gmra.mrb[0].mxu0 %v216
    %v11317 = vpop.f32.mrb[0].mxu0
    %v11318 = vadd.f32 %v11277, %v11317
    %v11319 = vpop.f32.mrb[0].mxu0
    %v11320 = vadd.f32 %v11279, %v11319
    %v11321 = vpop.f32.mrb[0].mxu0
    %v11322 = vpop.f32.mrb[0].mxu0
    %11323 = vdwg.mxu0
    %11324 = vmatprep.subr.bf16.mxu0 %v7653
    %11325 = vmatpush1.bf16.msra.mxu0 %v7652
    %11326 = vmatprep.subr.bf16.mxu0 %v7661
    %11327 = vmatpush1.bf16.msra.mxu0 %v7660
    %11328 = vmatprep.subr.bf16.mxu0 %v7669
    %11329 = vmatpush1.bf16.msra.mxu0 %v7668
    %11330 = vmatprep.subr.bf16.mxu0 %v7677
    %11331 = vmatpush1.bf16.msra.mxu0 %v7676
    %11332 = vmatprep.subr.bf16.mxu0 %v7685
    %11333 = vmatpush1.bf16.msra.mxu0 %v7684
    %11334 = vmatprep.subr.bf16.mxu0 %v7693
    %11335 = vmatpush1.bf16.msra.mxu0 %v7692
    %11336 = vmatprep.subr.bf16.mxu0 %v7701
    %11337 = vmatpush1.bf16.msra.mxu0 %v7700
    %11338 = vmatprep.subr.bf16.mxu0 %v7709
    %11339 = vmatpush1.bf16.msra.mxu0 %v7708
    %11340 = vmatprep.subr.bf16.mxu0 %v7717
    %11341 = vmatpush1.bf16.msra.mxu0 %v7716
    %11342 = vmatprep.subr.bf16.mxu0 %v7725
    %11343 = vmatpush1.bf16.msra.mxu0 %v7724
    %11344 = vmatprep.subr.bf16.mxu0 %v7733
    %11345 = vmatpush1.bf16.msra.mxu0 %v7732
    %11346 = vmatprep.subr.bf16.mxu0 %v7741
    %11347 = vmatpush1.bf16.msra.mxu0 %v7740
    %11348 = vmatprep.subr.bf16.mxu0 %v7749
    %11349 = vmatpush1.bf16.msra.mxu0 %v7748
    %11350 = vmatprep.subr.bf16.mxu0 %v7757
    %11351 = vmatpush1.bf16.msra.mxu0 %v7756
    %11352 = vmatprep.subr.bf16.mxu0 %v7765
    %11353 = vmatpush1.bf16.msra.mxu0 %v7764
    %11354 = vmatprep.subr.bf16.mxu0 %v7773
    %11355 = vmatpush1.bf16.msra.mxu0 %v7772
    %11356 = vmatprep.mubr.bf16.mxu0 %v219
    %11357 = vmatmul.mubr.bf16.gmra.mrb[0].mxu0 %v218
    %v11358 = vpop.f32.mrb[0].mxu0
    %v11359 = vadd.f32 %v11318, %v11358
    %v11360 = vpop.f32.mrb[0].mxu0
    %v11361 = vadd.f32 %v11320, %v11360
    %v11362 = vpop.f32.mrb[0].mxu0
    %v11363 = vpop.f32.mrb[0].mxu0
    %11364 = vdwg.mxu0
    %11365 = vmatprep.subr.bf16.mxu0 %v7781
    %11366 = vmatpush1.bf16.msra.mxu0 %v7780
    %11367 = vmatprep.subr.bf16.mxu0 %v7789
    %11368 = vmatpush1.bf16.msra.mxu0 %v7788
    %11369 = vmatprep.subr.bf16.mxu0 %v7797
    %11370 = vmatpush1.bf16.msra.mxu0 %v7796
    %11371 = vmatprep.subr.bf16.mxu0 %v7805
    %11372 = vmatpush1.bf16.msra.mxu0 %v7804
    %11373 = vmatprep.subr.bf16.mxu0 %v7813
    %11374 = vmatpush1.bf16.msra.mxu0 %v7812
    %11375 = vmatprep.subr.bf16.mxu0 %v7821
    %11376 = vmatpush1.bf16.msra.mxu0 %v7820
    %11377 = vmatprep.subr.bf16.mxu0 %v7829
    %11378 = vmatpush1.bf16.msra.mxu0 %v7828
    %11379 = vmatprep.subr.bf16.mxu0 %v7837
    %11380 = vmatpush1.bf16.msra.mxu0 %v7836
    %11381 = vmatprep.subr.bf16.mxu0 %v7845
    %11382 = vmatpush1.bf16.msra.mxu0 %v7844
    %11383 = vmatprep.subr.bf16.mxu0 %v7853
    %11384 = vmatpush1.bf16.msra.mxu0 %v7852
    %11385 = vmatprep.subr.bf16.mxu0 %v7861
    %11386 = vmatpush1.bf16.msra.mxu0 %v7860
    %11387 = vmatprep.subr.bf16.mxu0 %v7869
    %11388 = vmatpush1.bf16.msra.mxu0 %v7868
    %11389 = vmatprep.subr.bf16.mxu0 %v7877
    %11390 = vmatpush1.bf16.msra.mxu0 %v7876
    %11391 = vmatprep.subr.bf16.mxu0 %v7885
    %11392 = vmatpush1.bf16.msra.mxu0 %v7884
    %11393 = vmatprep.subr.bf16.mxu0 %v7893
    %11394 = vmatpush1.bf16.msra.mxu0 %v7892
    %11395 = vmatprep.subr.bf16.mxu0 %v7901
    %11396 = vmatpush1.bf16.msra.mxu0 %v7900
    %11397 = vmatprep.mubr.bf16.mxu0 %v221
    %11398 = vmatmul.mubr.bf16.gmra.mrb[0].mxu0 %v220
    %v11399 = vpop.f32.mrb[0].mxu0
    %v11400 = vadd.f32 %v11359, %v11399
    %v11401 = vpop.f32.mrb[0].mxu0
    %v11402 = vadd.f32 %v11361, %v11401
    %v11403 = vpop.f32.mrb[0].mxu0
    %v11404 = vpop.f32.mrb[0].mxu0
    %11405 = vdwg.mxu0
    %v11406 = vmax.f32 %v9924, %v10416
    %v11407 = vmax.f32 %v9926, %v10418
    %v11408 = vmax.f32 %v10908, %v11400
    %v11409 = vmax.f32 %v10910, %v11402
    %v11410 = vmax.f32 %v11406, %v11408
    %v11411 = vmax.f32 %v11407, %v11409
    %v11412 = vld [vmem:[#allocation7] ss:$8 sm:$0x3]
    %v11414 = vlaneseq
    %v11415 = vshrl.u32 %v11414, 7
    %v11416 = vsub.s32 0, %v11415
    %v11417 = vrot.slane %v11412, %v11416
    %v11418 = vlaneseq
    %v11419 = vshrl.u32 %v11418, 7
    %v11420 = vsub.s32 1, %v11419
    %v11421 = vrot.slane %v11412, %v11420
    %v11424 = vadd.f32 %v11410, %v11417
    %v11425 = vadd.f32 %v11411, %v11421
    %v11426 = vmax.f32 %v11424, 0.0
    %v11427 = vmax.f32 %v11425, 0.0
    %v11428 = vpack.c.bf16 %v11426, %v11426
    %v11429 = vpack.c.bf16 %v11427, %v11427
    %v11430 = vld [vmem:[#allocation5] sm:$0xf]
    %v11431 = vld [vmem:[#allocation5 + $0x4] sm:$0xf]
    %v11432 = vld [vmem:[#allocation5 + $0x8] sm:$0xf]
    %v11433 = vld [vmem:[#allocation5 + $0xc] sm:$0xf]
    %v11434 = vld [vmem:[#allocation5 + $0x10] sm:$0xf]
    %v11435 = vld [vmem:[#allocation5 + $0x14] sm:$0xf]
    %v11436 = vld [vmem:[#allocation5 + $0x18] sm:$0xf]
    %v11437 = vld [vmem:[#allocation5 + $0x1c] sm:$0xf]
    %v11438 = vld [vmem:[#allocation5 + $0x20] sm:$0xf]
    %v11439 = vld [vmem:[#allocation5 + $0x24] sm:$0xf]
    %v11440 = vld [vmem:[#allocation5 + $0x28] sm:$0xf]
    %v11441 = vld [vmem:[#allocation5 + $0x2c] sm:$0xf]
    %v11442 = vld [vmem:[#allocation5 + $0x30] sm:$0xf]
    %v11443 = vld [vmem:[#allocation5 + $0x34] sm:$0xf]
    %v11444 = vld [vmem:[#allocation5 + $0x38] sm:$0xf]
    %v11445 = vld [vmem:[#allocation5 + $0x3c] sm:$0xf]
    %v11446 = vld [vmem:[#allocation5 + $0x40] sm:$0xf]
    %v11447 = vld [vmem:[#allocation5 + $0x44] sm:$0xf]
    %v11448 = vld [vmem:[#allocation5 + $0x48] sm:$0xf]
    %v11449 = vld [vmem:[#allocation5 + $0x4c] sm:$0xf]
    %v11450 = vld [vmem:[#allocation5 + $0x50] sm:$0xf]
    %v11451 = vld [vmem:[#allocation5 + $0x54] sm:$0xf]
    %v11452 = vld [vmem:[#allocation5 + $0x58] sm:$0xf]
    %v11453 = vld [vmem:[#allocation5 + $0x5c] sm:$0xf]
    %v11454 = vld [vmem:[#allocation5 + $0x60] sm:$0xf]
    %v11455 = vld [vmem:[#allocation5 + $0x64] sm:$0xf]
    %v11456 = vld [vmem:[#allocation5 + $0x68] sm:$0xf]
    %v11457 = vld [vmem:[#allocation5 + $0x6c] sm:$0xf]
    %v11458 = vld [vmem:[#allocation5 + $0x70] sm:$0xf]
    %v11459 = vld [vmem:[#allocation5 + $0x74] sm:$0xf]
    %v11460 = vld [vmem:[#allocation5 + $0x78] sm:$0xf]
    %v11461 = vld [vmem:[#allocation5 + $0x7c] sm:$0xf]
    %v11494 = vunpack.c.l.b16 %v11430
    %v11495 = vunpack.c.l.b16 %v11431
    %v11496 = vunpack.c.l.b16 %v11432
    %v11497 = vunpack.c.l.b16 %v11433
    %v11498 = vunpack.c.l.b16 %v11434
    %v11499 = vunpack.c.l.b16 %v11435
    %v11500 = vunpack.c.l.b16 %v11436
    %v11501 = vunpack.c.l.b16 %v11437
    %v11502 = vunpack.c.l.b16 %v11438
    %v11503 = vunpack.c.l.b16 %v11439
    %v11504 = vunpack.c.l.b16 %v11440
    %v11505 = vunpack.c.l.b16 %v11441
    %v11506 = vunpack.c.l.b16 %v11442
    %v11507 = vunpack.c.l.b16 %v11443
    %v11508 = vunpack.c.l.b16 %v11444
    %v11509 = vunpack.c.l.b16 %v11445
    %v11510 = vunpack.c.l.b16 %v11446
    %v11511 = vunpack.c.l.b16 %v11447
    %v11512 = vunpack.c.l.b16 %v11448
    %v11513 = vunpack.c.l.b16 %v11449
    %v11514 = vunpack.c.l.b16 %v11450
    %v11515 = vunpack.c.l.b16 %v11451
    %v11516 = vunpack.c.l.b16 %v11452
    %v11517 = vunpack.c.l.b16 %v11453
    %v11518 = vunpack.c.l.b16 %v11454
    %v11519 = vunpack.c.l.b16 %v11455
    %v11520 = vunpack.c.l.b16 %v11456
    %v11521 = vunpack.c.l.b16 %v11457
    %v11522 = vunpack.c.l.b16 %v11458
    %v11523 = vunpack.c.l.b16 %v11459
    %v11524 = vunpack.c.l.b16 %v11460
    %v11525 = vunpack.c.l.b16 %v11461
    %v11526 = vpack.c.b16 %v11495, %v11494
    %v11527 = vpack.c.b16 %v11497, %v11496
    %v11528 = vpack.c.b16 %v11499, %v11498
    %v11529 = vpack.c.b16 %v11501, %v11500
    %v11530 = vpack.c.b16 %v11503, %v11502
    %v11531 = vpack.c.b16 %v11505, %v11504
    %v11532 = vpack.c.b16 %v11507, %v11506
    %v11533 = vpack.c.b16 %v11509, %v11508
    %v11534 = vpack.c.b16 %v11511, %v11510
    %v11535 = vpack.c.b16 %v11513, %v11512
    %v11536 = vpack.c.b16 %v11515, %v11514
    %v11537 = vpack.c.b16 %v11517, %v11516
    %v11538 = vpack.c.b16 %v11519, %v11518
    %v11539 = vpack.c.b16 %v11521, %v11520
    %v11540 = vpack.c.b16 %v11523, %v11522
    %v11541 = vpack.c.b16 %v11525, %v11524
    %11558 = vmatprep.subr.bf16.mxu0 0
    %11559 = vmatpush1.bf16.msra.mxu0 %v11526
    %11560 = vmatprep.subr.bf16.mxu0 0
    %11561 = vmatpush1.bf16.msra.mxu0 %v11527
    %11562 = vmatprep.subr.bf16.mxu0 0
    %11563 = vmatpush1.bf16.msra.mxu0 %v11528
    %11564 = vmatprep.subr.bf16.mxu0 0
    %11565 = vmatpush1.bf16.msra.mxu0 %v11529
    %11566 = vmatprep.subr.bf16.mxu0 0
    %11567 = vmatpush1.bf16.msra.mxu0 %v11530
    %11568 = vmatprep.subr.bf16.mxu0 0
    %11569 = vmatpush1.bf16.msra.mxu0 %v11531
    %11570 = vmatprep.subr.bf16.mxu0 0
    %11571 = vmatpush1.bf16.msra.mxu0 %v11532
    %11572 = vmatprep.subr.bf16.mxu0 0
    %11573 = vmatpush1.bf16.msra.mxu0 %v11533
    %11574 = vmatprep.subr.bf16.mxu0 0
    %11575 = vmatpush1.bf16.msra.mxu0 %v11534
    %11576 = vmatprep.subr.bf16.mxu0 0
    %11577 = vmatpush1.bf16.msra.mxu0 %v11535
    %11578 = vmatprep.subr.bf16.mxu0 0
    %11579 = vmatpush1.bf16.msra.mxu0 %v11536
    %11580 = vmatprep.subr.bf16.mxu0 0
    %11581 = vmatpush1.bf16.msra.mxu0 %v11537
    %11582 = vmatprep.subr.bf16.mxu0 0
    %11583 = vmatpush1.bf16.msra.mxu0 %v11538
    %11584 = vmatprep.subr.bf16.mxu0 0
    %11585 = vmatpush1.bf16.msra.mxu0 %v11539
    %11586 = vmatprep.subr.bf16.mxu0 0
    %11587 = vmatpush1.bf16.msra.mxu0 %v11540
    %11588 = vmatprep.subr.bf16.mxu0 0
    %11589 = vmatpush1.bf16.msra.mxu0 %v11541
    %11590 = vmatprep.mubr.bf16.mxu0 %v11429
    %11591 = vmatmul.mubr.bf16.gmra.mrb[0].mxu0 %v11428
    %v11592 = vpop.f32.mrb[0].mxu0
    %v11593 = vadd.f32 0.0, %v11592
    %v11594 = vpop.f32.mrb[0].mxu0
    %v11595 = vpop.f32.mrb[0].mxu0
    %v11596 = vpop.f32.mrb[0].mxu0
    %11597 = vdwg.mxu0
    %11599 = vrot.lane.b32.xlu0 %v11593, 96
    %v11600 = vpop.permute.xlu0 %11599
    %v11602 = vmax.f32 %v11593, %v11600
    %11604 = vrot.lane.b32.xlu0 %v11602, 64
    %v11605 = vpop.permute.xlu0 %11604
    %v11607 = vmax.f32 %v11602, %v11605
    %v11608 = vld [vmem:[#allocation7 + $0x1] ss:$0 sm:$0xff]
    %v11609 = vadd.f32 %v11607, %v11608
    %v11610 = vmax.f32 %v11609, 0.0
    %v11611 = vld [vmem:[#allocation7 + $0x10] sm:$0xff]
    %v11612 = vld [vmem:[#allocation7 + $0x20] sm:$0xff]
    %v11613 = vld [vmem:[#allocation7 + $0x30] sm:$0xff]
    %v11614 = vld [vmem:[#allocation7 + $0x40] sm:$0xff]
    %v11615 = vld [vmem:[#allocation7 + $0x2] ss:$0 sm:$0xff]
    %vm11616 = vcmask 261120
    %v11618 = vsel %vm11616, %v11610, 0
    %11620 = vmatprep.subr.mxu0 0.0
    %11621 = vmatpush1.msra.mxu0 %v11611
    %11622 = vmatprep.subr.mxu0 0.0
    %11623 = vmatpush1.msra.mxu0 %v11612
    %11624 = vmatprep.subr.mxu0 0.0
    %11625 = vmatpush1.msra.mxu0 %v11613
    %11626 = vmatprep.subr.mxu0 0.0
    %11627 = vmatpush1.msra.mxu0 %v11614
    %11628 = vmatprep.subr.mxu0 0.0
    %11629 = vmatpush1.msra.mxu0 0.0
    %11630 = vmatprep.subr.mxu0 0.0
    %11631 = vmatpush1.msra.mxu0 0.0
    %11632 = vmatprep.subr.mxu0 0.0
    %11633 = vmatpush1.msra.mxu0 0.0
    %11634 = vmatprep.subr.mxu0 0.0
    %11635 = vmatpush1.msra.mxu0 0.0
    %11636 = vmatprep.subr.mxu0 0.0
    %11637 = vmatpush1.msra.mxu0 0.0
    %11638 = vmatprep.subr.mxu0 0.0
    %11639 = vmatpush1.msra.mxu0 0.0
    %11640 = vmatprep.subr.mxu0 0.0
    %11641 = vmatpush1.msra.mxu0 0.0
    %11642 = vmatprep.subr.mxu0 0.0
    %11643 = vmatpush1.msra.mxu0 0.0
    %11644 = vmatprep.subr.mxu0 0.0
    %11645 = vmatpush1.msra.mxu0 0.0
    %11646 = vmatprep.subr.mxu0 0.0
    %11647 = vmatpush1.msra.mxu0 0.0
    %11648 = vmatprep.subr.mxu0 0.0
    %11649 = vmatpush1.msra.mxu0 0.0
    %11650 = vmatprep.subr.mxu0 0.0
    %11651 = vmatpush1.msra.mxu0 0.0
    %11652 = vmatprep.subr.mxu0 0.0
    %11653 = vmatpush1.msra.mxu0 0.0
    %11654 = vmatprep.subr.mxu0 0.0
    %11655 = vmatpush1.msra.mxu0 0.0
    %11656 = vmatprep.subr.mxu0 0.0
    %11657 = vmatpush1.msra.mxu0 0.0
    %11658 = vmatprep.subr.mxu0 0.0
    %11659 = vmatpush1.msra.mxu0 0.0
    %11660 = vmatprep.subr.mxu0 0.0
    %11661 = vmatpush1.msra.mxu0 0.0
    %11662 = vmatprep.subr.mxu0 0.0
    %11663 = vmatpush1.msra.mxu0 0.0
    %11664 = vmatprep.subr.mxu0 0.0
    %11665 = vmatpush1.msra.mxu0 0.0
    %11666 = vmatprep.subr.mxu0 0.0
    %11667 = vmatpush1.msra.mxu0 0.0
    %11668 = vmatprep.subr.mxu0 0.0
    %11669 = vmatpush1.msra.mxu0 0.0
    %11670 = vmatprep.subr.mxu0 0.0
    %11671 = vmatpush1.msra.mxu0 0.0
    %11672 = vmatprep.subr.mxu0 0.0
    %11673 = vmatpush1.msra.mxu0 0.0
    %11674 = vmatprep.subr.mxu0 0.0
    %11675 = vmatpush1.msra.mxu0 0.0
    %11676 = vmatprep.subr.mxu0 0.0
    %11677 = vmatpush1.msra.mxu0 0.0
    %11678 = vmatprep.subr.mxu0 0.0
    %11679 = vmatpush1.msra.mxu0 0.0
    %11680 = vmatprep.subr.mxu0 0.0
    %11681 = vmatpush1.msra.mxu0 0.0
    %11682 = vmatprep.subr.mxu0 0.0
    %11683 = vmatpush1.msra.mxu0 0.0
    %11684 = vmatprep.mubr.f32.mxu0 0.0
    %11685 = vmatmul.mubr.f32.gmra.mrb[0].mxu0 %v11618
    %v11686 = vpop.f32.mrb[0].mxu0
    %v11687 = vadd.f32 %v11615, %v11686
    %v11688 = vpop.f32.mrb[0].mxu0
    %11689 = vdwg.mxu0
    %vm11690 = vcmask 9216
    %11691 = vst.msk [vmem:[#allocation8] sm:$0x3] %vm11690, %v11687
    // Predicated region
    $region30: #{net_forward.1} parent=1 // pred_check
      _
    $region31: #{net_forward.1} parent=1 // pred_check_branch
      %11693 = sbr.rel (0) target = $region33
    $region32: #{net_forward.1} parent=1 // pred_region
      %s11695 = ssub.s32 32, 32
      %11696 = vsyncadd [#allocation4], %s11695
      %s11698 = sshll.u32 [#allocation8], 4
      %s11699 = int_to_ptr.vmem [resolvable:$true] %s11698
      %11701 = dma.vmem_to_hbm [thread:$0]  %s11699, 32, %s4, [#allocation4]
    $region33: #{net_forward.1} parent=1 // pred_fallthru
      _
    // Predicated region
    $region34: #{net_forward.1} parent=1 // pred_check
      _
    $region35: #{net_forward.1} parent=1 // pred_check_branch
      %11703 = sbr.rel (0) target = $region37
    $region36: #{net_forward.1} parent=1 // pred_region
      %11704 = dma.done [#allocation4], 32
    $region37: #{net_forward.1} parent=1 // pred_fallthru
      _
    %11705 = vsyncpa [#allocation3], 1
    %11706 = vsyncpa [#allocation6], 1
    %11707 = vsyncpa [#allocation4], 1

</llo_original>
